<compile_context>
chip_gen: v5e
topology: v5e:2x2
jax: 0.10.0
libtpu: 0.0.40
codegen_flags: <defaults>
</compile_context>

<pallas_src>
import functools

import jax
import jax.numpy as jnp
from jax.experimental import pallas as pl
from jax.experimental.pallas import tpu as pltpu

TAU = 0.7
EPS = 1e-12  # F.normalize default eps


# ---------------------------------------------------------------------------
# Fused kernel: MLP x4 row-tiles -> L2 normalize -> cosine sums -> per-row loss
# ---------------------------------------------------------------------------
def fused_contrast_kernel(z1_ref, z2_ref, z1p_ref, z2p_ref,
                          w1_ref, b1_ref, w2_ref, b2_ref,
                          loss_ref, *, inv_tau):
    tm = z1_ref.shape[0]

    # Stack the four row tiles into one (4*TM, H) slab -> bigger MXU tiles,
    # one matmul pair instead of four.
    x = jnp.concatenate(
        [z1_ref[...], z2_ref[...], z1p_ref[...], z2p_ref[...]], axis=0
    ).astype(jnp.float32)

    # 2-layer MLP (Linear -> ReLU -> Linear); weights stay resident in VMEM.
    h = jnp.dot(x, w1_ref[...], preferred_element_type=jnp.float32,
                precision=jax.lax.Precision.HIGHEST) + b1_ref[...]
    h = jnp.maximum(h, 0.0)
    y = jnp.dot(h, w2_ref[...], preferred_element_type=jnp.float32,
                precision=jax.lax.Precision.HIGHEST) + b2_ref[...]

    # Row-wise L2 normalize: x / max(||x||, eps) == x * rsqrt(max(||x||^2, eps^2)).
    # rsqrt runs on the EUP slot instead of a VALU divide.
    sq = jnp.sum(y * y, axis=1, keepdims=True)
    yn = y * jax.lax.rsqrt(jnp.maximum(sq, EPS * EPS))

    a = yn[0:tm]            # normalize(mlp(z1))        tile
    b = yn[tm:2 * tm]       # normalize(mlp(z2))        tile
    ap = yn[2 * tm:3 * tm]  # normalize(mlp(z1[perm]))  tile
    bp = yn[3 * tm:4 * tm]  # normalize(mlp(z2[perm]))  tile

    sb = jnp.sum(a * b, axis=1, keepdims=True) * inv_tau    # between / tau
    sn1 = jnp.sum(a * bp, axis=1, keepdims=True) * inv_tau  # neg1 / tau
    sn2 = jnp.sum(b * ap, axis=1, keepdims=True) * inv_tau  # neg2 / tau

    # -log(e_sb / (2*e_sb + e_sn1 + e_sn2)) == log(2*e_sb + e_sn1 + e_sn2) - sb
    loss_ref[...] = jnp.log(2.0 * jnp.exp(sb) + jnp.exp(sn1) + jnp.exp(sn2)) - sb


# ---------------------------------------------------------------------------
# Wrapper: one tiled pallas_call over independent row blocks + tiny JAX mean.
# ---------------------------------------------------------------------------
def contrast_forward(z1, z2, params, perm, *, tau=TAU, block_rows=None):
    w1, b1, w2, b2 = params
    n, h = z1.shape

    # Input-side permutation gather (glue).  MLP is row-wise, so
    # mlp(z)[perm] == mlp(z[perm]); gathering the *inputs* keeps the fused
    # kernel tiled with no cross-tile dependencies.
    z1p = jnp.take(z1, perm, axis=0)
    z2p = jnp.take(z2, perm, axis=0)

    # Pick a row-tile size that divides N (keeps blocks unmasked; candidates
    # are multiples of 8 for the sublane constraint).
    if block_rows is None:
        for cand in (512, 256, 128, 64, 32, 16, 8):
            if n % cand == 0:
                block_rows = cand
                break
        else:
            block_rows = n
    tm = block_rows
    assert n % tm == 0, "block_rows must divide N"
    grid = (n // tm,)

    kernel = functools.partial(fused_contrast_kernel, inv_tau=1.0 / tau)

    per_row = pl.pallas_call(
        kernel,
        out_shape=jax.ShapeDtypeStruct((n, 1), jnp.float32),
        grid_spec=pltpu.PrefetchScalarGridSpec(
            num_scalar_prefetch=0,
            grid=grid,
            in_specs=[
                pl.BlockSpec((tm, h), lambda i: (i, 0)),   # z1 tile
                pl.BlockSpec((tm, h), lambda i: (i, 0)),   # z2 tile
                pl.BlockSpec((tm, h), lambda i: (i, 0)),   # z1[perm] tile
                pl.BlockSpec((tm, h), lambda i: (i, 0)),   # z2[perm] tile
                pl.BlockSpec((h, h), lambda i: (0, 0)),    # W1 (resident)
                pl.BlockSpec((1, h), lambda i: (0, 0)),    # b1 (resident)
                pl.BlockSpec((h, h), lambda i: (0, 0)),    # W2 (resident)
                pl.BlockSpec((1, h), lambda i: (0, 0)),    # b2 (resident)
            ],
            out_specs=pl.BlockSpec((tm, 1), lambda i: (i, 0)),
        ),
        # Each grid step owns a disjoint output block, so the axis is truly
        # parallel (megacore sharding on multi-TensorCore chips).
        compiler_params=pltpu.CompilerParams(
            dimension_semantics=("parallel",)),
    )(z1, z2, z1p, z2p, w1, b1.reshape(1, h), w2, b2.reshape(1, h))

    # Tiny final reduction over N scalars (done in JAX on purpose so the grid
    # needs no serial accumulator).
    return jnp.mean(per_row)


# ---------------------------------------------------------------------------
# Pure-JAX reference for sanity checking (mirrors the PyTorch module).
# ---------------------------------------------------------------------------
def reference_forward(z1, z2, params, perm, *, tau=TAU):
    w1, b1, w2, b2 = params
    prec = jax.lax.Precision.HIGHEST

    def mlp(x):
        h = jnp.maximum(jnp.dot(x, w1, precision=prec) + b1, 0.0)
        return jnp.dot(h, w2, precision=prec) + b2

    def norm(x):
        return x / jnp.maximum(jnp.linalg.norm(x, axis=1, keepdims=True), EPS)

    h1, h2 = mlp(z1), mlp(z2)
    f = lambda s: jnp.exp(s / tau)
    between = f(jnp.sum(norm(h1) * norm(h2), axis=1))
    neg = f(jnp.sum(norm(h1) * norm(h2[perm]), axis=1)) + \
          f(jnp.sum(norm(h2) * norm(h1[perm]), axis=1))
    return -jnp.mean(jnp.log(between / (between + between + neg)))


if __name__ == "__main__":
    # Use full f32 matmul precision so the numerical comparison is tight.
    jax.config.update("jax_default_matmul_precision", "highest")

    # Lane-dense small shapes: N=512 node embeddings, hidden=128.
    N, H = 512, 128
    key = jax.random.PRNGKey(0)
    k_z1, k_z2, k_w1, k_b1, k_w2, k_b2, k_perm = jax.random.split(key, 7)

    z1 = jax.random.normal(k_z1, (N, H), dtype=jnp.float32)
    z2 = jax.random.normal(k_z2, (N, H), dtype=jnp.float32)

    # Deterministic param init (PyTorch Linear default: U(-1/sqrt(H), 1/sqrt(H))).
    bound = 1.0 / (H ** 0.5)
    w1 = jax.random.uniform(k_w1, (H, H), jnp.float32, -bound, bound)  # (in, out)
    b1 = jax.random.uniform(k_b1, (H,), jnp.float32, -bound, bound)
    w2 = jax.random.uniform(k_w2, (H, H), jnp.float32, -bound, bound)
    b2 = jax.random.uniform(k_b2, (H,), jnp.float32, -bound, bound)
    params = (w1, b1, w2, b2)

    # TODO(synk): torch.randperm draws from PyTorch global RNG state; a
    # deterministic jax.random.permutation stands in here.
    perm = jax.random.permutation(k_perm, N)

    # block_rows=128 -> 4 independent grid steps, exercising the tiled path.
    loss = contrast_forward(z1, z2, params, perm, block_rows=128)
    jax.block_until_ready(loss)

    ref = reference_forward(z1, z2, params, perm)
    assert jnp.allclose(loss, ref, atol=1e-5, rtol=1e-5), (loss, ref)

    print("KERNEL_OK")
</pallas_src>

<mosaic_0001>
module attributes {stable_mosaic.version = 11 : i64} {
  func.func @fused_contrast_kernel(%arg0: i32, %arg1: memref<128x128xf32, #tpu.memory_space<vmem>>, %arg2: memref<128x128xf32, #tpu.memory_space<vmem>>, %arg3: memref<128x128xf32, #tpu.memory_space<vmem>>, %arg4: memref<128x128xf32, #tpu.memory_space<vmem>>, %arg5: memref<128x128xf32, #tpu.memory_space<vmem>>, %arg6: memref<1x128xf32, #tpu.memory_space<vmem>>, %arg7: memref<128x128xf32, #tpu.memory_space<vmem>>, %arg8: memref<1x128xf32, #tpu.memory_space<vmem>>, %arg9: memref<128x1xf32, #tpu.memory_space<vmem>>) attributes {dimension_semantics = [#tpu.dimension_semantics<parallel>], iteration_bounds = array<i64: 4>, scalar_prefetch = 0 : i64, scratch_operands = 0 : i64, tpu.core_type = #tpu.core_type<tc>, window_params = [{transform_indices = @transform_0, window_bounds = array<i64: 128, 128>}, {transform_indices = @transform_1, window_bounds = array<i64: 128, 128>}, {transform_indices = @transform_2, window_bounds = array<i64: 128, 128>}, {transform_indices = @transform_3, window_bounds = array<i64: 128, 128>}, {pipeline_mode = #tpu.pipeline_mode<synchronous>, transform_indices = @transform_4, window_bounds = array<i64: 128, 128>}, {pipeline_mode = #tpu.pipeline_mode<synchronous>, transform_indices = @transform_5, window_bounds = array<i64: 1, 128>}, {pipeline_mode = #tpu.pipeline_mode<synchronous>, transform_indices = @transform_6, window_bounds = array<i64: 128, 128>}, {pipeline_mode = #tpu.pipeline_mode<synchronous>, transform_indices = @transform_7, window_bounds = array<i64: 1, 128>}, {transform_indices = @transform_8, window_bounds = array<i64: 128, 1>}]} {
    %c0 = arith.constant 0 : index
    %c0_0 = arith.constant 0 : index
    %0 = vector.load %arg1[%c0, %c0_0] : memref<128x128xf32, #tpu.memory_space<vmem>>, vector<128x128xf32>
    %c0_1 = arith.constant 0 : index
    %c0_2 = arith.constant 0 : index
    %1 = vector.load %arg2[%c0_1, %c0_2] : memref<128x128xf32, #tpu.memory_space<vmem>>, vector<128x128xf32>
    %c0_3 = arith.constant 0 : index
    %c0_4 = arith.constant 0 : index
    %2 = vector.load %arg3[%c0_3, %c0_4] : memref<128x128xf32, #tpu.memory_space<vmem>>, vector<128x128xf32>
    %c0_5 = arith.constant 0 : index
    %c0_6 = arith.constant 0 : index
    %3 = vector.load %arg4[%c0_5, %c0_6] : memref<128x128xf32, #tpu.memory_space<vmem>>, vector<128x128xf32>
    %4 = tpu.concatenate %0, %1, %2, %3 in 0 : vector<128x128xf32>, vector<128x128xf32>, vector<128x128xf32>, vector<128x128xf32> -> vector<512x128xf32>
    %c0_7 = arith.constant 0 : index
    %c0_8 = arith.constant 0 : index
    %5 = vector.load %arg5[%c0_7, %c0_8] : memref<128x128xf32, #tpu.memory_space<vmem>>, vector<128x128xf32>
    %cst = arith.constant dense<0.000000e+00> : vector<512x128xf32>
    %6 = tpu.matmul %4, %5, %cst {dimension_numbers = #tpu.dot_dimension_numbers<[1], [0], [0], [1], [0, 0, 1, 1], [], []>, precision = #tpu.contract_precision<fp32>} : vector<512x128xf32>, vector<128x128xf32>, vector<512x128xf32> -> vector<512x128xf32>
    %c0_9 = arith.constant 0 : index
    %c0_10 = arith.constant 0 : index
    %7 = vector.load %arg6[%c0_9, %c0_10] : memref<1x128xf32, #tpu.memory_space<vmem>>, vector<1x128xf32>
    %8 = vector.broadcast %7 : vector<1x128xf32> to vector<512x128xf32>
    %9 = arith.addf %6, %8 : vector<512x128xf32>
    %cst_11 = arith.constant 0.000000e+00 : f32
    %10 = vector.broadcast %cst_11 : f32 to vector<512x128xf32>
    %11 = arith.maximumf %9, %10 : vector<512x128xf32>
    %c0_12 = arith.constant 0 : index
    %c0_13 = arith.constant 0 : index
    %12 = vector.load %arg7[%c0_12, %c0_13] : memref<128x128xf32, #tpu.memory_space<vmem>>, vector<128x128xf32>
    %cst_14 = arith.constant dense<0.000000e+00> : vector<512x128xf32>
    %13 = tpu.matmul %11, %12, %cst_14 {dimension_numbers = #tpu.dot_dimension_numbers<[1], [0], [0], [1], [0, 0, 1, 1], [], []>, precision = #tpu.contract_precision<fp32>} : vector<512x128xf32>, vector<128x128xf32>, vector<512x128xf32> -> vector<512x128xf32>
    %c0_15 = arith.constant 0 : index
    %c0_16 = arith.constant 0 : index
    %14 = vector.load %arg8[%c0_15, %c0_16] : memref<1x128xf32, #tpu.memory_space<vmem>>, vector<1x128xf32>
    %15 = vector.broadcast %14 : vector<1x128xf32> to vector<512x128xf32>
    %16 = arith.addf %13, %15 : vector<512x128xf32>
    %17 = arith.mulf %16, %16 : vector<512x128xf32>
    %cst_17 = arith.constant dense<0.000000e+00> : vector<512xf32>
    %18 = vector.multi_reduction <add>, %17, %cst_17 [1] : vector<512x128xf32> to vector<512xf32>
    %19 = vector.shape_cast %18 : vector<512xf32> to vector<512x1xf32>
    %cst_18 = arith.constant 1.000000e-24 : f32
    %20 = vector.broadcast %cst_18 : f32 to vector<512x1xf32>
    %21 = arith.maximumf %19, %20 : vector<512x1xf32>
    %22 = math.rsqrt %21 : vector<512x1xf32>
    %23 = vector.broadcast %22 : vector<512x1xf32> to vector<512x128xf32>
    %24 = arith.mulf %16, %23 : vector<512x128xf32>
    %25 = vector.extract_strided_slice %24 {offsets = [0, 0], sizes = [128, 128], strides = [1, 1]} : vector<512x128xf32> to vector<128x128xf32>
    %26 = vector.extract_strided_slice %24 {offsets = [128, 0], sizes = [128, 128], strides = [1, 1]} : vector<512x128xf32> to vector<128x128xf32>
    %27 = vector.extract_strided_slice %24 {offsets = [256, 0], sizes = [128, 128], strides = [1, 1]} : vector<512x128xf32> to vector<128x128xf32>
    %28 = vector.extract_strided_slice %24 {offsets = [384, 0], sizes = [128, 128], strides = [1, 1]} : vector<512x128xf32> to vector<128x128xf32>
    %29 = arith.mulf %25, %26 : vector<128x128xf32>
    %cst_19 = arith.constant dense<0.000000e+00> : vector<128xf32>
    %30 = vector.multi_reduction <add>, %29, %cst_19 [1] : vector<128x128xf32> to vector<128xf32>
    %31 = vector.shape_cast %30 : vector<128xf32> to vector<128x1xf32>
    %cst_20 = arith.constant 1.42857146 : f32
    %32 = vector.broadcast %cst_20 : f32 to vector<128x1xf32>
    %33 = arith.mulf %31, %32 : vector<128x1xf32>
    %34 = arith.mulf %25, %28 : vector<128x128xf32>
    %cst_21 = arith.constant dense<0.000000e+00> : vector<128xf32>
    %35 = vector.multi_reduction <add>, %34, %cst_21 [1] : vector<128x128xf32> to vector<128xf32>
    %36 = vector.shape_cast %35 : vector<128xf32> to vector<128x1xf32>
    %cst_22 = arith.constant 1.42857146 : f32
    %37 = vector.broadcast %cst_22 : f32 to vector<128x1xf32>
    %38 = arith.mulf %36, %37 : vector<128x1xf32>
    %39 = arith.mulf %26, %27 : vector<128x128xf32>
    %cst_23 = arith.constant dense<0.000000e+00> : vector<128xf32>
    %40 = vector.multi_reduction <add>, %39, %cst_23 [1] : vector<128x128xf32> to vector<128xf32>
    %41 = vector.shape_cast %40 : vector<128xf32> to vector<128x1xf32>
    %cst_24 = arith.constant 1.42857146 : f32
    %42 = vector.broadcast %cst_24 : f32 to vector<128x1xf32>
    %43 = arith.mulf %41, %42 : vector<128x1xf32>
    %44 = math.exp %33 : vector<128x1xf32>
    %cst_25 = arith.constant 2.000000e+00 : f32
    %45 = vector.broadcast %cst_25 : f32 to vector<128x1xf32>
    %46 = arith.mulf %45, %44 : vector<128x1xf32>
    %47 = math.exp %38 : vector<128x1xf32>
    %48 = arith.addf %46, %47 : vector<128x1xf32>
    %49 = math.exp %43 : vector<128x1xf32>
    %50 = arith.addf %48, %49 : vector<128x1xf32>
    %51 = math.log %50 : vector<128x1xf32>
    %52 = arith.subf %51, %33 : vector<128x1xf32>
    %c0_26 = arith.constant 0 : index
    %c0_27 = arith.constant 0 : index
    %53 = vector.load %arg9[%c0_26, %c0_27] : memref<128x1xf32, #tpu.memory_space<vmem>>, vector<128x1xf32>
    tpu.vector_store %arg9[%c0_26, %c0_27], %52 {strides = array<i32>} : memref<128x1xf32, #tpu.memory_space<vmem>>, vector<128x1xf32>,
    return
  }
  func.func @transform_0(%arg0: i32) -> (i32, i32) {
    %c0_i32 = arith.constant 0 : i32
    %c0_i32_0 = arith.constant 0 : i32
    return %arg0, %c0_i32 : i32, i32
  }
  func.func @transform_1(%arg0: i32) -> (i32, i32) {
    %c0_i32 = arith.constant 0 : i32
    %c0_i32_0 = arith.constant 0 : i32
    return %arg0, %c0_i32 : i32, i32
  }
  func.func @transform_2(%arg0: i32) -> (i32, i32) {
    %c0_i32 = arith.constant 0 : i32
    %c0_i32_0 = arith.constant 0 : i32
    return %arg0, %c0_i32 : i32, i32
  }
  func.func @transform_3(%arg0: i32) -> (i32, i32) {
    %c0_i32 = arith.constant 0 : i32
    %c0_i32_0 = arith.constant 0 : i32
    return %arg0, %c0_i32 : i32, i32
  }
  func.func @transform_4(%arg0: i32) -> (i32, i32) {
    %c0_i32 = arith.constant 0 : i32
    %c0_i32_0 = arith.constant 0 : i32
    %c0_i32_1 = arith.constant 0 : i32
    return %c0_i32, %c0_i32_0 : i32, i32
  }
  func.func @transform_5(%arg0: i32) -> (i32, i32) {
    %c0_i32 = arith.constant 0 : i32
    %c0_i32_0 = arith.constant 0 : i32
    %c0_i32_1 = arith.constant 0 : i32
    return %c0_i32, %c0_i32_0 : i32, i32
  }
  func.func @transform_6(%arg0: i32) -> (i32, i32) {
    %c0_i32 = arith.constant 0 : i32
    %c0_i32_0 = arith.constant 0 : i32
    %c0_i32_1 = arith.constant 0 : i32
    return %c0_i32, %c0_i32_0 : i32, i32
  }
  func.func @transform_7(%arg0: i32) -> (i32, i32) {
    %c0_i32 = arith.constant 0 : i32
    %c0_i32_0 = arith.constant 0 : i32
    %c0_i32_1 = arith.constant 0 : i32
    return %c0_i32, %c0_i32_0 : i32, i32
  }
  func.func @transform_8(%arg0: i32) -> (i32, i32) {
    %c0_i32 = arith.constant 0 : i32
    %c0_i32_0 = arith.constant 0 : i32
    return %arg0, %c0_i32 : i32, i32
  }
}

</mosaic_0001>

<llo_original>
// kernel: tpu_custom_call.1
$region0: #{tpu_custom_call.1}
  #allocation0 [shape = 'u32[]', space=smem, size = 0x4, offset = 0x4, fixed_abs, tag = 'smem constant byte address 0x4 - core index']
  #allocation1 [shape = 'u32[72,128]{1,0:T(1,128)}', space=vmem, size = 0x9000, scoped, tag = 'internal scratch']
  %s0 = inlined_call_operand.hbm [shape: f32[512,128], index: 0, kind: input, shape index: {}]
  %s1 = inlined_call_operand.hbm [shape: f32[512,128], index: 1, kind: input, shape index: {}]
  %s2 = inlined_call_operand.hbm [shape: f32[512,128], index: 2, kind: input, shape index: {}]
  %s3 = inlined_call_operand.hbm [shape: f32[512,128], index: 3, kind: input, shape index: {}]
  %s4 = inlined_call_operand.hbm [shape: f32[128,128], index: 4, kind: input, shape index: {}]
  %s5 = inlined_call_operand.vmem [shape: f32[1,128], index: 5, kind: input, shape index: {}]
  %s6 = inlined_call_operand.hbm [shape: f32[128,128], index: 6, kind: input, shape index: {}]
  %s7 = inlined_call_operand.vmem [shape: f32[1,128], index: 7, kind: input, shape index: {}]
  %s8 = inlined_call_operand.vmem [shape: f32[512,1], index: 8, kind: output, shape index: {}]
  %s9 = sld [smem:[#allocation0]]
  $region89: #{tpu_custom_call.1} parent=0
    _
  %s11 = ssub.s32 1, %s9
  %s12 = scalar_select 0, %s11, %s9
  $region1: #{tpu_custom_call.1} parent=0
    #allocation2 [shape = 'u8[131072]{0}', space=vmem, size = 0x20000, scoped, tag = 'input window, operand 0']
    #allocation3 [shape = 's32[2]{0}', space=sflag, size = 0x8, scoped, tag = 'scoped memory for tpu_custom_call.1']
    #allocation4 [shape = 'u8[131072]{0}', space=vmem, size = 0x20000, scoped, tag = 'input window, operand 1']
    #allocation5 [shape = 's32[2]{0}', space=sflag, size = 0x8, scoped, tag = 'scoped memory for tpu_custom_call.1']
    #allocation6 [shape = 'u8[131072]{0}', space=vmem, size = 0x20000, scoped, tag = 'input window, operand 2']
    #allocation7 [shape = 'u8[131072]{0}', space=vmem, size = 0x20000, scoped, tag = 'input window, operand 3']
    #allocation8 [shape = 's32[2]{0}', space=sflag, size = 0x8, scoped, tag = 'scoped memory for tpu_custom_call.1']
    #allocation9 [shape = 'u8[65536]{0}', space=vmem, size = 0x10000, scoped, tag = 'input window, operand 4, single buffered']
    #allocation10 [shape = 'u8[65536]{0}', space=vmem, size = 0x10000, scoped, tag = 'input window, operand 6, single buffered']
    #allocation11 [shape = 's32[1]{0}', space=sflag, size = 0x4, scoped, tag = 'scoped memory for tpu_custom_call.1']
    %13 = vsyncpa [#allocation3], 0
    %s14 = scalar_lea.sflag [#allocation3], 1
    %15 = vsyncpa %s14, 0
    %16 = vsyncpa [#allocation5], 0
    %s17 = scalar_lea.sflag [#allocation5], 1
    %18 = vsyncpa %s17, 0
    %19 = vsyncpa [#allocation8], 0
    %s20 = scalar_lea.sflag [#allocation8], 1
    %21 = vsyncpa %s20, 0
    %22 = vsyncpa [#allocation11], 0
    loop: start=0, step=1, limit=6
    $region2: #{tpu_custom_call.1} parent=1 // loop_pre_header
      _
    $region3: #{tpu_custom_call.1} parent=1 // loop_header
      %s24 = sphi 0, %s28
      %p25 = scmp.ge.s32.totalorder %s24, 6
      %s34 = sphi 0, %s36
      %s37 = sphi 0, %s34
      %s38 = sphi 0, %s37
      %s54 = sphi 0, %s38
      %s60 = sphi 0, %s62
      %s63 = sphi 0, %s60
      %s64 = sphi 0, %s63
      %s80 = sphi 0, %s64
      %s86 = sphi 0, %s88
      %s89 = sphi 0, %s86
      %s90 = sphi 0, %s89
      %s106 = sphi 0, %s90
      %s112 = sphi 0, %s114
      %s115 = sphi 0, %s112
      %s116 = sphi 0, %s115
      %s132 = sphi 0, %s116
      %s136 = sphi 0, %s136
      %s138 = sphi 0, %s136
      %s139 = sphi 0, %s138
      %s153 = sphi 0, %s139
      %s157 = sphi 0, %s157
      %s159 = sphi 0, %s157
      %s160 = sphi 0, %s159
      %s174 = sphi 0, %s160
      %s178 = sphi 0, %s178
      %s180 = sphi 0, %s178
      %s181 = sphi 0, %s180
      %s195 = sphi 0, %s181
      %s199 = sphi 0, %s199
      %s201 = sphi 0, %s199
      %s202 = sphi 0, %s201
      %s216 = sphi 0, %s202
      %s222 = sphi 0, %s224
      %s225 = sphi 0, %s222
      %s226 = sphi 0, %s225
      %s242 = sphi 0, %s226
    $region4: #{tpu_custom_call.1} parent=1 // loop_header_branch
      %27 = sbr.rel (%p25) target = $region8
    $region5: #{tpu_custom_call.1} parent=1 // loop_body
      %s29 = ssub.s32 %s24, 1
      %s30 = ssub.s32 %s24, 2
      %s31 = sadd.s32 %s24, 1
      %s32 = ssub.s32 %s24, %s31
      %p33 = scmp.eq.s32.totalorder %s32, 0
      %s35 = sadd.s32 %s34, 1
      %s36 = scalar_select %p33, %s34, %s35
      %p39 = pneg %p33
      %p40 = scmp.eq.s32.totalorder %s24, 3
      %p41 = por %p39, %p40
      %p42 = scmp.ne.s32.totalorder %s34, %s37
      %p43 = scmp.eq.s32.totalorder %s24, 0
      %p44 = por %p42, %p43
      %p45 = scmp.ne.s32.totalorder %s34, %s37
      %p46 = scmp.eq.s32.totalorder %s29, 3
      %p47 = por %p45, %p46
      %p48 = scmp.ne.s32.totalorder %s37, %s38
      %p49 = scmp.eq.s32.totalorder %s29, 0
      %p50 = por %p48, %p49
      %p51 = scmp.ne.s32.totalorder %s37, %s38
      %p52 = scmp.eq.s32.totalorder %s30, 3
      %p53 = por %p51, %p52
      %p55 = scmp.ne.s32.totalorder %s38, %s54
      %p56 = scmp.eq.s32.totalorder %s30, 0
      %p57 = por %p55, %p56
      %s58 = ssub.s32 %s24, %s31
      %p59 = scmp.eq.s32.totalorder %s58, 0
      %s61 = sadd.s32 %s60, 1
      %s62 = scalar_select %p59, %s60, %s61
      %p65 = pneg %p59
      %p66 = scmp.eq.s32.totalorder %s24, 3
      %p67 = por %p65, %p66
      %p68 = scmp.ne.s32.totalorder %s60, %s63
      %p69 = scmp.eq.s32.totalorder %s24, 0
      %p70 = por %p68, %p69
      %p71 = scmp.ne.s32.totalorder %s60, %s63
      %p72 = scmp.eq.s32.totalorder %s29, 3
      %p73 = por %p71, %p72
      %p74 = scmp.ne.s32.totalorder %s63, %s64
      %p75 = scmp.eq.s32.totalorder %s29, 0
      %p76 = por %p74, %p75
      %p77 = scmp.ne.s32.totalorder %s63, %s64
      %p78 = scmp.eq.s32.totalorder %s30, 3
      %p79 = por %p77, %p78
      %p81 = scmp.ne.s32.totalorder %s64, %s80
      %p82 = scmp.eq.s32.totalorder %s30, 0
      %p83 = por %p81, %p82
      %s84 = ssub.s32 %s24, %s31
      %p85 = scmp.eq.s32.totalorder %s84, 0
      %s87 = sadd.s32 %s86, 1
      %s88 = scalar_select %p85, %s86, %s87
      %p91 = pneg %p85
      %p92 = scmp.eq.s32.totalorder %s24, 3
      %p93 = por %p91, %p92
      %p94 = scmp.ne.s32.totalorder %s86, %s89
      %p95 = scmp.eq.s32.totalorder %s24, 0
      %p96 = por %p94, %p95
      %p97 = scmp.ne.s32.totalorder %s86, %s89
      %p98 = scmp.eq.s32.totalorder %s29, 3
      %p99 = por %p97, %p98
      %p100 = scmp.ne.s32.totalorder %s89, %s90
      %p101 = scmp.eq.s32.totalorder %s29, 0
      %p102 = por %p100, %p101
      %p103 = scmp.ne.s32.totalorder %s89, %s90
      %p104 = scmp.eq.s32.totalorder %s30, 3
      %p105 = por %p103, %p104
      %p107 = scmp.ne.s32.totalorder %s90, %s106
      %p108 = scmp.eq.s32.totalorder %s30, 0
      %p109 = por %p107, %p108
      %s110 = ssub.s32 %s24, %s31
      %p111 = scmp.eq.s32.totalorder %s110, 0
      %s113 = sadd.s32 %s112, 1
      %s114 = scalar_select %p111, %s112, %s113
      %p117 = pneg %p111
      %p118 = scmp.eq.s32.totalorder %s24, 3
      %p119 = por %p117, %p118
      %p120 = scmp.ne.s32.totalorder %s112, %s115
      %p121 = scmp.eq.s32.totalorder %s24, 0
      %p122 = por %p120, %p121
      %p123 = scmp.ne.s32.totalorder %s112, %s115
      %p124 = scmp.eq.s32.totalorder %s29, 3
      %p125 = por %p123, %p124
      %p126 = scmp.ne.s32.totalorder %s115, %s116
      %p127 = scmp.eq.s32.totalorder %s29, 0
      %p128 = por %p126, %p127
      %p129 = scmp.ne.s32.totalorder %s115, %s116
      %p130 = scmp.eq.s32.totalorder %s30, 3
      %p131 = por %p129, %p130
      %p133 = scmp.ne.s32.totalorder %s116, %s132
      %p134 = scmp.eq.s32.totalorder %s30, 0
      %p135 = por %p133, %p134
      %s137 = sadd.s32 %s136, 1
      %p140 = scmp.eq.s32.totalorder %s24, 3
      %p141 = scmp.ne.s32.totalorder %s136, %s138
      %p142 = scmp.eq.s32.totalorder %s24, 0
      %p143 = por %p141, %p142
      %p144 = scmp.ne.s32.totalorder %s136, %s138
      %p145 = scmp.eq.s32.totalorder %s29, 3
      %p146 = por %p144, %p145
      %p147 = scmp.ne.s32.totalorder %s138, %s139
      %p148 = scmp.eq.s32.totalorder %s29, 0
      %p149 = por %p147, %p148
      %p150 = scmp.ne.s32.totalorder %s138, %s139
      %p151 = scmp.eq.s32.totalorder %s30, 3
      %p152 = por %p150, %p151
      %p154 = scmp.ne.s32.totalorder %s139, %s153
      %p155 = scmp.eq.s32.totalorder %s30, 0
      %p156 = por %p154, %p155
      %s158 = sadd.s32 %s157, 1
      %p161 = scmp.eq.s32.totalorder %s24, 3
      %p162 = scmp.ne.s32.totalorder %s157, %s159
      %p163 = scmp.eq.s32.totalorder %s24, 0
      %p164 = por %p162, %p163
      %p165 = scmp.ne.s32.totalorder %s157, %s159
      %p166 = scmp.eq.s32.totalorder %s29, 3
      %p167 = por %p165, %p166
      %p168 = scmp.ne.s32.totalorder %s159, %s160
      %p169 = scmp.eq.s32.totalorder %s29, 0
      %p170 = por %p168, %p169
      %p171 = scmp.ne.s32.totalorder %s159, %s160
      %p172 = scmp.eq.s32.totalorder %s30, 3
      %p173 = por %p171, %p172
      %p175 = scmp.ne.s32.totalorder %s160, %s174
      %p176 = scmp.eq.s32.totalorder %s30, 0
      %p177 = por %p175, %p176
      %s179 = sadd.s32 %s178, 1
      %p182 = scmp.eq.s32.totalorder %s24, 3
      %p183 = scmp.ne.s32.totalorder %s178, %s180
      %p184 = scmp.eq.s32.totalorder %s24, 0
      %p185 = por %p183, %p184
      %p186 = scmp.ne.s32.totalorder %s178, %s180
      %p187 = scmp.eq.s32.totalorder %s29, 3
      %p188 = por %p186, %p187
      %p189 = scmp.ne.s32.totalorder %s180, %s181
      %p190 = scmp.eq.s32.totalorder %s29, 0
      %p191 = por %p189, %p190
      %p192 = scmp.ne.s32.totalorder %s180, %s181
      %p193 = scmp.eq.s32.totalorder %s30, 3
      %p194 = por %p192, %p193
      %p196 = scmp.ne.s32.totalorder %s181, %s195
      %p197 = scmp.eq.s32.totalorder %s30, 0
      %p198 = por %p196, %p197
      %s200 = sadd.s32 %s199, 1
      %p203 = scmp.eq.s32.totalorder %s24, 3
      %p204 = scmp.ne.s32.totalorder %s199, %s201
      %p205 = scmp.eq.s32.totalorder %s24, 0
      %p206 = por %p204, %p205
      %p207 = scmp.ne.s32.totalorder %s199, %s201
      %p208 = scmp.eq.s32.totalorder %s29, 3
      %p209 = por %p207, %p208
      %p210 = scmp.ne.s32.totalorder %s201, %s202
      %p211 = scmp.eq.s32.totalorder %s29, 0
      %p212 = por %p210, %p211
      %p213 = scmp.ne.s32.totalorder %s201, %s202
      %p214 = scmp.eq.s32.totalorder %s30, 3
      %p215 = por %p213, %p214
      %p217 = scmp.ne.s32.totalorder %s202, %s216
      %p218 = scmp.eq.s32.totalorder %s30, 0
      %p219 = por %p217, %p218
      %s220 = ssub.s32 %s24, %s31
      %p221 = scmp.eq.s32.totalorder %s220, 0
      %s223 = sadd.s32 %s222, 1
      %s224 = scalar_select %p221, %s222, %s223
      %p227 = pneg %p221
      %p228 = scmp.eq.s32.totalorder %s24, 3
      %p229 = por %p227, %p228
      %p230 = scmp.ne.s32.totalorder %s222, %s225
      %p231 = scmp.eq.s32.totalorder %s24, 0
      %p232 = por %p230, %p231
      %p233 = scmp.ne.s32.totalorder %s222, %s225
      %p234 = scmp.eq.s32.totalorder %s29, 3
      %p235 = por %p233, %p234
      %p236 = scmp.ne.s32.totalorder %s225, %s226
      %p237 = scmp.eq.s32.totalorder %s29, 0
      %p238 = por %p236, %p237
      %p239 = scmp.ne.s32.totalorder %s225, %s226
      %p240 = scmp.eq.s32.totalorder %s30, 3
      %p241 = por %p239, %p240
      %p243 = scmp.ne.s32.totalorder %s226, %s242
      %p244 = scmp.eq.s32.totalorder %s30, 0
      %p245 = por %p243, %p244
      %p246 = scmp.le.s32.totalorder 1, %s24
      %p247 = scmp.lt.s32.totalorder %s24, 5
      %p248 = pnand %p246, %p247
      %p249 = pneg %p248
      // Predicated region
      $region9: #{tpu_custom_call.1} parent=5 // pred_check
        _
      $region10: #{tpu_custom_call.1} parent=5 // pred_check_branch
        %251 = sbr.rel (%p248) target = $region12
      $region11: #{tpu_custom_call.1} parent=5 // pred_region
        %s252 = ssub.s32 %s24, 1
        // Predicated region
        $region13: #{tpu_custom_call.1} parent=11 // pred_check
          %p253 = pneg %p149
        $region14: #{tpu_custom_call.1} parent=11 // pred_check_branch
          %255 = sbr.rel (%p253) target = $region16
        $region15: #{tpu_custom_call.1} parent=11 // pred_region
          %257 = vsyncadd [#allocation8], 0
          %s258 = sshll.u32 %s4, 4
          %s259 = int_to_ptr.hbm [resolvable:$true] %s258
          %s260 = sshll.u32 [#allocation9], 4
          %s261 = int_to_ptr.vmem [resolvable:$true] %s260
          %266 = dma.hbm_to_vmem [thread:$0]  %s259, 2048, %s261, [#allocation8], 128, 128, 8
        $region16: #{tpu_custom_call.1} parent=11 // pred_fallthru
          _
        // Predicated region
        $region17: #{tpu_custom_call.1} parent=11 // pred_check
          %p267 = pneg %p170
        $region18: #{tpu_custom_call.1} parent=11 // pred_check_branch
          %269 = sbr.rel (%p267) target = $region20
        $region19: #{tpu_custom_call.1} parent=11 // pred_region
          _
        $region20: #{tpu_custom_call.1} parent=11 // pred_fallthru
          _
        // Predicated region
        $region21: #{tpu_custom_call.1} parent=11 // pred_check
          %p270 = pneg %p191
        $region22: #{tpu_custom_call.1} parent=11 // pred_check_branch
          %272 = sbr.rel (%p270) target = $region24
        $region23: #{tpu_custom_call.1} parent=11 // pred_region
          %274 = vsyncadd [#allocation11], 0
          %s275 = sshll.u32 %s6, 4
          %s276 = int_to_ptr.hbm [resolvable:$true] %s275
          %s277 = sshll.u32 [#allocation10], 4
          %s278 = int_to_ptr.vmem [resolvable:$true] %s277
          %283 = dma.hbm_to_vmem [thread:$0]  %s276, 2048, %s278, [#allocation11], 128, 128, 8
        $region24: #{tpu_custom_call.1} parent=11 // pred_fallthru
          _
        // Predicated region
        $region25: #{tpu_custom_call.1} parent=11 // pred_check
          %p284 = pneg %p212
        $region26: #{tpu_custom_call.1} parent=11 // pred_check_branch
          %286 = sbr.rel (%p284) target = $region28
        $region27: #{tpu_custom_call.1} parent=11 // pred_region
          _
        $region28: #{tpu_custom_call.1} parent=11 // pred_fallthru
          _
      $region12: #{tpu_custom_call.1} parent=5 // pred_fallthru
        _
      %p287 = scmp.lt.s32.totalorder %s24, 4
      // Predicated region
      $region29: #{tpu_custom_call.1} parent=5 // pred_check
        %p288 = pneg %p287
      $region30: #{tpu_custom_call.1} parent=5 // pred_check_branch
        %290 = sbr.rel (%p288) target = $region32
      $region31: #{tpu_custom_call.1} parent=5 // pred_region
        // Predicated region
        $region33: #{tpu_custom_call.1} parent=31 // pred_check
          %p291 = pneg %p44
        $region34: #{tpu_custom_call.1} parent=31 // pred_check_branch
          %293 = sbr.rel (%p291) target = $region36
        $region35: #{tpu_custom_call.1} parent=31 // pred_region
          %s294 = sand.u32 %s34, 1
          %s295 = scalar_lea.sflag [#allocation3], %s294
          %s296 = sand.u32 %s34, 1
          %s297 = smul.addr %s296, 128
          %s298 = scalar_lea.vmem [#allocation2], %s297
          %s299 = smul.u32 16, %s24
          %301 = vsyncadd %s295, 0
          %s302 = smul.addr %s299, 8
          %s303 = scalar_lea.hbm %s0, %s302
          %s304 = sshll.u32 %s303, 4
          %s305 = int_to_ptr.hbm [resolvable:$true] %s304
          %s306 = sshll.u32 %s298, 4
          %s307 = int_to_ptr.vmem [resolvable:$true] %s306
          %312 = dma.hbm_to_vmem [thread:$0]  %s305, 2048, %s307, %s295, 128, 128, 8
        $region36: #{tpu_custom_call.1} parent=31 // pred_fallthru
          _
        // Predicated region
        $region37: #{tpu_custom_call.1} parent=31 // pred_check
          %p313 = pneg %p70
        $region38: #{tpu_custom_call.1} parent=31 // pred_check_branch
          %315 = sbr.rel (%p313) target = $region40
        $region39: #{tpu_custom_call.1} parent=31 // pred_region
          %s316 = sand.u32 %s24, 1
          %s317 = scalar_lea.sflag [#allocation5], %s316
          %s318 = sand.u32 %s60, 1
          %s319 = smul.addr %s318, 128
          %s320 = scalar_lea.vmem [#allocation4], %s319
          %s321 = smul.u32 16, %s24
          %323 = vsyncadd %s317, 0
          %s324 = smul.addr %s321, 8
          %s325 = scalar_lea.hbm %s1, %s324
          %s326 = sshll.u32 %s325, 4
          %s327 = int_to_ptr.hbm [resolvable:$true] %s326
          %s328 = sshll.u32 %s320, 4
          %s329 = int_to_ptr.vmem [resolvable:$true] %s328
          %334 = dma.hbm_to_vmem [thread:$0]  %s327, 2048, %s329, %s317, 128, 128, 8
        $region40: #{tpu_custom_call.1} parent=31 // pred_fallthru
          _
        // Predicated region
        $region41: #{tpu_custom_call.1} parent=31 // pred_check
          %p335 = pneg %p96
        $region42: #{tpu_custom_call.1} parent=31 // pred_check_branch
          %337 = sbr.rel (%p335) target = $region44
        $region43: #{tpu_custom_call.1} parent=31 // pred_region
          %s338 = sand.u32 %s24, 1
          %s339 = scalar_lea.sflag [#allocation5], %s338
          %s340 = sand.u32 %s86, 1
          %s341 = smul.addr %s340, 128
          %s342 = scalar_lea.vmem [#allocation6], %s341
          %s343 = smul.u32 16, %s24
          %345 = vsyncadd %s339, 0
          %s346 = smul.addr %s343, 8
          %s347 = scalar_lea.hbm %s2, %s346
          %s348 = sshll.u32 %s347, 4
          %s349 = int_to_ptr.hbm [resolvable:$true] %s348
          %s350 = sshll.u32 %s342, 4
          %s351 = int_to_ptr.vmem [resolvable:$true] %s350
          %356 = dma.hbm_to_vmem [thread:$0]  %s349, 2048, %s351, %s339, 128, 128, 8
        $region44: #{tpu_custom_call.1} parent=31 // pred_fallthru
          _
        // Predicated region
        $region45: #{tpu_custom_call.1} parent=31 // pred_check
          %p357 = pneg %p122
        $region46: #{tpu_custom_call.1} parent=31 // pred_check_branch
          %359 = sbr.rel (%p357) target = $region48
        $region47: #{tpu_custom_call.1} parent=31 // pred_region
          %s360 = sand.u32 %s24, 1
          %s361 = scalar_lea.sflag [#allocation8], %s360
          %s362 = sand.u32 %s112, 1
          %s363 = smul.addr %s362, 128
          %s364 = scalar_lea.vmem [#allocation7], %s363
          %s365 = smul.u32 16, %s24
          %367 = vsyncadd %s361, 0
          %s368 = smul.addr %s365, 8
          %s369 = scalar_lea.hbm %s3, %s368
          %s370 = sshll.u32 %s369, 4
          %s371 = int_to_ptr.hbm [resolvable:$true] %s370
          %s372 = sshll.u32 %s364, 4
          %s373 = int_to_ptr.vmem [resolvable:$true] %s372
          %378 = dma.hbm_to_vmem [thread:$0]  %s371, 2048, %s373, %s361, 128, 128, 8
        $region48: #{tpu_custom_call.1} parent=31 // pred_fallthru
          _
      $region32: #{tpu_custom_call.1} parent=5 // pred_fallthru
        _
      %p379 = scmp.le.s32.totalorder 1, %s24
      %p380 = scmp.lt.s32.totalorder %s24, 5
      %p381 = pnand %p379, %p380
      %p382 = pneg %p381
      // Predicated region
      $region49: #{tpu_custom_call.1} parent=5 // pred_check
        _
      $region50: #{tpu_custom_call.1} parent=5 // pred_check_branch
        %384 = sbr.rel (%p381) target = $region52
      $region51: #{tpu_custom_call.1} parent=5 // pred_region
        %s385 = ssub.s32 %s24, 1
        %s386 = sand.u32 %s37, 1
        %s387 = scalar_lea.sflag [#allocation3], %s386
        %s388 = sand.u32 %s37, 1
        %s389 = smul.addr %s388, 128
        %s390 = scalar_lea.vmem [#allocation2], %s389
        // Predicated region
        $region53: #{tpu_custom_call.1} parent=51 // pred_check
          %p391 = pneg %p50
        $region54: #{tpu_custom_call.1} parent=51 // pred_check_branch
          %393 = sbr.rel (%p391) target = $region56
        $region55: #{tpu_custom_call.1} parent=51 // pred_region
          %395 = dma.done %s387, 2048
        $region56: #{tpu_custom_call.1} parent=51 // pred_fallthru
          _
        %s396 = sand.u32 %s29, 1
        %s397 = scalar_lea.sflag [#allocation5], %s396
        %s398 = sand.u32 %s63, 1
        %s399 = smul.addr %s398, 128
        %s400 = scalar_lea.vmem [#allocation4], %s399
        // Predicated region
        $region57: #{tpu_custom_call.1} parent=51 // pred_check
          %p401 = pneg %p76
        $region58: #{tpu_custom_call.1} parent=51 // pred_check_branch
          %403 = sbr.rel (%p401) target = $region60
        $region59: #{tpu_custom_call.1} parent=51 // pred_region
          %405 = dma.done %s397, 2048
        $region60: #{tpu_custom_call.1} parent=51 // pred_fallthru
          _
        %s406 = sand.u32 %s29, 1
        %s407 = scalar_lea.sflag [#allocation5], %s406
        %s408 = sand.u32 %s89, 1
        %s409 = smul.addr %s408, 128
        %s410 = scalar_lea.vmem [#allocation6], %s409
        // Predicated region
        $region61: #{tpu_custom_call.1} parent=51 // pred_check
          %p411 = pneg %p102
        $region62: #{tpu_custom_call.1} parent=51 // pred_check_branch
          %413 = sbr.rel (%p411) target = $region64
        $region63: #{tpu_custom_call.1} parent=51 // pred_region
          %415 = dma.done %s407, 2048
        $region64: #{tpu_custom_call.1} parent=51 // pred_fallthru
          _
        %s416 = sand.u32 %s29, 1
        %s417 = scalar_lea.sflag [#allocation8], %s416
        %s418 = sand.u32 %s115, 1
        %s419 = smul.addr %s418, 128
        %s420 = scalar_lea.vmem [#allocation7], %s419
        // Predicated region
        $region65: #{tpu_custom_call.1} parent=51 // pred_check
          %p421 = pneg %p128
        $region66: #{tpu_custom_call.1} parent=51 // pred_check_branch
          %423 = sbr.rel (%p421) target = $region68
        $region67: #{tpu_custom_call.1} parent=51 // pred_region
          %425 = dma.done %s417, 2048
        $region68: #{tpu_custom_call.1} parent=51 // pred_fallthru
          _
        // Predicated region
        $region69: #{tpu_custom_call.1} parent=51 // pred_check
          %p426 = pneg %p149
        $region70: #{tpu_custom_call.1} parent=51 // pred_check_branch
          %428 = sbr.rel (%p426) target = $region72
        $region71: #{tpu_custom_call.1} parent=51 // pred_region
          %430 = dma.done [#allocation8], 2048
        $region72: #{tpu_custom_call.1} parent=51 // pred_fallthru
          _
        // Predicated region
        $region73: #{tpu_custom_call.1} parent=51 // pred_check
          %p431 = pneg %p191
        $region74: #{tpu_custom_call.1} parent=51 // pred_check_branch
          %433 = sbr.rel (%p431) target = $region76
        $region75: #{tpu_custom_call.1} parent=51 // pred_region
          %435 = dma.done [#allocation11], 2048
        $region76: #{tpu_custom_call.1} parent=51 // pred_fallthru
          _
        %s436 = sand.u32 %s37, 1
        %s437 = scalar_lea.sflag [#allocation3], %s436
        %s438 = sand.u32 %s37, 1
        %s439 = smul.addr %s438, 128
        %s440 = scalar_lea.vmem [#allocation2], %s439
        %p441 = pneg %p50
        %p442 = pneg %p47
        %s443 = sand.u32 %s29, 1
        %s444 = scalar_lea.sflag [#allocation5], %s443
        %s445 = sand.u32 %s63, 1
        %s446 = smul.addr %s445, 128
        %s447 = scalar_lea.vmem [#allocation4], %s446
        %p448 = pneg %p76
        %p449 = pneg %p73
        %s450 = sand.u32 %s29, 1
        %s451 = scalar_lea.sflag [#allocation5], %s450
        %s452 = sand.u32 %s89, 1
        %s453 = smul.addr %s452, 128
        %s454 = scalar_lea.vmem [#allocation6], %s453
        %p455 = pneg %p102
        %p456 = pneg %p99
        %s457 = sand.u32 %s29, 1
        %s458 = scalar_lea.sflag [#allocation8], %s457
        %s459 = sand.u32 %s115, 1
        %s460 = smul.addr %s459, 128
        %s461 = scalar_lea.vmem [#allocation7], %s460
        %p462 = pneg %p128
        %p463 = pneg %p125
        %p464 = pneg %p149
        %p465 = pneg %p146
        %p466 = pneg %p170
        %p467 = pneg %p167
        %p468 = pneg %p191
        %p469 = pneg %p188
        %p470 = pneg %p212
        %p471 = pneg %p209
        %p472 = pneg %p238
        %p473 = pneg %p235
        %s474 = smul.u32 16, %s29
        %p475 = scmp.lt.s32.totalorder %s474, 63
        %s476 = scalar_select %p475, %s474, 63
        %s477 = smul.addr %s476, 8
        %s478 = scalar_lea.vmem %s8, %s477
        %s479 = smul.u32 16, %s29
        %s480 = smul.u32 16, %s29
        %s481 = smul.u32 16, %s29
        %s482 = smul.u32 16, %s29
        %s483 = smul.u32 16, %s29
        %p484 = scmp.lt.s32.totalorder %s483, 63
        %s485 = scalar_select %p484, %s483, 63
        %s486 = smul.addr %s485, 8
        %s487 = scalar_lea.vmem %s8, %s486
        %s488 = smul.u32 16, %s29
        %v489 = vld [vmem:[%s390] sm:$0xff]
        %v490 = vld [vmem:[%s390 + $0x8] sm:$0xff]
        %v491 = vld [vmem:[%s390 + $0x10] sm:$0xff]
        %v492 = vld [vmem:[%s390 + $0x18] sm:$0xff]
        %v493 = vld [vmem:[%s390 + $0x20] sm:$0xff]
        %v494 = vld [vmem:[%s390 + $0x28] sm:$0xff]
        %v495 = vld [vmem:[%s390 + $0x30] sm:$0xff]
        %v496 = vld [vmem:[%s390 + $0x38] sm:$0xff]
        %v497 = vld [vmem:[%s390 + $0x40] sm:$0xff]
        %v498 = vld [vmem:[%s390 + $0x48] sm:$0xff]
        %v499 = vld [vmem:[%s390 + $0x50] sm:$0xff]
        %v500 = vld [vmem:[%s390 + $0x58] sm:$0xff]
        %v501 = vld [vmem:[%s390 + $0x60] sm:$0xff]
        %v502 = vld [vmem:[%s390 + $0x68] sm:$0xff]
        %v503 = vld [vmem:[%s390 + $0x70] sm:$0xff]
        %v504 = vld [vmem:[%s390 + $0x78] sm:$0xff]
        %v505 = vld [vmem:[%s400] sm:$0xff]
        %v506 = vld [vmem:[%s400 + $0x8] sm:$0xff]
        %v507 = vld [vmem:[%s400 + $0x10] sm:$0xff]
        %v508 = vld [vmem:[%s400 + $0x18] sm:$0xff]
        %v509 = vld [vmem:[%s400 + $0x20] sm:$0xff]
        %v510 = vld [vmem:[%s400 + $0x28] sm:$0xff]
        %v511 = vld [vmem:[%s400 + $0x30] sm:$0xff]
        %v512 = vld [vmem:[%s400 + $0x38] sm:$0xff]
        %v513 = vld [vmem:[%s400 + $0x40] sm:$0xff]
        %v514 = vld [vmem:[%s400 + $0x48] sm:$0xff]
        %v515 = vld [vmem:[%s400 + $0x50] sm:$0xff]
        %v516 = vld [vmem:[%s400 + $0x58] sm:$0xff]
        %v517 = vld [vmem:[%s400 + $0x60] sm:$0xff]
        %v518 = vld [vmem:[%s400 + $0x68] sm:$0xff]
        %v519 = vld [vmem:[%s400 + $0x70] sm:$0xff]
        %v520 = vld [vmem:[%s400 + $0x78] sm:$0xff]
        %v521 = vld [vmem:[%s410] sm:$0xff]
        %v522 = vld [vmem:[%s410 + $0x8] sm:$0xff]
        %v523 = vld [vmem:[%s410 + $0x10] sm:$0xff]
        %v524 = vld [vmem:[%s410 + $0x18] sm:$0xff]
        %v525 = vld [vmem:[%s410 + $0x20] sm:$0xff]
        %v526 = vld [vmem:[%s410 + $0x28] sm:$0xff]
        %v527 = vld [vmem:[%s410 + $0x30] sm:$0xff]
        %v528 = vld [vmem:[%s410 + $0x38] sm:$0xff]
        %v529 = vld [vmem:[%s410 + $0x40] sm:$0xff]
        %v530 = vld [vmem:[%s410 + $0x48] sm:$0xff]
        %v531 = vld [vmem:[%s410 + $0x50] sm:$0xff]
        %v532 = vld [vmem:[%s410 + $0x58] sm:$0xff]
        %v533 = vld [vmem:[%s410 + $0x60] sm:$0xff]
        %v534 = vld [vmem:[%s410 + $0x68] sm:$0xff]
        %v535 = vld [vmem:[%s410 + $0x70] sm:$0xff]
        %v536 = vld [vmem:[%s410 + $0x78] sm:$0xff]
        %v537 = vld [vmem:[%s420] sm:$0xff]
        %v538 = vld [vmem:[%s420 + $0x8] sm:$0xff]
        %v539 = vld [vmem:[%s420 + $0x10] sm:$0xff]
        %v540 = vld [vmem:[%s420 + $0x18] sm:$0xff]
        %v541 = vld [vmem:[%s420 + $0x20] sm:$0xff]
        %v542 = vld [vmem:[%s420 + $0x28] sm:$0xff]
        %v543 = vld [vmem:[%s420 + $0x30] sm:$0xff]
        %v544 = vld [vmem:[%s420 + $0x38] sm:$0xff]
        %v545 = vld [vmem:[%s420 + $0x40] sm:$0xff]
        %v546 = vld [vmem:[%s420 + $0x48] sm:$0xff]
        %v547 = vld [vmem:[%s420 + $0x50] sm:$0xff]
        %v548 = vld [vmem:[%s420 + $0x58] sm:$0xff]
        %v549 = vld [vmem:[%s420 + $0x60] sm:$0xff]
        %v550 = vld [vmem:[%s420 + $0x68] sm:$0xff]
        %v551 = vld [vmem:[%s420 + $0x70] sm:$0xff]
        %v552 = vld [vmem:[%s420 + $0x78] sm:$0xff]
        %v553 = vld [vmem:[#allocation9] sm:$0xff]
        %v554 = vld [vmem:[#allocation9 + $0x8] sm:$0xff]
        %v555 = vld [vmem:[#allocation9 + $0x10] sm:$0xff]
        %v556 = vld [vmem:[#allocation9 + $0x18] sm:$0xff]
        %v557 = vld [vmem:[#allocation9 + $0x20] sm:$0xff]
        %v558 = vld [vmem:[#allocation9 + $0x28] sm:$0xff]
        %v559 = vld [vmem:[#allocation9 + $0x30] sm:$0xff]
        %v560 = vld [vmem:[#allocation9 + $0x38] sm:$0xff]
        %v561 = vld [vmem:[#allocation9 + $0x40] sm:$0xff]
        %v562 = vld [vmem:[#allocation9 + $0x48] sm:$0xff]
        %v563 = vld [vmem:[#allocation9 + $0x50] sm:$0xff]
        %v564 = vld [vmem:[#allocation9 + $0x58] sm:$0xff]
        %v565 = vld [vmem:[#allocation9 + $0x60] sm:$0xff]
        %v566 = vld [vmem:[#allocation9 + $0x68] sm:$0xff]
        %v567 = vld [vmem:[#allocation9 + $0x70] sm:$0xff]
        %v568 = vld [vmem:[#allocation9 + $0x78] sm:$0xff]
        %v569 = vld [vmem:[%s5] sm:$0x1]
        %v571 = vperm.slane %v569, 0
        %v573 = vand.u32 %v568, 4294901760
        %574 = vmatpush.msra.mxu0 %v573
        %v575 = vand.u32 %v567, 4294901760
        %576 = vmatpush.msra.mxu0 %v575
        %v577 = vand.u32 %v566, 4294901760
        %578 = vmatpush.msra.mxu0 %v577
        %v579 = vand.u32 %v565, 4294901760
        %580 = vmatpush.msra.mxu0 %v579
        %v581 = vand.u32 %v564, 4294901760
        %582 = vmatpush.msra.mxu0 %v581
        %v583 = vand.u32 %v563, 4294901760
        %584 = vmatpush.msra.mxu0 %v583
        %v585 = vand.u32 %v562, 4294901760
        %586 = vmatpush.msra.mxu0 %v585
        %v587 = vand.u32 %v561, 4294901760
        %588 = vmatpush.msra.mxu0 %v587
        %v589 = vand.u32 %v560, 4294901760
        %590 = vmatpush.msra.mxu0 %v589
        %v591 = vand.u32 %v559, 4294901760
        %592 = vmatpush.msra.mxu0 %v591
        %v593 = vand.u32 %v558, 4294901760
        %594 = vmatpush.msra.mxu0 %v593
        %v595 = vand.u32 %v557, 4294901760
        %596 = vmatpush.msra.mxu0 %v595
        %v597 = vand.u32 %v556, 4294901760
        %598 = vmatpush.msra.mxu0 %v597
        %v599 = vand.u32 %v555, 4294901760
        %600 = vmatpush.msra.mxu0 %v599
        %v601 = vand.u32 %v554, 4294901760
        %602 = vmatpush.msra.mxu0 %v601
        %v603 = vand.u32 %v553, 4294901760
        %604 = vmatpush.msra.mxu0 %v603
        %v605 = vand.u32 %v489, 4294901760
        %v606 = vsub.f32 %v489, %v605
        %v607 = vand.u32 %v606, 4294901760
        %v608 = vsub.f32 %v606, %v607
        %v609 = vand.u32 %v608, 4294901760
        %610 = vmatmul.f32.gmra.mxu0 %v609
        %v611 = vpop.f32.mrf.mxu0
        %v612 = vadd.f32 %v571, %v611
        %v613 = vand.u32 %v490, 4294901760
        %v614 = vsub.f32 %v490, %v613
        %v615 = vand.u32 %v614, 4294901760
        %v616 = vsub.f32 %v614, %v615
        %v617 = vand.u32 %v616, 4294901760
        %618 = vmatmul.f32.gmra.mxu0 %v617
        %v619 = vpop.f32.mrf.mxu0
        %v620 = vadd.f32 %v571, %v619
        %v621 = vand.u32 %v491, 4294901760
        %v622 = vsub.f32 %v491, %v621
        %v623 = vand.u32 %v622, 4294901760
        %v624 = vsub.f32 %v622, %v623
        %v625 = vand.u32 %v624, 4294901760
        %626 = vmatmul.f32.gmra.mxu0 %v625
        %v627 = vpop.f32.mrf.mxu0
        %v628 = vadd.f32 %v571, %v627
        %v629 = vand.u32 %v492, 4294901760
        %v630 = vsub.f32 %v492, %v629
        %v631 = vand.u32 %v630, 4294901760
        %v632 = vsub.f32 %v630, %v631
        %v633 = vand.u32 %v632, 4294901760
        %634 = vmatmul.f32.gmra.mxu0 %v633
        %v635 = vpop.f32.mrf.mxu0
        %v636 = vadd.f32 %v571, %v635
        %v637 = vand.u32 %v493, 4294901760
        %v638 = vsub.f32 %v493, %v637
        %v639 = vand.u32 %v638, 4294901760
        %v640 = vsub.f32 %v638, %v639
        %v641 = vand.u32 %v640, 4294901760
        %642 = vmatmul.f32.gmra.mxu0 %v641
        %v643 = vpop.f32.mrf.mxu0
        %v644 = vadd.f32 %v571, %v643
        %v645 = vand.u32 %v494, 4294901760
        %v646 = vsub.f32 %v494, %v645
        %v647 = vand.u32 %v646, 4294901760
        %v648 = vsub.f32 %v646, %v647
        %v649 = vand.u32 %v648, 4294901760
        %650 = vmatmul.f32.gmra.mxu0 %v649
        %v651 = vpop.f32.mrf.mxu0
        %v652 = vadd.f32 %v571, %v651
        %v653 = vand.u32 %v495, 4294901760
        %v654 = vsub.f32 %v495, %v653
        %v655 = vand.u32 %v654, 4294901760
        %v656 = vsub.f32 %v654, %v655
        %v657 = vand.u32 %v656, 4294901760
        %658 = vmatmul.f32.gmra.mxu0 %v657
        %v659 = vpop.f32.mrf.mxu0
        %v660 = vadd.f32 %v571, %v659
        %v661 = vand.u32 %v496, 4294901760
        %v662 = vsub.f32 %v496, %v661
        %v663 = vand.u32 %v662, 4294901760
        %v664 = vsub.f32 %v662, %v663
        %v665 = vand.u32 %v664, 4294901760
        %666 = vmatmul.f32.gmra.mxu0 %v665
        %v667 = vpop.f32.mrf.mxu0
        %v668 = vadd.f32 %v571, %v667
        %v669 = vand.u32 %v497, 4294901760
        %v670 = vsub.f32 %v497, %v669
        %v671 = vand.u32 %v670, 4294901760
        %v672 = vsub.f32 %v670, %v671
        %v673 = vand.u32 %v672, 4294901760
        %674 = vmatmul.f32.gmra.mxu0 %v673
        %v675 = vpop.f32.mrf.mxu0
        %v676 = vadd.f32 %v571, %v675
        %v677 = vand.u32 %v498, 4294901760
        %v678 = vsub.f32 %v498, %v677
        %v679 = vand.u32 %v678, 4294901760
        %v680 = vsub.f32 %v678, %v679
        %v681 = vand.u32 %v680, 4294901760
        %682 = vmatmul.f32.gmra.mxu0 %v681
        %v683 = vpop.f32.mrf.mxu0
        %v684 = vadd.f32 %v571, %v683
        %v685 = vand.u32 %v499, 4294901760
        %v686 = vsub.f32 %v499, %v685
        %v687 = vand.u32 %v686, 4294901760
        %v688 = vsub.f32 %v686, %v687
        %v689 = vand.u32 %v688, 4294901760
        %690 = vmatmul.f32.gmra.mxu0 %v689
        %v691 = vpop.f32.mrf.mxu0
        %v692 = vadd.f32 %v571, %v691
        %v693 = vand.u32 %v500, 4294901760
        %v694 = vsub.f32 %v500, %v693
        %v695 = vand.u32 %v694, 4294901760
        %v696 = vsub.f32 %v694, %v695
        %v697 = vand.u32 %v696, 4294901760
        %698 = vmatmul.f32.gmra.mxu0 %v697
        %v699 = vpop.f32.mrf.mxu0
        %v700 = vadd.f32 %v571, %v699
        %v701 = vand.u32 %v501, 4294901760
        %v702 = vsub.f32 %v501, %v701
        %v703 = vand.u32 %v702, 4294901760
        %v704 = vsub.f32 %v702, %v703
        %v705 = vand.u32 %v704, 4294901760
        %706 = vmatmul.f32.gmra.mxu0 %v705
        %v707 = vpop.f32.mrf.mxu0
        %v708 = vadd.f32 %v571, %v707
        %v709 = vand.u32 %v502, 4294901760
        %v710 = vsub.f32 %v502, %v709
        %v711 = vand.u32 %v710, 4294901760
        %v712 = vsub.f32 %v710, %v711
        %v713 = vand.u32 %v712, 4294901760
        %714 = vmatmul.f32.gmra.mxu0 %v713
        %v715 = vpop.f32.mrf.mxu0
        %v716 = vadd.f32 %v571, %v715
        %v717 = vand.u32 %v503, 4294901760
        %v718 = vsub.f32 %v503, %v717
        %v719 = vand.u32 %v718, 4294901760
        %v720 = vsub.f32 %v718, %v719
        %v721 = vand.u32 %v720, 4294901760
        %722 = vmatmul.f32.gmra.mxu0 %v721
        %v723 = vpop.f32.mrf.mxu0
        %v724 = vadd.f32 %v571, %v723
        %v725 = vand.u32 %v504, 4294901760
        %v726 = vsub.f32 %v504, %v725
        %v727 = vand.u32 %v726, 4294901760
        %v728 = vsub.f32 %v726, %v727
        %v729 = vand.u32 %v728, 4294901760
        %730 = vmatmul.f32.gmra.mxu0 %v729
        %v731 = vpop.f32.mrf.mxu0
        %v732 = vadd.f32 %v571, %v731
        %v733 = vand.u32 %v505, 4294901760
        %v734 = vsub.f32 %v505, %v733
        %v735 = vand.u32 %v734, 4294901760
        %v736 = vsub.f32 %v734, %v735
        %v737 = vand.u32 %v736, 4294901760
        %738 = vmatmul.f32.gmra.mxu0 %v737
        %v739 = vpop.f32.mrf.mxu0
        %v740 = vadd.f32 %v571, %v739
        %v741 = vand.u32 %v506, 4294901760
        %v742 = vsub.f32 %v506, %v741
        %v743 = vand.u32 %v742, 4294901760
        %v744 = vsub.f32 %v742, %v743
        %v745 = vand.u32 %v744, 4294901760
        %746 = vmatmul.f32.gmra.mxu0 %v745
        %v747 = vpop.f32.mrf.mxu0
        %v748 = vadd.f32 %v571, %v747
        %v749 = vand.u32 %v507, 4294901760
        %v750 = vsub.f32 %v507, %v749
        %v751 = vand.u32 %v750, 4294901760
        %v752 = vsub.f32 %v750, %v751
        %v753 = vand.u32 %v752, 4294901760
        %754 = vmatmul.f32.gmra.mxu0 %v753
        %v755 = vpop.f32.mrf.mxu0
        %v756 = vadd.f32 %v571, %v755
        %v757 = vand.u32 %v508, 4294901760
        %v758 = vsub.f32 %v508, %v757
        %v759 = vand.u32 %v758, 4294901760
        %v760 = vsub.f32 %v758, %v759
        %v761 = vand.u32 %v760, 4294901760
        %762 = vmatmul.f32.gmra.mxu0 %v761
        %v763 = vpop.f32.mrf.mxu0
        %v764 = vadd.f32 %v571, %v763
        %v765 = vand.u32 %v509, 4294901760
        %v766 = vsub.f32 %v509, %v765
        %v767 = vand.u32 %v766, 4294901760
        %v768 = vsub.f32 %v766, %v767
        %v769 = vand.u32 %v768, 4294901760
        %770 = vmatmul.f32.gmra.mxu0 %v769
        %v771 = vpop.f32.mrf.mxu0
        %v772 = vadd.f32 %v571, %v771
        %v773 = vand.u32 %v510, 4294901760
        %v774 = vsub.f32 %v510, %v773
        %v775 = vand.u32 %v774, 4294901760
        %v776 = vsub.f32 %v774, %v775
        %v777 = vand.u32 %v776, 4294901760
        %778 = vmatmul.f32.gmra.mxu0 %v777
        %v779 = vpop.f32.mrf.mxu0
        %v780 = vadd.f32 %v571, %v779
        %v781 = vand.u32 %v511, 4294901760
        %v782 = vsub.f32 %v511, %v781
        %v783 = vand.u32 %v782, 4294901760
        %v784 = vsub.f32 %v782, %v783
        %v785 = vand.u32 %v784, 4294901760
        %786 = vmatmul.f32.gmra.mxu0 %v785
        %v787 = vpop.f32.mrf.mxu0
        %v788 = vadd.f32 %v571, %v787
        %v789 = vand.u32 %v512, 4294901760
        %v790 = vsub.f32 %v512, %v789
        %v791 = vand.u32 %v790, 4294901760
        %v792 = vsub.f32 %v790, %v791
        %v793 = vand.u32 %v792, 4294901760
        %794 = vmatmul.f32.gmra.mxu0 %v793
        %v795 = vpop.f32.mrf.mxu0
        %v796 = vadd.f32 %v571, %v795
        %v797 = vand.u32 %v513, 4294901760
        %v798 = vsub.f32 %v513, %v797
        %v799 = vand.u32 %v798, 4294901760
        %v800 = vsub.f32 %v798, %v799
        %v801 = vand.u32 %v800, 4294901760
        %802 = vmatmul.f32.gmra.mxu0 %v801
        %v803 = vpop.f32.mrf.mxu0
        %v804 = vadd.f32 %v571, %v803
        %v805 = vand.u32 %v514, 4294901760
        %v806 = vsub.f32 %v514, %v805
        %v807 = vand.u32 %v806, 4294901760
        %v808 = vsub.f32 %v806, %v807
        %v809 = vand.u32 %v808, 4294901760
        %810 = vmatmul.f32.gmra.mxu0 %v809
        %v811 = vpop.f32.mrf.mxu0
        %v812 = vadd.f32 %v571, %v811
        %v813 = vand.u32 %v515, 4294901760
        %v814 = vsub.f32 %v515, %v813
        %v815 = vand.u32 %v814, 4294901760
        %v816 = vsub.f32 %v814, %v815
        %v817 = vand.u32 %v816, 4294901760
        %818 = vmatmul.f32.gmra.mxu0 %v817
        %v819 = vpop.f32.mrf.mxu0
        %v820 = vadd.f32 %v571, %v819
        %v821 = vand.u32 %v516, 4294901760
        %v822 = vsub.f32 %v516, %v821
        %v823 = vand.u32 %v822, 4294901760
        %v824 = vsub.f32 %v822, %v823
        %v825 = vand.u32 %v824, 4294901760
        %826 = vmatmul.f32.gmra.mxu0 %v825
        %v827 = vpop.f32.mrf.mxu0
        %v828 = vadd.f32 %v571, %v827
        %v829 = vand.u32 %v517, 4294901760
        %v830 = vsub.f32 %v517, %v829
        %v831 = vand.u32 %v830, 4294901760
        %v832 = vsub.f32 %v830, %v831
        %v833 = vand.u32 %v832, 4294901760
        %834 = vmatmul.f32.gmra.mxu0 %v833
        %v835 = vpop.f32.mrf.mxu0
        %v836 = vadd.f32 %v571, %v835
        %v837 = vand.u32 %v518, 4294901760
        %v838 = vsub.f32 %v518, %v837
        %v839 = vand.u32 %v838, 4294901760
        %v840 = vsub.f32 %v838, %v839
        %v841 = vand.u32 %v840, 4294901760
        %842 = vmatmul.f32.gmra.mxu0 %v841
        %v843 = vpop.f32.mrf.mxu0
        %v844 = vadd.f32 %v571, %v843
        %v845 = vand.u32 %v519, 4294901760
        %v846 = vsub.f32 %v519, %v845
        %v847 = vand.u32 %v846, 4294901760
        %v848 = vsub.f32 %v846, %v847
        %v849 = vand.u32 %v848, 4294901760
        %850 = vmatmul.f32.gmra.mxu0 %v849
        %v851 = vpop.f32.mrf.mxu0
        %v852 = vadd.f32 %v571, %v851
        %v853 = vand.u32 %v520, 4294901760
        %v854 = vsub.f32 %v520, %v853
        %v855 = vand.u32 %v854, 4294901760
        %v856 = vsub.f32 %v854, %v855
        %v857 = vand.u32 %v856, 4294901760
        %858 = vmatmul.f32.gmra.mxu0 %v857
        %v859 = vpop.f32.mrf.mxu0
        %v860 = vadd.f32 %v571, %v859
        %v861 = vand.u32 %v521, 4294901760
        %v862 = vsub.f32 %v521, %v861
        %v863 = vand.u32 %v862, 4294901760
        %v864 = vsub.f32 %v862, %v863
        %v865 = vand.u32 %v864, 4294901760
        %866 = vmatmul.f32.gmra.mxu0 %v865
        %v867 = vpop.f32.mrf.mxu0
        %v868 = vadd.f32 %v571, %v867
        %v869 = vand.u32 %v522, 4294901760
        %v870 = vsub.f32 %v522, %v869
        %v871 = vand.u32 %v870, 4294901760
        %v872 = vsub.f32 %v870, %v871
        %v873 = vand.u32 %v872, 4294901760
        %874 = vmatmul.f32.gmra.mxu0 %v873
        %v875 = vpop.f32.mrf.mxu0
        %v876 = vadd.f32 %v571, %v875
        %v877 = vand.u32 %v523, 4294901760
        %v878 = vsub.f32 %v523, %v877
        %v879 = vand.u32 %v878, 4294901760
        %v880 = vsub.f32 %v878, %v879
        %v881 = vand.u32 %v880, 4294901760
        %882 = vmatmul.f32.gmra.mxu0 %v881
        %v883 = vpop.f32.mrf.mxu0
        %v884 = vadd.f32 %v571, %v883
        %v885 = vand.u32 %v524, 4294901760
        %v886 = vsub.f32 %v524, %v885
        %v887 = vand.u32 %v886, 4294901760
        %v888 = vsub.f32 %v886, %v887
        %v889 = vand.u32 %v888, 4294901760
        %890 = vmatmul.f32.gmra.mxu0 %v889
        %v891 = vpop.f32.mrf.mxu0
        %v892 = vadd.f32 %v571, %v891
        %v893 = vand.u32 %v525, 4294901760
        %v894 = vsub.f32 %v525, %v893
        %v895 = vand.u32 %v894, 4294901760
        %v896 = vsub.f32 %v894, %v895
        %v897 = vand.u32 %v896, 4294901760
        %898 = vmatmul.f32.gmra.mxu0 %v897
        %v899 = vpop.f32.mrf.mxu0
        %v900 = vadd.f32 %v571, %v899
        %v901 = vand.u32 %v526, 4294901760
        %v902 = vsub.f32 %v526, %v901
        %v903 = vand.u32 %v902, 4294901760
        %v904 = vsub.f32 %v902, %v903
        %v905 = vand.u32 %v904, 4294901760
        %906 = vmatmul.f32.gmra.mxu0 %v905
        %v907 = vpop.f32.mrf.mxu0
        %v908 = vadd.f32 %v571, %v907
        %v909 = vand.u32 %v527, 4294901760
        %v910 = vsub.f32 %v527, %v909
        %v911 = vand.u32 %v910, 4294901760
        %v912 = vsub.f32 %v910, %v911
        %v913 = vand.u32 %v912, 4294901760
        %914 = vmatmul.f32.gmra.mxu0 %v913
        %v915 = vpop.f32.mrf.mxu0
        %v916 = vadd.f32 %v571, %v915
        %v917 = vand.u32 %v528, 4294901760
        %v918 = vsub.f32 %v528, %v917
        %v919 = vand.u32 %v918, 4294901760
        %v920 = vsub.f32 %v918, %v919
        %v921 = vand.u32 %v920, 4294901760
        %922 = vmatmul.f32.gmra.mxu0 %v921
        %v923 = vpop.f32.mrf.mxu0
        %v924 = vadd.f32 %v571, %v923
        %v925 = vand.u32 %v529, 4294901760
        %v926 = vsub.f32 %v529, %v925
        %v927 = vand.u32 %v926, 4294901760
        %v928 = vsub.f32 %v926, %v927
        %v929 = vand.u32 %v928, 4294901760
        %930 = vmatmul.f32.gmra.mxu0 %v929
        %v931 = vpop.f32.mrf.mxu0
        %v932 = vadd.f32 %v571, %v931
        %v933 = vand.u32 %v530, 4294901760
        %v934 = vsub.f32 %v530, %v933
        %v935 = vand.u32 %v934, 4294901760
        %v936 = vsub.f32 %v934, %v935
        %v937 = vand.u32 %v936, 4294901760
        %938 = vmatmul.f32.gmra.mxu0 %v937
        %v939 = vpop.f32.mrf.mxu0
        %v940 = vadd.f32 %v571, %v939
        %v941 = vand.u32 %v531, 4294901760
        %v942 = vsub.f32 %v531, %v941
        %v943 = vand.u32 %v942, 4294901760
        %v944 = vsub.f32 %v942, %v943
        %v945 = vand.u32 %v944, 4294901760
        %946 = vmatmul.f32.gmra.mxu0 %v945
        %v947 = vpop.f32.mrf.mxu0
        %v948 = vadd.f32 %v571, %v947
        %v949 = vand.u32 %v532, 4294901760
        %v950 = vsub.f32 %v532, %v949
        %v951 = vand.u32 %v950, 4294901760
        %v952 = vsub.f32 %v950, %v951
        %v953 = vand.u32 %v952, 4294901760
        %954 = vmatmul.f32.gmra.mxu0 %v953
        %v955 = vpop.f32.mrf.mxu0
        %v956 = vadd.f32 %v571, %v955
        %v957 = vand.u32 %v533, 4294901760
        %v958 = vsub.f32 %v533, %v957
        %v959 = vand.u32 %v958, 4294901760
        %v960 = vsub.f32 %v958, %v959
        %v961 = vand.u32 %v960, 4294901760
        %962 = vmatmul.f32.gmra.mxu0 %v961
        %v963 = vpop.f32.mrf.mxu0
        %v964 = vadd.f32 %v571, %v963
        %v965 = vand.u32 %v534, 4294901760
        %v966 = vsub.f32 %v534, %v965
        %v967 = vand.u32 %v966, 4294901760
        %v968 = vsub.f32 %v966, %v967
        %v969 = vand.u32 %v968, 4294901760
        %970 = vmatmul.f32.gmra.mxu0 %v969
        %v971 = vpop.f32.mrf.mxu0
        %v972 = vadd.f32 %v571, %v971
        %v973 = vand.u32 %v535, 4294901760
        %v974 = vsub.f32 %v535, %v973
        %v975 = vand.u32 %v974, 4294901760
        %v976 = vsub.f32 %v974, %v975
        %v977 = vand.u32 %v976, 4294901760
        %978 = vmatmul.f32.gmra.mxu0 %v977
        %v979 = vpop.f32.mrf.mxu0
        %v980 = vadd.f32 %v571, %v979
        %v981 = vand.u32 %v536, 4294901760
        %v982 = vsub.f32 %v536, %v981
        %v983 = vand.u32 %v982, 4294901760
        %v984 = vsub.f32 %v982, %v983
        %v985 = vand.u32 %v984, 4294901760
        %986 = vmatmul.f32.gmra.mxu0 %v985
        %v987 = vpop.f32.mrf.mxu0
        %v988 = vadd.f32 %v571, %v987
        %v989 = vand.u32 %v537, 4294901760
        %v990 = vsub.f32 %v537, %v989
        %v991 = vand.u32 %v990, 4294901760
        %v992 = vsub.f32 %v990, %v991
        %v993 = vand.u32 %v992, 4294901760
        %994 = vmatmul.f32.gmra.mxu0 %v993
        %v995 = vpop.f32.mrf.mxu0
        %v996 = vadd.f32 %v571, %v995
        %v997 = vand.u32 %v538, 4294901760
        %v998 = vsub.f32 %v538, %v997
        %v999 = vand.u32 %v998, 4294901760
        %v1000 = vsub.f32 %v998, %v999
        %v1001 = vand.u32 %v1000, 4294901760
        %1002 = vmatmul.f32.gmra.mxu0 %v1001
        %v1003 = vpop.f32.mrf.mxu0
        %v1004 = vadd.f32 %v571, %v1003
        %v1005 = vand.u32 %v539, 4294901760
        %v1006 = vsub.f32 %v539, %v1005
        %v1007 = vand.u32 %v1006, 4294901760
        %v1008 = vsub.f32 %v1006, %v1007
        %v1009 = vand.u32 %v1008, 4294901760
        %1010 = vmatmul.f32.gmra.mxu0 %v1009
        %v1011 = vpop.f32.mrf.mxu0
        %v1012 = vadd.f32 %v571, %v1011
        %v1013 = vand.u32 %v540, 4294901760
        %v1014 = vsub.f32 %v540, %v1013
        %v1015 = vand.u32 %v1014, 4294901760
        %v1016 = vsub.f32 %v1014, %v1015
        %v1017 = vand.u32 %v1016, 4294901760
        %1018 = vmatmul.f32.gmra.mxu0 %v1017
        %v1019 = vpop.f32.mrf.mxu0
        %v1020 = vadd.f32 %v571, %v1019
        %v1021 = vand.u32 %v541, 4294901760
        %v1022 = vsub.f32 %v541, %v1021
        %v1023 = vand.u32 %v1022, 4294901760
        %v1024 = vsub.f32 %v1022, %v1023
        %v1025 = vand.u32 %v1024, 4294901760
        %1026 = vmatmul.f32.gmra.mxu0 %v1025
        %v1027 = vpop.f32.mrf.mxu0
        %v1028 = vadd.f32 %v571, %v1027
        %v1029 = vand.u32 %v542, 4294901760
        %v1030 = vsub.f32 %v542, %v1029
        %v1031 = vand.u32 %v1030, 4294901760
        %v1032 = vsub.f32 %v1030, %v1031
        %v1033 = vand.u32 %v1032, 4294901760
        %1034 = vmatmul.f32.gmra.mxu0 %v1033
        %v1035 = vpop.f32.mrf.mxu0
        %v1036 = vadd.f32 %v571, %v1035
        %v1037 = vand.u32 %v543, 4294901760
        %v1038 = vsub.f32 %v543, %v1037
        %v1039 = vand.u32 %v1038, 4294901760
        %v1040 = vsub.f32 %v1038, %v1039
        %v1041 = vand.u32 %v1040, 4294901760
        %1042 = vmatmul.f32.gmra.mxu0 %v1041
        %v1043 = vpop.f32.mrf.mxu0
        %v1044 = vadd.f32 %v571, %v1043
        %v1045 = vand.u32 %v544, 4294901760
        %v1046 = vsub.f32 %v544, %v1045
        %v1047 = vand.u32 %v1046, 4294901760
        %v1048 = vsub.f32 %v1046, %v1047
        %v1049 = vand.u32 %v1048, 4294901760
        %1050 = vmatmul.f32.gmra.mxu0 %v1049
        %v1051 = vpop.f32.mrf.mxu0
        %v1052 = vadd.f32 %v571, %v1051
        %v1053 = vand.u32 %v545, 4294901760
        %v1054 = vsub.f32 %v545, %v1053
        %v1055 = vand.u32 %v1054, 4294901760
        %v1056 = vsub.f32 %v1054, %v1055
        %v1057 = vand.u32 %v1056, 4294901760
        %1058 = vmatmul.f32.gmra.mxu0 %v1057
        %v1059 = vpop.f32.mrf.mxu0
        %v1060 = vadd.f32 %v571, %v1059
        %v1061 = vand.u32 %v546, 4294901760
        %v1062 = vsub.f32 %v546, %v1061
        %v1063 = vand.u32 %v1062, 4294901760
        %v1064 = vsub.f32 %v1062, %v1063
        %v1065 = vand.u32 %v1064, 4294901760
        %1066 = vmatmul.f32.gmra.mxu0 %v1065
        %v1067 = vpop.f32.mrf.mxu0
        %v1068 = vadd.f32 %v571, %v1067
        %v1069 = vand.u32 %v547, 4294901760
        %v1070 = vsub.f32 %v547, %v1069
        %v1071 = vand.u32 %v1070, 4294901760
        %v1072 = vsub.f32 %v1070, %v1071
        %v1073 = vand.u32 %v1072, 4294901760
        %1074 = vmatmul.f32.gmra.mxu0 %v1073
        %v1075 = vpop.f32.mrf.mxu0
        %v1076 = vadd.f32 %v571, %v1075
        %v1077 = vand.u32 %v548, 4294901760
        %v1078 = vsub.f32 %v548, %v1077
        %v1079 = vand.u32 %v1078, 4294901760
        %v1080 = vsub.f32 %v1078, %v1079
        %v1081 = vand.u32 %v1080, 4294901760
        %1082 = vmatmul.f32.gmra.mxu0 %v1081
        %v1083 = vpop.f32.mrf.mxu0
        %v1084 = vadd.f32 %v571, %v1083
        %v1085 = vand.u32 %v549, 4294901760
        %v1086 = vsub.f32 %v549, %v1085
        %v1087 = vand.u32 %v1086, 4294901760
        %v1088 = vsub.f32 %v1086, %v1087
        %v1089 = vand.u32 %v1088, 4294901760
        %1090 = vmatmul.f32.gmra.mxu0 %v1089
        %v1091 = vpop.f32.mrf.mxu0
        %v1092 = vadd.f32 %v571, %v1091
        %v1093 = vand.u32 %v550, 4294901760
        %v1094 = vsub.f32 %v550, %v1093
        %v1095 = vand.u32 %v1094, 4294901760
        %v1096 = vsub.f32 %v1094, %v1095
        %v1097 = vand.u32 %v1096, 4294901760
        %1098 = vmatmul.f32.gmra.mxu0 %v1097
        %v1099 = vpop.f32.mrf.mxu0
        %v1100 = vadd.f32 %v571, %v1099
        %v1101 = vand.u32 %v551, 4294901760
        %v1102 = vsub.f32 %v551, %v1101
        %v1103 = vand.u32 %v1102, 4294901760
        %v1104 = vsub.f32 %v1102, %v1103
        %v1105 = vand.u32 %v1104, 4294901760
        %1106 = vmatmul.f32.gmra.mxu0 %v1105
        %v1107 = vpop.f32.mrf.mxu0
        %v1108 = vadd.f32 %v571, %v1107
        %v1109 = vand.u32 %v552, 4294901760
        %v1110 = vsub.f32 %v552, %v1109
        %v1111 = vand.u32 %v1110, 4294901760
        %v1112 = vsub.f32 %v1110, %v1111
        %v1113 = vand.u32 %v1112, 4294901760
        %1114 = vmatmul.f32.gmra.mxu0 %v1113
        %v1115 = vpop.f32.mrf.mxu0
        %v1116 = vadd.f32 %v571, %v1115
        %1117 = vdwg.mxu0
        %v1118 = vand.u32 %v568, 4294901760
        %v1119 = vsub.f32 %v568, %v1118
        %v1120 = vand.u32 %v1119, 4294901760
        %v1121 = vsub.f32 %v1119, %v1120
        %v1122 = vand.u32 %v1121, 4294901760
        %1123 = vmatpush.msra.mxu0 %v1122
        %v1124 = vand.u32 %v567, 4294901760
        %v1125 = vsub.f32 %v567, %v1124
        %v1126 = vand.u32 %v1125, 4294901760
        %v1127 = vsub.f32 %v1125, %v1126
        %v1128 = vand.u32 %v1127, 4294901760
        %1129 = vmatpush.msra.mxu0 %v1128
        %v1130 = vand.u32 %v566, 4294901760
        %v1131 = vsub.f32 %v566, %v1130
        %v1132 = vand.u32 %v1131, 4294901760
        %v1133 = vsub.f32 %v1131, %v1132
        %v1134 = vand.u32 %v1133, 4294901760
        %1135 = vmatpush.msra.mxu0 %v1134
        %v1136 = vand.u32 %v565, 4294901760
        %v1137 = vsub.f32 %v565, %v1136
        %v1138 = vand.u32 %v1137, 4294901760
        %v1139 = vsub.f32 %v1137, %v1138
        %v1140 = vand.u32 %v1139, 4294901760
        %1141 = vmatpush.msra.mxu0 %v1140
        %v1142 = vand.u32 %v564, 4294901760
        %v1143 = vsub.f32 %v564, %v1142
        %v1144 = vand.u32 %v1143, 4294901760
        %v1145 = vsub.f32 %v1143, %v1144
        %v1146 = vand.u32 %v1145, 4294901760
        %1147 = vmatpush.msra.mxu0 %v1146
        %v1148 = vand.u32 %v563, 4294901760
        %v1149 = vsub.f32 %v563, %v1148
        %v1150 = vand.u32 %v1149, 4294901760
        %v1151 = vsub.f32 %v1149, %v1150
        %v1152 = vand.u32 %v1151, 4294901760
        %1153 = vmatpush.msra.mxu0 %v1152
        %v1154 = vand.u32 %v562, 4294901760
        %v1155 = vsub.f32 %v562, %v1154
        %v1156 = vand.u32 %v1155, 4294901760
        %v1157 = vsub.f32 %v1155, %v1156
        %v1158 = vand.u32 %v1157, 4294901760
        %1159 = vmatpush.msra.mxu0 %v1158
        %v1160 = vand.u32 %v561, 4294901760
        %v1161 = vsub.f32 %v561, %v1160
        %v1162 = vand.u32 %v1161, 4294901760
        %v1163 = vsub.f32 %v1161, %v1162
        %v1164 = vand.u32 %v1163, 4294901760
        %1165 = vmatpush.msra.mxu0 %v1164
        %v1166 = vand.u32 %v560, 4294901760
        %v1167 = vsub.f32 %v560, %v1166
        %v1168 = vand.u32 %v1167, 4294901760
        %v1169 = vsub.f32 %v1167, %v1168
        %v1170 = vand.u32 %v1169, 4294901760
        %1171 = vmatpush.msra.mxu0 %v1170
        %v1172 = vand.u32 %v559, 4294901760
        %v1173 = vsub.f32 %v559, %v1172
        %v1174 = vand.u32 %v1173, 4294901760
        %v1175 = vsub.f32 %v1173, %v1174
        %v1176 = vand.u32 %v1175, 4294901760
        %1177 = vmatpush.msra.mxu0 %v1176
        %v1178 = vand.u32 %v558, 4294901760
        %v1179 = vsub.f32 %v558, %v1178
        %v1180 = vand.u32 %v1179, 4294901760
        %v1181 = vsub.f32 %v1179, %v1180
        %v1182 = vand.u32 %v1181, 4294901760
        %1183 = vmatpush.msra.mxu0 %v1182
        %v1184 = vand.u32 %v557, 4294901760
        %v1185 = vsub.f32 %v557, %v1184
        %v1186 = vand.u32 %v1185, 4294901760
        %v1187 = vsub.f32 %v1185, %v1186
        %v1188 = vand.u32 %v1187, 4294901760
        %1189 = vmatpush.msra.mxu0 %v1188
        %v1190 = vand.u32 %v556, 4294901760
        %v1191 = vsub.f32 %v556, %v1190
        %v1192 = vand.u32 %v1191, 4294901760
        %v1193 = vsub.f32 %v1191, %v1192
        %v1194 = vand.u32 %v1193, 4294901760
        %1195 = vmatpush.msra.mxu0 %v1194
        %v1196 = vand.u32 %v555, 4294901760
        %v1197 = vsub.f32 %v555, %v1196
        %v1198 = vand.u32 %v1197, 4294901760
        %v1199 = vsub.f32 %v1197, %v1198
        %v1200 = vand.u32 %v1199, 4294901760
        %1201 = vmatpush.msra.mxu0 %v1200
        %v1202 = vand.u32 %v554, 4294901760
        %v1203 = vsub.f32 %v554, %v1202
        %v1204 = vand.u32 %v1203, 4294901760
        %v1205 = vsub.f32 %v1203, %v1204
        %v1206 = vand.u32 %v1205, 4294901760
        %1207 = vmatpush.msra.mxu0 %v1206
        %v1208 = vand.u32 %v553, 4294901760
        %v1209 = vsub.f32 %v553, %v1208
        %v1210 = vand.u32 %v1209, 4294901760
        %v1211 = vsub.f32 %v1209, %v1210
        %v1212 = vand.u32 %v1211, 4294901760
        %1213 = vmatpush.msra.mxu0 %v1212
        %v1214 = vand.u32 %v489, 4294901760
        %1215 = vmatmul.f32.gmra.mxu0 %v1214
        %v1216 = vpop.f32.mrf.mxu0
        %v1217 = vadd.f32 %v612, %v1216
        %v1218 = vand.u32 %v490, 4294901760
        %1219 = vmatmul.f32.gmra.mxu0 %v1218
        %v1220 = vpop.f32.mrf.mxu0
        %v1221 = vadd.f32 %v620, %v1220
        %v1222 = vand.u32 %v491, 4294901760
        %1223 = vmatmul.f32.gmra.mxu0 %v1222
        %v1224 = vpop.f32.mrf.mxu0
        %v1225 = vadd.f32 %v628, %v1224
        %v1226 = vand.u32 %v492, 4294901760
        %1227 = vmatmul.f32.gmra.mxu0 %v1226
        %v1228 = vpop.f32.mrf.mxu0
        %v1229 = vadd.f32 %v636, %v1228
        %v1230 = vand.u32 %v493, 4294901760
        %1231 = vmatmul.f32.gmra.mxu0 %v1230
        %v1232 = vpop.f32.mrf.mxu0
        %v1233 = vadd.f32 %v644, %v1232
        %v1234 = vand.u32 %v494, 4294901760
        %1235 = vmatmul.f32.gmra.mxu0 %v1234
        %v1236 = vpop.f32.mrf.mxu0
        %v1237 = vadd.f32 %v652, %v1236
        %v1238 = vand.u32 %v495, 4294901760
        %1239 = vmatmul.f32.gmra.mxu0 %v1238
        %v1240 = vpop.f32.mrf.mxu0
        %v1241 = vadd.f32 %v660, %v1240
        %v1242 = vand.u32 %v496, 4294901760
        %1243 = vmatmul.f32.gmra.mxu0 %v1242
        %v1244 = vpop.f32.mrf.mxu0
        %v1245 = vadd.f32 %v668, %v1244
        %v1246 = vand.u32 %v497, 4294901760
        %1247 = vmatmul.f32.gmra.mxu0 %v1246
        %v1248 = vpop.f32.mrf.mxu0
        %v1249 = vadd.f32 %v676, %v1248
        %v1250 = vand.u32 %v498, 4294901760
        %1251 = vmatmul.f32.gmra.mxu0 %v1250
        %v1252 = vpop.f32.mrf.mxu0
        %v1253 = vadd.f32 %v684, %v1252
        %v1254 = vand.u32 %v499, 4294901760
        %1255 = vmatmul.f32.gmra.mxu0 %v1254
        %v1256 = vpop.f32.mrf.mxu0
        %v1257 = vadd.f32 %v692, %v1256
        %v1258 = vand.u32 %v500, 4294901760
        %1259 = vmatmul.f32.gmra.mxu0 %v1258
        %v1260 = vpop.f32.mrf.mxu0
        %v1261 = vadd.f32 %v700, %v1260
        %v1262 = vand.u32 %v501, 4294901760
        %1263 = vmatmul.f32.gmra.mxu0 %v1262
        %v1264 = vpop.f32.mrf.mxu0
        %v1265 = vadd.f32 %v708, %v1264
        %v1266 = vand.u32 %v502, 4294901760
        %1267 = vmatmul.f32.gmra.mxu0 %v1266
        %v1268 = vpop.f32.mrf.mxu0
        %v1269 = vadd.f32 %v716, %v1268
        %v1270 = vand.u32 %v503, 4294901760
        %1271 = vmatmul.f32.gmra.mxu0 %v1270
        %v1272 = vpop.f32.mrf.mxu0
        %v1273 = vadd.f32 %v724, %v1272
        %v1274 = vand.u32 %v504, 4294901760
        %1275 = vmatmul.f32.gmra.mxu0 %v1274
        %v1276 = vpop.f32.mrf.mxu0
        %v1277 = vadd.f32 %v732, %v1276
        %v1278 = vand.u32 %v505, 4294901760
        %1279 = vmatmul.f32.gmra.mxu0 %v1278
        %v1280 = vpop.f32.mrf.mxu0
        %v1281 = vadd.f32 %v740, %v1280
        %v1282 = vand.u32 %v506, 4294901760
        %1283 = vmatmul.f32.gmra.mxu0 %v1282
        %v1284 = vpop.f32.mrf.mxu0
        %v1285 = vadd.f32 %v748, %v1284
        %v1286 = vand.u32 %v507, 4294901760
        %1287 = vmatmul.f32.gmra.mxu0 %v1286
        %v1288 = vpop.f32.mrf.mxu0
        %v1289 = vadd.f32 %v756, %v1288
        %v1290 = vand.u32 %v508, 4294901760
        %1291 = vmatmul.f32.gmra.mxu0 %v1290
        %v1292 = vpop.f32.mrf.mxu0
        %v1293 = vadd.f32 %v764, %v1292
        %v1294 = vand.u32 %v509, 4294901760
        %1295 = vmatmul.f32.gmra.mxu0 %v1294
        %v1296 = vpop.f32.mrf.mxu0
        %v1297 = vadd.f32 %v772, %v1296
        %v1298 = vand.u32 %v510, 4294901760
        %1299 = vmatmul.f32.gmra.mxu0 %v1298
        %v1300 = vpop.f32.mrf.mxu0
        %v1301 = vadd.f32 %v780, %v1300
        %v1302 = vand.u32 %v511, 4294901760
        %1303 = vmatmul.f32.gmra.mxu0 %v1302
        %v1304 = vpop.f32.mrf.mxu0
        %v1305 = vadd.f32 %v788, %v1304
        %v1306 = vand.u32 %v512, 4294901760
        %1307 = vmatmul.f32.gmra.mxu0 %v1306
        %v1308 = vpop.f32.mrf.mxu0
        %v1309 = vadd.f32 %v796, %v1308
        %v1310 = vand.u32 %v513, 4294901760
        %1311 = vmatmul.f32.gmra.mxu0 %v1310
        %v1312 = vpop.f32.mrf.mxu0
        %v1313 = vadd.f32 %v804, %v1312
        %v1314 = vand.u32 %v514, 4294901760
        %1315 = vmatmul.f32.gmra.mxu0 %v1314
        %v1316 = vpop.f32.mrf.mxu0
        %v1317 = vadd.f32 %v812, %v1316
        %v1318 = vand.u32 %v515, 4294901760
        %1319 = vmatmul.f32.gmra.mxu0 %v1318
        %v1320 = vpop.f32.mrf.mxu0
        %v1321 = vadd.f32 %v820, %v1320
        %v1322 = vand.u32 %v516, 4294901760
        %1323 = vmatmul.f32.gmra.mxu0 %v1322
        %v1324 = vpop.f32.mrf.mxu0
        %v1325 = vadd.f32 %v828, %v1324
        %v1326 = vand.u32 %v517, 4294901760
        %1327 = vmatmul.f32.gmra.mxu0 %v1326
        %v1328 = vpop.f32.mrf.mxu0
        %v1329 = vadd.f32 %v836, %v1328
        %v1330 = vand.u32 %v518, 4294901760
        %1331 = vmatmul.f32.gmra.mxu0 %v1330
        %v1332 = vpop.f32.mrf.mxu0
        %v1333 = vadd.f32 %v844, %v1332
        %v1334 = vand.u32 %v519, 4294901760
        %1335 = vmatmul.f32.gmra.mxu0 %v1334
        %v1336 = vpop.f32.mrf.mxu0
        %v1337 = vadd.f32 %v852, %v1336
        %v1338 = vand.u32 %v520, 4294901760
        %1339 = vmatmul.f32.gmra.mxu0 %v1338
        %v1340 = vpop.f32.mrf.mxu0
        %v1341 = vadd.f32 %v860, %v1340
        %v1342 = vand.u32 %v521, 4294901760
        %1343 = vmatmul.f32.gmra.mxu0 %v1342
        %v1344 = vpop.f32.mrf.mxu0
        %v1345 = vadd.f32 %v868, %v1344
        %v1346 = vand.u32 %v522, 4294901760
        %1347 = vmatmul.f32.gmra.mxu0 %v1346
        %v1348 = vpop.f32.mrf.mxu0
        %v1349 = vadd.f32 %v876, %v1348
        %v1350 = vand.u32 %v523, 4294901760
        %1351 = vmatmul.f32.gmra.mxu0 %v1350
        %v1352 = vpop.f32.mrf.mxu0
        %v1353 = vadd.f32 %v884, %v1352
        %v1354 = vand.u32 %v524, 4294901760
        %1355 = vmatmul.f32.gmra.mxu0 %v1354
        %v1356 = vpop.f32.mrf.mxu0
        %v1357 = vadd.f32 %v892, %v1356
        %v1358 = vand.u32 %v525, 4294901760
        %1359 = vmatmul.f32.gmra.mxu0 %v1358
        %v1360 = vpop.f32.mrf.mxu0
        %v1361 = vadd.f32 %v900, %v1360
        %v1362 = vand.u32 %v526, 4294901760
        %1363 = vmatmul.f32.gmra.mxu0 %v1362
        %v1364 = vpop.f32.mrf.mxu0
        %v1365 = vadd.f32 %v908, %v1364
        %v1366 = vand.u32 %v527, 4294901760
        %1367 = vmatmul.f32.gmra.mxu0 %v1366
        %v1368 = vpop.f32.mrf.mxu0
        %v1369 = vadd.f32 %v916, %v1368
        %v1370 = vand.u32 %v528, 4294901760
        %1371 = vmatmul.f32.gmra.mxu0 %v1370
        %v1372 = vpop.f32.mrf.mxu0
        %v1373 = vadd.f32 %v924, %v1372
        %v1374 = vand.u32 %v529, 4294901760
        %1375 = vmatmul.f32.gmra.mxu0 %v1374
        %v1376 = vpop.f32.mrf.mxu0
        %v1377 = vadd.f32 %v932, %v1376
        %v1378 = vand.u32 %v530, 4294901760
        %1379 = vmatmul.f32.gmra.mxu0 %v1378
        %v1380 = vpop.f32.mrf.mxu0
        %v1381 = vadd.f32 %v940, %v1380
        %v1382 = vand.u32 %v531, 4294901760
        %1383 = vmatmul.f32.gmra.mxu0 %v1382
        %v1384 = vpop.f32.mrf.mxu0
        %v1385 = vadd.f32 %v948, %v1384
        %v1386 = vand.u32 %v532, 4294901760
        %1387 = vmatmul.f32.gmra.mxu0 %v1386
        %v1388 = vpop.f32.mrf.mxu0
        %v1389 = vadd.f32 %v956, %v1388
        %v1390 = vand.u32 %v533, 4294901760
        %1391 = vmatmul.f32.gmra.mxu0 %v1390
        %v1392 = vpop.f32.mrf.mxu0
        %v1393 = vadd.f32 %v964, %v1392
        %v1394 = vand.u32 %v534, 4294901760
        %1395 = vmatmul.f32.gmra.mxu0 %v1394
        %v1396 = vpop.f32.mrf.mxu0
        %v1397 = vadd.f32 %v972, %v1396
        %v1398 = vand.u32 %v535, 4294901760
        %1399 = vmatmul.f32.gmra.mxu0 %v1398
        %v1400 = vpop.f32.mrf.mxu0
        %v1401 = vadd.f32 %v980, %v1400
        %v1402 = vand.u32 %v536, 4294901760
        %1403 = vmatmul.f32.gmra.mxu0 %v1402
        %v1404 = vpop.f32.mrf.mxu0
        %v1405 = vadd.f32 %v988, %v1404
        %v1406 = vand.u32 %v537, 4294901760
        %1407 = vmatmul.f32.gmra.mxu0 %v1406
        %v1408 = vpop.f32.mrf.mxu0
        %v1409 = vadd.f32 %v996, %v1408
        %v1410 = vand.u32 %v538, 4294901760
        %1411 = vmatmul.f32.gmra.mxu0 %v1410
        %v1412 = vpop.f32.mrf.mxu0
        %v1413 = vadd.f32 %v1004, %v1412
        %v1414 = vand.u32 %v539, 4294901760
        %1415 = vmatmul.f32.gmra.mxu0 %v1414
        %v1416 = vpop.f32.mrf.mxu0
        %v1417 = vadd.f32 %v1012, %v1416
        %v1418 = vand.u32 %v540, 4294901760
        %1419 = vmatmul.f32.gmra.mxu0 %v1418
        %v1420 = vpop.f32.mrf.mxu0
        %v1421 = vadd.f32 %v1020, %v1420
        %v1422 = vand.u32 %v541, 4294901760
        %1423 = vmatmul.f32.gmra.mxu0 %v1422
        %v1424 = vpop.f32.mrf.mxu0
        %v1425 = vadd.f32 %v1028, %v1424
        %v1426 = vand.u32 %v542, 4294901760
        %1427 = vmatmul.f32.gmra.mxu0 %v1426
        %v1428 = vpop.f32.mrf.mxu0
        %v1429 = vadd.f32 %v1036, %v1428
        %v1430 = vand.u32 %v543, 4294901760
        %1431 = vmatmul.f32.gmra.mxu0 %v1430
        %v1432 = vpop.f32.mrf.mxu0
        %v1433 = vadd.f32 %v1044, %v1432
        %v1434 = vand.u32 %v544, 4294901760
        %1435 = vmatmul.f32.gmra.mxu0 %v1434
        %v1436 = vpop.f32.mrf.mxu0
        %v1437 = vadd.f32 %v1052, %v1436
        %v1438 = vand.u32 %v545, 4294901760
        %1439 = vmatmul.f32.gmra.mxu0 %v1438
        %v1440 = vpop.f32.mrf.mxu0
        %v1441 = vadd.f32 %v1060, %v1440
        %v1442 = vand.u32 %v546, 4294901760
        %1443 = vmatmul.f32.gmra.mxu0 %v1442
        %v1444 = vpop.f32.mrf.mxu0
        %v1445 = vadd.f32 %v1068, %v1444
        %v1446 = vand.u32 %v547, 4294901760
        %1447 = vmatmul.f32.gmra.mxu0 %v1446
        %v1448 = vpop.f32.mrf.mxu0
        %v1449 = vadd.f32 %v1076, %v1448
        %v1450 = vand.u32 %v548, 4294901760
        %1451 = vmatmul.f32.gmra.mxu0 %v1450
        %v1452 = vpop.f32.mrf.mxu0
        %v1453 = vadd.f32 %v1084, %v1452
        %v1454 = vand.u32 %v549, 4294901760
        %1455 = vmatmul.f32.gmra.mxu0 %v1454
        %v1456 = vpop.f32.mrf.mxu0
        %v1457 = vadd.f32 %v1092, %v1456
        %v1458 = vand.u32 %v550, 4294901760
        %1459 = vmatmul.f32.gmra.mxu0 %v1458
        %v1460 = vpop.f32.mrf.mxu0
        %v1461 = vadd.f32 %v1100, %v1460
        %v1462 = vand.u32 %v551, 4294901760
        %1463 = vmatmul.f32.gmra.mxu0 %v1462
        %v1464 = vpop.f32.mrf.mxu0
        %v1465 = vadd.f32 %v1108, %v1464
        %v1466 = vand.u32 %v552, 4294901760
        %1467 = vmatmul.f32.gmra.mxu0 %v1466
        %v1468 = vpop.f32.mrf.mxu0
        %v1469 = vadd.f32 %v1116, %v1468
        %1470 = vdwg.mxu0
        %v1471 = vand.u32 %v568, 4294901760
        %v1472 = vsub.f32 %v568, %v1471
        %1473 = vmatpush.msra.mxu0 %v1472
        %v1474 = vand.u32 %v567, 4294901760
        %v1475 = vsub.f32 %v567, %v1474
        %1476 = vmatpush.msra.mxu0 %v1475
        %v1477 = vand.u32 %v566, 4294901760
        %v1478 = vsub.f32 %v566, %v1477
        %1479 = vmatpush.msra.mxu0 %v1478
        %v1480 = vand.u32 %v565, 4294901760
        %v1481 = vsub.f32 %v565, %v1480
        %1482 = vmatpush.msra.mxu0 %v1481
        %v1483 = vand.u32 %v564, 4294901760
        %v1484 = vsub.f32 %v564, %v1483
        %1485 = vmatpush.msra.mxu0 %v1484
        %v1486 = vand.u32 %v563, 4294901760
        %v1487 = vsub.f32 %v563, %v1486
        %1488 = vmatpush.msra.mxu0 %v1487
        %v1489 = vand.u32 %v562, 4294901760
        %v1490 = vsub.f32 %v562, %v1489
        %1491 = vmatpush.msra.mxu0 %v1490
        %v1492 = vand.u32 %v561, 4294901760
        %v1493 = vsub.f32 %v561, %v1492
        %1494 = vmatpush.msra.mxu0 %v1493
        %v1495 = vand.u32 %v560, 4294901760
        %v1496 = vsub.f32 %v560, %v1495
        %1497 = vmatpush.msra.mxu0 %v1496
        %v1498 = vand.u32 %v559, 4294901760
        %v1499 = vsub.f32 %v559, %v1498
        %1500 = vmatpush.msra.mxu0 %v1499
        %v1501 = vand.u32 %v558, 4294901760
        %v1502 = vsub.f32 %v558, %v1501
        %1503 = vmatpush.msra.mxu0 %v1502
        %v1504 = vand.u32 %v557, 4294901760
        %v1505 = vsub.f32 %v557, %v1504
        %1506 = vmatpush.msra.mxu0 %v1505
        %v1507 = vand.u32 %v556, 4294901760
        %v1508 = vsub.f32 %v556, %v1507
        %1509 = vmatpush.msra.mxu0 %v1508
        %v1510 = vand.u32 %v555, 4294901760
        %v1511 = vsub.f32 %v555, %v1510
        %1512 = vmatpush.msra.mxu0 %v1511
        %v1513 = vand.u32 %v554, 4294901760
        %v1514 = vsub.f32 %v554, %v1513
        %1515 = vmatpush.msra.mxu0 %v1514
        %v1516 = vand.u32 %v553, 4294901760
        %v1517 = vsub.f32 %v553, %v1516
        %1518 = vmatpush.msra.mxu0 %v1517
        %v1519 = vand.u32 %v489, 4294901760
        %v1520 = vsub.f32 %v489, %v1519
        %1521 = vmatmul.f32.gmra.mxu0 %v1520
        %v1522 = vpop.f32.mrf.mxu0
        %v1523 = vadd.f32 %v1217, %v1522
        %v1524 = vand.u32 %v490, 4294901760
        %v1525 = vsub.f32 %v490, %v1524
        %1526 = vmatmul.f32.gmra.mxu0 %v1525
        %v1527 = vpop.f32.mrf.mxu0
        %v1528 = vadd.f32 %v1221, %v1527
        %v1529 = vand.u32 %v491, 4294901760
        %v1530 = vsub.f32 %v491, %v1529
        %1531 = vmatmul.f32.gmra.mxu0 %v1530
        %v1532 = vpop.f32.mrf.mxu0
        %v1533 = vadd.f32 %v1225, %v1532
        %v1534 = vand.u32 %v492, 4294901760
        %v1535 = vsub.f32 %v492, %v1534
        %1536 = vmatmul.f32.gmra.mxu0 %v1535
        %v1537 = vpop.f32.mrf.mxu0
        %v1538 = vadd.f32 %v1229, %v1537
        %v1539 = vand.u32 %v493, 4294901760
        %v1540 = vsub.f32 %v493, %v1539
        %1541 = vmatmul.f32.gmra.mxu0 %v1540
        %v1542 = vpop.f32.mrf.mxu0
        %v1543 = vadd.f32 %v1233, %v1542
        %v1544 = vand.u32 %v494, 4294901760
        %v1545 = vsub.f32 %v494, %v1544
        %1546 = vmatmul.f32.gmra.mxu0 %v1545
        %v1547 = vpop.f32.mrf.mxu0
        %v1548 = vadd.f32 %v1237, %v1547
        %v1549 = vand.u32 %v495, 4294901760
        %v1550 = vsub.f32 %v495, %v1549
        %1551 = vmatmul.f32.gmra.mxu0 %v1550
        %v1552 = vpop.f32.mrf.mxu0
        %v1553 = vadd.f32 %v1241, %v1552
        %v1554 = vand.u32 %v496, 4294901760
        %v1555 = vsub.f32 %v496, %v1554
        %1556 = vmatmul.f32.gmra.mxu0 %v1555
        %v1557 = vpop.f32.mrf.mxu0
        %v1558 = vadd.f32 %v1245, %v1557
        %v1559 = vand.u32 %v497, 4294901760
        %v1560 = vsub.f32 %v497, %v1559
        %1561 = vmatmul.f32.gmra.mxu0 %v1560
        %v1562 = vpop.f32.mrf.mxu0
        %v1563 = vadd.f32 %v1249, %v1562
        %v1564 = vand.u32 %v498, 4294901760
        %v1565 = vsub.f32 %v498, %v1564
        %1566 = vmatmul.f32.gmra.mxu0 %v1565
        %v1567 = vpop.f32.mrf.mxu0
        %v1568 = vadd.f32 %v1253, %v1567
        %v1569 = vand.u32 %v499, 4294901760
        %v1570 = vsub.f32 %v499, %v1569
        %1571 = vmatmul.f32.gmra.mxu0 %v1570
        %v1572 = vpop.f32.mrf.mxu0
        %v1573 = vadd.f32 %v1257, %v1572
        %v1574 = vand.u32 %v500, 4294901760
        %v1575 = vsub.f32 %v500, %v1574
        %1576 = vmatmul.f32.gmra.mxu0 %v1575
        %v1577 = vpop.f32.mrf.mxu0
        %v1578 = vadd.f32 %v1261, %v1577
        %v1579 = vand.u32 %v501, 4294901760
        %v1580 = vsub.f32 %v501, %v1579
        %1581 = vmatmul.f32.gmra.mxu0 %v1580
        %v1582 = vpop.f32.mrf.mxu0
        %v1583 = vadd.f32 %v1265, %v1582
        %v1584 = vand.u32 %v502, 4294901760
        %v1585 = vsub.f32 %v502, %v1584
        %1586 = vmatmul.f32.gmra.mxu0 %v1585
        %v1587 = vpop.f32.mrf.mxu0
        %v1588 = vadd.f32 %v1269, %v1587
        %v1589 = vand.u32 %v503, 4294901760
        %v1590 = vsub.f32 %v503, %v1589
        %1591 = vmatmul.f32.gmra.mxu0 %v1590
        %v1592 = vpop.f32.mrf.mxu0
        %v1593 = vadd.f32 %v1273, %v1592
        %v1594 = vand.u32 %v504, 4294901760
        %v1595 = vsub.f32 %v504, %v1594
        %1596 = vmatmul.f32.gmra.mxu0 %v1595
        %v1597 = vpop.f32.mrf.mxu0
        %v1598 = vadd.f32 %v1277, %v1597
        %v1599 = vand.u32 %v505, 4294901760
        %v1600 = vsub.f32 %v505, %v1599
        %1601 = vmatmul.f32.gmra.mxu0 %v1600
        %v1602 = vpop.f32.mrf.mxu0
        %v1603 = vadd.f32 %v1281, %v1602
        %v1604 = vand.u32 %v506, 4294901760
        %v1605 = vsub.f32 %v506, %v1604
        %1606 = vmatmul.f32.gmra.mxu0 %v1605
        %v1607 = vpop.f32.mrf.mxu0
        %v1608 = vadd.f32 %v1285, %v1607
        %v1609 = vand.u32 %v507, 4294901760
        %v1610 = vsub.f32 %v507, %v1609
        %1611 = vmatmul.f32.gmra.mxu0 %v1610
        %v1612 = vpop.f32.mrf.mxu0
        %v1613 = vadd.f32 %v1289, %v1612
        %v1614 = vand.u32 %v508, 4294901760
        %v1615 = vsub.f32 %v508, %v1614
        %1616 = vmatmul.f32.gmra.mxu0 %v1615
        %v1617 = vpop.f32.mrf.mxu0
        %v1618 = vadd.f32 %v1293, %v1617
        %v1619 = vand.u32 %v509, 4294901760
        %v1620 = vsub.f32 %v509, %v1619
        %1621 = vmatmul.f32.gmra.mxu0 %v1620
        %v1622 = vpop.f32.mrf.mxu0
        %v1623 = vadd.f32 %v1297, %v1622
        %v1624 = vand.u32 %v510, 4294901760
        %v1625 = vsub.f32 %v510, %v1624
        %1626 = vmatmul.f32.gmra.mxu0 %v1625
        %v1627 = vpop.f32.mrf.mxu0
        %v1628 = vadd.f32 %v1301, %v1627
        %v1629 = vand.u32 %v511, 4294901760
        %v1630 = vsub.f32 %v511, %v1629
        %1631 = vmatmul.f32.gmra.mxu0 %v1630
        %v1632 = vpop.f32.mrf.mxu0
        %v1633 = vadd.f32 %v1305, %v1632
        %v1634 = vand.u32 %v512, 4294901760
        %v1635 = vsub.f32 %v512, %v1634
        %1636 = vmatmul.f32.gmra.mxu0 %v1635
        %v1637 = vpop.f32.mrf.mxu0
        %v1638 = vadd.f32 %v1309, %v1637
        %v1639 = vand.u32 %v513, 4294901760
        %v1640 = vsub.f32 %v513, %v1639
        %1641 = vmatmul.f32.gmra.mxu0 %v1640
        %v1642 = vpop.f32.mrf.mxu0
        %v1643 = vadd.f32 %v1313, %v1642
        %v1644 = vand.u32 %v514, 4294901760
        %v1645 = vsub.f32 %v514, %v1644
        %1646 = vmatmul.f32.gmra.mxu0 %v1645
        %v1647 = vpop.f32.mrf.mxu0
        %v1648 = vadd.f32 %v1317, %v1647
        %v1649 = vand.u32 %v515, 4294901760
        %v1650 = vsub.f32 %v515, %v1649
        %1651 = vmatmul.f32.gmra.mxu0 %v1650
        %v1652 = vpop.f32.mrf.mxu0
        %v1653 = vadd.f32 %v1321, %v1652
        %v1654 = vand.u32 %v516, 4294901760
        %v1655 = vsub.f32 %v516, %v1654
        %1656 = vmatmul.f32.gmra.mxu0 %v1655
        %v1657 = vpop.f32.mrf.mxu0
        %v1658 = vadd.f32 %v1325, %v1657
        %v1659 = vand.u32 %v517, 4294901760
        %v1660 = vsub.f32 %v517, %v1659
        %1661 = vmatmul.f32.gmra.mxu0 %v1660
        %v1662 = vpop.f32.mrf.mxu0
        %v1663 = vadd.f32 %v1329, %v1662
        %v1664 = vand.u32 %v518, 4294901760
        %v1665 = vsub.f32 %v518, %v1664
        %1666 = vmatmul.f32.gmra.mxu0 %v1665
        %v1667 = vpop.f32.mrf.mxu0
        %v1668 = vadd.f32 %v1333, %v1667
        %v1669 = vand.u32 %v519, 4294901760
        %v1670 = vsub.f32 %v519, %v1669
        %1671 = vmatmul.f32.gmra.mxu0 %v1670
        %v1672 = vpop.f32.mrf.mxu0
        %v1673 = vadd.f32 %v1337, %v1672
        %v1674 = vand.u32 %v520, 4294901760
        %v1675 = vsub.f32 %v520, %v1674
        %1676 = vmatmul.f32.gmra.mxu0 %v1675
        %v1677 = vpop.f32.mrf.mxu0
        %v1678 = vadd.f32 %v1341, %v1677
        %v1679 = vand.u32 %v521, 4294901760
        %v1680 = vsub.f32 %v521, %v1679
        %1681 = vmatmul.f32.gmra.mxu0 %v1680
        %v1682 = vpop.f32.mrf.mxu0
        %v1683 = vadd.f32 %v1345, %v1682
        %v1684 = vand.u32 %v522, 4294901760
        %v1685 = vsub.f32 %v522, %v1684
        %1686 = vmatmul.f32.gmra.mxu0 %v1685
        %v1687 = vpop.f32.mrf.mxu0
        %v1688 = vadd.f32 %v1349, %v1687
        %v1689 = vand.u32 %v523, 4294901760
        %v1690 = vsub.f32 %v523, %v1689
        %1691 = vmatmul.f32.gmra.mxu0 %v1690
        %v1692 = vpop.f32.mrf.mxu0
        %v1693 = vadd.f32 %v1353, %v1692
        %v1694 = vand.u32 %v524, 4294901760
        %v1695 = vsub.f32 %v524, %v1694
        %1696 = vmatmul.f32.gmra.mxu0 %v1695
        %v1697 = vpop.f32.mrf.mxu0
        %v1698 = vadd.f32 %v1357, %v1697
        %v1699 = vand.u32 %v525, 4294901760
        %v1700 = vsub.f32 %v525, %v1699
        %1701 = vmatmul.f32.gmra.mxu0 %v1700
        %v1702 = vpop.f32.mrf.mxu0
        %v1703 = vadd.f32 %v1361, %v1702
        %v1704 = vand.u32 %v526, 4294901760
        %v1705 = vsub.f32 %v526, %v1704
        %1706 = vmatmul.f32.gmra.mxu0 %v1705
        %v1707 = vpop.f32.mrf.mxu0
        %v1708 = vadd.f32 %v1365, %v1707
        %v1709 = vand.u32 %v527, 4294901760
        %v1710 = vsub.f32 %v527, %v1709
        %1711 = vmatmul.f32.gmra.mxu0 %v1710
        %v1712 = vpop.f32.mrf.mxu0
        %v1713 = vadd.f32 %v1369, %v1712
        %v1714 = vand.u32 %v528, 4294901760
        %v1715 = vsub.f32 %v528, %v1714
        %1716 = vmatmul.f32.gmra.mxu0 %v1715
        %v1717 = vpop.f32.mrf.mxu0
        %v1718 = vadd.f32 %v1373, %v1717
        %v1719 = vand.u32 %v529, 4294901760
        %v1720 = vsub.f32 %v529, %v1719
        %1721 = vmatmul.f32.gmra.mxu0 %v1720
        %v1722 = vpop.f32.mrf.mxu0
        %v1723 = vadd.f32 %v1377, %v1722
        %v1724 = vand.u32 %v530, 4294901760
        %v1725 = vsub.f32 %v530, %v1724
        %1726 = vmatmul.f32.gmra.mxu0 %v1725
        %v1727 = vpop.f32.mrf.mxu0
        %v1728 = vadd.f32 %v1381, %v1727
        %v1729 = vand.u32 %v531, 4294901760
        %v1730 = vsub.f32 %v531, %v1729
        %1731 = vmatmul.f32.gmra.mxu0 %v1730
        %v1732 = vpop.f32.mrf.mxu0
        %v1733 = vadd.f32 %v1385, %v1732
        %v1734 = vand.u32 %v532, 4294901760
        %v1735 = vsub.f32 %v532, %v1734
        %1736 = vmatmul.f32.gmra.mxu0 %v1735
        %v1737 = vpop.f32.mrf.mxu0
        %v1738 = vadd.f32 %v1389, %v1737
        %v1739 = vand.u32 %v533, 4294901760
        %v1740 = vsub.f32 %v533, %v1739
        %1741 = vmatmul.f32.gmra.mxu0 %v1740
        %v1742 = vpop.f32.mrf.mxu0
        %v1743 = vadd.f32 %v1393, %v1742
        %v1744 = vand.u32 %v534, 4294901760
        %v1745 = vsub.f32 %v534, %v1744
        %1746 = vmatmul.f32.gmra.mxu0 %v1745
        %v1747 = vpop.f32.mrf.mxu0
        %v1748 = vadd.f32 %v1397, %v1747
        %v1749 = vand.u32 %v535, 4294901760
        %v1750 = vsub.f32 %v535, %v1749
        %1751 = vmatmul.f32.gmra.mxu0 %v1750
        %v1752 = vpop.f32.mrf.mxu0
        %v1753 = vadd.f32 %v1401, %v1752
        %v1754 = vand.u32 %v536, 4294901760
        %v1755 = vsub.f32 %v536, %v1754
        %1756 = vmatmul.f32.gmra.mxu0 %v1755
        %v1757 = vpop.f32.mrf.mxu0
        %v1758 = vadd.f32 %v1405, %v1757
        %v1759 = vand.u32 %v537, 4294901760
        %v1760 = vsub.f32 %v537, %v1759
        %1761 = vmatmul.f32.gmra.mxu0 %v1760
        %v1762 = vpop.f32.mrf.mxu0
        %v1763 = vadd.f32 %v1409, %v1762
        %v1764 = vand.u32 %v538, 4294901760
        %v1765 = vsub.f32 %v538, %v1764
        %1766 = vmatmul.f32.gmra.mxu0 %v1765
        %v1767 = vpop.f32.mrf.mxu0
        %v1768 = vadd.f32 %v1413, %v1767
        %v1769 = vand.u32 %v539, 4294901760
        %v1770 = vsub.f32 %v539, %v1769
        %1771 = vmatmul.f32.gmra.mxu0 %v1770
        %v1772 = vpop.f32.mrf.mxu0
        %v1773 = vadd.f32 %v1417, %v1772
        %v1774 = vand.u32 %v540, 4294901760
        %v1775 = vsub.f32 %v540, %v1774
        %1776 = vmatmul.f32.gmra.mxu0 %v1775
        %v1777 = vpop.f32.mrf.mxu0
        %v1778 = vadd.f32 %v1421, %v1777
        %v1779 = vand.u32 %v541, 4294901760
        %v1780 = vsub.f32 %v541, %v1779
        %1781 = vmatmul.f32.gmra.mxu0 %v1780
        %v1782 = vpop.f32.mrf.mxu0
        %v1783 = vadd.f32 %v1425, %v1782
        %v1784 = vand.u32 %v542, 4294901760
        %v1785 = vsub.f32 %v542, %v1784
        %1786 = vmatmul.f32.gmra.mxu0 %v1785
        %v1787 = vpop.f32.mrf.mxu0
        %v1788 = vadd.f32 %v1429, %v1787
        %v1789 = vand.u32 %v543, 4294901760
        %v1790 = vsub.f32 %v543, %v1789
        %1791 = vmatmul.f32.gmra.mxu0 %v1790
        %v1792 = vpop.f32.mrf.mxu0
        %v1793 = vadd.f32 %v1433, %v1792
        %v1794 = vand.u32 %v544, 4294901760
        %v1795 = vsub.f32 %v544, %v1794
        %1796 = vmatmul.f32.gmra.mxu0 %v1795
        %v1797 = vpop.f32.mrf.mxu0
        %v1798 = vadd.f32 %v1437, %v1797
        %v1799 = vand.u32 %v545, 4294901760
        %v1800 = vsub.f32 %v545, %v1799
        %1801 = vmatmul.f32.gmra.mxu0 %v1800
        %v1802 = vpop.f32.mrf.mxu0
        %v1803 = vadd.f32 %v1441, %v1802
        %v1804 = vand.u32 %v546, 4294901760
        %v1805 = vsub.f32 %v546, %v1804
        %1806 = vmatmul.f32.gmra.mxu0 %v1805
        %v1807 = vpop.f32.mrf.mxu0
        %v1808 = vadd.f32 %v1445, %v1807
        %v1809 = vand.u32 %v547, 4294901760
        %v1810 = vsub.f32 %v547, %v1809
        %1811 = vmatmul.f32.gmra.mxu0 %v1810
        %v1812 = vpop.f32.mrf.mxu0
        %v1813 = vadd.f32 %v1449, %v1812
        %v1814 = vand.u32 %v548, 4294901760
        %v1815 = vsub.f32 %v548, %v1814
        %1816 = vmatmul.f32.gmra.mxu0 %v1815
        %v1817 = vpop.f32.mrf.mxu0
        %v1818 = vadd.f32 %v1453, %v1817
        %v1819 = vand.u32 %v549, 4294901760
        %v1820 = vsub.f32 %v549, %v1819
        %1821 = vmatmul.f32.gmra.mxu0 %v1820
        %v1822 = vpop.f32.mrf.mxu0
        %v1823 = vadd.f32 %v1457, %v1822
        %v1824 = vand.u32 %v550, 4294901760
        %v1825 = vsub.f32 %v550, %v1824
        %1826 = vmatmul.f32.gmra.mxu0 %v1825
        %v1827 = vpop.f32.mrf.mxu0
        %v1828 = vadd.f32 %v1461, %v1827
        %v1829 = vand.u32 %v551, 4294901760
        %v1830 = vsub.f32 %v551, %v1829
        %1831 = vmatmul.f32.gmra.mxu0 %v1830
        %v1832 = vpop.f32.mrf.mxu0
        %v1833 = vadd.f32 %v1465, %v1832
        %v1834 = vand.u32 %v552, 4294901760
        %v1835 = vsub.f32 %v552, %v1834
        %1836 = vmatmul.f32.gmra.mxu0 %v1835
        %v1837 = vpop.f32.mrf.mxu0
        %v1838 = vadd.f32 %v1469, %v1837
        %1839 = vdwg.mxu0
        %v1840 = vand.u32 %v568, 4294901760
        %1841 = vmatpush.msra.mxu0 %v1840
        %v1842 = vand.u32 %v567, 4294901760
        %1843 = vmatpush.msra.mxu0 %v1842
        %v1844 = vand.u32 %v566, 4294901760
        %1845 = vmatpush.msra.mxu0 %v1844
        %v1846 = vand.u32 %v565, 4294901760
        %1847 = vmatpush.msra.mxu0 %v1846
        %v1848 = vand.u32 %v564, 4294901760
        %1849 = vmatpush.msra.mxu0 %v1848
        %v1850 = vand.u32 %v563, 4294901760
        %1851 = vmatpush.msra.mxu0 %v1850
        %v1852 = vand.u32 %v562, 4294901760
        %1853 = vmatpush.msra.mxu0 %v1852
        %v1854 = vand.u32 %v561, 4294901760
        %1855 = vmatpush.msra.mxu0 %v1854
        %v1856 = vand.u32 %v560, 4294901760
        %1857 = vmatpush.msra.mxu0 %v1856
        %v1858 = vand.u32 %v559, 4294901760
        %1859 = vmatpush.msra.mxu0 %v1858
        %v1860 = vand.u32 %v558, 4294901760
        %1861 = vmatpush.msra.mxu0 %v1860
        %v1862 = vand.u32 %v557, 4294901760
        %1863 = vmatpush.msra.mxu0 %v1862
        %v1864 = vand.u32 %v556, 4294901760
        %1865 = vmatpush.msra.mxu0 %v1864
        %v1866 = vand.u32 %v555, 4294901760
        %1867 = vmatpush.msra.mxu0 %v1866
        %v1868 = vand.u32 %v554, 4294901760
        %1869 = vmatpush.msra.mxu0 %v1868
        %v1870 = vand.u32 %v553, 4294901760
        %1871 = vmatpush.msra.mxu0 %v1870
        %v1872 = vand.u32 %v489, 4294901760
        %v1873 = vsub.f32 %v489, %v1872
        %v1874 = vand.u32 %v1873, 4294901760
        %1875 = vmatmul.f32.gmra.mxu0 %v1874
        %v1876 = vpop.f32.mrf.mxu0
        %v1877 = vadd.f32 %v1523, %v1876
        %v1878 = vand.u32 %v490, 4294901760
        %v1879 = vsub.f32 %v490, %v1878
        %v1880 = vand.u32 %v1879, 4294901760
        %1881 = vmatmul.f32.gmra.mxu0 %v1880
        %v1882 = vpop.f32.mrf.mxu0
        %v1883 = vadd.f32 %v1528, %v1882
        %v1884 = vand.u32 %v491, 4294901760
        %v1885 = vsub.f32 %v491, %v1884
        %v1886 = vand.u32 %v1885, 4294901760
        %1887 = vmatmul.f32.gmra.mxu0 %v1886
        %v1888 = vpop.f32.mrf.mxu0
        %v1889 = vadd.f32 %v1533, %v1888
        %v1890 = vand.u32 %v492, 4294901760
        %v1891 = vsub.f32 %v492, %v1890
        %v1892 = vand.u32 %v1891, 4294901760
        %1893 = vmatmul.f32.gmra.mxu0 %v1892
        %v1894 = vpop.f32.mrf.mxu0
        %v1895 = vadd.f32 %v1538, %v1894
        %v1896 = vand.u32 %v493, 4294901760
        %v1897 = vsub.f32 %v493, %v1896
        %v1898 = vand.u32 %v1897, 4294901760
        %1899 = vmatmul.f32.gmra.mxu0 %v1898
        %v1900 = vpop.f32.mrf.mxu0
        %v1901 = vadd.f32 %v1543, %v1900
        %v1902 = vand.u32 %v494, 4294901760
        %v1903 = vsub.f32 %v494, %v1902
        %v1904 = vand.u32 %v1903, 4294901760
        %1905 = vmatmul.f32.gmra.mxu0 %v1904
        %v1906 = vpop.f32.mrf.mxu0
        %v1907 = vadd.f32 %v1548, %v1906
        %v1908 = vand.u32 %v495, 4294901760
        %v1909 = vsub.f32 %v495, %v1908
        %v1910 = vand.u32 %v1909, 4294901760
        %1911 = vmatmul.f32.gmra.mxu0 %v1910
        %v1912 = vpop.f32.mrf.mxu0
        %v1913 = vadd.f32 %v1553, %v1912
        %v1914 = vand.u32 %v496, 4294901760
        %v1915 = vsub.f32 %v496, %v1914
        %v1916 = vand.u32 %v1915, 4294901760
        %1917 = vmatmul.f32.gmra.mxu0 %v1916
        %v1918 = vpop.f32.mrf.mxu0
        %v1919 = vadd.f32 %v1558, %v1918
        %v1920 = vand.u32 %v497, 4294901760
        %v1921 = vsub.f32 %v497, %v1920
        %v1922 = vand.u32 %v1921, 4294901760
        %1923 = vmatmul.f32.gmra.mxu0 %v1922
        %v1924 = vpop.f32.mrf.mxu0
        %v1925 = vadd.f32 %v1563, %v1924
        %v1926 = vand.u32 %v498, 4294901760
        %v1927 = vsub.f32 %v498, %v1926
        %v1928 = vand.u32 %v1927, 4294901760
        %1929 = vmatmul.f32.gmra.mxu0 %v1928
        %v1930 = vpop.f32.mrf.mxu0
        %v1931 = vadd.f32 %v1568, %v1930
        %v1932 = vand.u32 %v499, 4294901760
        %v1933 = vsub.f32 %v499, %v1932
        %v1934 = vand.u32 %v1933, 4294901760
        %1935 = vmatmul.f32.gmra.mxu0 %v1934
        %v1936 = vpop.f32.mrf.mxu0
        %v1937 = vadd.f32 %v1573, %v1936
        %v1938 = vand.u32 %v500, 4294901760
        %v1939 = vsub.f32 %v500, %v1938
        %v1940 = vand.u32 %v1939, 4294901760
        %1941 = vmatmul.f32.gmra.mxu0 %v1940
        %v1942 = vpop.f32.mrf.mxu0
        %v1943 = vadd.f32 %v1578, %v1942
        %v1944 = vand.u32 %v501, 4294901760
        %v1945 = vsub.f32 %v501, %v1944
        %v1946 = vand.u32 %v1945, 4294901760
        %1947 = vmatmul.f32.gmra.mxu0 %v1946
        %v1948 = vpop.f32.mrf.mxu0
        %v1949 = vadd.f32 %v1583, %v1948
        %v1950 = vand.u32 %v502, 4294901760
        %v1951 = vsub.f32 %v502, %v1950
        %v1952 = vand.u32 %v1951, 4294901760
        %1953 = vmatmul.f32.gmra.mxu0 %v1952
        %v1954 = vpop.f32.mrf.mxu0
        %v1955 = vadd.f32 %v1588, %v1954
        %v1956 = vand.u32 %v503, 4294901760
        %v1957 = vsub.f32 %v503, %v1956
        %v1958 = vand.u32 %v1957, 4294901760
        %1959 = vmatmul.f32.gmra.mxu0 %v1958
        %v1960 = vpop.f32.mrf.mxu0
        %v1961 = vadd.f32 %v1593, %v1960
        %v1962 = vand.u32 %v504, 4294901760
        %v1963 = vsub.f32 %v504, %v1962
        %v1964 = vand.u32 %v1963, 4294901760
        %1965 = vmatmul.f32.gmra.mxu0 %v1964
        %v1966 = vpop.f32.mrf.mxu0
        %v1967 = vadd.f32 %v1598, %v1966
        %v1968 = vand.u32 %v505, 4294901760
        %v1969 = vsub.f32 %v505, %v1968
        %v1970 = vand.u32 %v1969, 4294901760
        %1971 = vmatmul.f32.gmra.mxu0 %v1970
        %v1972 = vpop.f32.mrf.mxu0
        %v1973 = vadd.f32 %v1603, %v1972
        %v1974 = vand.u32 %v506, 4294901760
        %v1975 = vsub.f32 %v506, %v1974
        %v1976 = vand.u32 %v1975, 4294901760
        %1977 = vmatmul.f32.gmra.mxu0 %v1976
        %v1978 = vpop.f32.mrf.mxu0
        %v1979 = vadd.f32 %v1608, %v1978
        %v1980 = vand.u32 %v507, 4294901760
        %v1981 = vsub.f32 %v507, %v1980
        %v1982 = vand.u32 %v1981, 4294901760
        %1983 = vmatmul.f32.gmra.mxu0 %v1982
        %v1984 = vpop.f32.mrf.mxu0
        %v1985 = vadd.f32 %v1613, %v1984
        %v1986 = vand.u32 %v508, 4294901760
        %v1987 = vsub.f32 %v508, %v1986
        %v1988 = vand.u32 %v1987, 4294901760
        %1989 = vmatmul.f32.gmra.mxu0 %v1988
        %v1990 = vpop.f32.mrf.mxu0
        %v1991 = vadd.f32 %v1618, %v1990
        %v1992 = vand.u32 %v509, 4294901760
        %v1993 = vsub.f32 %v509, %v1992
        %v1994 = vand.u32 %v1993, 4294901760
        %1995 = vmatmul.f32.gmra.mxu0 %v1994
        %v1996 = vpop.f32.mrf.mxu0
        %v1997 = vadd.f32 %v1623, %v1996
        %v1998 = vand.u32 %v510, 4294901760
        %v1999 = vsub.f32 %v510, %v1998
        %v2000 = vand.u32 %v1999, 4294901760
        %2001 = vmatmul.f32.gmra.mxu0 %v2000
        %v2002 = vpop.f32.mrf.mxu0
        %v2003 = vadd.f32 %v1628, %v2002
        %v2004 = vand.u32 %v511, 4294901760
        %v2005 = vsub.f32 %v511, %v2004
        %v2006 = vand.u32 %v2005, 4294901760
        %2007 = vmatmul.f32.gmra.mxu0 %v2006
        %v2008 = vpop.f32.mrf.mxu0
        %v2009 = vadd.f32 %v1633, %v2008
        %v2010 = vand.u32 %v512, 4294901760
        %v2011 = vsub.f32 %v512, %v2010
        %v2012 = vand.u32 %v2011, 4294901760
        %2013 = vmatmul.f32.gmra.mxu0 %v2012
        %v2014 = vpop.f32.mrf.mxu0
        %v2015 = vadd.f32 %v1638, %v2014
        %v2016 = vand.u32 %v513, 4294901760
        %v2017 = vsub.f32 %v513, %v2016
        %v2018 = vand.u32 %v2017, 4294901760
        %2019 = vmatmul.f32.gmra.mxu0 %v2018
        %v2020 = vpop.f32.mrf.mxu0
        %v2021 = vadd.f32 %v1643, %v2020
        %v2022 = vand.u32 %v514, 4294901760
        %v2023 = vsub.f32 %v514, %v2022
        %v2024 = vand.u32 %v2023, 4294901760
        %2025 = vmatmul.f32.gmra.mxu0 %v2024
        %v2026 = vpop.f32.mrf.mxu0
        %v2027 = vadd.f32 %v1648, %v2026
        %v2028 = vand.u32 %v515, 4294901760
        %v2029 = vsub.f32 %v515, %v2028
        %v2030 = vand.u32 %v2029, 4294901760
        %2031 = vmatmul.f32.gmra.mxu0 %v2030
        %v2032 = vpop.f32.mrf.mxu0
        %v2033 = vadd.f32 %v1653, %v2032
        %v2034 = vand.u32 %v516, 4294901760
        %v2035 = vsub.f32 %v516, %v2034
        %v2036 = vand.u32 %v2035, 4294901760
        %2037 = vmatmul.f32.gmra.mxu0 %v2036
        %v2038 = vpop.f32.mrf.mxu0
        %v2039 = vadd.f32 %v1658, %v2038
        %v2040 = vand.u32 %v517, 4294901760
        %v2041 = vsub.f32 %v517, %v2040
        %v2042 = vand.u32 %v2041, 4294901760
        %2043 = vmatmul.f32.gmra.mxu0 %v2042
        %v2044 = vpop.f32.mrf.mxu0
        %v2045 = vadd.f32 %v1663, %v2044
        %v2046 = vand.u32 %v518, 4294901760
        %v2047 = vsub.f32 %v518, %v2046
        %v2048 = vand.u32 %v2047, 4294901760
        %2049 = vmatmul.f32.gmra.mxu0 %v2048
        %v2050 = vpop.f32.mrf.mxu0
        %v2051 = vadd.f32 %v1668, %v2050
        %v2052 = vand.u32 %v519, 4294901760
        %v2053 = vsub.f32 %v519, %v2052
        %v2054 = vand.u32 %v2053, 4294901760
        %2055 = vmatmul.f32.gmra.mxu0 %v2054
        %v2056 = vpop.f32.mrf.mxu0
        %v2057 = vadd.f32 %v1673, %v2056
        %v2058 = vand.u32 %v520, 4294901760
        %v2059 = vsub.f32 %v520, %v2058
        %v2060 = vand.u32 %v2059, 4294901760
        %2061 = vmatmul.f32.gmra.mxu0 %v2060
        %v2062 = vpop.f32.mrf.mxu0
        %v2063 = vadd.f32 %v1678, %v2062
        %v2064 = vand.u32 %v521, 4294901760
        %v2065 = vsub.f32 %v521, %v2064
        %v2066 = vand.u32 %v2065, 4294901760
        %2067 = vmatmul.f32.gmra.mxu0 %v2066
        %v2068 = vpop.f32.mrf.mxu0
        %v2069 = vadd.f32 %v1683, %v2068
        %v2070 = vand.u32 %v522, 4294901760
        %v2071 = vsub.f32 %v522, %v2070
        %v2072 = vand.u32 %v2071, 4294901760
        %2073 = vmatmul.f32.gmra.mxu0 %v2072
        %v2074 = vpop.f32.mrf.mxu0
        %v2075 = vadd.f32 %v1688, %v2074
        %v2076 = vand.u32 %v523, 4294901760
        %v2077 = vsub.f32 %v523, %v2076
        %v2078 = vand.u32 %v2077, 4294901760
        %2079 = vmatmul.f32.gmra.mxu0 %v2078
        %v2080 = vpop.f32.mrf.mxu0
        %v2081 = vadd.f32 %v1693, %v2080
        %v2082 = vand.u32 %v524, 4294901760
        %v2083 = vsub.f32 %v524, %v2082
        %v2084 = vand.u32 %v2083, 4294901760
        %2085 = vmatmul.f32.gmra.mxu0 %v2084
        %v2086 = vpop.f32.mrf.mxu0
        %v2087 = vadd.f32 %v1698, %v2086
        %v2088 = vand.u32 %v525, 4294901760
        %v2089 = vsub.f32 %v525, %v2088
        %v2090 = vand.u32 %v2089, 4294901760
        %2091 = vmatmul.f32.gmra.mxu0 %v2090
        %v2092 = vpop.f32.mrf.mxu0
        %v2093 = vadd.f32 %v1703, %v2092
        %v2094 = vand.u32 %v526, 4294901760
        %v2095 = vsub.f32 %v526, %v2094
        %v2096 = vand.u32 %v2095, 4294901760
        %2097 = vmatmul.f32.gmra.mxu0 %v2096
        %v2098 = vpop.f32.mrf.mxu0
        %v2099 = vadd.f32 %v1708, %v2098
        %v2100 = vand.u32 %v527, 4294901760
        %v2101 = vsub.f32 %v527, %v2100
        %v2102 = vand.u32 %v2101, 4294901760
        %2103 = vmatmul.f32.gmra.mxu0 %v2102
        %v2104 = vpop.f32.mrf.mxu0
        %v2105 = vadd.f32 %v1713, %v2104
        %v2106 = vand.u32 %v528, 4294901760
        %v2107 = vsub.f32 %v528, %v2106
        %v2108 = vand.u32 %v2107, 4294901760
        %2109 = vmatmul.f32.gmra.mxu0 %v2108
        %v2110 = vpop.f32.mrf.mxu0
        %v2111 = vadd.f32 %v1718, %v2110
        %v2112 = vand.u32 %v529, 4294901760
        %v2113 = vsub.f32 %v529, %v2112
        %v2114 = vand.u32 %v2113, 4294901760
        %2115 = vmatmul.f32.gmra.mxu0 %v2114
        %v2116 = vpop.f32.mrf.mxu0
        %v2117 = vadd.f32 %v1723, %v2116
        %v2118 = vand.u32 %v530, 4294901760
        %v2119 = vsub.f32 %v530, %v2118
        %v2120 = vand.u32 %v2119, 4294901760
        %2121 = vmatmul.f32.gmra.mxu0 %v2120
        %v2122 = vpop.f32.mrf.mxu0
        %v2123 = vadd.f32 %v1728, %v2122
        %v2124 = vand.u32 %v531, 4294901760
        %v2125 = vsub.f32 %v531, %v2124
        %v2126 = vand.u32 %v2125, 4294901760
        %2127 = vmatmul.f32.gmra.mxu0 %v2126
        %v2128 = vpop.f32.mrf.mxu0
        %v2129 = vadd.f32 %v1733, %v2128
        %v2130 = vand.u32 %v532, 4294901760
        %v2131 = vsub.f32 %v532, %v2130
        %v2132 = vand.u32 %v2131, 4294901760
        %2133 = vmatmul.f32.gmra.mxu0 %v2132
        %v2134 = vpop.f32.mrf.mxu0
        %v2135 = vadd.f32 %v1738, %v2134
        %v2136 = vand.u32 %v533, 4294901760
        %v2137 = vsub.f32 %v533, %v2136
        %v2138 = vand.u32 %v2137, 4294901760
        %2139 = vmatmul.f32.gmra.mxu0 %v2138
        %v2140 = vpop.f32.mrf.mxu0
        %v2141 = vadd.f32 %v1743, %v2140
        %v2142 = vand.u32 %v534, 4294901760
        %v2143 = vsub.f32 %v534, %v2142
        %v2144 = vand.u32 %v2143, 4294901760
        %2145 = vmatmul.f32.gmra.mxu0 %v2144
        %v2146 = vpop.f32.mrf.mxu0
        %v2147 = vadd.f32 %v1748, %v2146
        %v2148 = vand.u32 %v535, 4294901760
        %v2149 = vsub.f32 %v535, %v2148
        %v2150 = vand.u32 %v2149, 4294901760
        %2151 = vmatmul.f32.gmra.mxu0 %v2150
        %v2152 = vpop.f32.mrf.mxu0
        %v2153 = vadd.f32 %v1753, %v2152
        %v2154 = vand.u32 %v536, 4294901760
        %v2155 = vsub.f32 %v536, %v2154
        %v2156 = vand.u32 %v2155, 4294901760
        %2157 = vmatmul.f32.gmra.mxu0 %v2156
        %v2158 = vpop.f32.mrf.mxu0
        %v2159 = vadd.f32 %v1758, %v2158
        %v2160 = vand.u32 %v537, 4294901760
        %v2161 = vsub.f32 %v537, %v2160
        %v2162 = vand.u32 %v2161, 4294901760
        %2163 = vmatmul.f32.gmra.mxu0 %v2162
        %v2164 = vpop.f32.mrf.mxu0
        %v2165 = vadd.f32 %v1763, %v2164
        %v2166 = vand.u32 %v538, 4294901760
        %v2167 = vsub.f32 %v538, %v2166
        %v2168 = vand.u32 %v2167, 4294901760
        %2169 = vmatmul.f32.gmra.mxu0 %v2168
        %v2170 = vpop.f32.mrf.mxu0
        %v2171 = vadd.f32 %v1768, %v2170
        %v2172 = vand.u32 %v539, 4294901760
        %v2173 = vsub.f32 %v539, %v2172
        %v2174 = vand.u32 %v2173, 4294901760
        %2175 = vmatmul.f32.gmra.mxu0 %v2174
        %v2176 = vpop.f32.mrf.mxu0
        %v2177 = vadd.f32 %v1773, %v2176
        %v2178 = vand.u32 %v540, 4294901760
        %v2179 = vsub.f32 %v540, %v2178
        %v2180 = vand.u32 %v2179, 4294901760
        %2181 = vmatmul.f32.gmra.mxu0 %v2180
        %v2182 = vpop.f32.mrf.mxu0
        %v2183 = vadd.f32 %v1778, %v2182
        %v2184 = vand.u32 %v541, 4294901760
        %v2185 = vsub.f32 %v541, %v2184
        %v2186 = vand.u32 %v2185, 4294901760
        %2187 = vmatmul.f32.gmra.mxu0 %v2186
        %v2188 = vpop.f32.mrf.mxu0
        %v2189 = vadd.f32 %v1783, %v2188
        %v2190 = vand.u32 %v542, 4294901760
        %v2191 = vsub.f32 %v542, %v2190
        %v2192 = vand.u32 %v2191, 4294901760
        %2193 = vmatmul.f32.gmra.mxu0 %v2192
        %v2194 = vpop.f32.mrf.mxu0
        %v2195 = vadd.f32 %v1788, %v2194
        %v2196 = vand.u32 %v543, 4294901760
        %v2197 = vsub.f32 %v543, %v2196
        %v2198 = vand.u32 %v2197, 4294901760
        %2199 = vmatmul.f32.gmra.mxu0 %v2198
        %v2200 = vpop.f32.mrf.mxu0
        %v2201 = vadd.f32 %v1793, %v2200
        %v2202 = vand.u32 %v544, 4294901760
        %v2203 = vsub.f32 %v544, %v2202
        %v2204 = vand.u32 %v2203, 4294901760
        %2205 = vmatmul.f32.gmra.mxu0 %v2204
        %v2206 = vpop.f32.mrf.mxu0
        %v2207 = vadd.f32 %v1798, %v2206
        %v2208 = vand.u32 %v545, 4294901760
        %v2209 = vsub.f32 %v545, %v2208
        %v2210 = vand.u32 %v2209, 4294901760
        %2211 = vmatmul.f32.gmra.mxu0 %v2210
        %v2212 = vpop.f32.mrf.mxu0
        %v2213 = vadd.f32 %v1803, %v2212
        %v2214 = vand.u32 %v546, 4294901760
        %v2215 = vsub.f32 %v546, %v2214
        %v2216 = vand.u32 %v2215, 4294901760
        %2217 = vmatmul.f32.gmra.mxu0 %v2216
        %v2218 = vpop.f32.mrf.mxu0
        %v2219 = vadd.f32 %v1808, %v2218
        %v2220 = vand.u32 %v547, 4294901760
        %v2221 = vsub.f32 %v547, %v2220
        %v2222 = vand.u32 %v2221, 4294901760
        %2223 = vmatmul.f32.gmra.mxu0 %v2222
        %v2224 = vpop.f32.mrf.mxu0
        %v2225 = vadd.f32 %v1813, %v2224
        %v2226 = vand.u32 %v548, 4294901760
        %v2227 = vsub.f32 %v548, %v2226
        %v2228 = vand.u32 %v2227, 4294901760
        %2229 = vmatmul.f32.gmra.mxu0 %v2228
        %v2230 = vpop.f32.mrf.mxu0
        %v2231 = vadd.f32 %v1818, %v2230
        %v2232 = vand.u32 %v549, 4294901760
        %v2233 = vsub.f32 %v549, %v2232
        %v2234 = vand.u32 %v2233, 4294901760
        %2235 = vmatmul.f32.gmra.mxu0 %v2234
        %v2236 = vpop.f32.mrf.mxu0
        %v2237 = vadd.f32 %v1823, %v2236
        %v2238 = vand.u32 %v550, 4294901760
        %v2239 = vsub.f32 %v550, %v2238
        %v2240 = vand.u32 %v2239, 4294901760
        %2241 = vmatmul.f32.gmra.mxu0 %v2240
        %v2242 = vpop.f32.mrf.mxu0
        %v2243 = vadd.f32 %v1828, %v2242
        %v2244 = vand.u32 %v551, 4294901760
        %v2245 = vsub.f32 %v551, %v2244
        %v2246 = vand.u32 %v2245, 4294901760
        %2247 = vmatmul.f32.gmra.mxu0 %v2246
        %v2248 = vpop.f32.mrf.mxu0
        %v2249 = vadd.f32 %v1833, %v2248
        %v2250 = vand.u32 %v552, 4294901760
        %v2251 = vsub.f32 %v552, %v2250
        %v2252 = vand.u32 %v2251, 4294901760
        %2253 = vmatmul.f32.gmra.mxu0 %v2252
        %v2254 = vpop.f32.mrf.mxu0
        %v2255 = vadd.f32 %v1838, %v2254
        %2256 = vdwg.mxu0
        %v2257 = vand.u32 %v568, 4294901760
        %v2258 = vsub.f32 %v568, %v2257
        %v2259 = vand.u32 %v2258, 4294901760
        %2260 = vmatpush.msra.mxu0 %v2259
        %v2261 = vand.u32 %v567, 4294901760
        %v2262 = vsub.f32 %v567, %v2261
        %v2263 = vand.u32 %v2262, 4294901760
        %2264 = vmatpush.msra.mxu0 %v2263
        %v2265 = vand.u32 %v566, 4294901760
        %v2266 = vsub.f32 %v566, %v2265
        %v2267 = vand.u32 %v2266, 4294901760
        %2268 = vmatpush.msra.mxu0 %v2267
        %v2269 = vand.u32 %v565, 4294901760
        %v2270 = vsub.f32 %v565, %v2269
        %v2271 = vand.u32 %v2270, 4294901760
        %2272 = vmatpush.msra.mxu0 %v2271
        %v2273 = vand.u32 %v564, 4294901760
        %v2274 = vsub.f32 %v564, %v2273
        %v2275 = vand.u32 %v2274, 4294901760
        %2276 = vmatpush.msra.mxu0 %v2275
        %v2277 = vand.u32 %v563, 4294901760
        %v2278 = vsub.f32 %v563, %v2277
        %v2279 = vand.u32 %v2278, 4294901760
        %2280 = vmatpush.msra.mxu0 %v2279
        %v2281 = vand.u32 %v562, 4294901760
        %v2282 = vsub.f32 %v562, %v2281
        %v2283 = vand.u32 %v2282, 4294901760
        %2284 = vmatpush.msra.mxu0 %v2283
        %v2285 = vand.u32 %v561, 4294901760
        %v2286 = vsub.f32 %v561, %v2285
        %v2287 = vand.u32 %v2286, 4294901760
        %2288 = vmatpush.msra.mxu0 %v2287
        %v2289 = vand.u32 %v560, 4294901760
        %v2290 = vsub.f32 %v560, %v2289
        %v2291 = vand.u32 %v2290, 4294901760
        %2292 = vmatpush.msra.mxu0 %v2291
        %v2293 = vand.u32 %v559, 4294901760
        %v2294 = vsub.f32 %v559, %v2293
        %v2295 = vand.u32 %v2294, 4294901760
        %2296 = vmatpush.msra.mxu0 %v2295
        %v2297 = vand.u32 %v558, 4294901760
        %v2298 = vsub.f32 %v558, %v2297
        %v2299 = vand.u32 %v2298, 4294901760
        %2300 = vmatpush.msra.mxu0 %v2299
        %v2301 = vand.u32 %v557, 4294901760
        %v2302 = vsub.f32 %v557, %v2301
        %v2303 = vand.u32 %v2302, 4294901760
        %2304 = vmatpush.msra.mxu0 %v2303
        %v2305 = vand.u32 %v556, 4294901760
        %v2306 = vsub.f32 %v556, %v2305
        %v2307 = vand.u32 %v2306, 4294901760
        %2308 = vmatpush.msra.mxu0 %v2307
        %v2309 = vand.u32 %v555, 4294901760
        %v2310 = vsub.f32 %v555, %v2309
        %v2311 = vand.u32 %v2310, 4294901760
        %2312 = vmatpush.msra.mxu0 %v2311
        %v2313 = vand.u32 %v554, 4294901760
        %v2314 = vsub.f32 %v554, %v2313
        %v2315 = vand.u32 %v2314, 4294901760
        %2316 = vmatpush.msra.mxu0 %v2315
        %v2317 = vand.u32 %v553, 4294901760
        %v2318 = vsub.f32 %v553, %v2317
        %v2319 = vand.u32 %v2318, 4294901760
        %2320 = vmatpush.msra.mxu0 %v2319
        %v2321 = vand.u32 %v489, 4294901760
        %2322 = vmatmul.f32.gmra.mxu0 %v2321
        %v2323 = vpop.f32.mrf.mxu0
        %v2324 = vadd.f32 %v1877, %v2323
        %v2325 = vand.u32 %v490, 4294901760
        %2326 = vmatmul.f32.gmra.mxu0 %v2325
        %v2327 = vpop.f32.mrf.mxu0
        %v2328 = vadd.f32 %v1883, %v2327
        %v2329 = vand.u32 %v491, 4294901760
        %2330 = vmatmul.f32.gmra.mxu0 %v2329
        %v2331 = vpop.f32.mrf.mxu0
        %v2332 = vadd.f32 %v1889, %v2331
        %v2333 = vand.u32 %v492, 4294901760
        %2334 = vmatmul.f32.gmra.mxu0 %v2333
        %v2335 = vpop.f32.mrf.mxu0
        %v2336 = vadd.f32 %v1895, %v2335
        %v2337 = vand.u32 %v493, 4294901760
        %2338 = vmatmul.f32.gmra.mxu0 %v2337
        %v2339 = vpop.f32.mrf.mxu0
        %v2340 = vadd.f32 %v1901, %v2339
        %v2341 = vand.u32 %v494, 4294901760
        %2342 = vmatmul.f32.gmra.mxu0 %v2341
        %v2343 = vpop.f32.mrf.mxu0
        %v2344 = vadd.f32 %v1907, %v2343
        %v2345 = vand.u32 %v495, 4294901760
        %2346 = vmatmul.f32.gmra.mxu0 %v2345
        %v2347 = vpop.f32.mrf.mxu0
        %v2348 = vadd.f32 %v1913, %v2347
        %v2349 = vand.u32 %v496, 4294901760
        %2350 = vmatmul.f32.gmra.mxu0 %v2349
        %v2351 = vpop.f32.mrf.mxu0
        %v2352 = vadd.f32 %v1919, %v2351
        %v2353 = vand.u32 %v497, 4294901760
        %2354 = vmatmul.f32.gmra.mxu0 %v2353
        %v2355 = vpop.f32.mrf.mxu0
        %v2356 = vadd.f32 %v1925, %v2355
        %v2357 = vand.u32 %v498, 4294901760
        %2358 = vmatmul.f32.gmra.mxu0 %v2357
        %v2359 = vpop.f32.mrf.mxu0
        %v2360 = vadd.f32 %v1931, %v2359
        %v2361 = vand.u32 %v499, 4294901760
        %2362 = vmatmul.f32.gmra.mxu0 %v2361
        %v2363 = vpop.f32.mrf.mxu0
        %v2364 = vadd.f32 %v1937, %v2363
        %v2365 = vand.u32 %v500, 4294901760
        %2366 = vmatmul.f32.gmra.mxu0 %v2365
        %v2367 = vpop.f32.mrf.mxu0
        %v2368 = vadd.f32 %v1943, %v2367
        %v2369 = vand.u32 %v501, 4294901760
        %2370 = vmatmul.f32.gmra.mxu0 %v2369
        %v2371 = vpop.f32.mrf.mxu0
        %v2372 = vadd.f32 %v1949, %v2371
        %v2373 = vand.u32 %v502, 4294901760
        %2374 = vmatmul.f32.gmra.mxu0 %v2373
        %v2375 = vpop.f32.mrf.mxu0
        %v2376 = vadd.f32 %v1955, %v2375
        %v2377 = vand.u32 %v503, 4294901760
        %2378 = vmatmul.f32.gmra.mxu0 %v2377
        %v2379 = vpop.f32.mrf.mxu0
        %v2380 = vadd.f32 %v1961, %v2379
        %v2381 = vand.u32 %v504, 4294901760
        %2382 = vmatmul.f32.gmra.mxu0 %v2381
        %v2383 = vpop.f32.mrf.mxu0
        %v2384 = vadd.f32 %v1967, %v2383
        %v2385 = vand.u32 %v505, 4294901760
        %2386 = vmatmul.f32.gmra.mxu0 %v2385
        %v2387 = vpop.f32.mrf.mxu0
        %v2388 = vadd.f32 %v1973, %v2387
        %v2389 = vand.u32 %v506, 4294901760
        %2390 = vmatmul.f32.gmra.mxu0 %v2389
        %v2391 = vpop.f32.mrf.mxu0
        %v2392 = vadd.f32 %v1979, %v2391
        %v2393 = vand.u32 %v507, 4294901760
        %2394 = vmatmul.f32.gmra.mxu0 %v2393
        %v2395 = vpop.f32.mrf.mxu0
        %v2396 = vadd.f32 %v1985, %v2395
        %v2397 = vand.u32 %v508, 4294901760
        %2398 = vmatmul.f32.gmra.mxu0 %v2397
        %v2399 = vpop.f32.mrf.mxu0
        %v2400 = vadd.f32 %v1991, %v2399
        %v2401 = vand.u32 %v509, 4294901760
        %2402 = vmatmul.f32.gmra.mxu0 %v2401
        %v2403 = vpop.f32.mrf.mxu0
        %v2404 = vadd.f32 %v1997, %v2403
        %v2405 = vand.u32 %v510, 4294901760
        %2406 = vmatmul.f32.gmra.mxu0 %v2405
        %v2407 = vpop.f32.mrf.mxu0
        %v2408 = vadd.f32 %v2003, %v2407
        %v2409 = vand.u32 %v511, 4294901760
        %2410 = vmatmul.f32.gmra.mxu0 %v2409
        %v2411 = vpop.f32.mrf.mxu0
        %v2412 = vadd.f32 %v2009, %v2411
        %v2413 = vand.u32 %v512, 4294901760
        %2414 = vmatmul.f32.gmra.mxu0 %v2413
        %v2415 = vpop.f32.mrf.mxu0
        %v2416 = vadd.f32 %v2015, %v2415
        %v2417 = vand.u32 %v513, 4294901760
        %2418 = vmatmul.f32.gmra.mxu0 %v2417
        %v2419 = vpop.f32.mrf.mxu0
        %v2420 = vadd.f32 %v2021, %v2419
        %v2421 = vand.u32 %v514, 4294901760
        %2422 = vmatmul.f32.gmra.mxu0 %v2421
        %v2423 = vpop.f32.mrf.mxu0
        %v2424 = vadd.f32 %v2027, %v2423
        %v2425 = vand.u32 %v515, 4294901760
        %2426 = vmatmul.f32.gmra.mxu0 %v2425
        %v2427 = vpop.f32.mrf.mxu0
        %v2428 = vadd.f32 %v2033, %v2427
        %v2429 = vand.u32 %v516, 4294901760
        %2430 = vmatmul.f32.gmra.mxu0 %v2429
        %v2431 = vpop.f32.mrf.mxu0
        %v2432 = vadd.f32 %v2039, %v2431
        %v2433 = vand.u32 %v517, 4294901760
        %2434 = vmatmul.f32.gmra.mxu0 %v2433
        %v2435 = vpop.f32.mrf.mxu0
        %v2436 = vadd.f32 %v2045, %v2435
        %v2437 = vand.u32 %v518, 4294901760
        %2438 = vmatmul.f32.gmra.mxu0 %v2437
        %v2439 = vpop.f32.mrf.mxu0
        %v2440 = vadd.f32 %v2051, %v2439
        %v2441 = vand.u32 %v519, 4294901760
        %2442 = vmatmul.f32.gmra.mxu0 %v2441
        %v2443 = vpop.f32.mrf.mxu0
        %v2444 = vadd.f32 %v2057, %v2443
        %v2445 = vand.u32 %v520, 4294901760
        %2446 = vmatmul.f32.gmra.mxu0 %v2445
        %v2447 = vpop.f32.mrf.mxu0
        %v2448 = vadd.f32 %v2063, %v2447
        %v2449 = vand.u32 %v521, 4294901760
        %2450 = vmatmul.f32.gmra.mxu0 %v2449
        %v2451 = vpop.f32.mrf.mxu0
        %v2452 = vadd.f32 %v2069, %v2451
        %v2453 = vand.u32 %v522, 4294901760
        %2454 = vmatmul.f32.gmra.mxu0 %v2453
        %v2455 = vpop.f32.mrf.mxu0
        %v2456 = vadd.f32 %v2075, %v2455
        %v2457 = vand.u32 %v523, 4294901760
        %2458 = vmatmul.f32.gmra.mxu0 %v2457
        %v2459 = vpop.f32.mrf.mxu0
        %v2460 = vadd.f32 %v2081, %v2459
        %v2461 = vand.u32 %v524, 4294901760
        %2462 = vmatmul.f32.gmra.mxu0 %v2461
        %v2463 = vpop.f32.mrf.mxu0
        %v2464 = vadd.f32 %v2087, %v2463
        %v2465 = vand.u32 %v525, 4294901760
        %2466 = vmatmul.f32.gmra.mxu0 %v2465
        %v2467 = vpop.f32.mrf.mxu0
        %v2468 = vadd.f32 %v2093, %v2467
        %v2469 = vand.u32 %v526, 4294901760
        %2470 = vmatmul.f32.gmra.mxu0 %v2469
        %v2471 = vpop.f32.mrf.mxu0
        %v2472 = vadd.f32 %v2099, %v2471
        %v2473 = vand.u32 %v527, 4294901760
        %2474 = vmatmul.f32.gmra.mxu0 %v2473
        %v2475 = vpop.f32.mrf.mxu0
        %v2476 = vadd.f32 %v2105, %v2475
        %v2477 = vand.u32 %v528, 4294901760
        %2478 = vmatmul.f32.gmra.mxu0 %v2477
        %v2479 = vpop.f32.mrf.mxu0
        %v2480 = vadd.f32 %v2111, %v2479
        %v2481 = vand.u32 %v529, 4294901760
        %2482 = vmatmul.f32.gmra.mxu0 %v2481
        %v2483 = vpop.f32.mrf.mxu0
        %v2484 = vadd.f32 %v2117, %v2483
        %v2485 = vand.u32 %v530, 4294901760
        %2486 = vmatmul.f32.gmra.mxu0 %v2485
        %v2487 = vpop.f32.mrf.mxu0
        %v2488 = vadd.f32 %v2123, %v2487
        %v2489 = vand.u32 %v531, 4294901760
        %2490 = vmatmul.f32.gmra.mxu0 %v2489
        %v2491 = vpop.f32.mrf.mxu0
        %v2492 = vadd.f32 %v2129, %v2491
        %v2493 = vand.u32 %v532, 4294901760
        %2494 = vmatmul.f32.gmra.mxu0 %v2493
        %v2495 = vpop.f32.mrf.mxu0
        %v2496 = vadd.f32 %v2135, %v2495
        %v2497 = vand.u32 %v533, 4294901760
        %2498 = vmatmul.f32.gmra.mxu0 %v2497
        %v2499 = vpop.f32.mrf.mxu0
        %v2500 = vadd.f32 %v2141, %v2499
        %v2501 = vand.u32 %v534, 4294901760
        %2502 = vmatmul.f32.gmra.mxu0 %v2501
        %v2503 = vpop.f32.mrf.mxu0
        %v2504 = vadd.f32 %v2147, %v2503
        %v2505 = vand.u32 %v535, 4294901760
        %2506 = vmatmul.f32.gmra.mxu0 %v2505
        %v2507 = vpop.f32.mrf.mxu0
        %v2508 = vadd.f32 %v2153, %v2507
        %v2509 = vand.u32 %v536, 4294901760
        %2510 = vmatmul.f32.gmra.mxu0 %v2509
        %v2511 = vpop.f32.mrf.mxu0
        %v2512 = vadd.f32 %v2159, %v2511
        %v2513 = vand.u32 %v537, 4294901760
        %2514 = vmatmul.f32.gmra.mxu0 %v2513
        %v2515 = vpop.f32.mrf.mxu0
        %v2516 = vadd.f32 %v2165, %v2515
        %v2517 = vand.u32 %v538, 4294901760
        %2518 = vmatmul.f32.gmra.mxu0 %v2517
        %v2519 = vpop.f32.mrf.mxu0
        %v2520 = vadd.f32 %v2171, %v2519
        %v2521 = vand.u32 %v539, 4294901760
        %2522 = vmatmul.f32.gmra.mxu0 %v2521
        %v2523 = vpop.f32.mrf.mxu0
        %v2524 = vadd.f32 %v2177, %v2523
        %v2525 = vand.u32 %v540, 4294901760
        %2526 = vmatmul.f32.gmra.mxu0 %v2525
        %v2527 = vpop.f32.mrf.mxu0
        %v2528 = vadd.f32 %v2183, %v2527
        %v2529 = vand.u32 %v541, 4294901760
        %2530 = vmatmul.f32.gmra.mxu0 %v2529
        %v2531 = vpop.f32.mrf.mxu0
        %v2532 = vadd.f32 %v2189, %v2531
        %v2533 = vand.u32 %v542, 4294901760
        %2534 = vmatmul.f32.gmra.mxu0 %v2533
        %v2535 = vpop.f32.mrf.mxu0
        %v2536 = vadd.f32 %v2195, %v2535
        %v2537 = vand.u32 %v543, 4294901760
        %2538 = vmatmul.f32.gmra.mxu0 %v2537
        %v2539 = vpop.f32.mrf.mxu0
        %v2540 = vadd.f32 %v2201, %v2539
        %v2541 = vand.u32 %v544, 4294901760
        %2542 = vmatmul.f32.gmra.mxu0 %v2541
        %v2543 = vpop.f32.mrf.mxu0
        %v2544 = vadd.f32 %v2207, %v2543
        %v2545 = vand.u32 %v545, 4294901760
        %2546 = vmatmul.f32.gmra.mxu0 %v2545
        %v2547 = vpop.f32.mrf.mxu0
        %v2548 = vadd.f32 %v2213, %v2547
        %v2549 = vand.u32 %v546, 4294901760
        %2550 = vmatmul.f32.gmra.mxu0 %v2549
        %v2551 = vpop.f32.mrf.mxu0
        %v2552 = vadd.f32 %v2219, %v2551
        %v2553 = vand.u32 %v547, 4294901760
        %2554 = vmatmul.f32.gmra.mxu0 %v2553
        %v2555 = vpop.f32.mrf.mxu0
        %v2556 = vadd.f32 %v2225, %v2555
        %v2557 = vand.u32 %v548, 4294901760
        %2558 = vmatmul.f32.gmra.mxu0 %v2557
        %v2559 = vpop.f32.mrf.mxu0
        %v2560 = vadd.f32 %v2231, %v2559
        %v2561 = vand.u32 %v549, 4294901760
        %2562 = vmatmul.f32.gmra.mxu0 %v2561
        %v2563 = vpop.f32.mrf.mxu0
        %v2564 = vadd.f32 %v2237, %v2563
        %v2565 = vand.u32 %v550, 4294901760
        %2566 = vmatmul.f32.gmra.mxu0 %v2565
        %v2567 = vpop.f32.mrf.mxu0
        %v2568 = vadd.f32 %v2243, %v2567
        %v2569 = vand.u32 %v551, 4294901760
        %2570 = vmatmul.f32.gmra.mxu0 %v2569
        %v2571 = vpop.f32.mrf.mxu0
        %v2572 = vadd.f32 %v2249, %v2571
        %v2573 = vand.u32 %v552, 4294901760
        %2574 = vmatmul.f32.gmra.mxu0 %v2573
        %v2575 = vpop.f32.mrf.mxu0
        %v2576 = vadd.f32 %v2255, %v2575
        %2577 = vdwg.mxu0
        %v2578 = vand.u32 %v568, 4294901760
        %2579 = vmatpush.msra.mxu0 %v2578
        %v2580 = vand.u32 %v567, 4294901760
        %2581 = vmatpush.msra.mxu0 %v2580
        %v2582 = vand.u32 %v566, 4294901760
        %2583 = vmatpush.msra.mxu0 %v2582
        %v2584 = vand.u32 %v565, 4294901760
        %2585 = vmatpush.msra.mxu0 %v2584
        %v2586 = vand.u32 %v564, 4294901760
        %2587 = vmatpush.msra.mxu0 %v2586
        %v2588 = vand.u32 %v563, 4294901760
        %2589 = vmatpush.msra.mxu0 %v2588
        %v2590 = vand.u32 %v562, 4294901760
        %2591 = vmatpush.msra.mxu0 %v2590
        %v2592 = vand.u32 %v561, 4294901760
        %2593 = vmatpush.msra.mxu0 %v2592
        %v2594 = vand.u32 %v560, 4294901760
        %2595 = vmatpush.msra.mxu0 %v2594
        %v2596 = vand.u32 %v559, 4294901760
        %2597 = vmatpush.msra.mxu0 %v2596
        %v2598 = vand.u32 %v558, 4294901760
        %2599 = vmatpush.msra.mxu0 %v2598
        %v2600 = vand.u32 %v557, 4294901760
        %2601 = vmatpush.msra.mxu0 %v2600
        %v2602 = vand.u32 %v556, 4294901760
        %2603 = vmatpush.msra.mxu0 %v2602
        %v2604 = vand.u32 %v555, 4294901760
        %2605 = vmatpush.msra.mxu0 %v2604
        %v2606 = vand.u32 %v554, 4294901760
        %2607 = vmatpush.msra.mxu0 %v2606
        %v2608 = vand.u32 %v553, 4294901760
        %2609 = vmatpush.msra.mxu0 %v2608
        %v2610 = vand.u32 %v489, 4294901760
        %2611 = vmatmul.f32.gmra.mxu0 %v2610
        %v2612 = vpop.f32.mrf.mxu0
        %v2613 = vadd.f32 %v2324, %v2612
        %v2614 = vand.u32 %v490, 4294901760
        %2615 = vmatmul.f32.gmra.mxu0 %v2614
        %v2616 = vpop.f32.mrf.mxu0
        %v2617 = vadd.f32 %v2328, %v2616
        %v2618 = vand.u32 %v491, 4294901760
        %2619 = vmatmul.f32.gmra.mxu0 %v2618
        %v2620 = vpop.f32.mrf.mxu0
        %v2621 = vadd.f32 %v2332, %v2620
        %v2622 = vand.u32 %v492, 4294901760
        %2623 = vmatmul.f32.gmra.mxu0 %v2622
        %v2624 = vpop.f32.mrf.mxu0
        %v2625 = vadd.f32 %v2336, %v2624
        %v2626 = vand.u32 %v493, 4294901760
        %2627 = vmatmul.f32.gmra.mxu0 %v2626
        %v2628 = vpop.f32.mrf.mxu0
        %v2629 = vadd.f32 %v2340, %v2628
        %v2630 = vand.u32 %v494, 4294901760
        %2631 = vmatmul.f32.gmra.mxu0 %v2630
        %v2632 = vpop.f32.mrf.mxu0
        %v2633 = vadd.f32 %v2344, %v2632
        %v2634 = vand.u32 %v495, 4294901760
        %2635 = vmatmul.f32.gmra.mxu0 %v2634
        %v2636 = vpop.f32.mrf.mxu0
        %v2637 = vadd.f32 %v2348, %v2636
        %v2638 = vand.u32 %v496, 4294901760
        %2639 = vmatmul.f32.gmra.mxu0 %v2638
        %v2640 = vpop.f32.mrf.mxu0
        %v2641 = vadd.f32 %v2352, %v2640
        %v2642 = vand.u32 %v497, 4294901760
        %2643 = vmatmul.f32.gmra.mxu0 %v2642
        %v2644 = vpop.f32.mrf.mxu0
        %v2645 = vadd.f32 %v2356, %v2644
        %v2646 = vand.u32 %v498, 4294901760
        %2647 = vmatmul.f32.gmra.mxu0 %v2646
        %v2648 = vpop.f32.mrf.mxu0
        %v2649 = vadd.f32 %v2360, %v2648
        %v2650 = vand.u32 %v499, 4294901760
        %2651 = vmatmul.f32.gmra.mxu0 %v2650
        %v2652 = vpop.f32.mrf.mxu0
        %v2653 = vadd.f32 %v2364, %v2652
        %v2654 = vand.u32 %v500, 4294901760
        %2655 = vmatmul.f32.gmra.mxu0 %v2654
        %v2656 = vpop.f32.mrf.mxu0
        %v2657 = vadd.f32 %v2368, %v2656
        %v2658 = vand.u32 %v501, 4294901760
        %2659 = vmatmul.f32.gmra.mxu0 %v2658
        %v2660 = vpop.f32.mrf.mxu0
        %v2661 = vadd.f32 %v2372, %v2660
        %v2662 = vand.u32 %v502, 4294901760
        %2663 = vmatmul.f32.gmra.mxu0 %v2662
        %v2664 = vpop.f32.mrf.mxu0
        %v2665 = vadd.f32 %v2376, %v2664
        %v2666 = vand.u32 %v503, 4294901760
        %2667 = vmatmul.f32.gmra.mxu0 %v2666
        %v2668 = vpop.f32.mrf.mxu0
        %v2669 = vadd.f32 %v2380, %v2668
        %v2670 = vand.u32 %v504, 4294901760
        %2671 = vmatmul.f32.gmra.mxu0 %v2670
        %v2672 = vpop.f32.mrf.mxu0
        %v2673 = vadd.f32 %v2384, %v2672
        %v2674 = vand.u32 %v505, 4294901760
        %2675 = vmatmul.f32.gmra.mxu0 %v2674
        %v2676 = vpop.f32.mrf.mxu0
        %v2677 = vadd.f32 %v2388, %v2676
        %v2678 = vand.u32 %v506, 4294901760
        %2679 = vmatmul.f32.gmra.mxu0 %v2678
        %v2680 = vpop.f32.mrf.mxu0
        %v2681 = vadd.f32 %v2392, %v2680
        %v2682 = vand.u32 %v507, 4294901760
        %2683 = vmatmul.f32.gmra.mxu0 %v2682
        %v2684 = vpop.f32.mrf.mxu0
        %v2685 = vadd.f32 %v2396, %v2684
        %v2686 = vand.u32 %v508, 4294901760
        %2687 = vmatmul.f32.gmra.mxu0 %v2686
        %v2688 = vpop.f32.mrf.mxu0
        %v2689 = vadd.f32 %v2400, %v2688
        %v2690 = vand.u32 %v509, 4294901760
        %2691 = vmatmul.f32.gmra.mxu0 %v2690
        %v2692 = vpop.f32.mrf.mxu0
        %v2693 = vadd.f32 %v2404, %v2692
        %v2694 = vand.u32 %v510, 4294901760
        %2695 = vmatmul.f32.gmra.mxu0 %v2694
        %v2696 = vpop.f32.mrf.mxu0
        %v2697 = vadd.f32 %v2408, %v2696
        %v2698 = vand.u32 %v511, 4294901760
        %2699 = vmatmul.f32.gmra.mxu0 %v2698
        %v2700 = vpop.f32.mrf.mxu0
        %v2701 = vadd.f32 %v2412, %v2700
        %v2702 = vand.u32 %v512, 4294901760
        %2703 = vmatmul.f32.gmra.mxu0 %v2702
        %v2704 = vpop.f32.mrf.mxu0
        %v2705 = vadd.f32 %v2416, %v2704
        %v2706 = vand.u32 %v513, 4294901760
        %2707 = vmatmul.f32.gmra.mxu0 %v2706
        %v2708 = vpop.f32.mrf.mxu0
        %v2709 = vadd.f32 %v2420, %v2708
        %v2710 = vand.u32 %v514, 4294901760
        %2711 = vmatmul.f32.gmra.mxu0 %v2710
        %v2712 = vpop.f32.mrf.mxu0
        %v2713 = vadd.f32 %v2424, %v2712
        %v2714 = vand.u32 %v515, 4294901760
        %2715 = vmatmul.f32.gmra.mxu0 %v2714
        %v2716 = vpop.f32.mrf.mxu0
        %v2717 = vadd.f32 %v2428, %v2716
        %v2718 = vand.u32 %v516, 4294901760
        %2719 = vmatmul.f32.gmra.mxu0 %v2718
        %v2720 = vpop.f32.mrf.mxu0
        %v2721 = vadd.f32 %v2432, %v2720
        %v2722 = vand.u32 %v517, 4294901760
        %2723 = vmatmul.f32.gmra.mxu0 %v2722
        %v2724 = vpop.f32.mrf.mxu0
        %v2725 = vadd.f32 %v2436, %v2724
        %v2726 = vand.u32 %v518, 4294901760
        %2727 = vmatmul.f32.gmra.mxu0 %v2726
        %v2728 = vpop.f32.mrf.mxu0
        %v2729 = vadd.f32 %v2440, %v2728
        %v2730 = vand.u32 %v519, 4294901760
        %2731 = vmatmul.f32.gmra.mxu0 %v2730
        %v2732 = vpop.f32.mrf.mxu0
        %v2733 = vadd.f32 %v2444, %v2732
        %v2734 = vand.u32 %v520, 4294901760
        %2735 = vmatmul.f32.gmra.mxu0 %v2734
        %v2736 = vpop.f32.mrf.mxu0
        %v2737 = vadd.f32 %v2448, %v2736
        %v2738 = vand.u32 %v521, 4294901760
        %2739 = vmatmul.f32.gmra.mxu0 %v2738
        %v2740 = vpop.f32.mrf.mxu0
        %v2741 = vadd.f32 %v2452, %v2740
        %v2742 = vand.u32 %v522, 4294901760
        %2743 = vmatmul.f32.gmra.mxu0 %v2742
        %v2744 = vpop.f32.mrf.mxu0
        %v2745 = vadd.f32 %v2456, %v2744
        %v2746 = vand.u32 %v523, 4294901760
        %2747 = vmatmul.f32.gmra.mxu0 %v2746
        %v2748 = vpop.f32.mrf.mxu0
        %v2749 = vadd.f32 %v2460, %v2748
        %v2750 = vand.u32 %v524, 4294901760
        %2751 = vmatmul.f32.gmra.mxu0 %v2750
        %v2752 = vpop.f32.mrf.mxu0
        %v2753 = vadd.f32 %v2464, %v2752
        %v2754 = vand.u32 %v525, 4294901760
        %2755 = vmatmul.f32.gmra.mxu0 %v2754
        %v2756 = vpop.f32.mrf.mxu0
        %v2757 = vadd.f32 %v2468, %v2756
        %v2758 = vand.u32 %v526, 4294901760
        %2759 = vmatmul.f32.gmra.mxu0 %v2758
        %v2760 = vpop.f32.mrf.mxu0
        %v2761 = vadd.f32 %v2472, %v2760
        %v2762 = vand.u32 %v527, 4294901760
        %2763 = vmatmul.f32.gmra.mxu0 %v2762
        %v2764 = vpop.f32.mrf.mxu0
        %v2765 = vadd.f32 %v2476, %v2764
        %v2766 = vand.u32 %v528, 4294901760
        %2767 = vmatmul.f32.gmra.mxu0 %v2766
        %v2768 = vpop.f32.mrf.mxu0
        %v2769 = vadd.f32 %v2480, %v2768
        %v2770 = vand.u32 %v529, 4294901760
        %2771 = vmatmul.f32.gmra.mxu0 %v2770
        %v2772 = vpop.f32.mrf.mxu0
        %v2773 = vadd.f32 %v2484, %v2772
        %v2774 = vand.u32 %v530, 4294901760
        %2775 = vmatmul.f32.gmra.mxu0 %v2774
        %v2776 = vpop.f32.mrf.mxu0
        %v2777 = vadd.f32 %v2488, %v2776
        %v2778 = vand.u32 %v531, 4294901760
        %2779 = vmatmul.f32.gmra.mxu0 %v2778
        %v2780 = vpop.f32.mrf.mxu0
        %v2781 = vadd.f32 %v2492, %v2780
        %v2782 = vand.u32 %v532, 4294901760
        %2783 = vmatmul.f32.gmra.mxu0 %v2782
        %v2784 = vpop.f32.mrf.mxu0
        %v2785 = vadd.f32 %v2496, %v2784
        %v2786 = vand.u32 %v533, 4294901760
        %2787 = vmatmul.f32.gmra.mxu0 %v2786
        %v2788 = vpop.f32.mrf.mxu0
        %v2789 = vadd.f32 %v2500, %v2788
        %v2790 = vand.u32 %v534, 4294901760
        %2791 = vmatmul.f32.gmra.mxu0 %v2790
        %v2792 = vpop.f32.mrf.mxu0
        %v2793 = vadd.f32 %v2504, %v2792
        %v2794 = vand.u32 %v535, 4294901760
        %2795 = vmatmul.f32.gmra.mxu0 %v2794
        %v2796 = vpop.f32.mrf.mxu0
        %v2797 = vadd.f32 %v2508, %v2796
        %v2798 = vand.u32 %v536, 4294901760
        %2799 = vmatmul.f32.gmra.mxu0 %v2798
        %v2800 = vpop.f32.mrf.mxu0
        %v2801 = vadd.f32 %v2512, %v2800
        %v2802 = vand.u32 %v537, 4294901760
        %2803 = vmatmul.f32.gmra.mxu0 %v2802
        %v2804 = vpop.f32.mrf.mxu0
        %v2805 = vadd.f32 %v2516, %v2804
        %v2806 = vand.u32 %v538, 4294901760
        %2807 = vmatmul.f32.gmra.mxu0 %v2806
        %v2808 = vpop.f32.mrf.mxu0
        %v2809 = vadd.f32 %v2520, %v2808
        %v2810 = vand.u32 %v539, 4294901760
        %2811 = vmatmul.f32.gmra.mxu0 %v2810
        %v2812 = vpop.f32.mrf.mxu0
        %v2813 = vadd.f32 %v2524, %v2812
        %v2814 = vand.u32 %v540, 4294901760
        %2815 = vmatmul.f32.gmra.mxu0 %v2814
        %v2816 = vpop.f32.mrf.mxu0
        %v2817 = vadd.f32 %v2528, %v2816
        %v2818 = vand.u32 %v541, 4294901760
        %2819 = vmatmul.f32.gmra.mxu0 %v2818
        %v2820 = vpop.f32.mrf.mxu0
        %v2821 = vadd.f32 %v2532, %v2820
        %v2822 = vand.u32 %v542, 4294901760
        %2823 = vmatmul.f32.gmra.mxu0 %v2822
        %v2824 = vpop.f32.mrf.mxu0
        %v2825 = vadd.f32 %v2536, %v2824
        %v2826 = vand.u32 %v543, 4294901760
        %2827 = vmatmul.f32.gmra.mxu0 %v2826
        %v2828 = vpop.f32.mrf.mxu0
        %v2829 = vadd.f32 %v2540, %v2828
        %v2830 = vand.u32 %v544, 4294901760
        %2831 = vmatmul.f32.gmra.mxu0 %v2830
        %v2832 = vpop.f32.mrf.mxu0
        %v2833 = vadd.f32 %v2544, %v2832
        %v2834 = vand.u32 %v545, 4294901760
        %2835 = vmatmul.f32.gmra.mxu0 %v2834
        %v2836 = vpop.f32.mrf.mxu0
        %v2837 = vadd.f32 %v2548, %v2836
        %v2838 = vand.u32 %v546, 4294901760
        %2839 = vmatmul.f32.gmra.mxu0 %v2838
        %v2840 = vpop.f32.mrf.mxu0
        %v2841 = vadd.f32 %v2552, %v2840
        %v2842 = vand.u32 %v547, 4294901760
        %2843 = vmatmul.f32.gmra.mxu0 %v2842
        %v2844 = vpop.f32.mrf.mxu0
        %v2845 = vadd.f32 %v2556, %v2844
        %v2846 = vand.u32 %v548, 4294901760
        %2847 = vmatmul.f32.gmra.mxu0 %v2846
        %v2848 = vpop.f32.mrf.mxu0
        %v2849 = vadd.f32 %v2560, %v2848
        %v2850 = vand.u32 %v549, 4294901760
        %2851 = vmatmul.f32.gmra.mxu0 %v2850
        %v2852 = vpop.f32.mrf.mxu0
        %v2853 = vadd.f32 %v2564, %v2852
        %v2854 = vand.u32 %v550, 4294901760
        %2855 = vmatmul.f32.gmra.mxu0 %v2854
        %v2856 = vpop.f32.mrf.mxu0
        %v2857 = vadd.f32 %v2568, %v2856
        %v2858 = vand.u32 %v551, 4294901760
        %2859 = vmatmul.f32.gmra.mxu0 %v2858
        %v2860 = vpop.f32.mrf.mxu0
        %v2861 = vadd.f32 %v2572, %v2860
        %v2862 = vand.u32 %v552, 4294901760
        %2863 = vmatmul.f32.gmra.mxu0 %v2862
        %v2864 = vpop.f32.mrf.mxu0
        %v2865 = vadd.f32 %v2576, %v2864
        %2866 = vdwg.mxu0
        %v2867 = vmax.f32 %v2613, 0.0
        %v2868 = vmax.f32 %v2617, 0.0
        %v2869 = vmax.f32 %v2621, 0.0
        %v2870 = vmax.f32 %v2625, 0.0
        %v2871 = vmax.f32 %v2629, 0.0
        %v2872 = vmax.f32 %v2633, 0.0
        %v2873 = vmax.f32 %v2637, 0.0
        %v2874 = vmax.f32 %v2641, 0.0
        %v2875 = vmax.f32 %v2645, 0.0
        %v2876 = vmax.f32 %v2649, 0.0
        %v2877 = vmax.f32 %v2653, 0.0
        %v2878 = vmax.f32 %v2657, 0.0
        %v2879 = vmax.f32 %v2661, 0.0
        %v2880 = vmax.f32 %v2665, 0.0
        %v2881 = vmax.f32 %v2669, 0.0
        %v2882 = vmax.f32 %v2673, 0.0
        %v2883 = vmax.f32 %v2677, 0.0
        %v2884 = vmax.f32 %v2681, 0.0
        %v2885 = vmax.f32 %v2685, 0.0
        %v2886 = vmax.f32 %v2689, 0.0
        %v2887 = vmax.f32 %v2693, 0.0
        %v2888 = vmax.f32 %v2697, 0.0
        %v2889 = vmax.f32 %v2701, 0.0
        %v2890 = vmax.f32 %v2705, 0.0
        %v2891 = vmax.f32 %v2709, 0.0
        %v2892 = vmax.f32 %v2713, 0.0
        %v2893 = vmax.f32 %v2717, 0.0
        %v2894 = vmax.f32 %v2721, 0.0
        %v2895 = vmax.f32 %v2725, 0.0
        %v2896 = vmax.f32 %v2729, 0.0
        %v2897 = vmax.f32 %v2733, 0.0
        %v2898 = vmax.f32 %v2737, 0.0
        %v2899 = vmax.f32 %v2741, 0.0
        %v2900 = vmax.f32 %v2745, 0.0
        %v2901 = vmax.f32 %v2749, 0.0
        %v2902 = vmax.f32 %v2753, 0.0
        %v2903 = vmax.f32 %v2757, 0.0
        %v2904 = vmax.f32 %v2761, 0.0
        %v2905 = vmax.f32 %v2765, 0.0
        %v2906 = vmax.f32 %v2769, 0.0
        %v2907 = vmax.f32 %v2773, 0.0
        %v2908 = vmax.f32 %v2777, 0.0
        %v2909 = vmax.f32 %v2781, 0.0
        %v2910 = vmax.f32 %v2785, 0.0
        %v2911 = vmax.f32 %v2789, 0.0
        %v2912 = vmax.f32 %v2793, 0.0
        %v2913 = vmax.f32 %v2797, 0.0
        %v2914 = vmax.f32 %v2801, 0.0
        %v2915 = vmax.f32 %v2805, 0.0
        %v2916 = vmax.f32 %v2809, 0.0
        %v2917 = vmax.f32 %v2813, 0.0
        %v2918 = vmax.f32 %v2817, 0.0
        %v2919 = vmax.f32 %v2821, 0.0
        %v2920 = vmax.f32 %v2825, 0.0
        %v2921 = vmax.f32 %v2829, 0.0
        %v2922 = vmax.f32 %v2833, 0.0
        %v2923 = vmax.f32 %v2837, 0.0
        %v2924 = vmax.f32 %v2841, 0.0
        %v2925 = vmax.f32 %v2845, 0.0
        %v2926 = vmax.f32 %v2849, 0.0
        %v2927 = vmax.f32 %v2853, 0.0
        %v2928 = vmax.f32 %v2857, 0.0
        %v2929 = vmax.f32 %v2861, 0.0
        %v2930 = vmax.f32 %v2865, 0.0
        %v2931 = vld [vmem:[#allocation10] sm:$0xff]
        %v2932 = vld [vmem:[#allocation10 + $0x8] sm:$0xff]
        %v2933 = vld [vmem:[#allocation10 + $0x10] sm:$0xff]
        %v2934 = vld [vmem:[#allocation10 + $0x18] sm:$0xff]
        %v2935 = vld [vmem:[#allocation10 + $0x20] sm:$0xff]
        %v2936 = vld [vmem:[#allocation10 + $0x28] sm:$0xff]
        %v2937 = vld [vmem:[#allocation10 + $0x30] sm:$0xff]
        %v2938 = vld [vmem:[#allocation10 + $0x38] sm:$0xff]
        %v2939 = vld [vmem:[#allocation10 + $0x40] sm:$0xff]
        %v2940 = vld [vmem:[#allocation10 + $0x48] sm:$0xff]
        %v2941 = vld [vmem:[#allocation10 + $0x50] sm:$0xff]
        %v2942 = vld [vmem:[#allocation10 + $0x58] sm:$0xff]
        %v2943 = vld [vmem:[#allocation10 + $0x60] sm:$0xff]
        %v2944 = vld [vmem:[#allocation10 + $0x68] sm:$0xff]
        %v2945 = vld [vmem:[#allocation10 + $0x70] sm:$0xff]
        %v2946 = vld [vmem:[#allocation10 + $0x78] sm:$0xff]
        %v2947 = vld [vmem:[%s7] sm:$0x1]
        %v2949 = vperm.slane %v2947, 0
        %v2951 = vand.u32 %v2946, 4294901760
        %2952 = vmatpush.msra.mxu0 %v2951
        %v2953 = vand.u32 %v2945, 4294901760
        %2954 = vmatpush.msra.mxu0 %v2953
        %v2955 = vand.u32 %v2944, 4294901760
        %2956 = vmatpush.msra.mxu0 %v2955
        %v2957 = vand.u32 %v2943, 4294901760
        %2958 = vmatpush.msra.mxu0 %v2957
        %v2959 = vand.u32 %v2942, 4294901760
        %2960 = vmatpush.msra.mxu0 %v2959
        %v2961 = vand.u32 %v2941, 4294901760
        %2962 = vmatpush.msra.mxu0 %v2961
        %v2963 = vand.u32 %v2940, 4294901760
        %2964 = vmatpush.msra.mxu0 %v2963
        %v2965 = vand.u32 %v2939, 4294901760
        %2966 = vmatpush.msra.mxu0 %v2965
        %v2967 = vand.u32 %v2938, 4294901760
        %2968 = vmatpush.msra.mxu0 %v2967
        %v2969 = vand.u32 %v2937, 4294901760
        %2970 = vmatpush.msra.mxu0 %v2969
        %v2971 = vand.u32 %v2936, 4294901760
        %2972 = vmatpush.msra.mxu0 %v2971
        %v2973 = vand.u32 %v2935, 4294901760
        %2974 = vmatpush.msra.mxu0 %v2973
        %v2975 = vand.u32 %v2934, 4294901760
        %2976 = vmatpush.msra.mxu0 %v2975
        %v2977 = vand.u32 %v2933, 4294901760
        %2978 = vmatpush.msra.mxu0 %v2977
        %v2979 = vand.u32 %v2932, 4294901760
        %2980 = vmatpush.msra.mxu0 %v2979
        %v2981 = vand.u32 %v2931, 4294901760
        %2982 = vmatpush.msra.mxu0 %v2981
        %v2983 = vand.u32 %v2867, 4294901760
        %v2984 = vsub.f32 %v2867, %v2983
        %v2985 = vand.u32 %v2984, 4294901760
        %v2986 = vsub.f32 %v2984, %v2985
        %v2987 = vand.u32 %v2986, 4294901760
        %2988 = vmatmul.f32.gmra.mxu0 %v2987
        %v2989 = vpop.f32.mrf.mxu0
        %v2990 = vadd.f32 %v2949, %v2989
        %v2991 = vand.u32 %v2868, 4294901760
        %v2992 = vsub.f32 %v2868, %v2991
        %v2993 = vand.u32 %v2992, 4294901760
        %v2994 = vsub.f32 %v2992, %v2993
        %v2995 = vand.u32 %v2994, 4294901760
        %2996 = vmatmul.f32.gmra.mxu0 %v2995
        %v2997 = vpop.f32.mrf.mxu0
        %v2998 = vadd.f32 %v2949, %v2997
        %v2999 = vand.u32 %v2869, 4294901760
        %v3000 = vsub.f32 %v2869, %v2999
        %v3001 = vand.u32 %v3000, 4294901760
        %v3002 = vsub.f32 %v3000, %v3001
        %v3003 = vand.u32 %v3002, 4294901760
        %3004 = vmatmul.f32.gmra.mxu0 %v3003
        %v3005 = vpop.f32.mrf.mxu0
        %v3006 = vadd.f32 %v2949, %v3005
        %v3007 = vand.u32 %v2870, 4294901760
        %v3008 = vsub.f32 %v2870, %v3007
        %v3009 = vand.u32 %v3008, 4294901760
        %v3010 = vsub.f32 %v3008, %v3009
        %v3011 = vand.u32 %v3010, 4294901760
        %3012 = vmatmul.f32.gmra.mxu0 %v3011
        %v3013 = vpop.f32.mrf.mxu0
        %v3014 = vadd.f32 %v2949, %v3013
        %v3015 = vand.u32 %v2871, 4294901760
        %v3016 = vsub.f32 %v2871, %v3015
        %v3017 = vand.u32 %v3016, 4294901760
        %v3018 = vsub.f32 %v3016, %v3017
        %v3019 = vand.u32 %v3018, 4294901760
        %3020 = vmatmul.f32.gmra.mxu0 %v3019
        %v3021 = vpop.f32.mrf.mxu0
        %v3022 = vadd.f32 %v2949, %v3021
        %v3023 = vand.u32 %v2872, 4294901760
        %v3024 = vsub.f32 %v2872, %v3023
        %v3025 = vand.u32 %v3024, 4294901760
        %v3026 = vsub.f32 %v3024, %v3025
        %v3027 = vand.u32 %v3026, 4294901760
        %3028 = vmatmul.f32.gmra.mxu0 %v3027
        %v3029 = vpop.f32.mrf.mxu0
        %v3030 = vadd.f32 %v2949, %v3029
        %v3031 = vand.u32 %v2873, 4294901760
        %v3032 = vsub.f32 %v2873, %v3031
        %v3033 = vand.u32 %v3032, 4294901760
        %v3034 = vsub.f32 %v3032, %v3033
        %v3035 = vand.u32 %v3034, 4294901760
        %3036 = vmatmul.f32.gmra.mxu0 %v3035
        %v3037 = vpop.f32.mrf.mxu0
        %v3038 = vadd.f32 %v2949, %v3037
        %v3039 = vand.u32 %v2874, 4294901760
        %v3040 = vsub.f32 %v2874, %v3039
        %v3041 = vand.u32 %v3040, 4294901760
        %v3042 = vsub.f32 %v3040, %v3041
        %v3043 = vand.u32 %v3042, 4294901760
        %3044 = vmatmul.f32.gmra.mxu0 %v3043
        %v3045 = vpop.f32.mrf.mxu0
        %v3046 = vadd.f32 %v2949, %v3045
        %v3047 = vand.u32 %v2875, 4294901760
        %v3048 = vsub.f32 %v2875, %v3047
        %v3049 = vand.u32 %v3048, 4294901760
        %v3050 = vsub.f32 %v3048, %v3049
        %v3051 = vand.u32 %v3050, 4294901760
        %3052 = vmatmul.f32.gmra.mxu0 %v3051
        %v3053 = vpop.f32.mrf.mxu0
        %v3054 = vadd.f32 %v2949, %v3053
        %v3055 = vand.u32 %v2876, 4294901760
        %v3056 = vsub.f32 %v2876, %v3055
        %v3057 = vand.u32 %v3056, 4294901760
        %v3058 = vsub.f32 %v3056, %v3057
        %v3059 = vand.u32 %v3058, 4294901760
        %3060 = vmatmul.f32.gmra.mxu0 %v3059
        %v3061 = vpop.f32.mrf.mxu0
        %v3062 = vadd.f32 %v2949, %v3061
        %v3063 = vand.u32 %v2877, 4294901760
        %v3064 = vsub.f32 %v2877, %v3063
        %v3065 = vand.u32 %v3064, 4294901760
        %v3066 = vsub.f32 %v3064, %v3065
        %v3067 = vand.u32 %v3066, 4294901760
        %3068 = vmatmul.f32.gmra.mxu0 %v3067
        %v3069 = vpop.f32.mrf.mxu0
        %v3070 = vadd.f32 %v2949, %v3069
        %v3071 = vand.u32 %v2878, 4294901760
        %v3072 = vsub.f32 %v2878, %v3071
        %v3073 = vand.u32 %v3072, 4294901760
        %v3074 = vsub.f32 %v3072, %v3073
        %v3075 = vand.u32 %v3074, 4294901760
        %3076 = vmatmul.f32.gmra.mxu0 %v3075
        %v3077 = vpop.f32.mrf.mxu0
        %v3078 = vadd.f32 %v2949, %v3077
        %v3079 = vand.u32 %v2879, 4294901760
        %v3080 = vsub.f32 %v2879, %v3079
        %v3081 = vand.u32 %v3080, 4294901760
        %v3082 = vsub.f32 %v3080, %v3081
        %v3083 = vand.u32 %v3082, 4294901760
        %3084 = vmatmul.f32.gmra.mxu0 %v3083
        %v3085 = vpop.f32.mrf.mxu0
        %v3086 = vadd.f32 %v2949, %v3085
        %v3087 = vand.u32 %v2880, 4294901760
        %v3088 = vsub.f32 %v2880, %v3087
        %v3089 = vand.u32 %v3088, 4294901760
        %v3090 = vsub.f32 %v3088, %v3089
        %v3091 = vand.u32 %v3090, 4294901760
        %3092 = vmatmul.f32.gmra.mxu0 %v3091
        %v3093 = vpop.f32.mrf.mxu0
        %v3094 = vadd.f32 %v2949, %v3093
        %v3095 = vand.u32 %v2881, 4294901760
        %v3096 = vsub.f32 %v2881, %v3095
        %v3097 = vand.u32 %v3096, 4294901760
        %v3098 = vsub.f32 %v3096, %v3097
        %v3099 = vand.u32 %v3098, 4294901760
        %3100 = vmatmul.f32.gmra.mxu0 %v3099
        %v3101 = vpop.f32.mrf.mxu0
        %v3102 = vadd.f32 %v2949, %v3101
        %v3103 = vand.u32 %v2882, 4294901760
        %v3104 = vsub.f32 %v2882, %v3103
        %v3105 = vand.u32 %v3104, 4294901760
        %v3106 = vsub.f32 %v3104, %v3105
        %v3107 = vand.u32 %v3106, 4294901760
        %3108 = vmatmul.f32.gmra.mxu0 %v3107
        %v3109 = vpop.f32.mrf.mxu0
        %v3110 = vadd.f32 %v2949, %v3109
        %v3111 = vand.u32 %v2883, 4294901760
        %v3112 = vsub.f32 %v2883, %v3111
        %v3113 = vand.u32 %v3112, 4294901760
        %v3114 = vsub.f32 %v3112, %v3113
        %v3115 = vand.u32 %v3114, 4294901760
        %3116 = vmatmul.f32.gmra.mxu0 %v3115
        %v3117 = vpop.f32.mrf.mxu0
        %v3118 = vadd.f32 %v2949, %v3117
        %v3119 = vand.u32 %v2884, 4294901760
        %v3120 = vsub.f32 %v2884, %v3119
        %v3121 = vand.u32 %v3120, 4294901760
        %v3122 = vsub.f32 %v3120, %v3121
        %v3123 = vand.u32 %v3122, 4294901760
        %3124 = vmatmul.f32.gmra.mxu0 %v3123
        %v3125 = vpop.f32.mrf.mxu0
        %v3126 = vadd.f32 %v2949, %v3125
        %v3127 = vand.u32 %v2885, 4294901760
        %v3128 = vsub.f32 %v2885, %v3127
        %v3129 = vand.u32 %v3128, 4294901760
        %v3130 = vsub.f32 %v3128, %v3129
        %v3131 = vand.u32 %v3130, 4294901760
        %3132 = vmatmul.f32.gmra.mxu0 %v3131
        %v3133 = vpop.f32.mrf.mxu0
        %v3134 = vadd.f32 %v2949, %v3133
        %v3135 = vand.u32 %v2886, 4294901760
        %v3136 = vsub.f32 %v2886, %v3135
        %v3137 = vand.u32 %v3136, 4294901760
        %v3138 = vsub.f32 %v3136, %v3137
        %v3139 = vand.u32 %v3138, 4294901760
        %3140 = vmatmul.f32.gmra.mxu0 %v3139
        %v3141 = vpop.f32.mrf.mxu0
        %v3142 = vadd.f32 %v2949, %v3141
        %v3143 = vand.u32 %v2887, 4294901760
        %v3144 = vsub.f32 %v2887, %v3143
        %v3145 = vand.u32 %v3144, 4294901760
        %v3146 = vsub.f32 %v3144, %v3145
        %v3147 = vand.u32 %v3146, 4294901760
        %3148 = vmatmul.f32.gmra.mxu0 %v3147
        %v3149 = vpop.f32.mrf.mxu0
        %v3150 = vadd.f32 %v2949, %v3149
        %v3151 = vand.u32 %v2888, 4294901760
        %v3152 = vsub.f32 %v2888, %v3151
        %v3153 = vand.u32 %v3152, 4294901760
        %v3154 = vsub.f32 %v3152, %v3153
        %v3155 = vand.u32 %v3154, 4294901760
        %3156 = vmatmul.f32.gmra.mxu0 %v3155
        %v3157 = vpop.f32.mrf.mxu0
        %v3158 = vadd.f32 %v2949, %v3157
        %v3159 = vand.u32 %v2889, 4294901760
        %v3160 = vsub.f32 %v2889, %v3159
        %v3161 = vand.u32 %v3160, 4294901760
        %v3162 = vsub.f32 %v3160, %v3161
        %v3163 = vand.u32 %v3162, 4294901760
        %3164 = vmatmul.f32.gmra.mxu0 %v3163
        %v3165 = vpop.f32.mrf.mxu0
        %v3166 = vadd.f32 %v2949, %v3165
        %v3167 = vand.u32 %v2890, 4294901760
        %v3168 = vsub.f32 %v2890, %v3167
        %v3169 = vand.u32 %v3168, 4294901760
        %v3170 = vsub.f32 %v3168, %v3169
        %v3171 = vand.u32 %v3170, 4294901760
        %3172 = vmatmul.f32.gmra.mxu0 %v3171
        %v3173 = vpop.f32.mrf.mxu0
        %v3174 = vadd.f32 %v2949, %v3173
        %v3175 = vand.u32 %v2891, 4294901760
        %v3176 = vsub.f32 %v2891, %v3175
        %v3177 = vand.u32 %v3176, 4294901760
        %v3178 = vsub.f32 %v3176, %v3177
        %v3179 = vand.u32 %v3178, 4294901760
        %3180 = vmatmul.f32.gmra.mxu0 %v3179
        %v3181 = vpop.f32.mrf.mxu0
        %v3182 = vadd.f32 %v2949, %v3181
        %v3183 = vand.u32 %v2892, 4294901760
        %v3184 = vsub.f32 %v2892, %v3183
        %v3185 = vand.u32 %v3184, 4294901760
        %v3186 = vsub.f32 %v3184, %v3185
        %v3187 = vand.u32 %v3186, 4294901760
        %3188 = vmatmul.f32.gmra.mxu0 %v3187
        %v3189 = vpop.f32.mrf.mxu0
        %v3190 = vadd.f32 %v2949, %v3189
        %v3191 = vand.u32 %v2893, 4294901760
        %v3192 = vsub.f32 %v2893, %v3191
        %v3193 = vand.u32 %v3192, 4294901760
        %v3194 = vsub.f32 %v3192, %v3193
        %v3195 = vand.u32 %v3194, 4294901760
        %3196 = vmatmul.f32.gmra.mxu0 %v3195
        %v3197 = vpop.f32.mrf.mxu0
        %v3198 = vadd.f32 %v2949, %v3197
        %v3199 = vand.u32 %v2894, 4294901760
        %v3200 = vsub.f32 %v2894, %v3199
        %v3201 = vand.u32 %v3200, 4294901760
        %v3202 = vsub.f32 %v3200, %v3201
        %v3203 = vand.u32 %v3202, 4294901760
        %3204 = vmatmul.f32.gmra.mxu0 %v3203
        %v3205 = vpop.f32.mrf.mxu0
        %v3206 = vadd.f32 %v2949, %v3205
        %v3207 = vand.u32 %v2895, 4294901760
        %v3208 = vsub.f32 %v2895, %v3207
        %v3209 = vand.u32 %v3208, 4294901760
        %v3210 = vsub.f32 %v3208, %v3209
        %v3211 = vand.u32 %v3210, 4294901760
        %3212 = vmatmul.f32.gmra.mxu0 %v3211
        %v3213 = vpop.f32.mrf.mxu0
        %v3214 = vadd.f32 %v2949, %v3213
        %v3215 = vand.u32 %v2896, 4294901760
        %v3216 = vsub.f32 %v2896, %v3215
        %v3217 = vand.u32 %v3216, 4294901760
        %v3218 = vsub.f32 %v3216, %v3217
        %v3219 = vand.u32 %v3218, 4294901760
        %3220 = vmatmul.f32.gmra.mxu0 %v3219
        %v3221 = vpop.f32.mrf.mxu0
        %v3222 = vadd.f32 %v2949, %v3221
        %v3223 = vand.u32 %v2897, 4294901760
        %v3224 = vsub.f32 %v2897, %v3223
        %v3225 = vand.u32 %v3224, 4294901760
        %v3226 = vsub.f32 %v3224, %v3225
        %v3227 = vand.u32 %v3226, 4294901760
        %3228 = vmatmul.f32.gmra.mxu0 %v3227
        %v3229 = vpop.f32.mrf.mxu0
        %v3230 = vadd.f32 %v2949, %v3229
        %v3231 = vand.u32 %v2898, 4294901760
        %v3232 = vsub.f32 %v2898, %v3231
        %v3233 = vand.u32 %v3232, 4294901760
        %v3234 = vsub.f32 %v3232, %v3233
        %v3235 = vand.u32 %v3234, 4294901760
        %3236 = vmatmul.f32.gmra.mxu0 %v3235
        %v3237 = vpop.f32.mrf.mxu0
        %v3238 = vadd.f32 %v2949, %v3237
        %v3239 = vand.u32 %v2899, 4294901760
        %v3240 = vsub.f32 %v2899, %v3239
        %v3241 = vand.u32 %v3240, 4294901760
        %v3242 = vsub.f32 %v3240, %v3241
        %v3243 = vand.u32 %v3242, 4294901760
        %3244 = vmatmul.f32.gmra.mxu0 %v3243
        %v3245 = vpop.f32.mrf.mxu0
        %v3246 = vadd.f32 %v2949, %v3245
        %v3247 = vand.u32 %v2900, 4294901760
        %v3248 = vsub.f32 %v2900, %v3247
        %v3249 = vand.u32 %v3248, 4294901760
        %v3250 = vsub.f32 %v3248, %v3249
        %v3251 = vand.u32 %v3250, 4294901760
        %3252 = vmatmul.f32.gmra.mxu0 %v3251
        %v3253 = vpop.f32.mrf.mxu0
        %v3254 = vadd.f32 %v2949, %v3253
        %v3255 = vand.u32 %v2901, 4294901760
        %v3256 = vsub.f32 %v2901, %v3255
        %v3257 = vand.u32 %v3256, 4294901760
        %v3258 = vsub.f32 %v3256, %v3257
        %v3259 = vand.u32 %v3258, 4294901760
        %3260 = vmatmul.f32.gmra.mxu0 %v3259
        %v3261 = vpop.f32.mrf.mxu0
        %v3262 = vadd.f32 %v2949, %v3261
        %v3263 = vand.u32 %v2902, 4294901760
        %v3264 = vsub.f32 %v2902, %v3263
        %v3265 = vand.u32 %v3264, 4294901760
        %v3266 = vsub.f32 %v3264, %v3265
        %v3267 = vand.u32 %v3266, 4294901760
        %3268 = vmatmul.f32.gmra.mxu0 %v3267
        %v3269 = vpop.f32.mrf.mxu0
        %v3270 = vadd.f32 %v2949, %v3269
        %v3271 = vand.u32 %v2903, 4294901760
        %v3272 = vsub.f32 %v2903, %v3271
        %v3273 = vand.u32 %v3272, 4294901760
        %v3274 = vsub.f32 %v3272, %v3273
        %v3275 = vand.u32 %v3274, 4294901760
        %3276 = vmatmul.f32.gmra.mxu0 %v3275
        %v3277 = vpop.f32.mrf.mxu0
        %v3278 = vadd.f32 %v2949, %v3277
        %v3279 = vand.u32 %v2904, 4294901760
        %v3280 = vsub.f32 %v2904, %v3279
        %v3281 = vand.u32 %v3280, 4294901760
        %v3282 = vsub.f32 %v3280, %v3281
        %v3283 = vand.u32 %v3282, 4294901760
        %3284 = vmatmul.f32.gmra.mxu0 %v3283
        %v3285 = vpop.f32.mrf.mxu0
        %v3286 = vadd.f32 %v2949, %v3285
        %v3287 = vand.u32 %v2905, 4294901760
        %v3288 = vsub.f32 %v2905, %v3287
        %v3289 = vand.u32 %v3288, 4294901760
        %v3290 = vsub.f32 %v3288, %v3289
        %v3291 = vand.u32 %v3290, 4294901760
        %3292 = vmatmul.f32.gmra.mxu0 %v3291
        %v3293 = vpop.f32.mrf.mxu0
        %v3294 = vadd.f32 %v2949, %v3293
        %v3295 = vand.u32 %v2906, 4294901760
        %v3296 = vsub.f32 %v2906, %v3295
        %v3297 = vand.u32 %v3296, 4294901760
        %v3298 = vsub.f32 %v3296, %v3297
        %v3299 = vand.u32 %v3298, 4294901760
        %3300 = vmatmul.f32.gmra.mxu0 %v3299
        %v3301 = vpop.f32.mrf.mxu0
        %v3302 = vadd.f32 %v2949, %v3301
        %v3303 = vand.u32 %v2907, 4294901760
        %v3304 = vsub.f32 %v2907, %v3303
        %v3305 = vand.u32 %v3304, 4294901760
        %v3306 = vsub.f32 %v3304, %v3305
        %v3307 = vand.u32 %v3306, 4294901760
        %3308 = vmatmul.f32.gmra.mxu0 %v3307
        %v3309 = vpop.f32.mrf.mxu0
        %v3310 = vadd.f32 %v2949, %v3309
        %v3311 = vand.u32 %v2908, 4294901760
        %v3312 = vsub.f32 %v2908, %v3311
        %v3313 = vand.u32 %v3312, 4294901760
        %v3314 = vsub.f32 %v3312, %v3313
        %v3315 = vand.u32 %v3314, 4294901760
        %3316 = vmatmul.f32.gmra.mxu0 %v3315
        %v3317 = vpop.f32.mrf.mxu0
        %v3318 = vadd.f32 %v2949, %v3317
        %v3319 = vand.u32 %v2909, 4294901760
        %v3320 = vsub.f32 %v2909, %v3319
        %v3321 = vand.u32 %v3320, 4294901760
        %v3322 = vsub.f32 %v3320, %v3321
        %v3323 = vand.u32 %v3322, 4294901760
        %3324 = vmatmul.f32.gmra.mxu0 %v3323
        %v3325 = vpop.f32.mrf.mxu0
        %v3326 = vadd.f32 %v2949, %v3325
        %v3327 = vand.u32 %v2910, 4294901760
        %v3328 = vsub.f32 %v2910, %v3327
        %v3329 = vand.u32 %v3328, 4294901760
        %v3330 = vsub.f32 %v3328, %v3329
        %v3331 = vand.u32 %v3330, 4294901760
        %3332 = vmatmul.f32.gmra.mxu0 %v3331
        %v3333 = vpop.f32.mrf.mxu0
        %v3334 = vadd.f32 %v2949, %v3333
        %v3335 = vand.u32 %v2911, 4294901760
        %v3336 = vsub.f32 %v2911, %v3335
        %v3337 = vand.u32 %v3336, 4294901760
        %v3338 = vsub.f32 %v3336, %v3337
        %v3339 = vand.u32 %v3338, 4294901760
        %3340 = vmatmul.f32.gmra.mxu0 %v3339
        %v3341 = vpop.f32.mrf.mxu0
        %v3342 = vadd.f32 %v2949, %v3341
        %v3343 = vand.u32 %v2912, 4294901760
        %v3344 = vsub.f32 %v2912, %v3343
        %v3345 = vand.u32 %v3344, 4294901760
        %v3346 = vsub.f32 %v3344, %v3345
        %v3347 = vand.u32 %v3346, 4294901760
        %3348 = vmatmul.f32.gmra.mxu0 %v3347
        %v3349 = vpop.f32.mrf.mxu0
        %v3350 = vadd.f32 %v2949, %v3349
        %v3351 = vand.u32 %v2913, 4294901760
        %v3352 = vsub.f32 %v2913, %v3351
        %v3353 = vand.u32 %v3352, 4294901760
        %v3354 = vsub.f32 %v3352, %v3353
        %v3355 = vand.u32 %v3354, 4294901760
        %3356 = vmatmul.f32.gmra.mxu0 %v3355
        %v3357 = vpop.f32.mrf.mxu0
        %v3358 = vadd.f32 %v2949, %v3357
        %v3359 = vand.u32 %v2914, 4294901760
        %v3360 = vsub.f32 %v2914, %v3359
        %v3361 = vand.u32 %v3360, 4294901760
        %v3362 = vsub.f32 %v3360, %v3361
        %v3363 = vand.u32 %v3362, 4294901760
        %3364 = vmatmul.f32.gmra.mxu0 %v3363
        %v3365 = vpop.f32.mrf.mxu0
        %v3366 = vadd.f32 %v2949, %v3365
        %v3367 = vand.u32 %v2915, 4294901760
        %v3368 = vsub.f32 %v2915, %v3367
        %v3369 = vand.u32 %v3368, 4294901760
        %v3370 = vsub.f32 %v3368, %v3369
        %v3371 = vand.u32 %v3370, 4294901760
        %3372 = vmatmul.f32.gmra.mxu0 %v3371
        %v3373 = vpop.f32.mrf.mxu0
        %v3374 = vadd.f32 %v2949, %v3373
        %v3375 = vand.u32 %v2916, 4294901760
        %v3376 = vsub.f32 %v2916, %v3375
        %v3377 = vand.u32 %v3376, 4294901760
        %v3378 = vsub.f32 %v3376, %v3377
        %v3379 = vand.u32 %v3378, 4294901760
        %3380 = vmatmul.f32.gmra.mxu0 %v3379
        %v3381 = vpop.f32.mrf.mxu0
        %v3382 = vadd.f32 %v2949, %v3381
        %v3383 = vand.u32 %v2917, 4294901760
        %v3384 = vsub.f32 %v2917, %v3383
        %v3385 = vand.u32 %v3384, 4294901760
        %v3386 = vsub.f32 %v3384, %v3385
        %v3387 = vand.u32 %v3386, 4294901760
        %3388 = vmatmul.f32.gmra.mxu0 %v3387
        %v3389 = vpop.f32.mrf.mxu0
        %v3390 = vadd.f32 %v2949, %v3389
        %v3391 = vand.u32 %v2918, 4294901760
        %v3392 = vsub.f32 %v2918, %v3391
        %v3393 = vand.u32 %v3392, 4294901760
        %v3394 = vsub.f32 %v3392, %v3393
        %v3395 = vand.u32 %v3394, 4294901760
        %3396 = vmatmul.f32.gmra.mxu0 %v3395
        %v3397 = vpop.f32.mrf.mxu0
        %v3398 = vadd.f32 %v2949, %v3397
        %v3399 = vand.u32 %v2919, 4294901760
        %v3400 = vsub.f32 %v2919, %v3399
        %v3401 = vand.u32 %v3400, 4294901760
        %v3402 = vsub.f32 %v3400, %v3401
        %v3403 = vand.u32 %v3402, 4294901760
        %3404 = vmatmul.f32.gmra.mxu0 %v3403
        %v3405 = vpop.f32.mrf.mxu0
        %v3406 = vadd.f32 %v2949, %v3405
        %v3407 = vand.u32 %v2920, 4294901760
        %v3408 = vsub.f32 %v2920, %v3407
        %v3409 = vand.u32 %v3408, 4294901760
        %v3410 = vsub.f32 %v3408, %v3409
        %v3411 = vand.u32 %v3410, 4294901760
        %3412 = vmatmul.f32.gmra.mxu0 %v3411
        %v3413 = vpop.f32.mrf.mxu0
        %v3414 = vadd.f32 %v2949, %v3413
        %v3415 = vand.u32 %v2921, 4294901760
        %v3416 = vsub.f32 %v2921, %v3415
        %v3417 = vand.u32 %v3416, 4294901760
        %v3418 = vsub.f32 %v3416, %v3417
        %v3419 = vand.u32 %v3418, 4294901760
        %3420 = vmatmul.f32.gmra.mxu0 %v3419
        %v3421 = vpop.f32.mrf.mxu0
        %v3422 = vadd.f32 %v2949, %v3421
        %v3423 = vand.u32 %v2922, 4294901760
        %v3424 = vsub.f32 %v2922, %v3423
        %v3425 = vand.u32 %v3424, 4294901760
        %v3426 = vsub.f32 %v3424, %v3425
        %v3427 = vand.u32 %v3426, 4294901760
        %3428 = vmatmul.f32.gmra.mxu0 %v3427
        %v3429 = vpop.f32.mrf.mxu0
        %v3430 = vadd.f32 %v2949, %v3429
        %v3431 = vand.u32 %v2923, 4294901760
        %v3432 = vsub.f32 %v2923, %v3431
        %v3433 = vand.u32 %v3432, 4294901760
        %v3434 = vsub.f32 %v3432, %v3433
        %v3435 = vand.u32 %v3434, 4294901760
        %3436 = vmatmul.f32.gmra.mxu0 %v3435
        %v3437 = vpop.f32.mrf.mxu0
        %v3438 = vadd.f32 %v2949, %v3437
        %v3439 = vand.u32 %v2924, 4294901760
        %v3440 = vsub.f32 %v2924, %v3439
        %v3441 = vand.u32 %v3440, 4294901760
        %v3442 = vsub.f32 %v3440, %v3441
        %v3443 = vand.u32 %v3442, 4294901760
        %3444 = vmatmul.f32.gmra.mxu0 %v3443
        %v3445 = vpop.f32.mrf.mxu0
        %v3446 = vadd.f32 %v2949, %v3445
        %v3447 = vand.u32 %v2925, 4294901760
        %v3448 = vsub.f32 %v2925, %v3447
        %v3449 = vand.u32 %v3448, 4294901760
        %v3450 = vsub.f32 %v3448, %v3449
        %v3451 = vand.u32 %v3450, 4294901760
        %3452 = vmatmul.f32.gmra.mxu0 %v3451
        %v3453 = vpop.f32.mrf.mxu0
        %v3454 = vadd.f32 %v2949, %v3453
        %v3455 = vand.u32 %v2926, 4294901760
        %v3456 = vsub.f32 %v2926, %v3455
        %v3457 = vand.u32 %v3456, 4294901760
        %v3458 = vsub.f32 %v3456, %v3457
        %v3459 = vand.u32 %v3458, 4294901760
        %3460 = vmatmul.f32.gmra.mxu0 %v3459
        %v3461 = vpop.f32.mrf.mxu0
        %v3462 = vadd.f32 %v2949, %v3461
        %v3463 = vand.u32 %v2927, 4294901760
        %v3464 = vsub.f32 %v2927, %v3463
        %v3465 = vand.u32 %v3464, 4294901760
        %v3466 = vsub.f32 %v3464, %v3465
        %v3467 = vand.u32 %v3466, 4294901760
        %3468 = vmatmul.f32.gmra.mxu0 %v3467
        %v3469 = vpop.f32.mrf.mxu0
        %v3470 = vadd.f32 %v2949, %v3469
        %v3471 = vand.u32 %v2928, 4294901760
        %v3472 = vsub.f32 %v2928, %v3471
        %v3473 = vand.u32 %v3472, 4294901760
        %v3474 = vsub.f32 %v3472, %v3473
        %v3475 = vand.u32 %v3474, 4294901760
        %3476 = vmatmul.f32.gmra.mxu0 %v3475
        %v3477 = vpop.f32.mrf.mxu0
        %v3478 = vadd.f32 %v2949, %v3477
        %v3479 = vand.u32 %v2929, 4294901760
        %v3480 = vsub.f32 %v2929, %v3479
        %v3481 = vand.u32 %v3480, 4294901760
        %v3482 = vsub.f32 %v3480, %v3481
        %v3483 = vand.u32 %v3482, 4294901760
        %3484 = vmatmul.f32.gmra.mxu0 %v3483
        %v3485 = vpop.f32.mrf.mxu0
        %v3486 = vadd.f32 %v2949, %v3485
        %v3487 = vand.u32 %v2930, 4294901760
        %v3488 = vsub.f32 %v2930, %v3487
        %v3489 = vand.u32 %v3488, 4294901760
        %v3490 = vsub.f32 %v3488, %v3489
        %v3491 = vand.u32 %v3490, 4294901760
        %3492 = vmatmul.f32.gmra.mxu0 %v3491
        %v3493 = vpop.f32.mrf.mxu0
        %v3494 = vadd.f32 %v2949, %v3493
        %3495 = vdwg.mxu0
        %v3496 = vand.u32 %v2946, 4294901760
        %v3497 = vsub.f32 %v2946, %v3496
        %v3498 = vand.u32 %v3497, 4294901760
        %v3499 = vsub.f32 %v3497, %v3498
        %v3500 = vand.u32 %v3499, 4294901760
        %3501 = vmatpush.msra.mxu0 %v3500
        %v3502 = vand.u32 %v2945, 4294901760
        %v3503 = vsub.f32 %v2945, %v3502
        %v3504 = vand.u32 %v3503, 4294901760
        %v3505 = vsub.f32 %v3503, %v3504
        %v3506 = vand.u32 %v3505, 4294901760
        %3507 = vmatpush.msra.mxu0 %v3506
        %v3508 = vand.u32 %v2944, 4294901760
        %v3509 = vsub.f32 %v2944, %v3508
        %v3510 = vand.u32 %v3509, 4294901760
        %v3511 = vsub.f32 %v3509, %v3510
        %v3512 = vand.u32 %v3511, 4294901760
        %3513 = vmatpush.msra.mxu0 %v3512
        %v3514 = vand.u32 %v2943, 4294901760
        %v3515 = vsub.f32 %v2943, %v3514
        %v3516 = vand.u32 %v3515, 4294901760
        %v3517 = vsub.f32 %v3515, %v3516
        %v3518 = vand.u32 %v3517, 4294901760
        %3519 = vmatpush.msra.mxu0 %v3518
        %v3520 = vand.u32 %v2942, 4294901760
        %v3521 = vsub.f32 %v2942, %v3520
        %v3522 = vand.u32 %v3521, 4294901760
        %v3523 = vsub.f32 %v3521, %v3522
        %v3524 = vand.u32 %v3523, 4294901760
        %3525 = vmatpush.msra.mxu0 %v3524
        %v3526 = vand.u32 %v2941, 4294901760
        %v3527 = vsub.f32 %v2941, %v3526
        %v3528 = vand.u32 %v3527, 4294901760
        %v3529 = vsub.f32 %v3527, %v3528
        %v3530 = vand.u32 %v3529, 4294901760
        %3531 = vmatpush.msra.mxu0 %v3530
        %v3532 = vand.u32 %v2940, 4294901760
        %v3533 = vsub.f32 %v2940, %v3532
        %v3534 = vand.u32 %v3533, 4294901760
        %v3535 = vsub.f32 %v3533, %v3534
        %v3536 = vand.u32 %v3535, 4294901760
        %3537 = vmatpush.msra.mxu0 %v3536
        %v3538 = vand.u32 %v2939, 4294901760
        %v3539 = vsub.f32 %v2939, %v3538
        %v3540 = vand.u32 %v3539, 4294901760
        %v3541 = vsub.f32 %v3539, %v3540
        %v3542 = vand.u32 %v3541, 4294901760
        %3543 = vmatpush.msra.mxu0 %v3542
        %v3544 = vand.u32 %v2938, 4294901760
        %v3545 = vsub.f32 %v2938, %v3544
        %v3546 = vand.u32 %v3545, 4294901760
        %v3547 = vsub.f32 %v3545, %v3546
        %v3548 = vand.u32 %v3547, 4294901760
        %3549 = vmatpush.msra.mxu0 %v3548
        %v3550 = vand.u32 %v2937, 4294901760
        %v3551 = vsub.f32 %v2937, %v3550
        %v3552 = vand.u32 %v3551, 4294901760
        %v3553 = vsub.f32 %v3551, %v3552
        %v3554 = vand.u32 %v3553, 4294901760
        %3555 = vmatpush.msra.mxu0 %v3554
        %v3556 = vand.u32 %v2936, 4294901760
        %v3557 = vsub.f32 %v2936, %v3556
        %v3558 = vand.u32 %v3557, 4294901760
        %v3559 = vsub.f32 %v3557, %v3558
        %v3560 = vand.u32 %v3559, 4294901760
        %3561 = vmatpush.msra.mxu0 %v3560
        %v3562 = vand.u32 %v2935, 4294901760
        %v3563 = vsub.f32 %v2935, %v3562
        %v3564 = vand.u32 %v3563, 4294901760
        %v3565 = vsub.f32 %v3563, %v3564
        %v3566 = vand.u32 %v3565, 4294901760
        %3567 = vmatpush.msra.mxu0 %v3566
        %v3568 = vand.u32 %v2934, 4294901760
        %v3569 = vsub.f32 %v2934, %v3568
        %v3570 = vand.u32 %v3569, 4294901760
        %v3571 = vsub.f32 %v3569, %v3570
        %v3572 = vand.u32 %v3571, 4294901760
        %3573 = vmatpush.msra.mxu0 %v3572
        %v3574 = vand.u32 %v2933, 4294901760
        %v3575 = vsub.f32 %v2933, %v3574
        %v3576 = vand.u32 %v3575, 4294901760
        %v3577 = vsub.f32 %v3575, %v3576
        %v3578 = vand.u32 %v3577, 4294901760
        %3579 = vmatpush.msra.mxu0 %v3578
        %v3580 = vand.u32 %v2932, 4294901760
        %v3581 = vsub.f32 %v2932, %v3580
        %v3582 = vand.u32 %v3581, 4294901760
        %v3583 = vsub.f32 %v3581, %v3582
        %v3584 = vand.u32 %v3583, 4294901760
        %3585 = vmatpush.msra.mxu0 %v3584
        %v3586 = vand.u32 %v2931, 4294901760
        %v3587 = vsub.f32 %v2931, %v3586
        %v3588 = vand.u32 %v3587, 4294901760
        %v3589 = vsub.f32 %v3587, %v3588
        %v3590 = vand.u32 %v3589, 4294901760
        %3591 = vmatpush.msra.mxu0 %v3590
        %v3592 = vand.u32 %v2867, 4294901760
        %3593 = vmatmul.f32.gmra.mxu0 %v3592
        %v3594 = vpop.f32.mrf.mxu0
        %v3595 = vadd.f32 %v2990, %v3594
        %v3596 = vand.u32 %v2868, 4294901760
        %3597 = vmatmul.f32.gmra.mxu0 %v3596
        %v3598 = vpop.f32.mrf.mxu0
        %v3599 = vadd.f32 %v2998, %v3598
        %v3600 = vand.u32 %v2869, 4294901760
        %3601 = vmatmul.f32.gmra.mxu0 %v3600
        %v3602 = vpop.f32.mrf.mxu0
        %v3603 = vadd.f32 %v3006, %v3602
        %v3604 = vand.u32 %v2870, 4294901760
        %3605 = vmatmul.f32.gmra.mxu0 %v3604
        %v3606 = vpop.f32.mrf.mxu0
        %v3607 = vadd.f32 %v3014, %v3606
        %v3608 = vand.u32 %v2871, 4294901760
        %3609 = vmatmul.f32.gmra.mxu0 %v3608
        %v3610 = vpop.f32.mrf.mxu0
        %v3611 = vadd.f32 %v3022, %v3610
        %v3612 = vand.u32 %v2872, 4294901760
        %3613 = vmatmul.f32.gmra.mxu0 %v3612
        %v3614 = vpop.f32.mrf.mxu0
        %v3615 = vadd.f32 %v3030, %v3614
        %v3616 = vand.u32 %v2873, 4294901760
        %3617 = vmatmul.f32.gmra.mxu0 %v3616
        %v3618 = vpop.f32.mrf.mxu0
        %v3619 = vadd.f32 %v3038, %v3618
        %v3620 = vand.u32 %v2874, 4294901760
        %3621 = vmatmul.f32.gmra.mxu0 %v3620
        %v3622 = vpop.f32.mrf.mxu0
        %v3623 = vadd.f32 %v3046, %v3622
        %v3624 = vand.u32 %v2875, 4294901760
        %3625 = vmatmul.f32.gmra.mxu0 %v3624
        %v3626 = vpop.f32.mrf.mxu0
        %v3627 = vadd.f32 %v3054, %v3626
        %v3628 = vand.u32 %v2876, 4294901760
        %3629 = vmatmul.f32.gmra.mxu0 %v3628
        %v3630 = vpop.f32.mrf.mxu0
        %v3631 = vadd.f32 %v3062, %v3630
        %v3632 = vand.u32 %v2877, 4294901760
        %3633 = vmatmul.f32.gmra.mxu0 %v3632
        %v3634 = vpop.f32.mrf.mxu0
        %v3635 = vadd.f32 %v3070, %v3634
        %v3636 = vand.u32 %v2878, 4294901760
        %3637 = vmatmul.f32.gmra.mxu0 %v3636
        %v3638 = vpop.f32.mrf.mxu0
        %v3639 = vadd.f32 %v3078, %v3638
        %v3640 = vand.u32 %v2879, 4294901760
        %3641 = vmatmul.f32.gmra.mxu0 %v3640
        %v3642 = vpop.f32.mrf.mxu0
        %v3643 = vadd.f32 %v3086, %v3642
        %v3644 = vand.u32 %v2880, 4294901760
        %3645 = vmatmul.f32.gmra.mxu0 %v3644
        %v3646 = vpop.f32.mrf.mxu0
        %v3647 = vadd.f32 %v3094, %v3646
        %v3648 = vand.u32 %v2881, 4294901760
        %3649 = vmatmul.f32.gmra.mxu0 %v3648
        %v3650 = vpop.f32.mrf.mxu0
        %v3651 = vadd.f32 %v3102, %v3650
        %v3652 = vand.u32 %v2882, 4294901760
        %3653 = vmatmul.f32.gmra.mxu0 %v3652
        %v3654 = vpop.f32.mrf.mxu0
        %v3655 = vadd.f32 %v3110, %v3654
        %v3656 = vand.u32 %v2883, 4294901760
        %3657 = vmatmul.f32.gmra.mxu0 %v3656
        %v3658 = vpop.f32.mrf.mxu0
        %v3659 = vadd.f32 %v3118, %v3658
        %v3660 = vand.u32 %v2884, 4294901760
        %3661 = vmatmul.f32.gmra.mxu0 %v3660
        %v3662 = vpop.f32.mrf.mxu0
        %v3663 = vadd.f32 %v3126, %v3662
        %v3664 = vand.u32 %v2885, 4294901760
        %3665 = vmatmul.f32.gmra.mxu0 %v3664
        %v3666 = vpop.f32.mrf.mxu0
        %v3667 = vadd.f32 %v3134, %v3666
        %v3668 = vand.u32 %v2886, 4294901760
        %3669 = vmatmul.f32.gmra.mxu0 %v3668
        %v3670 = vpop.f32.mrf.mxu0
        %v3671 = vadd.f32 %v3142, %v3670
        %v3672 = vand.u32 %v2887, 4294901760
        %3673 = vmatmul.f32.gmra.mxu0 %v3672
        %v3674 = vpop.f32.mrf.mxu0
        %v3675 = vadd.f32 %v3150, %v3674
        %v3676 = vand.u32 %v2888, 4294901760
        %3677 = vmatmul.f32.gmra.mxu0 %v3676
        %v3678 = vpop.f32.mrf.mxu0
        %v3679 = vadd.f32 %v3158, %v3678
        %v3680 = vand.u32 %v2889, 4294901760
        %3681 = vmatmul.f32.gmra.mxu0 %v3680
        %v3682 = vpop.f32.mrf.mxu0
        %v3683 = vadd.f32 %v3166, %v3682
        %v3684 = vand.u32 %v2890, 4294901760
        %3685 = vmatmul.f32.gmra.mxu0 %v3684
        %v3686 = vpop.f32.mrf.mxu0
        %v3687 = vadd.f32 %v3174, %v3686
        %v3688 = vand.u32 %v2891, 4294901760
        %3689 = vmatmul.f32.gmra.mxu0 %v3688
        %v3690 = vpop.f32.mrf.mxu0
        %v3691 = vadd.f32 %v3182, %v3690
        %v3692 = vand.u32 %v2892, 4294901760
        %3693 = vmatmul.f32.gmra.mxu0 %v3692
        %v3694 = vpop.f32.mrf.mxu0
        %v3695 = vadd.f32 %v3190, %v3694
        %v3696 = vand.u32 %v2893, 4294901760
        %3697 = vmatmul.f32.gmra.mxu0 %v3696
        %v3698 = vpop.f32.mrf.mxu0
        %v3699 = vadd.f32 %v3198, %v3698
        %v3700 = vand.u32 %v2894, 4294901760
        %3701 = vmatmul.f32.gmra.mxu0 %v3700
        %v3702 = vpop.f32.mrf.mxu0
        %v3703 = vadd.f32 %v3206, %v3702
        %v3704 = vand.u32 %v2895, 4294901760
        %3705 = vmatmul.f32.gmra.mxu0 %v3704
        %v3706 = vpop.f32.mrf.mxu0
        %v3707 = vadd.f32 %v3214, %v3706
        %v3708 = vand.u32 %v2896, 4294901760
        %3709 = vmatmul.f32.gmra.mxu0 %v3708
        %v3710 = vpop.f32.mrf.mxu0
        %v3711 = vadd.f32 %v3222, %v3710
        %v3712 = vand.u32 %v2897, 4294901760
        %3713 = vmatmul.f32.gmra.mxu0 %v3712
        %v3714 = vpop.f32.mrf.mxu0
        %v3715 = vadd.f32 %v3230, %v3714
        %v3716 = vand.u32 %v2898, 4294901760
        %3717 = vmatmul.f32.gmra.mxu0 %v3716
        %v3718 = vpop.f32.mrf.mxu0
        %v3719 = vadd.f32 %v3238, %v3718
        %v3720 = vand.u32 %v2899, 4294901760
        %3721 = vmatmul.f32.gmra.mxu0 %v3720
        %v3722 = vpop.f32.mrf.mxu0
        %v3723 = vadd.f32 %v3246, %v3722
        %v3724 = vand.u32 %v2900, 4294901760
        %3725 = vmatmul.f32.gmra.mxu0 %v3724
        %v3726 = vpop.f32.mrf.mxu0
        %v3727 = vadd.f32 %v3254, %v3726
        %v3728 = vand.u32 %v2901, 4294901760
        %3729 = vmatmul.f32.gmra.mxu0 %v3728
        %v3730 = vpop.f32.mrf.mxu0
        %v3731 = vadd.f32 %v3262, %v3730
        %v3732 = vand.u32 %v2902, 4294901760
        %3733 = vmatmul.f32.gmra.mxu0 %v3732
        %v3734 = vpop.f32.mrf.mxu0
        %v3735 = vadd.f32 %v3270, %v3734
        %v3736 = vand.u32 %v2903, 4294901760
        %3737 = vmatmul.f32.gmra.mxu0 %v3736
        %v3738 = vpop.f32.mrf.mxu0
        %v3739 = vadd.f32 %v3278, %v3738
        %v3740 = vand.u32 %v2904, 4294901760
        %3741 = vmatmul.f32.gmra.mxu0 %v3740
        %v3742 = vpop.f32.mrf.mxu0
        %v3743 = vadd.f32 %v3286, %v3742
        %v3744 = vand.u32 %v2905, 4294901760
        %3745 = vmatmul.f32.gmra.mxu0 %v3744
        %v3746 = vpop.f32.mrf.mxu0
        %v3747 = vadd.f32 %v3294, %v3746
        %v3748 = vand.u32 %v2906, 4294901760
        %3749 = vmatmul.f32.gmra.mxu0 %v3748
        %v3750 = vpop.f32.mrf.mxu0
        %v3751 = vadd.f32 %v3302, %v3750
        %v3752 = vand.u32 %v2907, 4294901760
        %3753 = vmatmul.f32.gmra.mxu0 %v3752
        %v3754 = vpop.f32.mrf.mxu0
        %v3755 = vadd.f32 %v3310, %v3754
        %v3756 = vand.u32 %v2908, 4294901760
        %3757 = vmatmul.f32.gmra.mxu0 %v3756
        %v3758 = vpop.f32.mrf.mxu0
        %v3759 = vadd.f32 %v3318, %v3758
        %v3760 = vand.u32 %v2909, 4294901760
        %3761 = vmatmul.f32.gmra.mxu0 %v3760
        %v3762 = vpop.f32.mrf.mxu0
        %v3763 = vadd.f32 %v3326, %v3762
        %v3764 = vand.u32 %v2910, 4294901760
        %3765 = vmatmul.f32.gmra.mxu0 %v3764
        %v3766 = vpop.f32.mrf.mxu0
        %v3767 = vadd.f32 %v3334, %v3766
        %v3768 = vand.u32 %v2911, 4294901760
        %3769 = vmatmul.f32.gmra.mxu0 %v3768
        %v3770 = vpop.f32.mrf.mxu0
        %v3771 = vadd.f32 %v3342, %v3770
        %v3772 = vand.u32 %v2912, 4294901760
        %3773 = vmatmul.f32.gmra.mxu0 %v3772
        %v3774 = vpop.f32.mrf.mxu0
        %v3775 = vadd.f32 %v3350, %v3774
        %v3776 = vand.u32 %v2913, 4294901760
        %3777 = vmatmul.f32.gmra.mxu0 %v3776
        %v3778 = vpop.f32.mrf.mxu0
        %v3779 = vadd.f32 %v3358, %v3778
        %v3780 = vand.u32 %v2914, 4294901760
        %3781 = vmatmul.f32.gmra.mxu0 %v3780
        %v3782 = vpop.f32.mrf.mxu0
        %v3783 = vadd.f32 %v3366, %v3782
        %v3784 = vand.u32 %v2915, 4294901760
        %3785 = vmatmul.f32.gmra.mxu0 %v3784
        %v3786 = vpop.f32.mrf.mxu0
        %v3787 = vadd.f32 %v3374, %v3786
        %v3788 = vand.u32 %v2916, 4294901760
        %3789 = vmatmul.f32.gmra.mxu0 %v3788
        %v3790 = vpop.f32.mrf.mxu0
        %v3791 = vadd.f32 %v3382, %v3790
        %v3792 = vand.u32 %v2917, 4294901760
        %3793 = vmatmul.f32.gmra.mxu0 %v3792
        %v3794 = vpop.f32.mrf.mxu0
        %v3795 = vadd.f32 %v3390, %v3794
        %v3796 = vand.u32 %v2918, 4294901760
        %3797 = vmatmul.f32.gmra.mxu0 %v3796
        %v3798 = vpop.f32.mrf.mxu0
        %v3799 = vadd.f32 %v3398, %v3798
        %v3800 = vand.u32 %v2919, 4294901760
        %3801 = vmatmul.f32.gmra.mxu0 %v3800
        %v3802 = vpop.f32.mrf.mxu0
        %v3803 = vadd.f32 %v3406, %v3802
        %v3804 = vand.u32 %v2920, 4294901760
        %3805 = vmatmul.f32.gmra.mxu0 %v3804
        %v3806 = vpop.f32.mrf.mxu0
        %v3807 = vadd.f32 %v3414, %v3806
        %v3808 = vand.u32 %v2921, 4294901760
        %3809 = vmatmul.f32.gmra.mxu0 %v3808
        %v3810 = vpop.f32.mrf.mxu0
        %v3811 = vadd.f32 %v3422, %v3810
        %v3812 = vand.u32 %v2922, 4294901760
        %3813 = vmatmul.f32.gmra.mxu0 %v3812
        %v3814 = vpop.f32.mrf.mxu0
        %v3815 = vadd.f32 %v3430, %v3814
        %v3816 = vand.u32 %v2923, 4294901760
        %3817 = vmatmul.f32.gmra.mxu0 %v3816
        %v3818 = vpop.f32.mrf.mxu0
        %v3819 = vadd.f32 %v3438, %v3818
        %v3820 = vand.u32 %v2924, 4294901760
        %3821 = vmatmul.f32.gmra.mxu0 %v3820
        %v3822 = vpop.f32.mrf.mxu0
        %v3823 = vadd.f32 %v3446, %v3822
        %v3824 = vand.u32 %v2925, 4294901760
        %3825 = vmatmul.f32.gmra.mxu0 %v3824
        %v3826 = vpop.f32.mrf.mxu0
        %v3827 = vadd.f32 %v3454, %v3826
        %v3828 = vand.u32 %v2926, 4294901760
        %3829 = vmatmul.f32.gmra.mxu0 %v3828
        %v3830 = vpop.f32.mrf.mxu0
        %v3831 = vadd.f32 %v3462, %v3830
        %v3832 = vand.u32 %v2927, 4294901760
        %3833 = vmatmul.f32.gmra.mxu0 %v3832
        %v3834 = vpop.f32.mrf.mxu0
        %v3835 = vadd.f32 %v3470, %v3834
        %v3836 = vand.u32 %v2928, 4294901760
        %3837 = vmatmul.f32.gmra.mxu0 %v3836
        %v3838 = vpop.f32.mrf.mxu0
        %v3839 = vadd.f32 %v3478, %v3838
        %v3840 = vand.u32 %v2929, 4294901760
        %3841 = vmatmul.f32.gmra.mxu0 %v3840
        %v3842 = vpop.f32.mrf.mxu0
        %v3843 = vadd.f32 %v3486, %v3842
        %v3844 = vand.u32 %v2930, 4294901760
        %3845 = vmatmul.f32.gmra.mxu0 %v3844
        %v3846 = vpop.f32.mrf.mxu0
        %v3847 = vadd.f32 %v3494, %v3846
        %3848 = vdwg.mxu0
        %v3849 = vand.u32 %v2946, 4294901760
        %v3850 = vsub.f32 %v2946, %v3849
        %3851 = vmatpush.msra.mxu0 %v3850
        %v3852 = vand.u32 %v2945, 4294901760
        %v3853 = vsub.f32 %v2945, %v3852
        %3854 = vmatpush.msra.mxu0 %v3853
        %v3855 = vand.u32 %v2944, 4294901760
        %v3856 = vsub.f32 %v2944, %v3855
        %3857 = vmatpush.msra.mxu0 %v3856
        %v3858 = vand.u32 %v2943, 4294901760
        %v3859 = vsub.f32 %v2943, %v3858
        %3860 = vmatpush.msra.mxu0 %v3859
        %v3861 = vand.u32 %v2942, 4294901760
        %v3862 = vsub.f32 %v2942, %v3861
        %3863 = vmatpush.msra.mxu0 %v3862
        %v3864 = vand.u32 %v2941, 4294901760
        %v3865 = vsub.f32 %v2941, %v3864
        %3866 = vmatpush.msra.mxu0 %v3865
        %v3867 = vand.u32 %v2940, 4294901760
        %v3868 = vsub.f32 %v2940, %v3867
        %3869 = vmatpush.msra.mxu0 %v3868
        %v3870 = vand.u32 %v2939, 4294901760
        %v3871 = vsub.f32 %v2939, %v3870
        %3872 = vmatpush.msra.mxu0 %v3871
        %v3873 = vand.u32 %v2938, 4294901760
        %v3874 = vsub.f32 %v2938, %v3873
        %3875 = vmatpush.msra.mxu0 %v3874
        %v3876 = vand.u32 %v2937, 4294901760
        %v3877 = vsub.f32 %v2937, %v3876
        %3878 = vmatpush.msra.mxu0 %v3877
        %v3879 = vand.u32 %v2936, 4294901760
        %v3880 = vsub.f32 %v2936, %v3879
        %3881 = vmatpush.msra.mxu0 %v3880
        %v3882 = vand.u32 %v2935, 4294901760
        %v3883 = vsub.f32 %v2935, %v3882
        %3884 = vmatpush.msra.mxu0 %v3883
        %v3885 = vand.u32 %v2934, 4294901760
        %v3886 = vsub.f32 %v2934, %v3885
        %3887 = vmatpush.msra.mxu0 %v3886
        %v3888 = vand.u32 %v2933, 4294901760
        %v3889 = vsub.f32 %v2933, %v3888
        %3890 = vmatpush.msra.mxu0 %v3889
        %v3891 = vand.u32 %v2932, 4294901760
        %v3892 = vsub.f32 %v2932, %v3891
        %3893 = vmatpush.msra.mxu0 %v3892
        %v3894 = vand.u32 %v2931, 4294901760
        %v3895 = vsub.f32 %v2931, %v3894
        %3896 = vmatpush.msra.mxu0 %v3895
        %v3897 = vand.u32 %v2867, 4294901760
        %v3898 = vsub.f32 %v2867, %v3897
        %3899 = vmatmul.f32.gmra.mxu0 %v3898
        %v3900 = vpop.f32.mrf.mxu0
        %v3901 = vadd.f32 %v3595, %v3900
        %v3902 = vand.u32 %v2868, 4294901760
        %v3903 = vsub.f32 %v2868, %v3902
        %3904 = vmatmul.f32.gmra.mxu0 %v3903
        %v3905 = vpop.f32.mrf.mxu0
        %v3906 = vadd.f32 %v3599, %v3905
        %v3907 = vand.u32 %v2869, 4294901760
        %v3908 = vsub.f32 %v2869, %v3907
        %3909 = vmatmul.f32.gmra.mxu0 %v3908
        %v3910 = vpop.f32.mrf.mxu0
        %v3911 = vadd.f32 %v3603, %v3910
        %v3912 = vand.u32 %v2870, 4294901760
        %v3913 = vsub.f32 %v2870, %v3912
        %3914 = vmatmul.f32.gmra.mxu0 %v3913
        %v3915 = vpop.f32.mrf.mxu0
        %v3916 = vadd.f32 %v3607, %v3915
        %v3917 = vand.u32 %v2871, 4294901760
        %v3918 = vsub.f32 %v2871, %v3917
        %3919 = vmatmul.f32.gmra.mxu0 %v3918
        %v3920 = vpop.f32.mrf.mxu0
        %v3921 = vadd.f32 %v3611, %v3920
        %v3922 = vand.u32 %v2872, 4294901760
        %v3923 = vsub.f32 %v2872, %v3922
        %3924 = vmatmul.f32.gmra.mxu0 %v3923
        %v3925 = vpop.f32.mrf.mxu0
        %v3926 = vadd.f32 %v3615, %v3925
        %v3927 = vand.u32 %v2873, 4294901760
        %v3928 = vsub.f32 %v2873, %v3927
        %3929 = vmatmul.f32.gmra.mxu0 %v3928
        %v3930 = vpop.f32.mrf.mxu0
        %v3931 = vadd.f32 %v3619, %v3930
        %v3932 = vand.u32 %v2874, 4294901760
        %v3933 = vsub.f32 %v2874, %v3932
        %3934 = vmatmul.f32.gmra.mxu0 %v3933
        %v3935 = vpop.f32.mrf.mxu0
        %v3936 = vadd.f32 %v3623, %v3935
        %v3937 = vand.u32 %v2875, 4294901760
        %v3938 = vsub.f32 %v2875, %v3937
        %3939 = vmatmul.f32.gmra.mxu0 %v3938
        %v3940 = vpop.f32.mrf.mxu0
        %v3941 = vadd.f32 %v3627, %v3940
        %v3942 = vand.u32 %v2876, 4294901760
        %v3943 = vsub.f32 %v2876, %v3942
        %3944 = vmatmul.f32.gmra.mxu0 %v3943
        %v3945 = vpop.f32.mrf.mxu0
        %v3946 = vadd.f32 %v3631, %v3945
        %v3947 = vand.u32 %v2877, 4294901760
        %v3948 = vsub.f32 %v2877, %v3947
        %3949 = vmatmul.f32.gmra.mxu0 %v3948
        %v3950 = vpop.f32.mrf.mxu0
        %v3951 = vadd.f32 %v3635, %v3950
        %v3952 = vand.u32 %v2878, 4294901760
        %v3953 = vsub.f32 %v2878, %v3952
        %3954 = vmatmul.f32.gmra.mxu0 %v3953
        %v3955 = vpop.f32.mrf.mxu0
        %v3956 = vadd.f32 %v3639, %v3955
        %v3957 = vand.u32 %v2879, 4294901760
        %v3958 = vsub.f32 %v2879, %v3957
        %3959 = vmatmul.f32.gmra.mxu0 %v3958
        %v3960 = vpop.f32.mrf.mxu0
        %v3961 = vadd.f32 %v3643, %v3960
        %v3962 = vand.u32 %v2880, 4294901760
        %v3963 = vsub.f32 %v2880, %v3962
        %3964 = vmatmul.f32.gmra.mxu0 %v3963
        %v3965 = vpop.f32.mrf.mxu0
        %v3966 = vadd.f32 %v3647, %v3965
        %v3967 = vand.u32 %v2881, 4294901760
        %v3968 = vsub.f32 %v2881, %v3967
        %3969 = vmatmul.f32.gmra.mxu0 %v3968
        %v3970 = vpop.f32.mrf.mxu0
        %v3971 = vadd.f32 %v3651, %v3970
        %v3972 = vand.u32 %v2882, 4294901760
        %v3973 = vsub.f32 %v2882, %v3972
        %3974 = vmatmul.f32.gmra.mxu0 %v3973
        %v3975 = vpop.f32.mrf.mxu0
        %v3976 = vadd.f32 %v3655, %v3975
        %v3977 = vand.u32 %v2883, 4294901760
        %v3978 = vsub.f32 %v2883, %v3977
        %3979 = vmatmul.f32.gmra.mxu0 %v3978
        %v3980 = vpop.f32.mrf.mxu0
        %v3981 = vadd.f32 %v3659, %v3980
        %v3982 = vand.u32 %v2884, 4294901760
        %v3983 = vsub.f32 %v2884, %v3982
        %3984 = vmatmul.f32.gmra.mxu0 %v3983
        %v3985 = vpop.f32.mrf.mxu0
        %v3986 = vadd.f32 %v3663, %v3985
        %v3987 = vand.u32 %v2885, 4294901760
        %v3988 = vsub.f32 %v2885, %v3987
        %3989 = vmatmul.f32.gmra.mxu0 %v3988
        %v3990 = vpop.f32.mrf.mxu0
        %v3991 = vadd.f32 %v3667, %v3990
        %v3992 = vand.u32 %v2886, 4294901760
        %v3993 = vsub.f32 %v2886, %v3992
        %3994 = vmatmul.f32.gmra.mxu0 %v3993
        %v3995 = vpop.f32.mrf.mxu0
        %v3996 = vadd.f32 %v3671, %v3995
        %v3997 = vand.u32 %v2887, 4294901760
        %v3998 = vsub.f32 %v2887, %v3997
        %3999 = vmatmul.f32.gmra.mxu0 %v3998
        %v4000 = vpop.f32.mrf.mxu0
        %v4001 = vadd.f32 %v3675, %v4000
        %v4002 = vand.u32 %v2888, 4294901760
        %v4003 = vsub.f32 %v2888, %v4002
        %4004 = vmatmul.f32.gmra.mxu0 %v4003
        %v4005 = vpop.f32.mrf.mxu0
        %v4006 = vadd.f32 %v3679, %v4005
        %v4007 = vand.u32 %v2889, 4294901760
        %v4008 = vsub.f32 %v2889, %v4007
        %4009 = vmatmul.f32.gmra.mxu0 %v4008
        %v4010 = vpop.f32.mrf.mxu0
        %v4011 = vadd.f32 %v3683, %v4010
        %v4012 = vand.u32 %v2890, 4294901760
        %v4013 = vsub.f32 %v2890, %v4012
        %4014 = vmatmul.f32.gmra.mxu0 %v4013
        %v4015 = vpop.f32.mrf.mxu0
        %v4016 = vadd.f32 %v3687, %v4015
        %v4017 = vand.u32 %v2891, 4294901760
        %v4018 = vsub.f32 %v2891, %v4017
        %4019 = vmatmul.f32.gmra.mxu0 %v4018
        %v4020 = vpop.f32.mrf.mxu0
        %v4021 = vadd.f32 %v3691, %v4020
        %v4022 = vand.u32 %v2892, 4294901760
        %v4023 = vsub.f32 %v2892, %v4022
        %4024 = vmatmul.f32.gmra.mxu0 %v4023
        %v4025 = vpop.f32.mrf.mxu0
        %v4026 = vadd.f32 %v3695, %v4025
        %v4027 = vand.u32 %v2893, 4294901760
        %v4028 = vsub.f32 %v2893, %v4027
        %4029 = vmatmul.f32.gmra.mxu0 %v4028
        %v4030 = vpop.f32.mrf.mxu0
        %v4031 = vadd.f32 %v3699, %v4030
        %v4032 = vand.u32 %v2894, 4294901760
        %v4033 = vsub.f32 %v2894, %v4032
        %4034 = vmatmul.f32.gmra.mxu0 %v4033
        %v4035 = vpop.f32.mrf.mxu0
        %v4036 = vadd.f32 %v3703, %v4035
        %v4037 = vand.u32 %v2895, 4294901760
        %v4038 = vsub.f32 %v2895, %v4037
        %4039 = vmatmul.f32.gmra.mxu0 %v4038
        %v4040 = vpop.f32.mrf.mxu0
        %v4041 = vadd.f32 %v3707, %v4040
        %v4042 = vand.u32 %v2896, 4294901760
        %v4043 = vsub.f32 %v2896, %v4042
        %4044 = vmatmul.f32.gmra.mxu0 %v4043
        %v4045 = vpop.f32.mrf.mxu0
        %v4046 = vadd.f32 %v3711, %v4045
        %v4047 = vand.u32 %v2897, 4294901760
        %v4048 = vsub.f32 %v2897, %v4047
        %4049 = vmatmul.f32.gmra.mxu0 %v4048
        %v4050 = vpop.f32.mrf.mxu0
        %v4051 = vadd.f32 %v3715, %v4050
        %v4052 = vand.u32 %v2898, 4294901760
        %v4053 = vsub.f32 %v2898, %v4052
        %4054 = vmatmul.f32.gmra.mxu0 %v4053
        %v4055 = vpop.f32.mrf.mxu0
        %v4056 = vadd.f32 %v3719, %v4055
        %v4057 = vand.u32 %v2899, 4294901760
        %v4058 = vsub.f32 %v2899, %v4057
        %4059 = vmatmul.f32.gmra.mxu0 %v4058
        %v4060 = vpop.f32.mrf.mxu0
        %v4061 = vadd.f32 %v3723, %v4060
        %v4062 = vand.u32 %v2900, 4294901760
        %v4063 = vsub.f32 %v2900, %v4062
        %4064 = vmatmul.f32.gmra.mxu0 %v4063
        %v4065 = vpop.f32.mrf.mxu0
        %v4066 = vadd.f32 %v3727, %v4065
        %v4067 = vand.u32 %v2901, 4294901760
        %v4068 = vsub.f32 %v2901, %v4067
        %4069 = vmatmul.f32.gmra.mxu0 %v4068
        %v4070 = vpop.f32.mrf.mxu0
        %v4071 = vadd.f32 %v3731, %v4070
        %v4072 = vand.u32 %v2902, 4294901760
        %v4073 = vsub.f32 %v2902, %v4072
        %4074 = vmatmul.f32.gmra.mxu0 %v4073
        %v4075 = vpop.f32.mrf.mxu0
        %v4076 = vadd.f32 %v3735, %v4075
        %v4077 = vand.u32 %v2903, 4294901760
        %v4078 = vsub.f32 %v2903, %v4077
        %4079 = vmatmul.f32.gmra.mxu0 %v4078
        %v4080 = vpop.f32.mrf.mxu0
        %v4081 = vadd.f32 %v3739, %v4080
        %v4082 = vand.u32 %v2904, 4294901760
        %v4083 = vsub.f32 %v2904, %v4082
        %4084 = vmatmul.f32.gmra.mxu0 %v4083
        %v4085 = vpop.f32.mrf.mxu0
        %v4086 = vadd.f32 %v3743, %v4085
        %v4087 = vand.u32 %v2905, 4294901760
        %v4088 = vsub.f32 %v2905, %v4087
        %4089 = vmatmul.f32.gmra.mxu0 %v4088
        %v4090 = vpop.f32.mrf.mxu0
        %v4091 = vadd.f32 %v3747, %v4090
        %v4092 = vand.u32 %v2906, 4294901760
        %v4093 = vsub.f32 %v2906, %v4092
        %4094 = vmatmul.f32.gmra.mxu0 %v4093
        %v4095 = vpop.f32.mrf.mxu0
        %v4096 = vadd.f32 %v3751, %v4095
        %v4097 = vand.u32 %v2907, 4294901760
        %v4098 = vsub.f32 %v2907, %v4097
        %4099 = vmatmul.f32.gmra.mxu0 %v4098
        %v4100 = vpop.f32.mrf.mxu0
        %v4101 = vadd.f32 %v3755, %v4100
        %v4102 = vand.u32 %v2908, 4294901760
        %v4103 = vsub.f32 %v2908, %v4102
        %4104 = vmatmul.f32.gmra.mxu0 %v4103
        %v4105 = vpop.f32.mrf.mxu0
        %v4106 = vadd.f32 %v3759, %v4105
        %v4107 = vand.u32 %v2909, 4294901760
        %v4108 = vsub.f32 %v2909, %v4107
        %4109 = vmatmul.f32.gmra.mxu0 %v4108
        %v4110 = vpop.f32.mrf.mxu0
        %v4111 = vadd.f32 %v3763, %v4110
        %v4112 = vand.u32 %v2910, 4294901760
        %v4113 = vsub.f32 %v2910, %v4112
        %4114 = vmatmul.f32.gmra.mxu0 %v4113
        %v4115 = vpop.f32.mrf.mxu0
        %v4116 = vadd.f32 %v3767, %v4115
        %v4117 = vand.u32 %v2911, 4294901760
        %v4118 = vsub.f32 %v2911, %v4117
        %4119 = vmatmul.f32.gmra.mxu0 %v4118
        %v4120 = vpop.f32.mrf.mxu0
        %v4121 = vadd.f32 %v3771, %v4120
        %v4122 = vand.u32 %v2912, 4294901760
        %v4123 = vsub.f32 %v2912, %v4122
        %4124 = vmatmul.f32.gmra.mxu0 %v4123
        %v4125 = vpop.f32.mrf.mxu0
        %v4126 = vadd.f32 %v3775, %v4125
        %v4127 = vand.u32 %v2913, 4294901760
        %v4128 = vsub.f32 %v2913, %v4127
        %4129 = vmatmul.f32.gmra.mxu0 %v4128
        %v4130 = vpop.f32.mrf.mxu0
        %v4131 = vadd.f32 %v3779, %v4130
        %v4132 = vand.u32 %v2914, 4294901760
        %v4133 = vsub.f32 %v2914, %v4132
        %4134 = vmatmul.f32.gmra.mxu0 %v4133
        %v4135 = vpop.f32.mrf.mxu0
        %v4136 = vadd.f32 %v3783, %v4135
        %v4137 = vand.u32 %v2915, 4294901760
        %v4138 = vsub.f32 %v2915, %v4137
        %4139 = vmatmul.f32.gmra.mxu0 %v4138
        %v4140 = vpop.f32.mrf.mxu0
        %v4141 = vadd.f32 %v3787, %v4140
        %v4142 = vand.u32 %v2916, 4294901760
        %v4143 = vsub.f32 %v2916, %v4142
        %4144 = vmatmul.f32.gmra.mxu0 %v4143
        %v4145 = vpop.f32.mrf.mxu0
        %v4146 = vadd.f32 %v3791, %v4145
        %v4147 = vand.u32 %v2917, 4294901760
        %v4148 = vsub.f32 %v2917, %v4147
        %4149 = vmatmul.f32.gmra.mxu0 %v4148
        %v4150 = vpop.f32.mrf.mxu0
        %v4151 = vadd.f32 %v3795, %v4150
        %v4152 = vand.u32 %v2918, 4294901760
        %v4153 = vsub.f32 %v2918, %v4152
        %4154 = vmatmul.f32.gmra.mxu0 %v4153
        %v4155 = vpop.f32.mrf.mxu0
        %v4156 = vadd.f32 %v3799, %v4155
        %v4157 = vand.u32 %v2919, 4294901760
        %v4158 = vsub.f32 %v2919, %v4157
        %4159 = vmatmul.f32.gmra.mxu0 %v4158
        %v4160 = vpop.f32.mrf.mxu0
        %v4161 = vadd.f32 %v3803, %v4160
        %v4162 = vand.u32 %v2920, 4294901760
        %v4163 = vsub.f32 %v2920, %v4162
        %4164 = vmatmul.f32.gmra.mxu0 %v4163
        %v4165 = vpop.f32.mrf.mxu0
        %v4166 = vadd.f32 %v3807, %v4165
        %v4167 = vand.u32 %v2921, 4294901760
        %v4168 = vsub.f32 %v2921, %v4167
        %4169 = vmatmul.f32.gmra.mxu0 %v4168
        %v4170 = vpop.f32.mrf.mxu0
        %v4171 = vadd.f32 %v3811, %v4170
        %v4172 = vand.u32 %v2922, 4294901760
        %v4173 = vsub.f32 %v2922, %v4172
        %4174 = vmatmul.f32.gmra.mxu0 %v4173
        %v4175 = vpop.f32.mrf.mxu0
        %v4176 = vadd.f32 %v3815, %v4175
        %v4177 = vand.u32 %v2923, 4294901760
        %v4178 = vsub.f32 %v2923, %v4177
        %4179 = vmatmul.f32.gmra.mxu0 %v4178
        %v4180 = vpop.f32.mrf.mxu0
        %v4181 = vadd.f32 %v3819, %v4180
        %v4182 = vand.u32 %v2924, 4294901760
        %v4183 = vsub.f32 %v2924, %v4182
        %4184 = vmatmul.f32.gmra.mxu0 %v4183
        %v4185 = vpop.f32.mrf.mxu0
        %v4186 = vadd.f32 %v3823, %v4185
        %v4187 = vand.u32 %v2925, 4294901760
        %v4188 = vsub.f32 %v2925, %v4187
        %4189 = vmatmul.f32.gmra.mxu0 %v4188
        %v4190 = vpop.f32.mrf.mxu0
        %v4191 = vadd.f32 %v3827, %v4190
        %v4192 = vand.u32 %v2926, 4294901760
        %v4193 = vsub.f32 %v2926, %v4192
        %4194 = vmatmul.f32.gmra.mxu0 %v4193
        %v4195 = vpop.f32.mrf.mxu0
        %v4196 = vadd.f32 %v3831, %v4195
        %v4197 = vand.u32 %v2927, 4294901760
        %v4198 = vsub.f32 %v2927, %v4197
        %4199 = vmatmul.f32.gmra.mxu0 %v4198
        %v4200 = vpop.f32.mrf.mxu0
        %v4201 = vadd.f32 %v3835, %v4200
        %v4202 = vand.u32 %v2928, 4294901760
        %v4203 = vsub.f32 %v2928, %v4202
        %4204 = vmatmul.f32.gmra.mxu0 %v4203
        %v4205 = vpop.f32.mrf.mxu0
        %v4206 = vadd.f32 %v3839, %v4205
        %v4207 = vand.u32 %v2929, 4294901760
        %v4208 = vsub.f32 %v2929, %v4207
        %4209 = vmatmul.f32.gmra.mxu0 %v4208
        %v4210 = vpop.f32.mrf.mxu0
        %v4211 = vadd.f32 %v3843, %v4210
        %v4212 = vand.u32 %v2930, 4294901760
        %v4213 = vsub.f32 %v2930, %v4212
        %4214 = vmatmul.f32.gmra.mxu0 %v4213
        %v4215 = vpop.f32.mrf.mxu0
        %v4216 = vadd.f32 %v3847, %v4215
        %4217 = vdwg.mxu0
        %v4218 = vand.u32 %v2946, 4294901760
        %4219 = vmatpush.msra.mxu0 %v4218
        %v4220 = vand.u32 %v2945, 4294901760
        %4221 = vmatpush.msra.mxu0 %v4220
        %v4222 = vand.u32 %v2944, 4294901760
        %4223 = vmatpush.msra.mxu0 %v4222
        %v4224 = vand.u32 %v2943, 4294901760
        %4225 = vmatpush.msra.mxu0 %v4224
        %v4226 = vand.u32 %v2942, 4294901760
        %4227 = vmatpush.msra.mxu0 %v4226
        %v4228 = vand.u32 %v2941, 4294901760
        %4229 = vmatpush.msra.mxu0 %v4228
        %v4230 = vand.u32 %v2940, 4294901760
        %4231 = vmatpush.msra.mxu0 %v4230
        %v4232 = vand.u32 %v2939, 4294901760
        %4233 = vmatpush.msra.mxu0 %v4232
        %v4234 = vand.u32 %v2938, 4294901760
        %4235 = vmatpush.msra.mxu0 %v4234
        %v4236 = vand.u32 %v2937, 4294901760
        %4237 = vmatpush.msra.mxu0 %v4236
        %v4238 = vand.u32 %v2936, 4294901760
        %4239 = vmatpush.msra.mxu0 %v4238
        %v4240 = vand.u32 %v2935, 4294901760
        %4241 = vmatpush.msra.mxu0 %v4240
        %v4242 = vand.u32 %v2934, 4294901760
        %4243 = vmatpush.msra.mxu0 %v4242
        %v4244 = vand.u32 %v2933, 4294901760
        %4245 = vmatpush.msra.mxu0 %v4244
        %v4246 = vand.u32 %v2932, 4294901760
        %4247 = vmatpush.msra.mxu0 %v4246
        %v4248 = vand.u32 %v2931, 4294901760
        %4249 = vmatpush.msra.mxu0 %v4248
        %v4250 = vand.u32 %v2867, 4294901760
        %v4251 = vsub.f32 %v2867, %v4250
        %v4252 = vand.u32 %v4251, 4294901760
        %4253 = vmatmul.f32.gmra.mxu0 %v4252
        %v4254 = vpop.f32.mrf.mxu0
        %v4255 = vadd.f32 %v3901, %v4254
        %v4256 = vand.u32 %v2868, 4294901760
        %v4257 = vsub.f32 %v2868, %v4256
        %v4258 = vand.u32 %v4257, 4294901760
        %4259 = vmatmul.f32.gmra.mxu0 %v4258
        %v4260 = vpop.f32.mrf.mxu0
        %v4261 = vadd.f32 %v3906, %v4260
        %v4262 = vand.u32 %v2869, 4294901760
        %v4263 = vsub.f32 %v2869, %v4262
        %v4264 = vand.u32 %v4263, 4294901760
        %4265 = vmatmul.f32.gmra.mxu0 %v4264
        %v4266 = vpop.f32.mrf.mxu0
        %v4267 = vadd.f32 %v3911, %v4266
        %v4268 = vand.u32 %v2870, 4294901760
        %v4269 = vsub.f32 %v2870, %v4268
        %v4270 = vand.u32 %v4269, 4294901760
        %4271 = vmatmul.f32.gmra.mxu0 %v4270
        %v4272 = vpop.f32.mrf.mxu0
        %v4273 = vadd.f32 %v3916, %v4272
        %v4274 = vand.u32 %v2871, 4294901760
        %v4275 = vsub.f32 %v2871, %v4274
        %v4276 = vand.u32 %v4275, 4294901760
        %4277 = vmatmul.f32.gmra.mxu0 %v4276
        %v4278 = vpop.f32.mrf.mxu0
        %v4279 = vadd.f32 %v3921, %v4278
        %v4280 = vand.u32 %v2872, 4294901760
        %v4281 = vsub.f32 %v2872, %v4280
        %v4282 = vand.u32 %v4281, 4294901760
        %4283 = vmatmul.f32.gmra.mxu0 %v4282
        %v4284 = vpop.f32.mrf.mxu0
        %v4285 = vadd.f32 %v3926, %v4284
        %v4286 = vand.u32 %v2873, 4294901760
        %v4287 = vsub.f32 %v2873, %v4286
        %v4288 = vand.u32 %v4287, 4294901760
        %4289 = vmatmul.f32.gmra.mxu0 %v4288
        %v4290 = vpop.f32.mrf.mxu0
        %v4291 = vadd.f32 %v3931, %v4290
        %v4292 = vand.u32 %v2874, 4294901760
        %v4293 = vsub.f32 %v2874, %v4292
        %v4294 = vand.u32 %v4293, 4294901760
        %4295 = vmatmul.f32.gmra.mxu0 %v4294
        %v4296 = vpop.f32.mrf.mxu0
        %v4297 = vadd.f32 %v3936, %v4296
        %v4298 = vand.u32 %v2875, 4294901760
        %v4299 = vsub.f32 %v2875, %v4298
        %v4300 = vand.u32 %v4299, 4294901760
        %4301 = vmatmul.f32.gmra.mxu0 %v4300
        %v4302 = vpop.f32.mrf.mxu0
        %v4303 = vadd.f32 %v3941, %v4302
        %v4304 = vand.u32 %v2876, 4294901760
        %v4305 = vsub.f32 %v2876, %v4304
        %v4306 = vand.u32 %v4305, 4294901760
        %4307 = vmatmul.f32.gmra.mxu0 %v4306
        %v4308 = vpop.f32.mrf.mxu0
        %v4309 = vadd.f32 %v3946, %v4308
        %v4310 = vand.u32 %v2877, 4294901760
        %v4311 = vsub.f32 %v2877, %v4310
        %v4312 = vand.u32 %v4311, 4294901760
        %4313 = vmatmul.f32.gmra.mxu0 %v4312
        %v4314 = vpop.f32.mrf.mxu0
        %v4315 = vadd.f32 %v3951, %v4314
        %v4316 = vand.u32 %v2878, 4294901760
        %v4317 = vsub.f32 %v2878, %v4316
        %v4318 = vand.u32 %v4317, 4294901760
        %4319 = vmatmul.f32.gmra.mxu0 %v4318
        %v4320 = vpop.f32.mrf.mxu0
        %v4321 = vadd.f32 %v3956, %v4320
        %v4322 = vand.u32 %v2879, 4294901760
        %v4323 = vsub.f32 %v2879, %v4322
        %v4324 = vand.u32 %v4323, 4294901760
        %4325 = vmatmul.f32.gmra.mxu0 %v4324
        %v4326 = vpop.f32.mrf.mxu0
        %v4327 = vadd.f32 %v3961, %v4326
        %v4328 = vand.u32 %v2880, 4294901760
        %v4329 = vsub.f32 %v2880, %v4328
        %v4330 = vand.u32 %v4329, 4294901760
        %4331 = vmatmul.f32.gmra.mxu0 %v4330
        %v4332 = vpop.f32.mrf.mxu0
        %v4333 = vadd.f32 %v3966, %v4332
        %v4334 = vand.u32 %v2881, 4294901760
        %v4335 = vsub.f32 %v2881, %v4334
        %v4336 = vand.u32 %v4335, 4294901760
        %4337 = vmatmul.f32.gmra.mxu0 %v4336
        %v4338 = vpop.f32.mrf.mxu0
        %v4339 = vadd.f32 %v3971, %v4338
        %v4340 = vand.u32 %v2882, 4294901760
        %v4341 = vsub.f32 %v2882, %v4340
        %v4342 = vand.u32 %v4341, 4294901760
        %4343 = vmatmul.f32.gmra.mxu0 %v4342
        %v4344 = vpop.f32.mrf.mxu0
        %v4345 = vadd.f32 %v3976, %v4344
        %v4346 = vand.u32 %v2883, 4294901760
        %v4347 = vsub.f32 %v2883, %v4346
        %v4348 = vand.u32 %v4347, 4294901760
        %4349 = vmatmul.f32.gmra.mxu0 %v4348
        %v4350 = vpop.f32.mrf.mxu0
        %v4351 = vadd.f32 %v3981, %v4350
        %v4352 = vand.u32 %v2884, 4294901760
        %v4353 = vsub.f32 %v2884, %v4352
        %v4354 = vand.u32 %v4353, 4294901760
        %4355 = vmatmul.f32.gmra.mxu0 %v4354
        %v4356 = vpop.f32.mrf.mxu0
        %v4357 = vadd.f32 %v3986, %v4356
        %v4358 = vand.u32 %v2885, 4294901760
        %v4359 = vsub.f32 %v2885, %v4358
        %v4360 = vand.u32 %v4359, 4294901760
        %4361 = vmatmul.f32.gmra.mxu0 %v4360
        %v4362 = vpop.f32.mrf.mxu0
        %v4363 = vadd.f32 %v3991, %v4362
        %v4364 = vand.u32 %v2886, 4294901760
        %v4365 = vsub.f32 %v2886, %v4364
        %v4366 = vand.u32 %v4365, 4294901760
        %4367 = vmatmul.f32.gmra.mxu0 %v4366
        %v4368 = vpop.f32.mrf.mxu0
        %v4369 = vadd.f32 %v3996, %v4368
        %v4370 = vand.u32 %v2887, 4294901760
        %v4371 = vsub.f32 %v2887, %v4370
        %v4372 = vand.u32 %v4371, 4294901760
        %4373 = vmatmul.f32.gmra.mxu0 %v4372
        %v4374 = vpop.f32.mrf.mxu0
        %v4375 = vadd.f32 %v4001, %v4374
        %v4376 = vand.u32 %v2888, 4294901760
        %v4377 = vsub.f32 %v2888, %v4376
        %v4378 = vand.u32 %v4377, 4294901760
        %4379 = vmatmul.f32.gmra.mxu0 %v4378
        %v4380 = vpop.f32.mrf.mxu0
        %v4381 = vadd.f32 %v4006, %v4380
        %v4382 = vand.u32 %v2889, 4294901760
        %v4383 = vsub.f32 %v2889, %v4382
        %v4384 = vand.u32 %v4383, 4294901760
        %4385 = vmatmul.f32.gmra.mxu0 %v4384
        %v4386 = vpop.f32.mrf.mxu0
        %v4387 = vadd.f32 %v4011, %v4386
        %v4388 = vand.u32 %v2890, 4294901760
        %v4389 = vsub.f32 %v2890, %v4388
        %v4390 = vand.u32 %v4389, 4294901760
        %4391 = vmatmul.f32.gmra.mxu0 %v4390
        %v4392 = vpop.f32.mrf.mxu0
        %v4393 = vadd.f32 %v4016, %v4392
        %v4394 = vand.u32 %v2891, 4294901760
        %v4395 = vsub.f32 %v2891, %v4394
        %v4396 = vand.u32 %v4395, 4294901760
        %4397 = vmatmul.f32.gmra.mxu0 %v4396
        %v4398 = vpop.f32.mrf.mxu0
        %v4399 = vadd.f32 %v4021, %v4398
        %v4400 = vand.u32 %v2892, 4294901760
        %v4401 = vsub.f32 %v2892, %v4400
        %v4402 = vand.u32 %v4401, 4294901760
        %4403 = vmatmul.f32.gmra.mxu0 %v4402
        %v4404 = vpop.f32.mrf.mxu0
        %v4405 = vadd.f32 %v4026, %v4404
        %v4406 = vand.u32 %v2893, 4294901760
        %v4407 = vsub.f32 %v2893, %v4406
        %v4408 = vand.u32 %v4407, 4294901760
        %4409 = vmatmul.f32.gmra.mxu0 %v4408
        %v4410 = vpop.f32.mrf.mxu0
        %v4411 = vadd.f32 %v4031, %v4410
        %v4412 = vand.u32 %v2894, 4294901760
        %v4413 = vsub.f32 %v2894, %v4412
        %v4414 = vand.u32 %v4413, 4294901760
        %4415 = vmatmul.f32.gmra.mxu0 %v4414
        %v4416 = vpop.f32.mrf.mxu0
        %v4417 = vadd.f32 %v4036, %v4416
        %v4418 = vand.u32 %v2895, 4294901760
        %v4419 = vsub.f32 %v2895, %v4418
        %v4420 = vand.u32 %v4419, 4294901760
        %4421 = vmatmul.f32.gmra.mxu0 %v4420
        %v4422 = vpop.f32.mrf.mxu0
        %v4423 = vadd.f32 %v4041, %v4422
        %v4424 = vand.u32 %v2896, 4294901760
        %v4425 = vsub.f32 %v2896, %v4424
        %v4426 = vand.u32 %v4425, 4294901760
        %4427 = vmatmul.f32.gmra.mxu0 %v4426
        %v4428 = vpop.f32.mrf.mxu0
        %v4429 = vadd.f32 %v4046, %v4428
        %v4430 = vand.u32 %v2897, 4294901760
        %v4431 = vsub.f32 %v2897, %v4430
        %v4432 = vand.u32 %v4431, 4294901760
        %4433 = vmatmul.f32.gmra.mxu0 %v4432
        %v4434 = vpop.f32.mrf.mxu0
        %v4435 = vadd.f32 %v4051, %v4434
        %v4436 = vand.u32 %v2898, 4294901760
        %v4437 = vsub.f32 %v2898, %v4436
        %v4438 = vand.u32 %v4437, 4294901760
        %4439 = vmatmul.f32.gmra.mxu0 %v4438
        %v4440 = vpop.f32.mrf.mxu0
        %v4441 = vadd.f32 %v4056, %v4440
        %v4442 = vand.u32 %v2899, 4294901760
        %v4443 = vsub.f32 %v2899, %v4442
        %v4444 = vand.u32 %v4443, 4294901760
        %4445 = vmatmul.f32.gmra.mxu0 %v4444
        %v4446 = vpop.f32.mrf.mxu0
        %v4447 = vadd.f32 %v4061, %v4446
        %v4448 = vand.u32 %v2900, 4294901760
        %v4449 = vsub.f32 %v2900, %v4448
        %v4450 = vand.u32 %v4449, 4294901760
        %4451 = vmatmul.f32.gmra.mxu0 %v4450
        %v4452 = vpop.f32.mrf.mxu0
        %v4453 = vadd.f32 %v4066, %v4452
        %v4454 = vand.u32 %v2901, 4294901760
        %v4455 = vsub.f32 %v2901, %v4454
        %v4456 = vand.u32 %v4455, 4294901760
        %4457 = vmatmul.f32.gmra.mxu0 %v4456
        %v4458 = vpop.f32.mrf.mxu0
        %v4459 = vadd.f32 %v4071, %v4458
        %v4460 = vand.u32 %v2902, 4294901760
        %v4461 = vsub.f32 %v2902, %v4460
        %v4462 = vand.u32 %v4461, 4294901760
        %4463 = vmatmul.f32.gmra.mxu0 %v4462
        %v4464 = vpop.f32.mrf.mxu0
        %v4465 = vadd.f32 %v4076, %v4464
        %v4466 = vand.u32 %v2903, 4294901760
        %v4467 = vsub.f32 %v2903, %v4466
        %v4468 = vand.u32 %v4467, 4294901760
        %4469 = vmatmul.f32.gmra.mxu0 %v4468
        %v4470 = vpop.f32.mrf.mxu0
        %v4471 = vadd.f32 %v4081, %v4470
        %v4472 = vand.u32 %v2904, 4294901760
        %v4473 = vsub.f32 %v2904, %v4472
        %v4474 = vand.u32 %v4473, 4294901760
        %4475 = vmatmul.f32.gmra.mxu0 %v4474
        %v4476 = vpop.f32.mrf.mxu0
        %v4477 = vadd.f32 %v4086, %v4476
        %v4478 = vand.u32 %v2905, 4294901760
        %v4479 = vsub.f32 %v2905, %v4478
        %v4480 = vand.u32 %v4479, 4294901760
        %4481 = vmatmul.f32.gmra.mxu0 %v4480
        %v4482 = vpop.f32.mrf.mxu0
        %v4483 = vadd.f32 %v4091, %v4482
        %v4484 = vand.u32 %v2906, 4294901760
        %v4485 = vsub.f32 %v2906, %v4484
        %v4486 = vand.u32 %v4485, 4294901760
        %4487 = vmatmul.f32.gmra.mxu0 %v4486
        %v4488 = vpop.f32.mrf.mxu0
        %v4489 = vadd.f32 %v4096, %v4488
        %v4490 = vand.u32 %v2907, 4294901760
        %v4491 = vsub.f32 %v2907, %v4490
        %v4492 = vand.u32 %v4491, 4294901760
        %4493 = vmatmul.f32.gmra.mxu0 %v4492
        %v4494 = vpop.f32.mrf.mxu0
        %v4495 = vadd.f32 %v4101, %v4494
        %v4496 = vand.u32 %v2908, 4294901760
        %v4497 = vsub.f32 %v2908, %v4496
        %v4498 = vand.u32 %v4497, 4294901760
        %4499 = vmatmul.f32.gmra.mxu0 %v4498
        %v4500 = vpop.f32.mrf.mxu0
        %v4501 = vadd.f32 %v4106, %v4500
        %v4502 = vand.u32 %v2909, 4294901760
        %v4503 = vsub.f32 %v2909, %v4502
        %v4504 = vand.u32 %v4503, 4294901760
        %4505 = vmatmul.f32.gmra.mxu0 %v4504
        %v4506 = vpop.f32.mrf.mxu0
        %v4507 = vadd.f32 %v4111, %v4506
        %v4508 = vand.u32 %v2910, 4294901760
        %v4509 = vsub.f32 %v2910, %v4508
        %v4510 = vand.u32 %v4509, 4294901760
        %4511 = vmatmul.f32.gmra.mxu0 %v4510
        %v4512 = vpop.f32.mrf.mxu0
        %v4513 = vadd.f32 %v4116, %v4512
        %v4514 = vand.u32 %v2911, 4294901760
        %v4515 = vsub.f32 %v2911, %v4514
        %v4516 = vand.u32 %v4515, 4294901760
        %4517 = vmatmul.f32.gmra.mxu0 %v4516
        %v4518 = vpop.f32.mrf.mxu0
        %v4519 = vadd.f32 %v4121, %v4518
        %v4520 = vand.u32 %v2912, 4294901760
        %v4521 = vsub.f32 %v2912, %v4520
        %v4522 = vand.u32 %v4521, 4294901760
        %4523 = vmatmul.f32.gmra.mxu0 %v4522
        %v4524 = vpop.f32.mrf.mxu0
        %v4525 = vadd.f32 %v4126, %v4524
        %v4526 = vand.u32 %v2913, 4294901760
        %v4527 = vsub.f32 %v2913, %v4526
        %v4528 = vand.u32 %v4527, 4294901760
        %4529 = vmatmul.f32.gmra.mxu0 %v4528
        %v4530 = vpop.f32.mrf.mxu0
        %v4531 = vadd.f32 %v4131, %v4530
        %v4532 = vand.u32 %v2914, 4294901760
        %v4533 = vsub.f32 %v2914, %v4532
        %v4534 = vand.u32 %v4533, 4294901760
        %4535 = vmatmul.f32.gmra.mxu0 %v4534
        %v4536 = vpop.f32.mrf.mxu0
        %v4537 = vadd.f32 %v4136, %v4536
        %v4538 = vand.u32 %v2915, 4294901760
        %v4539 = vsub.f32 %v2915, %v4538
        %v4540 = vand.u32 %v4539, 4294901760
        %4541 = vmatmul.f32.gmra.mxu0 %v4540
        %v4542 = vpop.f32.mrf.mxu0
        %v4543 = vadd.f32 %v4141, %v4542
        %v4544 = vand.u32 %v2916, 4294901760
        %v4545 = vsub.f32 %v2916, %v4544
        %v4546 = vand.u32 %v4545, 4294901760
        %4547 = vmatmul.f32.gmra.mxu0 %v4546
        %v4548 = vpop.f32.mrf.mxu0
        %v4549 = vadd.f32 %v4146, %v4548
        %v4550 = vand.u32 %v2917, 4294901760
        %v4551 = vsub.f32 %v2917, %v4550
        %v4552 = vand.u32 %v4551, 4294901760
        %4553 = vmatmul.f32.gmra.mxu0 %v4552
        %v4554 = vpop.f32.mrf.mxu0
        %v4555 = vadd.f32 %v4151, %v4554
        %v4556 = vand.u32 %v2918, 4294901760
        %v4557 = vsub.f32 %v2918, %v4556
        %v4558 = vand.u32 %v4557, 4294901760
        %4559 = vmatmul.f32.gmra.mxu0 %v4558
        %v4560 = vpop.f32.mrf.mxu0
        %v4561 = vadd.f32 %v4156, %v4560
        %v4562 = vand.u32 %v2919, 4294901760
        %v4563 = vsub.f32 %v2919, %v4562
        %v4564 = vand.u32 %v4563, 4294901760
        %4565 = vmatmul.f32.gmra.mxu0 %v4564
        %v4566 = vpop.f32.mrf.mxu0
        %v4567 = vadd.f32 %v4161, %v4566
        %v4568 = vand.u32 %v2920, 4294901760
        %v4569 = vsub.f32 %v2920, %v4568
        %v4570 = vand.u32 %v4569, 4294901760
        %4571 = vmatmul.f32.gmra.mxu0 %v4570
        %v4572 = vpop.f32.mrf.mxu0
        %v4573 = vadd.f32 %v4166, %v4572
        %v4574 = vand.u32 %v2921, 4294901760
        %v4575 = vsub.f32 %v2921, %v4574
        %v4576 = vand.u32 %v4575, 4294901760
        %4577 = vmatmul.f32.gmra.mxu0 %v4576
        %v4578 = vpop.f32.mrf.mxu0
        %v4579 = vadd.f32 %v4171, %v4578
        %v4580 = vand.u32 %v2922, 4294901760
        %v4581 = vsub.f32 %v2922, %v4580
        %v4582 = vand.u32 %v4581, 4294901760
        %4583 = vmatmul.f32.gmra.mxu0 %v4582
        %v4584 = vpop.f32.mrf.mxu0
        %v4585 = vadd.f32 %v4176, %v4584
        %v4586 = vand.u32 %v2923, 4294901760
        %v4587 = vsub.f32 %v2923, %v4586
        %v4588 = vand.u32 %v4587, 4294901760
        %4589 = vmatmul.f32.gmra.mxu0 %v4588
        %v4590 = vpop.f32.mrf.mxu0
        %v4591 = vadd.f32 %v4181, %v4590
        %v4592 = vand.u32 %v2924, 4294901760
        %v4593 = vsub.f32 %v2924, %v4592
        %v4594 = vand.u32 %v4593, 4294901760
        %4595 = vmatmul.f32.gmra.mxu0 %v4594
        %v4596 = vpop.f32.mrf.mxu0
        %v4597 = vadd.f32 %v4186, %v4596
        %v4598 = vand.u32 %v2925, 4294901760
        %v4599 = vsub.f32 %v2925, %v4598
        %v4600 = vand.u32 %v4599, 4294901760
        %4601 = vmatmul.f32.gmra.mxu0 %v4600
        %v4602 = vpop.f32.mrf.mxu0
        %v4603 = vadd.f32 %v4191, %v4602
        %v4604 = vand.u32 %v2926, 4294901760
        %v4605 = vsub.f32 %v2926, %v4604
        %v4606 = vand.u32 %v4605, 4294901760
        %4607 = vmatmul.f32.gmra.mxu0 %v4606
        %v4608 = vpop.f32.mrf.mxu0
        %v4609 = vadd.f32 %v4196, %v4608
        %v4610 = vand.u32 %v2927, 4294901760
        %v4611 = vsub.f32 %v2927, %v4610
        %v4612 = vand.u32 %v4611, 4294901760
        %4613 = vmatmul.f32.gmra.mxu0 %v4612
        %v4614 = vpop.f32.mrf.mxu0
        %v4615 = vadd.f32 %v4201, %v4614
        %v4616 = vand.u32 %v2928, 4294901760
        %v4617 = vsub.f32 %v2928, %v4616
        %v4618 = vand.u32 %v4617, 4294901760
        %4619 = vmatmul.f32.gmra.mxu0 %v4618
        %v4620 = vpop.f32.mrf.mxu0
        %v4621 = vadd.f32 %v4206, %v4620
        %v4622 = vand.u32 %v2929, 4294901760
        %v4623 = vsub.f32 %v2929, %v4622
        %v4624 = vand.u32 %v4623, 4294901760
        %4625 = vmatmul.f32.gmra.mxu0 %v4624
        %v4626 = vpop.f32.mrf.mxu0
        %v4627 = vadd.f32 %v4211, %v4626
        %v4628 = vand.u32 %v2930, 4294901760
        %v4629 = vsub.f32 %v2930, %v4628
        %v4630 = vand.u32 %v4629, 4294901760
        %4631 = vmatmul.f32.gmra.mxu0 %v4630
        %v4632 = vpop.f32.mrf.mxu0
        %v4633 = vadd.f32 %v4216, %v4632
        %4634 = vdwg.mxu0
        %v4635 = vand.u32 %v2946, 4294901760
        %v4636 = vsub.f32 %v2946, %v4635
        %v4637 = vand.u32 %v4636, 4294901760
        %4638 = vmatpush.msra.mxu0 %v4637
        %v4639 = vand.u32 %v2945, 4294901760
        %v4640 = vsub.f32 %v2945, %v4639
        %v4641 = vand.u32 %v4640, 4294901760
        %4642 = vmatpush.msra.mxu0 %v4641
        %v4643 = vand.u32 %v2944, 4294901760
        %v4644 = vsub.f32 %v2944, %v4643
        %v4645 = vand.u32 %v4644, 4294901760
        %4646 = vmatpush.msra.mxu0 %v4645
        %v4647 = vand.u32 %v2943, 4294901760
        %v4648 = vsub.f32 %v2943, %v4647
        %v4649 = vand.u32 %v4648, 4294901760
        %4650 = vmatpush.msra.mxu0 %v4649
        %v4651 = vand.u32 %v2942, 4294901760
        %v4652 = vsub.f32 %v2942, %v4651
        %v4653 = vand.u32 %v4652, 4294901760
        %4654 = vmatpush.msra.mxu0 %v4653
        %v4655 = vand.u32 %v2941, 4294901760
        %v4656 = vsub.f32 %v2941, %v4655
        %v4657 = vand.u32 %v4656, 4294901760
        %4658 = vmatpush.msra.mxu0 %v4657
        %v4659 = vand.u32 %v2940, 4294901760
        %v4660 = vsub.f32 %v2940, %v4659
        %v4661 = vand.u32 %v4660, 4294901760
        %4662 = vmatpush.msra.mxu0 %v4661
        %v4663 = vand.u32 %v2939, 4294901760
        %v4664 = vsub.f32 %v2939, %v4663
        %v4665 = vand.u32 %v4664, 4294901760
        %4666 = vmatpush.msra.mxu0 %v4665
        %v4667 = vand.u32 %v2938, 4294901760
        %v4668 = vsub.f32 %v2938, %v4667
        %v4669 = vand.u32 %v4668, 4294901760
        %4670 = vmatpush.msra.mxu0 %v4669
        %v4671 = vand.u32 %v2937, 4294901760
        %v4672 = vsub.f32 %v2937, %v4671
        %v4673 = vand.u32 %v4672, 4294901760
        %4674 = vmatpush.msra.mxu0 %v4673
        %v4675 = vand.u32 %v2936, 4294901760
        %v4676 = vsub.f32 %v2936, %v4675
        %v4677 = vand.u32 %v4676, 4294901760
        %4678 = vmatpush.msra.mxu0 %v4677
        %v4679 = vand.u32 %v2935, 4294901760
        %v4680 = vsub.f32 %v2935, %v4679
        %v4681 = vand.u32 %v4680, 4294901760
        %4682 = vmatpush.msra.mxu0 %v4681
        %v4683 = vand.u32 %v2934, 4294901760
        %v4684 = vsub.f32 %v2934, %v4683
        %v4685 = vand.u32 %v4684, 4294901760
        %4686 = vmatpush.msra.mxu0 %v4685
        %v4687 = vand.u32 %v2933, 4294901760
        %v4688 = vsub.f32 %v2933, %v4687
        %v4689 = vand.u32 %v4688, 4294901760
        %4690 = vmatpush.msra.mxu0 %v4689
        %v4691 = vand.u32 %v2932, 4294901760
        %v4692 = vsub.f32 %v2932, %v4691
        %v4693 = vand.u32 %v4692, 4294901760
        %4694 = vmatpush.msra.mxu0 %v4693
        %v4695 = vand.u32 %v2931, 4294901760
        %v4696 = vsub.f32 %v2931, %v4695
        %v4697 = vand.u32 %v4696, 4294901760
        %4698 = vmatpush.msra.mxu0 %v4697
        %v4699 = vand.u32 %v2867, 4294901760
        %4700 = vmatmul.f32.gmra.mxu0 %v4699
        %v4701 = vpop.f32.mrf.mxu0
        %v4702 = vadd.f32 %v4255, %v4701
        %v4703 = vand.u32 %v2868, 4294901760
        %4704 = vmatmul.f32.gmra.mxu0 %v4703
        %v4705 = vpop.f32.mrf.mxu0
        %v4706 = vadd.f32 %v4261, %v4705
        %v4707 = vand.u32 %v2869, 4294901760
        %4708 = vmatmul.f32.gmra.mxu0 %v4707
        %v4709 = vpop.f32.mrf.mxu0
        %v4710 = vadd.f32 %v4267, %v4709
        %v4711 = vand.u32 %v2870, 4294901760
        %4712 = vmatmul.f32.gmra.mxu0 %v4711
        %v4713 = vpop.f32.mrf.mxu0
        %v4714 = vadd.f32 %v4273, %v4713
        %v4715 = vand.u32 %v2871, 4294901760
        %4716 = vmatmul.f32.gmra.mxu0 %v4715
        %v4717 = vpop.f32.mrf.mxu0
        %v4718 = vadd.f32 %v4279, %v4717
        %v4719 = vand.u32 %v2872, 4294901760
        %4720 = vmatmul.f32.gmra.mxu0 %v4719
        %v4721 = vpop.f32.mrf.mxu0
        %v4722 = vadd.f32 %v4285, %v4721
        %v4723 = vand.u32 %v2873, 4294901760
        %4724 = vmatmul.f32.gmra.mxu0 %v4723
        %v4725 = vpop.f32.mrf.mxu0
        %v4726 = vadd.f32 %v4291, %v4725
        %v4727 = vand.u32 %v2874, 4294901760
        %4728 = vmatmul.f32.gmra.mxu0 %v4727
        %v4729 = vpop.f32.mrf.mxu0
        %v4730 = vadd.f32 %v4297, %v4729
        %v4731 = vand.u32 %v2875, 4294901760
        %4732 = vmatmul.f32.gmra.mxu0 %v4731
        %v4733 = vpop.f32.mrf.mxu0
        %v4734 = vadd.f32 %v4303, %v4733
        %v4735 = vand.u32 %v2876, 4294901760
        %4736 = vmatmul.f32.gmra.mxu0 %v4735
        %v4737 = vpop.f32.mrf.mxu0
        %v4738 = vadd.f32 %v4309, %v4737
        %v4739 = vand.u32 %v2877, 4294901760
        %4740 = vmatmul.f32.gmra.mxu0 %v4739
        %v4741 = vpop.f32.mrf.mxu0
        %v4742 = vadd.f32 %v4315, %v4741
        %v4743 = vand.u32 %v2878, 4294901760
        %4744 = vmatmul.f32.gmra.mxu0 %v4743
        %v4745 = vpop.f32.mrf.mxu0
        %v4746 = vadd.f32 %v4321, %v4745
        %v4747 = vand.u32 %v2879, 4294901760
        %4748 = vmatmul.f32.gmra.mxu0 %v4747
        %v4749 = vpop.f32.mrf.mxu0
        %v4750 = vadd.f32 %v4327, %v4749
        %v4751 = vand.u32 %v2880, 4294901760
        %4752 = vmatmul.f32.gmra.mxu0 %v4751
        %v4753 = vpop.f32.mrf.mxu0
        %v4754 = vadd.f32 %v4333, %v4753
        %v4755 = vand.u32 %v2881, 4294901760
        %4756 = vmatmul.f32.gmra.mxu0 %v4755
        %v4757 = vpop.f32.mrf.mxu0
        %v4758 = vadd.f32 %v4339, %v4757
        %v4759 = vand.u32 %v2882, 4294901760
        %4760 = vmatmul.f32.gmra.mxu0 %v4759
        %v4761 = vpop.f32.mrf.mxu0
        %v4762 = vadd.f32 %v4345, %v4761
        %v4763 = vand.u32 %v2883, 4294901760
        %4764 = vmatmul.f32.gmra.mxu0 %v4763
        %v4765 = vpop.f32.mrf.mxu0
        %v4766 = vadd.f32 %v4351, %v4765
        %v4767 = vand.u32 %v2884, 4294901760
        %4768 = vmatmul.f32.gmra.mxu0 %v4767
        %v4769 = vpop.f32.mrf.mxu0
        %v4770 = vadd.f32 %v4357, %v4769
        %v4771 = vand.u32 %v2885, 4294901760
        %4772 = vmatmul.f32.gmra.mxu0 %v4771
        %v4773 = vpop.f32.mrf.mxu0
        %v4774 = vadd.f32 %v4363, %v4773
        %v4775 = vand.u32 %v2886, 4294901760
        %4776 = vmatmul.f32.gmra.mxu0 %v4775
        %v4777 = vpop.f32.mrf.mxu0
        %v4778 = vadd.f32 %v4369, %v4777
        %v4779 = vand.u32 %v2887, 4294901760
        %4780 = vmatmul.f32.gmra.mxu0 %v4779
        %v4781 = vpop.f32.mrf.mxu0
        %v4782 = vadd.f32 %v4375, %v4781
        %v4783 = vand.u32 %v2888, 4294901760
        %4784 = vmatmul.f32.gmra.mxu0 %v4783
        %v4785 = vpop.f32.mrf.mxu0
        %v4786 = vadd.f32 %v4381, %v4785
        %v4787 = vand.u32 %v2889, 4294901760
        %4788 = vmatmul.f32.gmra.mxu0 %v4787
        %v4789 = vpop.f32.mrf.mxu0
        %v4790 = vadd.f32 %v4387, %v4789
        %v4791 = vand.u32 %v2890, 4294901760
        %4792 = vmatmul.f32.gmra.mxu0 %v4791
        %v4793 = vpop.f32.mrf.mxu0
        %v4794 = vadd.f32 %v4393, %v4793
        %v4795 = vand.u32 %v2891, 4294901760
        %4796 = vmatmul.f32.gmra.mxu0 %v4795
        %v4797 = vpop.f32.mrf.mxu0
        %v4798 = vadd.f32 %v4399, %v4797
        %v4799 = vand.u32 %v2892, 4294901760
        %4800 = vmatmul.f32.gmra.mxu0 %v4799
        %v4801 = vpop.f32.mrf.mxu0
        %v4802 = vadd.f32 %v4405, %v4801
        %v4803 = vand.u32 %v2893, 4294901760
        %4804 = vmatmul.f32.gmra.mxu0 %v4803
        %v4805 = vpop.f32.mrf.mxu0
        %v4806 = vadd.f32 %v4411, %v4805
        %v4807 = vand.u32 %v2894, 4294901760
        %4808 = vmatmul.f32.gmra.mxu0 %v4807
        %v4809 = vpop.f32.mrf.mxu0
        %v4810 = vadd.f32 %v4417, %v4809
        %v4811 = vand.u32 %v2895, 4294901760
        %4812 = vmatmul.f32.gmra.mxu0 %v4811
        %v4813 = vpop.f32.mrf.mxu0
        %v4814 = vadd.f32 %v4423, %v4813
        %v4815 = vand.u32 %v2896, 4294901760
        %4816 = vmatmul.f32.gmra.mxu0 %v4815
        %v4817 = vpop.f32.mrf.mxu0
        %v4818 = vadd.f32 %v4429, %v4817
        %v4819 = vand.u32 %v2897, 4294901760
        %4820 = vmatmul.f32.gmra.mxu0 %v4819
        %v4821 = vpop.f32.mrf.mxu0
        %v4822 = vadd.f32 %v4435, %v4821
        %v4823 = vand.u32 %v2898, 4294901760
        %4824 = vmatmul.f32.gmra.mxu0 %v4823
        %v4825 = vpop.f32.mrf.mxu0
        %v4826 = vadd.f32 %v4441, %v4825
        %v4827 = vand.u32 %v2899, 4294901760
        %4828 = vmatmul.f32.gmra.mxu0 %v4827
        %v4829 = vpop.f32.mrf.mxu0
        %v4830 = vadd.f32 %v4447, %v4829
        %v4831 = vand.u32 %v2900, 4294901760
        %4832 = vmatmul.f32.gmra.mxu0 %v4831
        %v4833 = vpop.f32.mrf.mxu0
        %v4834 = vadd.f32 %v4453, %v4833
        %v4835 = vand.u32 %v2901, 4294901760
        %4836 = vmatmul.f32.gmra.mxu0 %v4835
        %v4837 = vpop.f32.mrf.mxu0
        %v4838 = vadd.f32 %v4459, %v4837
        %v4839 = vand.u32 %v2902, 4294901760
        %4840 = vmatmul.f32.gmra.mxu0 %v4839
        %v4841 = vpop.f32.mrf.mxu0
        %v4842 = vadd.f32 %v4465, %v4841
        %v4843 = vand.u32 %v2903, 4294901760
        %4844 = vmatmul.f32.gmra.mxu0 %v4843
        %v4845 = vpop.f32.mrf.mxu0
        %v4846 = vadd.f32 %v4471, %v4845
        %v4847 = vand.u32 %v2904, 4294901760
        %4848 = vmatmul.f32.gmra.mxu0 %v4847
        %v4849 = vpop.f32.mrf.mxu0
        %v4850 = vadd.f32 %v4477, %v4849
        %v4851 = vand.u32 %v2905, 4294901760
        %4852 = vmatmul.f32.gmra.mxu0 %v4851
        %v4853 = vpop.f32.mrf.mxu0
        %v4854 = vadd.f32 %v4483, %v4853
        %v4855 = vand.u32 %v2906, 4294901760
        %4856 = vmatmul.f32.gmra.mxu0 %v4855
        %v4857 = vpop.f32.mrf.mxu0
        %v4858 = vadd.f32 %v4489, %v4857
        %v4859 = vand.u32 %v2907, 4294901760
        %4860 = vmatmul.f32.gmra.mxu0 %v4859
        %v4861 = vpop.f32.mrf.mxu0
        %v4862 = vadd.f32 %v4495, %v4861
        %v4863 = vand.u32 %v2908, 4294901760
        %4864 = vmatmul.f32.gmra.mxu0 %v4863
        %v4865 = vpop.f32.mrf.mxu0
        %v4866 = vadd.f32 %v4501, %v4865
        %v4867 = vand.u32 %v2909, 4294901760
        %4868 = vmatmul.f32.gmra.mxu0 %v4867
        %v4869 = vpop.f32.mrf.mxu0
        %v4870 = vadd.f32 %v4507, %v4869
        %v4871 = vand.u32 %v2910, 4294901760
        %4872 = vmatmul.f32.gmra.mxu0 %v4871
        %v4873 = vpop.f32.mrf.mxu0
        %v4874 = vadd.f32 %v4513, %v4873
        %v4875 = vand.u32 %v2911, 4294901760
        %4876 = vmatmul.f32.gmra.mxu0 %v4875
        %v4877 = vpop.f32.mrf.mxu0
        %v4878 = vadd.f32 %v4519, %v4877
        %v4879 = vand.u32 %v2912, 4294901760
        %4880 = vmatmul.f32.gmra.mxu0 %v4879
        %v4881 = vpop.f32.mrf.mxu0
        %v4882 = vadd.f32 %v4525, %v4881
        %v4883 = vand.u32 %v2913, 4294901760
        %4884 = vmatmul.f32.gmra.mxu0 %v4883
        %v4885 = vpop.f32.mrf.mxu0
        %v4886 = vadd.f32 %v4531, %v4885
        %v4887 = vand.u32 %v2914, 4294901760
        %4888 = vmatmul.f32.gmra.mxu0 %v4887
        %v4889 = vpop.f32.mrf.mxu0
        %v4890 = vadd.f32 %v4537, %v4889
        %v4891 = vand.u32 %v2915, 4294901760
        %4892 = vmatmul.f32.gmra.mxu0 %v4891
        %v4893 = vpop.f32.mrf.mxu0
        %v4894 = vadd.f32 %v4543, %v4893
        %v4895 = vand.u32 %v2916, 4294901760
        %4896 = vmatmul.f32.gmra.mxu0 %v4895
        %v4897 = vpop.f32.mrf.mxu0
        %v4898 = vadd.f32 %v4549, %v4897
        %v4899 = vand.u32 %v2917, 4294901760
        %4900 = vmatmul.f32.gmra.mxu0 %v4899
        %v4901 = vpop.f32.mrf.mxu0
        %v4902 = vadd.f32 %v4555, %v4901
        %v4903 = vand.u32 %v2918, 4294901760
        %4904 = vmatmul.f32.gmra.mxu0 %v4903
        %v4905 = vpop.f32.mrf.mxu0
        %v4906 = vadd.f32 %v4561, %v4905
        %v4907 = vand.u32 %v2919, 4294901760
        %4908 = vmatmul.f32.gmra.mxu0 %v4907
        %v4909 = vpop.f32.mrf.mxu0
        %v4910 = vadd.f32 %v4567, %v4909
        %v4911 = vand.u32 %v2920, 4294901760
        %4912 = vmatmul.f32.gmra.mxu0 %v4911
        %v4913 = vpop.f32.mrf.mxu0
        %v4914 = vadd.f32 %v4573, %v4913
        %v4915 = vand.u32 %v2921, 4294901760
        %4916 = vmatmul.f32.gmra.mxu0 %v4915
        %v4917 = vpop.f32.mrf.mxu0
        %v4918 = vadd.f32 %v4579, %v4917
        %v4919 = vand.u32 %v2922, 4294901760
        %4920 = vmatmul.f32.gmra.mxu0 %v4919
        %v4921 = vpop.f32.mrf.mxu0
        %v4922 = vadd.f32 %v4585, %v4921
        %v4923 = vand.u32 %v2923, 4294901760
        %4924 = vmatmul.f32.gmra.mxu0 %v4923
        %v4925 = vpop.f32.mrf.mxu0
        %v4926 = vadd.f32 %v4591, %v4925
        %v4927 = vand.u32 %v2924, 4294901760
        %4928 = vmatmul.f32.gmra.mxu0 %v4927
        %v4929 = vpop.f32.mrf.mxu0
        %v4930 = vadd.f32 %v4597, %v4929
        %v4931 = vand.u32 %v2925, 4294901760
        %4932 = vmatmul.f32.gmra.mxu0 %v4931
        %v4933 = vpop.f32.mrf.mxu0
        %v4934 = vadd.f32 %v4603, %v4933
        %v4935 = vand.u32 %v2926, 4294901760
        %4936 = vmatmul.f32.gmra.mxu0 %v4935
        %v4937 = vpop.f32.mrf.mxu0
        %v4938 = vadd.f32 %v4609, %v4937
        %v4939 = vand.u32 %v2927, 4294901760
        %4940 = vmatmul.f32.gmra.mxu0 %v4939
        %v4941 = vpop.f32.mrf.mxu0
        %v4942 = vadd.f32 %v4615, %v4941
        %v4943 = vand.u32 %v2928, 4294901760
        %4944 = vmatmul.f32.gmra.mxu0 %v4943
        %v4945 = vpop.f32.mrf.mxu0
        %v4946 = vadd.f32 %v4621, %v4945
        %v4947 = vand.u32 %v2929, 4294901760
        %4948 = vmatmul.f32.gmra.mxu0 %v4947
        %v4949 = vpop.f32.mrf.mxu0
        %v4950 = vadd.f32 %v4627, %v4949
        %v4951 = vand.u32 %v2930, 4294901760
        %4952 = vmatmul.f32.gmra.mxu0 %v4951
        %v4953 = vpop.f32.mrf.mxu0
        %v4954 = vadd.f32 %v4633, %v4953
        %4955 = vdwg.mxu0
        %v4956 = vand.u32 %v2946, 4294901760
        %4957 = vmatpush.msra.mxu0 %v4956
        %v4958 = vand.u32 %v2945, 4294901760
        %4959 = vmatpush.msra.mxu0 %v4958
        %v4960 = vand.u32 %v2944, 4294901760
        %4961 = vmatpush.msra.mxu0 %v4960
        %v4962 = vand.u32 %v2943, 4294901760
        %4963 = vmatpush.msra.mxu0 %v4962
        %v4964 = vand.u32 %v2942, 4294901760
        %4965 = vmatpush.msra.mxu0 %v4964
        %v4966 = vand.u32 %v2941, 4294901760
        %4967 = vmatpush.msra.mxu0 %v4966
        %v4968 = vand.u32 %v2940, 4294901760
        %4969 = vmatpush.msra.mxu0 %v4968
        %v4970 = vand.u32 %v2939, 4294901760
        %4971 = vmatpush.msra.mxu0 %v4970
        %v4972 = vand.u32 %v2938, 4294901760
        %4973 = vmatpush.msra.mxu0 %v4972
        %v4974 = vand.u32 %v2937, 4294901760
        %4975 = vmatpush.msra.mxu0 %v4974
        %v4976 = vand.u32 %v2936, 4294901760
        %4977 = vmatpush.msra.mxu0 %v4976
        %v4978 = vand.u32 %v2935, 4294901760
        %4979 = vmatpush.msra.mxu0 %v4978
        %v4980 = vand.u32 %v2934, 4294901760
        %4981 = vmatpush.msra.mxu0 %v4980
        %v4982 = vand.u32 %v2933, 4294901760
        %4983 = vmatpush.msra.mxu0 %v4982
        %v4984 = vand.u32 %v2932, 4294901760
        %4985 = vmatpush.msra.mxu0 %v4984
        %v4986 = vand.u32 %v2931, 4294901760
        %4987 = vmatpush.msra.mxu0 %v4986
        %v4988 = vand.u32 %v2867, 4294901760
        %4989 = vmatmul.f32.gmra.mxu0 %v4988
        %v4990 = vpop.f32.mrf.mxu0
        %v4991 = vadd.f32 %v4702, %v4990
        %v4992 = vand.u32 %v2868, 4294901760
        %4993 = vmatmul.f32.gmra.mxu0 %v4992
        %v4994 = vpop.f32.mrf.mxu0
        %v4995 = vadd.f32 %v4706, %v4994
        %v4996 = vand.u32 %v2869, 4294901760
        %4997 = vmatmul.f32.gmra.mxu0 %v4996
        %v4998 = vpop.f32.mrf.mxu0
        %v4999 = vadd.f32 %v4710, %v4998
        %v5000 = vand.u32 %v2870, 4294901760
        %5001 = vmatmul.f32.gmra.mxu0 %v5000
        %v5002 = vpop.f32.mrf.mxu0
        %v5003 = vadd.f32 %v4714, %v5002
        %v5004 = vand.u32 %v2871, 4294901760
        %5005 = vmatmul.f32.gmra.mxu0 %v5004
        %v5006 = vpop.f32.mrf.mxu0
        %v5007 = vadd.f32 %v4718, %v5006
        %v5008 = vand.u32 %v2872, 4294901760
        %5009 = vmatmul.f32.gmra.mxu0 %v5008
        %v5010 = vpop.f32.mrf.mxu0
        %v5011 = vadd.f32 %v4722, %v5010
        %v5012 = vand.u32 %v2873, 4294901760
        %5013 = vmatmul.f32.gmra.mxu0 %v5012
        %v5014 = vpop.f32.mrf.mxu0
        %v5015 = vadd.f32 %v4726, %v5014
        %v5016 = vand.u32 %v2874, 4294901760
        %5017 = vmatmul.f32.gmra.mxu0 %v5016
        %v5018 = vpop.f32.mrf.mxu0
        %v5019 = vadd.f32 %v4730, %v5018
        %v5020 = vand.u32 %v2875, 4294901760
        %5021 = vmatmul.f32.gmra.mxu0 %v5020
        %v5022 = vpop.f32.mrf.mxu0
        %v5023 = vadd.f32 %v4734, %v5022
        %v5024 = vand.u32 %v2876, 4294901760
        %5025 = vmatmul.f32.gmra.mxu0 %v5024
        %v5026 = vpop.f32.mrf.mxu0
        %v5027 = vadd.f32 %v4738, %v5026
        %v5028 = vand.u32 %v2877, 4294901760
        %5029 = vmatmul.f32.gmra.mxu0 %v5028
        %v5030 = vpop.f32.mrf.mxu0
        %v5031 = vadd.f32 %v4742, %v5030
        %v5032 = vand.u32 %v2878, 4294901760
        %5033 = vmatmul.f32.gmra.mxu0 %v5032
        %v5034 = vpop.f32.mrf.mxu0
        %v5035 = vadd.f32 %v4746, %v5034
        %v5036 = vand.u32 %v2879, 4294901760
        %5037 = vmatmul.f32.gmra.mxu0 %v5036
        %v5038 = vpop.f32.mrf.mxu0
        %v5039 = vadd.f32 %v4750, %v5038
        %v5040 = vand.u32 %v2880, 4294901760
        %5041 = vmatmul.f32.gmra.mxu0 %v5040
        %v5042 = vpop.f32.mrf.mxu0
        %v5043 = vadd.f32 %v4754, %v5042
        %v5044 = vand.u32 %v2881, 4294901760
        %5045 = vmatmul.f32.gmra.mxu0 %v5044
        %v5046 = vpop.f32.mrf.mxu0
        %v5047 = vadd.f32 %v4758, %v5046
        %v5048 = vand.u32 %v2882, 4294901760
        %5049 = vmatmul.f32.gmra.mxu0 %v5048
        %v5050 = vpop.f32.mrf.mxu0
        %v5051 = vadd.f32 %v4762, %v5050
        %v5052 = vand.u32 %v2883, 4294901760
        %5053 = vmatmul.f32.gmra.mxu0 %v5052
        %v5054 = vpop.f32.mrf.mxu0
        %v5055 = vadd.f32 %v4766, %v5054
        %v5056 = vand.u32 %v2884, 4294901760
        %5057 = vmatmul.f32.gmra.mxu0 %v5056
        %v5058 = vpop.f32.mrf.mxu0
        %v5059 = vadd.f32 %v4770, %v5058
        %v5060 = vand.u32 %v2885, 4294901760
        %5061 = vmatmul.f32.gmra.mxu0 %v5060
        %v5062 = vpop.f32.mrf.mxu0
        %v5063 = vadd.f32 %v4774, %v5062
        %v5064 = vand.u32 %v2886, 4294901760
        %5065 = vmatmul.f32.gmra.mxu0 %v5064
        %v5066 = vpop.f32.mrf.mxu0
        %v5067 = vadd.f32 %v4778, %v5066
        %v5068 = vand.u32 %v2887, 4294901760
        %5069 = vmatmul.f32.gmra.mxu0 %v5068
        %v5070 = vpop.f32.mrf.mxu0
        %v5071 = vadd.f32 %v4782, %v5070
        %v5072 = vand.u32 %v2888, 4294901760
        %5073 = vmatmul.f32.gmra.mxu0 %v5072
        %v5074 = vpop.f32.mrf.mxu0
        %v5075 = vadd.f32 %v4786, %v5074
        %v5076 = vand.u32 %v2889, 4294901760
        %5077 = vmatmul.f32.gmra.mxu0 %v5076
        %v5078 = vpop.f32.mrf.mxu0
        %v5079 = vadd.f32 %v4790, %v5078
        %v5080 = vand.u32 %v2890, 4294901760
        %5081 = vmatmul.f32.gmra.mxu0 %v5080
        %v5082 = vpop.f32.mrf.mxu0
        %v5083 = vadd.f32 %v4794, %v5082
        %v5084 = vand.u32 %v2891, 4294901760
        %5085 = vmatmul.f32.gmra.mxu0 %v5084
        %v5086 = vpop.f32.mrf.mxu0
        %v5087 = vadd.f32 %v4798, %v5086
        %v5088 = vand.u32 %v2892, 4294901760
        %5089 = vmatmul.f32.gmra.mxu0 %v5088
        %v5090 = vpop.f32.mrf.mxu0
        %v5091 = vadd.f32 %v4802, %v5090
        %v5092 = vand.u32 %v2893, 4294901760
        %5093 = vmatmul.f32.gmra.mxu0 %v5092
        %v5094 = vpop.f32.mrf.mxu0
        %v5095 = vadd.f32 %v4806, %v5094
        %v5096 = vand.u32 %v2894, 4294901760
        %5097 = vmatmul.f32.gmra.mxu0 %v5096
        %v5098 = vpop.f32.mrf.mxu0
        %v5099 = vadd.f32 %v4810, %v5098
        %v5100 = vand.u32 %v2895, 4294901760
        %5101 = vmatmul.f32.gmra.mxu0 %v5100
        %v5102 = vpop.f32.mrf.mxu0
        %v5103 = vadd.f32 %v4814, %v5102
        %v5104 = vand.u32 %v2896, 4294901760
        %5105 = vmatmul.f32.gmra.mxu0 %v5104
        %v5106 = vpop.f32.mrf.mxu0
        %v5107 = vadd.f32 %v4818, %v5106
        %v5108 = vand.u32 %v2897, 4294901760
        %5109 = vmatmul.f32.gmra.mxu0 %v5108
        %v5110 = vpop.f32.mrf.mxu0
        %v5111 = vadd.f32 %v4822, %v5110
        %v5112 = vand.u32 %v2898, 4294901760
        %5113 = vmatmul.f32.gmra.mxu0 %v5112
        %v5114 = vpop.f32.mrf.mxu0
        %v5115 = vadd.f32 %v4826, %v5114
        %v5116 = vand.u32 %v2899, 4294901760
        %5117 = vmatmul.f32.gmra.mxu0 %v5116
        %v5118 = vpop.f32.mrf.mxu0
        %v5119 = vadd.f32 %v4830, %v5118
        %v5120 = vand.u32 %v2900, 4294901760
        %5121 = vmatmul.f32.gmra.mxu0 %v5120
        %v5122 = vpop.f32.mrf.mxu0
        %v5123 = vadd.f32 %v4834, %v5122
        %v5124 = vand.u32 %v2901, 4294901760
        %5125 = vmatmul.f32.gmra.mxu0 %v5124
        %v5126 = vpop.f32.mrf.mxu0
        %v5127 = vadd.f32 %v4838, %v5126
        %v5128 = vand.u32 %v2902, 4294901760
        %5129 = vmatmul.f32.gmra.mxu0 %v5128
        %v5130 = vpop.f32.mrf.mxu0
        %v5131 = vadd.f32 %v4842, %v5130
        %v5132 = vand.u32 %v2903, 4294901760
        %5133 = vmatmul.f32.gmra.mxu0 %v5132
        %v5134 = vpop.f32.mrf.mxu0
        %v5135 = vadd.f32 %v4846, %v5134
        %v5136 = vand.u32 %v2904, 4294901760
        %5137 = vmatmul.f32.gmra.mxu0 %v5136
        %v5138 = vpop.f32.mrf.mxu0
        %v5139 = vadd.f32 %v4850, %v5138
        %v5140 = vand.u32 %v2905, 4294901760
        %5141 = vmatmul.f32.gmra.mxu0 %v5140
        %v5142 = vpop.f32.mrf.mxu0
        %v5143 = vadd.f32 %v4854, %v5142
        %v5144 = vand.u32 %v2906, 4294901760
        %5145 = vmatmul.f32.gmra.mxu0 %v5144
        %v5146 = vpop.f32.mrf.mxu0
        %v5147 = vadd.f32 %v4858, %v5146
        %v5148 = vand.u32 %v2907, 4294901760
        %5149 = vmatmul.f32.gmra.mxu0 %v5148
        %v5150 = vpop.f32.mrf.mxu0
        %v5151 = vadd.f32 %v4862, %v5150
        %v5152 = vand.u32 %v2908, 4294901760
        %5153 = vmatmul.f32.gmra.mxu0 %v5152
        %v5154 = vpop.f32.mrf.mxu0
        %v5155 = vadd.f32 %v4866, %v5154
        %v5156 = vand.u32 %v2909, 4294901760
        %5157 = vmatmul.f32.gmra.mxu0 %v5156
        %v5158 = vpop.f32.mrf.mxu0
        %v5159 = vadd.f32 %v4870, %v5158
        %v5160 = vand.u32 %v2910, 4294901760
        %5161 = vmatmul.f32.gmra.mxu0 %v5160
        %v5162 = vpop.f32.mrf.mxu0
        %v5163 = vadd.f32 %v4874, %v5162
        %v5164 = vand.u32 %v2911, 4294901760
        %5165 = vmatmul.f32.gmra.mxu0 %v5164
        %v5166 = vpop.f32.mrf.mxu0
        %v5167 = vadd.f32 %v4878, %v5166
        %v5168 = vand.u32 %v2912, 4294901760
        %5169 = vmatmul.f32.gmra.mxu0 %v5168
        %v5170 = vpop.f32.mrf.mxu0
        %v5171 = vadd.f32 %v4882, %v5170
        %v5172 = vand.u32 %v2913, 4294901760
        %5173 = vmatmul.f32.gmra.mxu0 %v5172
        %v5174 = vpop.f32.mrf.mxu0
        %v5175 = vadd.f32 %v4886, %v5174
        %v5176 = vand.u32 %v2914, 4294901760
        %5177 = vmatmul.f32.gmra.mxu0 %v5176
        %v5178 = vpop.f32.mrf.mxu0
        %v5179 = vadd.f32 %v4890, %v5178
        %v5180 = vand.u32 %v2915, 4294901760
        %5181 = vmatmul.f32.gmra.mxu0 %v5180
        %v5182 = vpop.f32.mrf.mxu0
        %v5183 = vadd.f32 %v4894, %v5182
        %v5184 = vand.u32 %v2916, 4294901760
        %5185 = vmatmul.f32.gmra.mxu0 %v5184
        %v5186 = vpop.f32.mrf.mxu0
        %v5187 = vadd.f32 %v4898, %v5186
        %v5188 = vand.u32 %v2917, 4294901760
        %5189 = vmatmul.f32.gmra.mxu0 %v5188
        %v5190 = vpop.f32.mrf.mxu0
        %v5191 = vadd.f32 %v4902, %v5190
        %v5192 = vand.u32 %v2918, 4294901760
        %5193 = vmatmul.f32.gmra.mxu0 %v5192
        %v5194 = vpop.f32.mrf.mxu0
        %v5195 = vadd.f32 %v4906, %v5194
        %v5196 = vand.u32 %v2919, 4294901760
        %5197 = vmatmul.f32.gmra.mxu0 %v5196
        %v5198 = vpop.f32.mrf.mxu0
        %v5199 = vadd.f32 %v4910, %v5198
        %v5200 = vand.u32 %v2920, 4294901760
        %5201 = vmatmul.f32.gmra.mxu0 %v5200
        %v5202 = vpop.f32.mrf.mxu0
        %v5203 = vadd.f32 %v4914, %v5202
        %v5204 = vand.u32 %v2921, 4294901760
        %5205 = vmatmul.f32.gmra.mxu0 %v5204
        %v5206 = vpop.f32.mrf.mxu0
        %v5207 = vadd.f32 %v4918, %v5206
        %v5208 = vand.u32 %v2922, 4294901760
        %5209 = vmatmul.f32.gmra.mxu0 %v5208
        %v5210 = vpop.f32.mrf.mxu0
        %v5211 = vadd.f32 %v4922, %v5210
        %v5212 = vand.u32 %v2923, 4294901760
        %5213 = vmatmul.f32.gmra.mxu0 %v5212
        %v5214 = vpop.f32.mrf.mxu0
        %v5215 = vadd.f32 %v4926, %v5214
        %v5216 = vand.u32 %v2924, 4294901760
        %5217 = vmatmul.f32.gmra.mxu0 %v5216
        %v5218 = vpop.f32.mrf.mxu0
        %v5219 = vadd.f32 %v4930, %v5218
        %v5220 = vand.u32 %v2925, 4294901760
        %5221 = vmatmul.f32.gmra.mxu0 %v5220
        %v5222 = vpop.f32.mrf.mxu0
        %v5223 = vadd.f32 %v4934, %v5222
        %v5224 = vand.u32 %v2926, 4294901760
        %5225 = vmatmul.f32.gmra.mxu0 %v5224
        %v5226 = vpop.f32.mrf.mxu0
        %v5227 = vadd.f32 %v4938, %v5226
        %v5228 = vand.u32 %v2927, 4294901760
        %5229 = vmatmul.f32.gmra.mxu0 %v5228
        %v5230 = vpop.f32.mrf.mxu0
        %v5231 = vadd.f32 %v4942, %v5230
        %v5232 = vand.u32 %v2928, 4294901760
        %5233 = vmatmul.f32.gmra.mxu0 %v5232
        %v5234 = vpop.f32.mrf.mxu0
        %v5235 = vadd.f32 %v4946, %v5234
        %v5236 = vand.u32 %v2929, 4294901760
        %5237 = vmatmul.f32.gmra.mxu0 %v5236
        %v5238 = vpop.f32.mrf.mxu0
        %v5239 = vadd.f32 %v4950, %v5238
        %v5240 = vand.u32 %v2930, 4294901760
        %5241 = vmatmul.f32.gmra.mxu0 %v5240
        %v5242 = vpop.f32.mrf.mxu0
        %v5243 = vadd.f32 %v4954, %v5242
        %5244 = vdwg.mxu0
        %v5245 = vmul.f32 %v4991, %v4991
        %v5246 = vmul.f32 %v4995, %v4995
        %v5247 = vmul.f32 %v4999, %v4999
        %v5248 = vmul.f32 %v5003, %v5003
        %v5249 = vmul.f32 %v5007, %v5007
        %v5250 = vmul.f32 %v5011, %v5011
        %v5251 = vmul.f32 %v5015, %v5015
        %v5252 = vmul.f32 %v5019, %v5019
        %v5253 = vmul.f32 %v5023, %v5023
        %v5254 = vmul.f32 %v5027, %v5027
        %v5255 = vmul.f32 %v5031, %v5031
        %v5256 = vmul.f32 %v5035, %v5035
        %v5257 = vmul.f32 %v5039, %v5039
        %v5258 = vmul.f32 %v5043, %v5043
        %v5259 = vmul.f32 %v5047, %v5047
        %v5260 = vmul.f32 %v5051, %v5051
        %v5261 = vmul.f32 %v5055, %v5055
        %v5262 = vmul.f32 %v5059, %v5059
        %v5263 = vmul.f32 %v5063, %v5063
        %v5264 = vmul.f32 %v5067, %v5067
        %v5265 = vmul.f32 %v5071, %v5071
        %v5266 = vmul.f32 %v5075, %v5075
        %v5267 = vmul.f32 %v5079, %v5079
        %v5268 = vmul.f32 %v5083, %v5083
        %v5269 = vmul.f32 %v5087, %v5087
        %v5270 = vmul.f32 %v5091, %v5091
        %v5271 = vmul.f32 %v5095, %v5095
        %v5272 = vmul.f32 %v5099, %v5099
        %v5273 = vmul.f32 %v5103, %v5103
        %v5274 = vmul.f32 %v5107, %v5107
        %v5275 = vmul.f32 %v5111, %v5111
        %v5276 = vmul.f32 %v5115, %v5115
        %v5277 = vmul.f32 %v5119, %v5119
        %v5278 = vmul.f32 %v5123, %v5123
        %v5279 = vmul.f32 %v5127, %v5127
        %v5280 = vmul.f32 %v5131, %v5131
        %v5281 = vmul.f32 %v5135, %v5135
        %v5282 = vmul.f32 %v5139, %v5139
        %v5283 = vmul.f32 %v5143, %v5143
        %v5284 = vmul.f32 %v5147, %v5147
        %v5285 = vmul.f32 %v5151, %v5151
        %v5286 = vmul.f32 %v5155, %v5155
        %v5287 = vmul.f32 %v5159, %v5159
        %v5288 = vmul.f32 %v5163, %v5163
        %v5289 = vmul.f32 %v5167, %v5167
        %v5290 = vmul.f32 %v5171, %v5171
        %v5291 = vmul.f32 %v5175, %v5175
        %v5292 = vmul.f32 %v5179, %v5179
        %v5293 = vmul.f32 %v5183, %v5183
        %v5294 = vmul.f32 %v5187, %v5187
        %v5295 = vmul.f32 %v5191, %v5191
        %v5296 = vmul.f32 %v5195, %v5195
        %v5297 = vmul.f32 %v5199, %v5199
        %v5298 = vmul.f32 %v5203, %v5203
        %v5299 = vmul.f32 %v5207, %v5207
        %v5300 = vmul.f32 %v5211, %v5211
        %v5301 = vmul.f32 %v5215, %v5215
        %v5302 = vmul.f32 %v5219, %v5219
        %v5303 = vmul.f32 %v5223, %v5223
        %v5304 = vmul.f32 %v5227, %v5227
        %v5305 = vmul.f32 %v5231, %v5231
        %v5306 = vmul.f32 %v5235, %v5235
        %v5307 = vmul.f32 %v5239, %v5239
        %v5308 = vmul.f32 %v5243, %v5243
        %5309 = vadd.xlane.f32.xlu0 %v5245
        %v5310 = vpop.xlane.xlu0 %5309
        %5311 = vadd.xlane.f32.xlu0 %v5246
        %v5312 = vpop.xlane.xlu0 %5311
        %5313 = vadd.xlane.f32.xlu0 %v5247
        %v5314 = vpop.xlane.xlu0 %5313
        %5315 = vadd.xlane.f32.xlu0 %v5248
        %v5316 = vpop.xlane.xlu0 %5315
        %5317 = vadd.xlane.f32.xlu0 %v5249
        %v5318 = vpop.xlane.xlu0 %5317
        %5319 = vadd.xlane.f32.xlu0 %v5250
        %v5320 = vpop.xlane.xlu0 %5319
        %5321 = vadd.xlane.f32.xlu0 %v5251
        %v5322 = vpop.xlane.xlu0 %5321
        %5323 = vadd.xlane.f32.xlu0 %v5252
        %v5324 = vpop.xlane.xlu0 %5323
        %5325 = vadd.xlane.f32.xlu0 %v5253
        %v5326 = vpop.xlane.xlu0 %5325
        %5327 = vadd.xlane.f32.xlu0 %v5254
        %v5328 = vpop.xlane.xlu0 %5327
        %5329 = vadd.xlane.f32.xlu0 %v5255
        %v5330 = vpop.xlane.xlu0 %5329
        %5331 = vadd.xlane.f32.xlu0 %v5256
        %v5332 = vpop.xlane.xlu0 %5331
        %5333 = vadd.xlane.f32.xlu0 %v5257
        %v5334 = vpop.xlane.xlu0 %5333
        %5335 = vadd.xlane.f32.xlu0 %v5258
        %v5336 = vpop.xlane.xlu0 %5335
        %5337 = vadd.xlane.f32.xlu0 %v5259
        %v5338 = vpop.xlane.xlu0 %5337
        %5339 = vadd.xlane.f32.xlu0 %v5260
        %v5340 = vpop.xlane.xlu0 %5339
        %5341 = vadd.xlane.f32.xlu0 %v5261
        %v5342 = vpop.xlane.xlu0 %5341
        %5343 = vadd.xlane.f32.xlu0 %v5262
        %v5344 = vpop.xlane.xlu0 %5343
        %5345 = vadd.xlane.f32.xlu0 %v5263
        %v5346 = vpop.xlane.xlu0 %5345
        %5347 = vadd.xlane.f32.xlu0 %v5264
        %v5348 = vpop.xlane.xlu0 %5347
        %5349 = vadd.xlane.f32.xlu0 %v5265
        %v5350 = vpop.xlane.xlu0 %5349
        %5351 = vadd.xlane.f32.xlu0 %v5266
        %v5352 = vpop.xlane.xlu0 %5351
        %5353 = vadd.xlane.f32.xlu0 %v5267
        %v5354 = vpop.xlane.xlu0 %5353
        %5355 = vadd.xlane.f32.xlu0 %v5268
        %v5356 = vpop.xlane.xlu0 %5355
        %5357 = vadd.xlane.f32.xlu0 %v5269
        %v5358 = vpop.xlane.xlu0 %5357
        %5359 = vadd.xlane.f32.xlu0 %v5270
        %v5360 = vpop.xlane.xlu0 %5359
        %5361 = vadd.xlane.f32.xlu0 %v5271
        %v5362 = vpop.xlane.xlu0 %5361
        %5363 = vadd.xlane.f32.xlu0 %v5272
        %v5364 = vpop.xlane.xlu0 %5363
        %5365 = vadd.xlane.f32.xlu0 %v5273
        %v5366 = vpop.xlane.xlu0 %5365
        %5367 = vadd.xlane.f32.xlu0 %v5274
        %v5368 = vpop.xlane.xlu0 %5367
        %5369 = vadd.xlane.f32.xlu0 %v5275
        %v5370 = vpop.xlane.xlu0 %5369
        %5371 = vadd.xlane.f32.xlu0 %v5276
        %v5372 = vpop.xlane.xlu0 %5371
        %5373 = vadd.xlane.f32.xlu0 %v5277
        %v5374 = vpop.xlane.xlu0 %5373
        %5375 = vadd.xlane.f32.xlu0 %v5278
        %v5376 = vpop.xlane.xlu0 %5375
        %5377 = vadd.xlane.f32.xlu0 %v5279
        %v5378 = vpop.xlane.xlu0 %5377
        %5379 = vadd.xlane.f32.xlu0 %v5280
        %v5380 = vpop.xlane.xlu0 %5379
        %5381 = vadd.xlane.f32.xlu0 %v5281
        %v5382 = vpop.xlane.xlu0 %5381
        %5383 = vadd.xlane.f32.xlu0 %v5282
        %v5384 = vpop.xlane.xlu0 %5383
        %5385 = vadd.xlane.f32.xlu0 %v5283
        %v5386 = vpop.xlane.xlu0 %5385
        %5387 = vadd.xlane.f32.xlu0 %v5284
        %v5388 = vpop.xlane.xlu0 %5387
        %5389 = vadd.xlane.f32.xlu0 %v5285
        %v5390 = vpop.xlane.xlu0 %5389
        %5391 = vadd.xlane.f32.xlu0 %v5286
        %v5392 = vpop.xlane.xlu0 %5391
        %5393 = vadd.xlane.f32.xlu0 %v5287
        %v5394 = vpop.xlane.xlu0 %5393
        %5395 = vadd.xlane.f32.xlu0 %v5288
        %v5396 = vpop.xlane.xlu0 %5395
        %5397 = vadd.xlane.f32.xlu0 %v5289
        %v5398 = vpop.xlane.xlu0 %5397
        %5399 = vadd.xlane.f32.xlu0 %v5290
        %v5400 = vpop.xlane.xlu0 %5399
        %5401 = vadd.xlane.f32.xlu0 %v5291
        %v5402 = vpop.xlane.xlu0 %5401
        %5403 = vadd.xlane.f32.xlu0 %v5292
        %v5404 = vpop.xlane.xlu0 %5403
        %5405 = vadd.xlane.f32.xlu0 %v5293
        %v5406 = vpop.xlane.xlu0 %5405
        %5407 = vadd.xlane.f32.xlu0 %v5294
        %v5408 = vpop.xlane.xlu0 %5407
        %5409 = vadd.xlane.f32.xlu0 %v5295
        %v5410 = vpop.xlane.xlu0 %5409
        %5411 = vadd.xlane.f32.xlu0 %v5296
        %v5412 = vpop.xlane.xlu0 %5411
        %5413 = vadd.xlane.f32.xlu0 %v5297
        %v5414 = vpop.xlane.xlu0 %5413
        %5415 = vadd.xlane.f32.xlu0 %v5298
        %v5416 = vpop.xlane.xlu0 %5415
        %5417 = vadd.xlane.f32.xlu0 %v5299
        %v5418 = vpop.xlane.xlu0 %5417
        %5419 = vadd.xlane.f32.xlu0 %v5300
        %v5420 = vpop.xlane.xlu0 %5419
        %5421 = vadd.xlane.f32.xlu0 %v5301
        %v5422 = vpop.xlane.xlu0 %5421
        %5423 = vadd.xlane.f32.xlu0 %v5302
        %v5424 = vpop.xlane.xlu0 %5423
        %5425 = vadd.xlane.f32.xlu0 %v5303
        %v5426 = vpop.xlane.xlu0 %5425
        %5427 = vadd.xlane.f32.xlu0 %v5304
        %v5428 = vpop.xlane.xlu0 %5427
        %5429 = vadd.xlane.f32.xlu0 %v5305
        %v5430 = vpop.xlane.xlu0 %5429
        %5431 = vadd.xlane.f32.xlu0 %v5306
        %v5432 = vpop.xlane.xlu0 %5431
        %5433 = vadd.xlane.f32.xlu0 %v5307
        %v5434 = vpop.xlane.xlu0 %5433
        %5435 = vadd.xlane.f32.xlu0 %v5308
        %v5436 = vpop.xlane.xlu0 %5435
        %v5437 = vmax.f32 %v5310, 1e-24
        %v5438 = vmax.f32 %v5312, 1e-24
        %v5439 = vmax.f32 %v5314, 1e-24
        %v5440 = vmax.f32 %v5316, 1e-24
        %v5441 = vmax.f32 %v5318, 1e-24
        %v5442 = vmax.f32 %v5320, 1e-24
        %v5443 = vmax.f32 %v5322, 1e-24
        %v5444 = vmax.f32 %v5324, 1e-24
        %v5445 = vmax.f32 %v5326, 1e-24
        %v5446 = vmax.f32 %v5328, 1e-24
        %v5447 = vmax.f32 %v5330, 1e-24
        %v5448 = vmax.f32 %v5332, 1e-24
        %v5449 = vmax.f32 %v5334, 1e-24
        %v5450 = vmax.f32 %v5336, 1e-24
        %v5451 = vmax.f32 %v5338, 1e-24
        %v5452 = vmax.f32 %v5340, 1e-24
        %v5453 = vmax.f32 %v5342, 1e-24
        %v5454 = vmax.f32 %v5344, 1e-24
        %v5455 = vmax.f32 %v5346, 1e-24
        %v5456 = vmax.f32 %v5348, 1e-24
        %v5457 = vmax.f32 %v5350, 1e-24
        %v5458 = vmax.f32 %v5352, 1e-24
        %v5459 = vmax.f32 %v5354, 1e-24
        %v5460 = vmax.f32 %v5356, 1e-24
        %v5461 = vmax.f32 %v5358, 1e-24
        %v5462 = vmax.f32 %v5360, 1e-24
        %v5463 = vmax.f32 %v5362, 1e-24
        %v5464 = vmax.f32 %v5364, 1e-24
        %v5465 = vmax.f32 %v5366, 1e-24
        %v5466 = vmax.f32 %v5368, 1e-24
        %v5467 = vmax.f32 %v5370, 1e-24
        %v5468 = vmax.f32 %v5372, 1e-24
        %v5469 = vmax.f32 %v5374, 1e-24
        %v5470 = vmax.f32 %v5376, 1e-24
        %v5471 = vmax.f32 %v5378, 1e-24
        %v5472 = vmax.f32 %v5380, 1e-24
        %v5473 = vmax.f32 %v5382, 1e-24
        %v5474 = vmax.f32 %v5384, 1e-24
        %v5475 = vmax.f32 %v5386, 1e-24
        %v5476 = vmax.f32 %v5388, 1e-24
        %v5477 = vmax.f32 %v5390, 1e-24
        %v5478 = vmax.f32 %v5392, 1e-24
        %v5479 = vmax.f32 %v5394, 1e-24
        %v5480 = vmax.f32 %v5396, 1e-24
        %v5481 = vmax.f32 %v5398, 1e-24
        %v5482 = vmax.f32 %v5400, 1e-24
        %v5483 = vmax.f32 %v5402, 1e-24
        %v5484 = vmax.f32 %v5404, 1e-24
        %v5485 = vmax.f32 %v5406, 1e-24
        %v5486 = vmax.f32 %v5408, 1e-24
        %v5487 = vmax.f32 %v5410, 1e-24
        %v5488 = vmax.f32 %v5412, 1e-24
        %v5489 = vmax.f32 %v5414, 1e-24
        %v5490 = vmax.f32 %v5416, 1e-24
        %v5491 = vmax.f32 %v5418, 1e-24
        %v5492 = vmax.f32 %v5420, 1e-24
        %v5493 = vmax.f32 %v5422, 1e-24
        %v5494 = vmax.f32 %v5424, 1e-24
        %v5495 = vmax.f32 %v5426, 1e-24
        %v5496 = vmax.f32 %v5428, 1e-24
        %v5497 = vmax.f32 %v5430, 1e-24
        %v5498 = vmax.f32 %v5432, 1e-24
        %v5499 = vmax.f32 %v5434, 1e-24
        %v5500 = vmax.f32 %v5436, 1e-24
        %v5501 = vrsqrt.pop %v5437
        %v5502 = vmul.f32 %v5501, %v5437
        %v5503 = vmul.f32 %v5502, %v5501
        %v5504 = vmul.f32 0.5, %v5503
        %v5505 = vsub.f32 1.5, %v5504
        %v5506 = vmul.f32 %v5501, %v5505
        %vm5507 = vweird.f32 %v5437
        %vm5508 = vweird.f32 %v5501
        %vm5509 = vmor %vm5507, %vm5508
        %v5510 = vsel %vm5509, %v5501, %v5506
        %v5511 = vrsqrt.pop %v5438
        %v5512 = vmul.f32 %v5511, %v5438
        %v5513 = vmul.f32 %v5512, %v5511
        %v5514 = vmul.f32 0.5, %v5513
        %v5515 = vsub.f32 1.5, %v5514
        %v5516 = vmul.f32 %v5511, %v5515
        %vm5517 = vweird.f32 %v5438
        %vm5518 = vweird.f32 %v5511
        %vm5519 = vmor %vm5517, %vm5518
        %v5520 = vsel %vm5519, %v5511, %v5516
        %v5521 = vrsqrt.pop %v5439
        %v5522 = vmul.f32 %v5521, %v5439
        %v5523 = vmul.f32 %v5522, %v5521
        %v5524 = vmul.f32 0.5, %v5523
        %v5525 = vsub.f32 1.5, %v5524
        %v5526 = vmul.f32 %v5521, %v5525
        %vm5527 = vweird.f32 %v5439
        %vm5528 = vweird.f32 %v5521
        %vm5529 = vmor %vm5527, %vm5528
        %v5530 = vsel %vm5529, %v5521, %v5526
        %v5531 = vrsqrt.pop %v5440
        %v5532 = vmul.f32 %v5531, %v5440
        %v5533 = vmul.f32 %v5532, %v5531
        %v5534 = vmul.f32 0.5, %v5533
        %v5535 = vsub.f32 1.5, %v5534
        %v5536 = vmul.f32 %v5531, %v5535
        %vm5537 = vweird.f32 %v5440
        %vm5538 = vweird.f32 %v5531
        %vm5539 = vmor %vm5537, %vm5538
        %v5540 = vsel %vm5539, %v5531, %v5536
        %v5541 = vrsqrt.pop %v5441
        %v5542 = vmul.f32 %v5541, %v5441
        %v5543 = vmul.f32 %v5542, %v5541
        %v5544 = vmul.f32 0.5, %v5543
        %v5545 = vsub.f32 1.5, %v5544
        %v5546 = vmul.f32 %v5541, %v5545
        %vm5547 = vweird.f32 %v5441
        %vm5548 = vweird.f32 %v5541
        %vm5549 = vmor %vm5547, %vm5548
        %v5550 = vsel %vm5549, %v5541, %v5546
        %v5551 = vrsqrt.pop %v5442
        %v5552 = vmul.f32 %v5551, %v5442
        %v5553 = vmul.f32 %v5552, %v5551
        %v5554 = vmul.f32 0.5, %v5553
        %v5555 = vsub.f32 1.5, %v5554
        %v5556 = vmul.f32 %v5551, %v5555
        %vm5557 = vweird.f32 %v5442
        %vm5558 = vweird.f32 %v5551
        %vm5559 = vmor %vm5557, %vm5558
        %v5560 = vsel %vm5559, %v5551, %v5556
        %v5561 = vrsqrt.pop %v5443
        %v5562 = vmul.f32 %v5561, %v5443
        %v5563 = vmul.f32 %v5562, %v5561
        %v5564 = vmul.f32 0.5, %v5563
        %v5565 = vsub.f32 1.5, %v5564
        %v5566 = vmul.f32 %v5561, %v5565
        %vm5567 = vweird.f32 %v5443
        %vm5568 = vweird.f32 %v5561
        %vm5569 = vmor %vm5567, %vm5568
        %v5570 = vsel %vm5569, %v5561, %v5566
        %v5571 = vrsqrt.pop %v5444
        %v5572 = vmul.f32 %v5571, %v5444
        %v5573 = vmul.f32 %v5572, %v5571
        %v5574 = vmul.f32 0.5, %v5573
        %v5575 = vsub.f32 1.5, %v5574
        %v5576 = vmul.f32 %v5571, %v5575
        %vm5577 = vweird.f32 %v5444
        %vm5578 = vweird.f32 %v5571
        %vm5579 = vmor %vm5577, %vm5578
        %v5580 = vsel %vm5579, %v5571, %v5576
        %v5581 = vrsqrt.pop %v5445
        %v5582 = vmul.f32 %v5581, %v5445
        %v5583 = vmul.f32 %v5582, %v5581
        %v5584 = vmul.f32 0.5, %v5583
        %v5585 = vsub.f32 1.5, %v5584
        %v5586 = vmul.f32 %v5581, %v5585
        %vm5587 = vweird.f32 %v5445
        %vm5588 = vweird.f32 %v5581
        %vm5589 = vmor %vm5587, %vm5588
        %v5590 = vsel %vm5589, %v5581, %v5586
        %v5591 = vrsqrt.pop %v5446
        %v5592 = vmul.f32 %v5591, %v5446
        %v5593 = vmul.f32 %v5592, %v5591
        %v5594 = vmul.f32 0.5, %v5593
        %v5595 = vsub.f32 1.5, %v5594
        %v5596 = vmul.f32 %v5591, %v5595
        %vm5597 = vweird.f32 %v5446
        %vm5598 = vweird.f32 %v5591
        %vm5599 = vmor %vm5597, %vm5598
        %v5600 = vsel %vm5599, %v5591, %v5596
        %v5601 = vrsqrt.pop %v5447
        %v5602 = vmul.f32 %v5601, %v5447
        %v5603 = vmul.f32 %v5602, %v5601
        %v5604 = vmul.f32 0.5, %v5603
        %v5605 = vsub.f32 1.5, %v5604
        %v5606 = vmul.f32 %v5601, %v5605
        %vm5607 = vweird.f32 %v5447
        %vm5608 = vweird.f32 %v5601
        %vm5609 = vmor %vm5607, %vm5608
        %v5610 = vsel %vm5609, %v5601, %v5606
        %v5611 = vrsqrt.pop %v5448
        %v5612 = vmul.f32 %v5611, %v5448
        %v5613 = vmul.f32 %v5612, %v5611
        %v5614 = vmul.f32 0.5, %v5613
        %v5615 = vsub.f32 1.5, %v5614
        %v5616 = vmul.f32 %v5611, %v5615
        %vm5617 = vweird.f32 %v5448
        %vm5618 = vweird.f32 %v5611
        %vm5619 = vmor %vm5617, %vm5618
        %v5620 = vsel %vm5619, %v5611, %v5616
        %v5621 = vrsqrt.pop %v5449
        %v5622 = vmul.f32 %v5621, %v5449
        %v5623 = vmul.f32 %v5622, %v5621
        %v5624 = vmul.f32 0.5, %v5623
        %v5625 = vsub.f32 1.5, %v5624
        %v5626 = vmul.f32 %v5621, %v5625
        %vm5627 = vweird.f32 %v5449
        %vm5628 = vweird.f32 %v5621
        %vm5629 = vmor %vm5627, %vm5628
        %v5630 = vsel %vm5629, %v5621, %v5626
        %v5631 = vrsqrt.pop %v5450
        %v5632 = vmul.f32 %v5631, %v5450
        %v5633 = vmul.f32 %v5632, %v5631
        %v5634 = vmul.f32 0.5, %v5633
        %v5635 = vsub.f32 1.5, %v5634
        %v5636 = vmul.f32 %v5631, %v5635
        %vm5637 = vweird.f32 %v5450
        %vm5638 = vweird.f32 %v5631
        %vm5639 = vmor %vm5637, %vm5638
        %v5640 = vsel %vm5639, %v5631, %v5636
        %v5641 = vrsqrt.pop %v5451
        %v5642 = vmul.f32 %v5641, %v5451
        %v5643 = vmul.f32 %v5642, %v5641
        %v5644 = vmul.f32 0.5, %v5643
        %v5645 = vsub.f32 1.5, %v5644
        %v5646 = vmul.f32 %v5641, %v5645
        %vm5647 = vweird.f32 %v5451
        %vm5648 = vweird.f32 %v5641
        %vm5649 = vmor %vm5647, %vm5648
        %v5650 = vsel %vm5649, %v5641, %v5646
        %v5651 = vrsqrt.pop %v5452
        %v5652 = vmul.f32 %v5651, %v5452
        %v5653 = vmul.f32 %v5652, %v5651
        %v5654 = vmul.f32 0.5, %v5653
        %v5655 = vsub.f32 1.5, %v5654
        %v5656 = vmul.f32 %v5651, %v5655
        %vm5657 = vweird.f32 %v5452
        %vm5658 = vweird.f32 %v5651
        %vm5659 = vmor %vm5657, %vm5658
        %v5660 = vsel %vm5659, %v5651, %v5656
        %v5661 = vrsqrt.pop %v5453
        %v5662 = vmul.f32 %v5661, %v5453
        %v5663 = vmul.f32 %v5662, %v5661
        %v5664 = vmul.f32 0.5, %v5663
        %v5665 = vsub.f32 1.5, %v5664
        %v5666 = vmul.f32 %v5661, %v5665
        %vm5667 = vweird.f32 %v5453
        %vm5668 = vweird.f32 %v5661
        %vm5669 = vmor %vm5667, %vm5668
        %v5670 = vsel %vm5669, %v5661, %v5666
        %v5671 = vrsqrt.pop %v5454
        %v5672 = vmul.f32 %v5671, %v5454
        %v5673 = vmul.f32 %v5672, %v5671
        %v5674 = vmul.f32 0.5, %v5673
        %v5675 = vsub.f32 1.5, %v5674
        %v5676 = vmul.f32 %v5671, %v5675
        %vm5677 = vweird.f32 %v5454
        %vm5678 = vweird.f32 %v5671
        %vm5679 = vmor %vm5677, %vm5678
        %v5680 = vsel %vm5679, %v5671, %v5676
        %v5681 = vrsqrt.pop %v5455
        %v5682 = vmul.f32 %v5681, %v5455
        %v5683 = vmul.f32 %v5682, %v5681
        %v5684 = vmul.f32 0.5, %v5683
        %v5685 = vsub.f32 1.5, %v5684
        %v5686 = vmul.f32 %v5681, %v5685
        %vm5687 = vweird.f32 %v5455
        %vm5688 = vweird.f32 %v5681
        %vm5689 = vmor %vm5687, %vm5688
        %v5690 = vsel %vm5689, %v5681, %v5686
        %v5691 = vrsqrt.pop %v5456
        %v5692 = vmul.f32 %v5691, %v5456
        %v5693 = vmul.f32 %v5692, %v5691
        %v5694 = vmul.f32 0.5, %v5693
        %v5695 = vsub.f32 1.5, %v5694
        %v5696 = vmul.f32 %v5691, %v5695
        %vm5697 = vweird.f32 %v5456
        %vm5698 = vweird.f32 %v5691
        %vm5699 = vmor %vm5697, %vm5698
        %v5700 = vsel %vm5699, %v5691, %v5696
        %v5701 = vrsqrt.pop %v5457
        %v5702 = vmul.f32 %v5701, %v5457
        %v5703 = vmul.f32 %v5702, %v5701
        %v5704 = vmul.f32 0.5, %v5703
        %v5705 = vsub.f32 1.5, %v5704
        %v5706 = vmul.f32 %v5701, %v5705
        %vm5707 = vweird.f32 %v5457
        %vm5708 = vweird.f32 %v5701
        %vm5709 = vmor %vm5707, %vm5708
        %v5710 = vsel %vm5709, %v5701, %v5706
        %v5711 = vrsqrt.pop %v5458
        %v5712 = vmul.f32 %v5711, %v5458
        %v5713 = vmul.f32 %v5712, %v5711
        %v5714 = vmul.f32 0.5, %v5713
        %v5715 = vsub.f32 1.5, %v5714
        %v5716 = vmul.f32 %v5711, %v5715
        %vm5717 = vweird.f32 %v5458
        %vm5718 = vweird.f32 %v5711
        %vm5719 = vmor %vm5717, %vm5718
        %v5720 = vsel %vm5719, %v5711, %v5716
        %v5721 = vrsqrt.pop %v5459
        %v5722 = vmul.f32 %v5721, %v5459
        %v5723 = vmul.f32 %v5722, %v5721
        %v5724 = vmul.f32 0.5, %v5723
        %v5725 = vsub.f32 1.5, %v5724
        %v5726 = vmul.f32 %v5721, %v5725
        %vm5727 = vweird.f32 %v5459
        %vm5728 = vweird.f32 %v5721
        %vm5729 = vmor %vm5727, %vm5728
        %v5730 = vsel %vm5729, %v5721, %v5726
        %v5731 = vrsqrt.pop %v5460
        %v5732 = vmul.f32 %v5731, %v5460
        %v5733 = vmul.f32 %v5732, %v5731
        %v5734 = vmul.f32 0.5, %v5733
        %v5735 = vsub.f32 1.5, %v5734
        %v5736 = vmul.f32 %v5731, %v5735
        %vm5737 = vweird.f32 %v5460
        %vm5738 = vweird.f32 %v5731
        %vm5739 = vmor %vm5737, %vm5738
        %v5740 = vsel %vm5739, %v5731, %v5736
        %v5741 = vrsqrt.pop %v5461
        %v5742 = vmul.f32 %v5741, %v5461
        %v5743 = vmul.f32 %v5742, %v5741
        %v5744 = vmul.f32 0.5, %v5743
        %v5745 = vsub.f32 1.5, %v5744
        %v5746 = vmul.f32 %v5741, %v5745
        %vm5747 = vweird.f32 %v5461
        %vm5748 = vweird.f32 %v5741
        %vm5749 = vmor %vm5747, %vm5748
        %v5750 = vsel %vm5749, %v5741, %v5746
        %v5751 = vrsqrt.pop %v5462
        %v5752 = vmul.f32 %v5751, %v5462
        %v5753 = vmul.f32 %v5752, %v5751
        %v5754 = vmul.f32 0.5, %v5753
        %v5755 = vsub.f32 1.5, %v5754
        %v5756 = vmul.f32 %v5751, %v5755
        %vm5757 = vweird.f32 %v5462
        %vm5758 = vweird.f32 %v5751
        %vm5759 = vmor %vm5757, %vm5758
        %v5760 = vsel %vm5759, %v5751, %v5756
        %v5761 = vrsqrt.pop %v5463
        %v5762 = vmul.f32 %v5761, %v5463
        %v5763 = vmul.f32 %v5762, %v5761
        %v5764 = vmul.f32 0.5, %v5763
        %v5765 = vsub.f32 1.5, %v5764
        %v5766 = vmul.f32 %v5761, %v5765
        %vm5767 = vweird.f32 %v5463
        %vm5768 = vweird.f32 %v5761
        %vm5769 = vmor %vm5767, %vm5768
        %v5770 = vsel %vm5769, %v5761, %v5766
        %v5771 = vrsqrt.pop %v5464
        %v5772 = vmul.f32 %v5771, %v5464
        %v5773 = vmul.f32 %v5772, %v5771
        %v5774 = vmul.f32 0.5, %v5773
        %v5775 = vsub.f32 1.5, %v5774
        %v5776 = vmul.f32 %v5771, %v5775
        %vm5777 = vweird.f32 %v5464
        %vm5778 = vweird.f32 %v5771
        %vm5779 = vmor %vm5777, %vm5778
        %v5780 = vsel %vm5779, %v5771, %v5776
        %v5781 = vrsqrt.pop %v5465
        %v5782 = vmul.f32 %v5781, %v5465
        %v5783 = vmul.f32 %v5782, %v5781
        %v5784 = vmul.f32 0.5, %v5783
        %v5785 = vsub.f32 1.5, %v5784
        %v5786 = vmul.f32 %v5781, %v5785
        %vm5787 = vweird.f32 %v5465
        %vm5788 = vweird.f32 %v5781
        %vm5789 = vmor %vm5787, %vm5788
        %v5790 = vsel %vm5789, %v5781, %v5786
        %v5791 = vrsqrt.pop %v5466
        %v5792 = vmul.f32 %v5791, %v5466
        %v5793 = vmul.f32 %v5792, %v5791
        %v5794 = vmul.f32 0.5, %v5793
        %v5795 = vsub.f32 1.5, %v5794
        %v5796 = vmul.f32 %v5791, %v5795
        %vm5797 = vweird.f32 %v5466
        %vm5798 = vweird.f32 %v5791
        %vm5799 = vmor %vm5797, %vm5798
        %v5800 = vsel %vm5799, %v5791, %v5796
        %v5801 = vrsqrt.pop %v5467
        %v5802 = vmul.f32 %v5801, %v5467
        %v5803 = vmul.f32 %v5802, %v5801
        %v5804 = vmul.f32 0.5, %v5803
        %v5805 = vsub.f32 1.5, %v5804
        %v5806 = vmul.f32 %v5801, %v5805
        %vm5807 = vweird.f32 %v5467
        %vm5808 = vweird.f32 %v5801
        %vm5809 = vmor %vm5807, %vm5808
        %v5810 = vsel %vm5809, %v5801, %v5806
        %v5811 = vrsqrt.pop %v5468
        %v5812 = vmul.f32 %v5811, %v5468
        %v5813 = vmul.f32 %v5812, %v5811
        %v5814 = vmul.f32 0.5, %v5813
        %v5815 = vsub.f32 1.5, %v5814
        %v5816 = vmul.f32 %v5811, %v5815
        %vm5817 = vweird.f32 %v5468
        %vm5818 = vweird.f32 %v5811
        %vm5819 = vmor %vm5817, %vm5818
        %v5820 = vsel %vm5819, %v5811, %v5816
        %v5821 = vrsqrt.pop %v5469
        %v5822 = vmul.f32 %v5821, %v5469
        %v5823 = vmul.f32 %v5822, %v5821
        %v5824 = vmul.f32 0.5, %v5823
        %v5825 = vsub.f32 1.5, %v5824
        %v5826 = vmul.f32 %v5821, %v5825
        %vm5827 = vweird.f32 %v5469
        %vm5828 = vweird.f32 %v5821
        %vm5829 = vmor %vm5827, %vm5828
        %v5830 = vsel %vm5829, %v5821, %v5826
        %v5831 = vrsqrt.pop %v5470
        %v5832 = vmul.f32 %v5831, %v5470
        %v5833 = vmul.f32 %v5832, %v5831
        %v5834 = vmul.f32 0.5, %v5833
        %v5835 = vsub.f32 1.5, %v5834
        %v5836 = vmul.f32 %v5831, %v5835
        %vm5837 = vweird.f32 %v5470
        %vm5838 = vweird.f32 %v5831
        %vm5839 = vmor %vm5837, %vm5838
        %v5840 = vsel %vm5839, %v5831, %v5836
        %v5841 = vrsqrt.pop %v5471
        %v5842 = vmul.f32 %v5841, %v5471
        %v5843 = vmul.f32 %v5842, %v5841
        %v5844 = vmul.f32 0.5, %v5843
        %v5845 = vsub.f32 1.5, %v5844
        %v5846 = vmul.f32 %v5841, %v5845
        %vm5847 = vweird.f32 %v5471
        %vm5848 = vweird.f32 %v5841
        %vm5849 = vmor %vm5847, %vm5848
        %v5850 = vsel %vm5849, %v5841, %v5846
        %v5851 = vrsqrt.pop %v5472
        %v5852 = vmul.f32 %v5851, %v5472
        %v5853 = vmul.f32 %v5852, %v5851
        %v5854 = vmul.f32 0.5, %v5853
        %v5855 = vsub.f32 1.5, %v5854
        %v5856 = vmul.f32 %v5851, %v5855
        %vm5857 = vweird.f32 %v5472
        %vm5858 = vweird.f32 %v5851
        %vm5859 = vmor %vm5857, %vm5858
        %v5860 = vsel %vm5859, %v5851, %v5856
        %v5861 = vrsqrt.pop %v5473
        %v5862 = vmul.f32 %v5861, %v5473
        %v5863 = vmul.f32 %v5862, %v5861
        %v5864 = vmul.f32 0.5, %v5863
        %v5865 = vsub.f32 1.5, %v5864
        %v5866 = vmul.f32 %v5861, %v5865
        %vm5867 = vweird.f32 %v5473
        %vm5868 = vweird.f32 %v5861
        %vm5869 = vmor %vm5867, %vm5868
        %v5870 = vsel %vm5869, %v5861, %v5866
        %v5871 = vrsqrt.pop %v5474
        %v5872 = vmul.f32 %v5871, %v5474
        %v5873 = vmul.f32 %v5872, %v5871
        %v5874 = vmul.f32 0.5, %v5873
        %v5875 = vsub.f32 1.5, %v5874
        %v5876 = vmul.f32 %v5871, %v5875
        %vm5877 = vweird.f32 %v5474
        %vm5878 = vweird.f32 %v5871
        %vm5879 = vmor %vm5877, %vm5878
        %v5880 = vsel %vm5879, %v5871, %v5876
        %v5881 = vrsqrt.pop %v5475
        %v5882 = vmul.f32 %v5881, %v5475
        %v5883 = vmul.f32 %v5882, %v5881
        %v5884 = vmul.f32 0.5, %v5883
        %v5885 = vsub.f32 1.5, %v5884
        %v5886 = vmul.f32 %v5881, %v5885
        %vm5887 = vweird.f32 %v5475
        %vm5888 = vweird.f32 %v5881
        %vm5889 = vmor %vm5887, %vm5888
        %v5890 = vsel %vm5889, %v5881, %v5886
        %v5891 = vrsqrt.pop %v5476
        %v5892 = vmul.f32 %v5891, %v5476
        %v5893 = vmul.f32 %v5892, %v5891
        %v5894 = vmul.f32 0.5, %v5893
        %v5895 = vsub.f32 1.5, %v5894
        %v5896 = vmul.f32 %v5891, %v5895
        %vm5897 = vweird.f32 %v5476
        %vm5898 = vweird.f32 %v5891
        %vm5899 = vmor %vm5897, %vm5898
        %v5900 = vsel %vm5899, %v5891, %v5896
        %v5901 = vrsqrt.pop %v5477
        %v5902 = vmul.f32 %v5901, %v5477
        %v5903 = vmul.f32 %v5902, %v5901
        %v5904 = vmul.f32 0.5, %v5903
        %v5905 = vsub.f32 1.5, %v5904
        %v5906 = vmul.f32 %v5901, %v5905
        %vm5907 = vweird.f32 %v5477
        %vm5908 = vweird.f32 %v5901
        %vm5909 = vmor %vm5907, %vm5908
        %v5910 = vsel %vm5909, %v5901, %v5906
        %v5911 = vrsqrt.pop %v5478
        %v5912 = vmul.f32 %v5911, %v5478
        %v5913 = vmul.f32 %v5912, %v5911
        %v5914 = vmul.f32 0.5, %v5913
        %v5915 = vsub.f32 1.5, %v5914
        %v5916 = vmul.f32 %v5911, %v5915
        %vm5917 = vweird.f32 %v5478
        %vm5918 = vweird.f32 %v5911
        %vm5919 = vmor %vm5917, %vm5918
        %v5920 = vsel %vm5919, %v5911, %v5916
        %v5921 = vrsqrt.pop %v5479
        %v5922 = vmul.f32 %v5921, %v5479
        %v5923 = vmul.f32 %v5922, %v5921
        %v5924 = vmul.f32 0.5, %v5923
        %v5925 = vsub.f32 1.5, %v5924
        %v5926 = vmul.f32 %v5921, %v5925
        %vm5927 = vweird.f32 %v5479
        %vm5928 = vweird.f32 %v5921
        %vm5929 = vmor %vm5927, %vm5928
        %v5930 = vsel %vm5929, %v5921, %v5926
        %v5931 = vrsqrt.pop %v5480
        %v5932 = vmul.f32 %v5931, %v5480
        %v5933 = vmul.f32 %v5932, %v5931
        %v5934 = vmul.f32 0.5, %v5933
        %v5935 = vsub.f32 1.5, %v5934
        %v5936 = vmul.f32 %v5931, %v5935
        %vm5937 = vweird.f32 %v5480
        %vm5938 = vweird.f32 %v5931
        %vm5939 = vmor %vm5937, %vm5938
        %v5940 = vsel %vm5939, %v5931, %v5936
        %v5941 = vrsqrt.pop %v5481
        %v5942 = vmul.f32 %v5941, %v5481
        %v5943 = vmul.f32 %v5942, %v5941
        %v5944 = vmul.f32 0.5, %v5943
        %v5945 = vsub.f32 1.5, %v5944
        %v5946 = vmul.f32 %v5941, %v5945
        %vm5947 = vweird.f32 %v5481
        %vm5948 = vweird.f32 %v5941
        %vm5949 = vmor %vm5947, %vm5948
        %v5950 = vsel %vm5949, %v5941, %v5946
        %v5951 = vrsqrt.pop %v5482
        %v5952 = vmul.f32 %v5951, %v5482
        %v5953 = vmul.f32 %v5952, %v5951
        %v5954 = vmul.f32 0.5, %v5953
        %v5955 = vsub.f32 1.5, %v5954
        %v5956 = vmul.f32 %v5951, %v5955
        %vm5957 = vweird.f32 %v5482
        %vm5958 = vweird.f32 %v5951
        %vm5959 = vmor %vm5957, %vm5958
        %v5960 = vsel %vm5959, %v5951, %v5956
        %v5961 = vrsqrt.pop %v5483
        %v5962 = vmul.f32 %v5961, %v5483
        %v5963 = vmul.f32 %v5962, %v5961
        %v5964 = vmul.f32 0.5, %v5963
        %v5965 = vsub.f32 1.5, %v5964
        %v5966 = vmul.f32 %v5961, %v5965
        %vm5967 = vweird.f32 %v5483
        %vm5968 = vweird.f32 %v5961
        %vm5969 = vmor %vm5967, %vm5968
        %v5970 = vsel %vm5969, %v5961, %v5966
        %v5971 = vrsqrt.pop %v5484
        %v5972 = vmul.f32 %v5971, %v5484
        %v5973 = vmul.f32 %v5972, %v5971
        %v5974 = vmul.f32 0.5, %v5973
        %v5975 = vsub.f32 1.5, %v5974
        %v5976 = vmul.f32 %v5971, %v5975
        %vm5977 = vweird.f32 %v5484
        %vm5978 = vweird.f32 %v5971
        %vm5979 = vmor %vm5977, %vm5978
        %v5980 = vsel %vm5979, %v5971, %v5976
        %v5981 = vrsqrt.pop %v5485
        %v5982 = vmul.f32 %v5981, %v5485
        %v5983 = vmul.f32 %v5982, %v5981
        %v5984 = vmul.f32 0.5, %v5983
        %v5985 = vsub.f32 1.5, %v5984
        %v5986 = vmul.f32 %v5981, %v5985
        %vm5987 = vweird.f32 %v5485
        %vm5988 = vweird.f32 %v5981
        %vm5989 = vmor %vm5987, %vm5988
        %v5990 = vsel %vm5989, %v5981, %v5986
        %v5991 = vrsqrt.pop %v5486
        %v5992 = vmul.f32 %v5991, %v5486
        %v5993 = vmul.f32 %v5992, %v5991
        %v5994 = vmul.f32 0.5, %v5993
        %v5995 = vsub.f32 1.5, %v5994
        %v5996 = vmul.f32 %v5991, %v5995
        %vm5997 = vweird.f32 %v5486
        %vm5998 = vweird.f32 %v5991
        %vm5999 = vmor %vm5997, %vm5998
        %v6000 = vsel %vm5999, %v5991, %v5996
        %v6001 = vrsqrt.pop %v5487
        %v6002 = vmul.f32 %v6001, %v5487
        %v6003 = vmul.f32 %v6002, %v6001
        %v6004 = vmul.f32 0.5, %v6003
        %v6005 = vsub.f32 1.5, %v6004
        %v6006 = vmul.f32 %v6001, %v6005
        %vm6007 = vweird.f32 %v5487
        %vm6008 = vweird.f32 %v6001
        %vm6009 = vmor %vm6007, %vm6008
        %v6010 = vsel %vm6009, %v6001, %v6006
        %v6011 = vrsqrt.pop %v5488
        %v6012 = vmul.f32 %v6011, %v5488
        %v6013 = vmul.f32 %v6012, %v6011
        %v6014 = vmul.f32 0.5, %v6013
        %v6015 = vsub.f32 1.5, %v6014
        %v6016 = vmul.f32 %v6011, %v6015
        %vm6017 = vweird.f32 %v5488
        %vm6018 = vweird.f32 %v6011
        %vm6019 = vmor %vm6017, %vm6018
        %v6020 = vsel %vm6019, %v6011, %v6016
        %v6021 = vrsqrt.pop %v5489
        %v6022 = vmul.f32 %v6021, %v5489
        %v6023 = vmul.f32 %v6022, %v6021
        %v6024 = vmul.f32 0.5, %v6023
        %v6025 = vsub.f32 1.5, %v6024
        %v6026 = vmul.f32 %v6021, %v6025
        %vm6027 = vweird.f32 %v5489
        %vm6028 = vweird.f32 %v6021
        %vm6029 = vmor %vm6027, %vm6028
        %v6030 = vsel %vm6029, %v6021, %v6026
        %v6031 = vrsqrt.pop %v5490
        %v6032 = vmul.f32 %v6031, %v5490
        %v6033 = vmul.f32 %v6032, %v6031
        %v6034 = vmul.f32 0.5, %v6033
        %v6035 = vsub.f32 1.5, %v6034
        %v6036 = vmul.f32 %v6031, %v6035
        %vm6037 = vweird.f32 %v5490
        %vm6038 = vweird.f32 %v6031
        %vm6039 = vmor %vm6037, %vm6038
        %v6040 = vsel %vm6039, %v6031, %v6036
        %v6041 = vrsqrt.pop %v5491
        %v6042 = vmul.f32 %v6041, %v5491
        %v6043 = vmul.f32 %v6042, %v6041
        %v6044 = vmul.f32 0.5, %v6043
        %v6045 = vsub.f32 1.5, %v6044
        %v6046 = vmul.f32 %v6041, %v6045
        %vm6047 = vweird.f32 %v5491
        %vm6048 = vweird.f32 %v6041
        %vm6049 = vmor %vm6047, %vm6048
        %v6050 = vsel %vm6049, %v6041, %v6046
        %v6051 = vrsqrt.pop %v5492
        %v6052 = vmul.f32 %v6051, %v5492
        %v6053 = vmul.f32 %v6052, %v6051
        %v6054 = vmul.f32 0.5, %v6053
        %v6055 = vsub.f32 1.5, %v6054
        %v6056 = vmul.f32 %v6051, %v6055
        %vm6057 = vweird.f32 %v5492
        %vm6058 = vweird.f32 %v6051
        %vm6059 = vmor %vm6057, %vm6058
        %v6060 = vsel %vm6059, %v6051, %v6056
        %v6061 = vrsqrt.pop %v5493
        %v6062 = vmul.f32 %v6061, %v5493
        %v6063 = vmul.f32 %v6062, %v6061
        %v6064 = vmul.f32 0.5, %v6063
        %v6065 = vsub.f32 1.5, %v6064
        %v6066 = vmul.f32 %v6061, %v6065
        %vm6067 = vweird.f32 %v5493
        %vm6068 = vweird.f32 %v6061
        %vm6069 = vmor %vm6067, %vm6068
        %v6070 = vsel %vm6069, %v6061, %v6066
        %v6071 = vrsqrt.pop %v5494
        %v6072 = vmul.f32 %v6071, %v5494
        %v6073 = vmul.f32 %v6072, %v6071
        %v6074 = vmul.f32 0.5, %v6073
        %v6075 = vsub.f32 1.5, %v6074
        %v6076 = vmul.f32 %v6071, %v6075
        %vm6077 = vweird.f32 %v5494
        %vm6078 = vweird.f32 %v6071
        %vm6079 = vmor %vm6077, %vm6078
        %v6080 = vsel %vm6079, %v6071, %v6076
        %v6081 = vrsqrt.pop %v5495
        %v6082 = vmul.f32 %v6081, %v5495
        %v6083 = vmul.f32 %v6082, %v6081
        %v6084 = vmul.f32 0.5, %v6083
        %v6085 = vsub.f32 1.5, %v6084
        %v6086 = vmul.f32 %v6081, %v6085
        %vm6087 = vweird.f32 %v5495
        %vm6088 = vweird.f32 %v6081
        %vm6089 = vmor %vm6087, %vm6088
        %v6090 = vsel %vm6089, %v6081, %v6086
        %v6091 = vrsqrt.pop %v5496
        %v6092 = vmul.f32 %v6091, %v5496
        %v6093 = vmul.f32 %v6092, %v6091
        %v6094 = vmul.f32 0.5, %v6093
        %v6095 = vsub.f32 1.5, %v6094
        %v6096 = vmul.f32 %v6091, %v6095
        %vm6097 = vweird.f32 %v5496
        %vm6098 = vweird.f32 %v6091
        %vm6099 = vmor %vm6097, %vm6098
        %v6100 = vsel %vm6099, %v6091, %v6096
        %v6101 = vrsqrt.pop %v5497
        %v6102 = vmul.f32 %v6101, %v5497
        %v6103 = vmul.f32 %v6102, %v6101
        %v6104 = vmul.f32 0.5, %v6103
        %v6105 = vsub.f32 1.5, %v6104
        %v6106 = vmul.f32 %v6101, %v6105
        %vm6107 = vweird.f32 %v5497
        %vm6108 = vweird.f32 %v6101
        %vm6109 = vmor %vm6107, %vm6108
        %v6110 = vsel %vm6109, %v6101, %v6106
        %v6111 = vrsqrt.pop %v5498
        %v6112 = vmul.f32 %v6111, %v5498
        %v6113 = vmul.f32 %v6112, %v6111
        %v6114 = vmul.f32 0.5, %v6113
        %v6115 = vsub.f32 1.5, %v6114
        %v6116 = vmul.f32 %v6111, %v6115
        %vm6117 = vweird.f32 %v5498
        %vm6118 = vweird.f32 %v6111
        %vm6119 = vmor %vm6117, %vm6118
        %v6120 = vsel %vm6119, %v6111, %v6116
        %v6121 = vrsqrt.pop %v5499
        %v6122 = vmul.f32 %v6121, %v5499
        %v6123 = vmul.f32 %v6122, %v6121
        %v6124 = vmul.f32 0.5, %v6123
        %v6125 = vsub.f32 1.5, %v6124
        %v6126 = vmul.f32 %v6121, %v6125
        %vm6127 = vweird.f32 %v5499
        %vm6128 = vweird.f32 %v6121
        %vm6129 = vmor %vm6127, %vm6128
        %v6130 = vsel %vm6129, %v6121, %v6126
        %v6131 = vrsqrt.pop %v5500
        %v6132 = vmul.f32 %v6131, %v5500
        %v6133 = vmul.f32 %v6132, %v6131
        %v6134 = vmul.f32 0.5, %v6133
        %v6135 = vsub.f32 1.5, %v6134
        %v6136 = vmul.f32 %v6131, %v6135
        %vm6137 = vweird.f32 %v5500
        %vm6138 = vweird.f32 %v6131
        %vm6139 = vmor %vm6137, %vm6138
        %v6140 = vsel %vm6139, %v6131, %v6136
        %v6141 = vmul.f32 %v4991, %v5510
        %v6142 = vmul.f32 %v4995, %v5520
        %v6143 = vmul.f32 %v4999, %v5530
        %v6144 = vmul.f32 %v5003, %v5540
        %v6145 = vmul.f32 %v5007, %v5550
        %v6146 = vmul.f32 %v5011, %v5560
        %v6147 = vmul.f32 %v5015, %v5570
        %v6148 = vmul.f32 %v5019, %v5580
        %v6149 = vmul.f32 %v5023, %v5590
        %v6150 = vmul.f32 %v5027, %v5600
        %v6151 = vmul.f32 %v5031, %v5610
        %v6152 = vmul.f32 %v5035, %v5620
        %v6153 = vmul.f32 %v5039, %v5630
        %v6154 = vmul.f32 %v5043, %v5640
        %v6155 = vmul.f32 %v5047, %v5650
        %v6156 = vmul.f32 %v5051, %v5660
        %v6157 = vmul.f32 %v5055, %v5670
        %v6158 = vmul.f32 %v5059, %v5680
        %v6159 = vmul.f32 %v5063, %v5690
        %v6160 = vmul.f32 %v5067, %v5700
        %v6161 = vmul.f32 %v5071, %v5710
        %v6162 = vmul.f32 %v5075, %v5720
        %v6163 = vmul.f32 %v5079, %v5730
        %v6164 = vmul.f32 %v5083, %v5740
        %v6165 = vmul.f32 %v5087, %v5750
        %v6166 = vmul.f32 %v5091, %v5760
        %v6167 = vmul.f32 %v5095, %v5770
        %v6168 = vmul.f32 %v5099, %v5780
        %v6169 = vmul.f32 %v5103, %v5790
        %v6170 = vmul.f32 %v5107, %v5800
        %v6171 = vmul.f32 %v5111, %v5810
        %v6172 = vmul.f32 %v5115, %v5820
        %v6173 = vmul.f32 %v5119, %v5830
        %v6174 = vmul.f32 %v5123, %v5840
        %v6175 = vmul.f32 %v5127, %v5850
        %v6176 = vmul.f32 %v5131, %v5860
        %v6177 = vmul.f32 %v5135, %v5870
        %v6178 = vmul.f32 %v5139, %v5880
        %v6179 = vmul.f32 %v5143, %v5890
        %v6180 = vmul.f32 %v5147, %v5900
        %v6181 = vmul.f32 %v5151, %v5910
        %v6182 = vmul.f32 %v5155, %v5920
        %v6183 = vmul.f32 %v5159, %v5930
        %v6184 = vmul.f32 %v5163, %v5940
        %v6185 = vmul.f32 %v5167, %v5950
        %v6186 = vmul.f32 %v5171, %v5960
        %v6187 = vmul.f32 %v5175, %v5970
        %v6188 = vmul.f32 %v5179, %v5980
        %v6189 = vmul.f32 %v5183, %v5990
        %v6190 = vmul.f32 %v5187, %v6000
        %v6191 = vmul.f32 %v5191, %v6010
        %v6192 = vmul.f32 %v5195, %v6020
        %v6193 = vmul.f32 %v5199, %v6030
        %v6194 = vmul.f32 %v5203, %v6040
        %v6195 = vmul.f32 %v5207, %v6050
        %v6196 = vmul.f32 %v5211, %v6060
        %v6197 = vmul.f32 %v5215, %v6070
        %v6198 = vmul.f32 %v5219, %v6080
        %v6199 = vmul.f32 %v5223, %v6090
        %v6200 = vmul.f32 %v5227, %v6100
        %v6201 = vmul.f32 %v5231, %v6110
        %v6202 = vmul.f32 %v5235, %v6120
        %v6203 = vmul.f32 %v5239, %v6130
        %v6204 = vmul.f32 %v5243, %v6140
        %v6205 = vmul.f32 %v6141, %v6157
        %v6206 = vmul.f32 %v6142, %v6158
        %v6207 = vmul.f32 %v6143, %v6159
        %v6208 = vmul.f32 %v6144, %v6160
        %v6209 = vmul.f32 %v6145, %v6161
        %v6210 = vmul.f32 %v6146, %v6162
        %v6211 = vmul.f32 %v6147, %v6163
        %v6212 = vmul.f32 %v6148, %v6164
        %v6213 = vmul.f32 %v6149, %v6165
        %v6214 = vmul.f32 %v6150, %v6166
        %v6215 = vmul.f32 %v6151, %v6167
        %v6216 = vmul.f32 %v6152, %v6168
        %v6217 = vmul.f32 %v6153, %v6169
        %v6218 = vmul.f32 %v6154, %v6170
        %v6219 = vmul.f32 %v6155, %v6171
        %v6220 = vmul.f32 %v6156, %v6172
        %6221 = vadd.xlane.f32.xlu0 %v6205
        %v6222 = vpop.xlane.xlu0 %6221
        %6223 = vadd.xlane.f32.xlu0 %v6206
        %v6224 = vpop.xlane.xlu0 %6223
        %6225 = vadd.xlane.f32.xlu0 %v6207
        %v6226 = vpop.xlane.xlu0 %6225
        %6227 = vadd.xlane.f32.xlu0 %v6208
        %v6228 = vpop.xlane.xlu0 %6227
        %6229 = vadd.xlane.f32.xlu0 %v6209
        %v6230 = vpop.xlane.xlu0 %6229
        %6231 = vadd.xlane.f32.xlu0 %v6210
        %v6232 = vpop.xlane.xlu0 %6231
        %6233 = vadd.xlane.f32.xlu0 %v6211
        %v6234 = vpop.xlane.xlu0 %6233
        %6235 = vadd.xlane.f32.xlu0 %v6212
        %v6236 = vpop.xlane.xlu0 %6235
        %6237 = vadd.xlane.f32.xlu0 %v6213
        %v6238 = vpop.xlane.xlu0 %6237
        %6239 = vadd.xlane.f32.xlu0 %v6214
        %v6240 = vpop.xlane.xlu0 %6239
        %6241 = vadd.xlane.f32.xlu0 %v6215
        %v6242 = vpop.xlane.xlu0 %6241
        %6243 = vadd.xlane.f32.xlu0 %v6216
        %v6244 = vpop.xlane.xlu0 %6243
        %6245 = vadd.xlane.f32.xlu0 %v6217
        %v6246 = vpop.xlane.xlu0 %6245
        %6247 = vadd.xlane.f32.xlu0 %v6218
        %v6248 = vpop.xlane.xlu0 %6247
        %6249 = vadd.xlane.f32.xlu0 %v6219
        %v6250 = vpop.xlane.xlu0 %6249
        %6251 = vadd.xlane.f32.xlu0 %v6220
        %v6252 = vpop.xlane.xlu0 %6251
        %v6253 = vmul.f32 %v6222, 1.4285715
        %v6254 = vmul.f32 %v6224, 1.4285715
        %v6255 = vmul.f32 %v6226, 1.4285715
        %v6256 = vmul.f32 %v6228, 1.4285715
        %v6257 = vmul.f32 %v6230, 1.4285715
        %v6258 = vmul.f32 %v6232, 1.4285715
        %v6259 = vmul.f32 %v6234, 1.4285715
        %v6260 = vmul.f32 %v6236, 1.4285715
        %v6261 = vmul.f32 %v6238, 1.4285715
        %v6262 = vmul.f32 %v6240, 1.4285715
        %v6263 = vmul.f32 %v6242, 1.4285715
        %v6264 = vmul.f32 %v6244, 1.4285715
        %v6265 = vmul.f32 %v6246, 1.4285715
        %v6266 = vmul.f32 %v6248, 1.4285715
        %v6267 = vmul.f32 %v6250, 1.4285715
        %v6268 = vmul.f32 %v6252, 1.4285715
        %v6269 = vmul.f32 %v6141, %v6189
        %v6270 = vmul.f32 %v6142, %v6190
        %v6271 = vmul.f32 %v6143, %v6191
        %v6272 = vmul.f32 %v6144, %v6192
        %v6273 = vmul.f32 %v6145, %v6193
        %v6274 = vmul.f32 %v6146, %v6194
        %v6275 = vmul.f32 %v6147, %v6195
        %v6276 = vmul.f32 %v6148, %v6196
        %v6277 = vmul.f32 %v6149, %v6197
        %v6278 = vmul.f32 %v6150, %v6198
        %v6279 = vmul.f32 %v6151, %v6199
        %v6280 = vmul.f32 %v6152, %v6200
        %v6281 = vmul.f32 %v6153, %v6201
        %v6282 = vmul.f32 %v6154, %v6202
        %v6283 = vmul.f32 %v6155, %v6203
        %v6284 = vmul.f32 %v6156, %v6204
        %6285 = vadd.xlane.f32.xlu0 %v6269
        %v6286 = vpop.xlane.xlu0 %6285
        %6287 = vadd.xlane.f32.xlu0 %v6270
        %v6288 = vpop.xlane.xlu0 %6287
        %6289 = vadd.xlane.f32.xlu0 %v6271
        %v6290 = vpop.xlane.xlu0 %6289
        %6291 = vadd.xlane.f32.xlu0 %v6272
        %v6292 = vpop.xlane.xlu0 %6291
        %6293 = vadd.xlane.f32.xlu0 %v6273
        %v6294 = vpop.xlane.xlu0 %6293
        %6295 = vadd.xlane.f32.xlu0 %v6274
        %v6296 = vpop.xlane.xlu0 %6295
        %6297 = vadd.xlane.f32.xlu0 %v6275
        %v6298 = vpop.xlane.xlu0 %6297
        %6299 = vadd.xlane.f32.xlu0 %v6276
        %v6300 = vpop.xlane.xlu0 %6299
        %6301 = vadd.xlane.f32.xlu0 %v6277
        %v6302 = vpop.xlane.xlu0 %6301
        %6303 = vadd.xlane.f32.xlu0 %v6278
        %v6304 = vpop.xlane.xlu0 %6303
        %6305 = vadd.xlane.f32.xlu0 %v6279
        %v6306 = vpop.xlane.xlu0 %6305
        %6307 = vadd.xlane.f32.xlu0 %v6280
        %v6308 = vpop.xlane.xlu0 %6307
        %6309 = vadd.xlane.f32.xlu0 %v6281
        %v6310 = vpop.xlane.xlu0 %6309
        %6311 = vadd.xlane.f32.xlu0 %v6282
        %v6312 = vpop.xlane.xlu0 %6311
        %6313 = vadd.xlane.f32.xlu0 %v6283
        %v6314 = vpop.xlane.xlu0 %6313
        %6315 = vadd.xlane.f32.xlu0 %v6284
        %v6316 = vpop.xlane.xlu0 %6315
        %v6317 = vmul.f32 %v6286, 1.4285715
        %v6318 = vmul.f32 %v6288, 1.4285715
        %v6319 = vmul.f32 %v6290, 1.4285715
        %v6320 = vmul.f32 %v6292, 1.4285715
        %v6321 = vmul.f32 %v6294, 1.4285715
        %v6322 = vmul.f32 %v6296, 1.4285715
        %v6323 = vmul.f32 %v6298, 1.4285715
        %v6324 = vmul.f32 %v6300, 1.4285715
        %v6325 = vmul.f32 %v6302, 1.4285715
        %v6326 = vmul.f32 %v6304, 1.4285715
        %v6327 = vmul.f32 %v6306, 1.4285715
        %v6328 = vmul.f32 %v6308, 1.4285715
        %v6329 = vmul.f32 %v6310, 1.4285715
        %v6330 = vmul.f32 %v6312, 1.4285715
        %v6331 = vmul.f32 %v6314, 1.4285715
        %v6332 = vmul.f32 %v6316, 1.4285715
        %v6333 = vmul.f32 %v6157, %v6173
        %v6334 = vmul.f32 %v6158, %v6174
        %v6335 = vmul.f32 %v6159, %v6175
        %v6336 = vmul.f32 %v6160, %v6176
        %v6337 = vmul.f32 %v6161, %v6177
        %v6338 = vmul.f32 %v6162, %v6178
        %v6339 = vmul.f32 %v6163, %v6179
        %v6340 = vmul.f32 %v6164, %v6180
        %v6341 = vmul.f32 %v6165, %v6181
        %v6342 = vmul.f32 %v6166, %v6182
        %v6343 = vmul.f32 %v6167, %v6183
        %v6344 = vmul.f32 %v6168, %v6184
        %v6345 = vmul.f32 %v6169, %v6185
        %v6346 = vmul.f32 %v6170, %v6186
        %v6347 = vmul.f32 %v6171, %v6187
        %v6348 = vmul.f32 %v6172, %v6188
        %6349 = vadd.xlane.f32.xlu0 %v6333
        %v6350 = vpop.xlane.xlu0 %6349
        %6351 = vadd.xlane.f32.xlu0 %v6334
        %v6352 = vpop.xlane.xlu0 %6351
        %6353 = vadd.xlane.f32.xlu0 %v6335
        %v6354 = vpop.xlane.xlu0 %6353
        %6355 = vadd.xlane.f32.xlu0 %v6336
        %v6356 = vpop.xlane.xlu0 %6355
        %6357 = vadd.xlane.f32.xlu0 %v6337
        %v6358 = vpop.xlane.xlu0 %6357
        %6359 = vadd.xlane.f32.xlu0 %v6338
        %v6360 = vpop.xlane.xlu0 %6359
        %6361 = vadd.xlane.f32.xlu0 %v6339
        %v6362 = vpop.xlane.xlu0 %6361
        %6363 = vadd.xlane.f32.xlu0 %v6340
        %v6364 = vpop.xlane.xlu0 %6363
        %6365 = vadd.xlane.f32.xlu0 %v6341
        %v6366 = vpop.xlane.xlu0 %6365
        %6367 = vadd.xlane.f32.xlu0 %v6342
        %v6368 = vpop.xlane.xlu0 %6367
        %6369 = vadd.xlane.f32.xlu0 %v6343
        %v6370 = vpop.xlane.xlu0 %6369
        %6371 = vadd.xlane.f32.xlu0 %v6344
        %v6372 = vpop.xlane.xlu0 %6371
        %6373 = vadd.xlane.f32.xlu0 %v6345
        %v6374 = vpop.xlane.xlu0 %6373
        %6375 = vadd.xlane.f32.xlu0 %v6346
        %v6376 = vpop.xlane.xlu0 %6375
        %6377 = vadd.xlane.f32.xlu0 %v6347
        %v6378 = vpop.xlane.xlu0 %6377
        %6379 = vadd.xlane.f32.xlu0 %v6348
        %v6380 = vpop.xlane.xlu0 %6379
        %v6381 = vmul.f32 %v6350, 1.4285715
        %v6382 = vmul.f32 %v6352, 1.4285715
        %v6383 = vmul.f32 %v6354, 1.4285715
        %v6384 = vmul.f32 %v6356, 1.4285715
        %v6385 = vmul.f32 %v6358, 1.4285715
        %v6386 = vmul.f32 %v6360, 1.4285715
        %v6387 = vmul.f32 %v6362, 1.4285715
        %v6388 = vmul.f32 %v6364, 1.4285715
        %v6389 = vmul.f32 %v6366, 1.4285715
        %v6390 = vmul.f32 %v6368, 1.4285715
        %v6391 = vmul.f32 %v6370, 1.4285715
        %v6392 = vmul.f32 %v6372, 1.4285715
        %v6393 = vmul.f32 %v6374, 1.4285715
        %v6394 = vmul.f32 %v6376, 1.4285715
        %v6395 = vmul.f32 %v6378, 1.4285715
        %v6396 = vmul.f32 %v6380, 1.4285715
        %v6397 = vmul.f32 %v6253, 1.442695
        %v6398 = vpow.pop %v6397
        %v6399 = vmul.f32 %v6254, 1.442695
        %v6400 = vpow.pop %v6399
        %v6401 = vmul.f32 %v6255, 1.442695
        %v6402 = vpow.pop %v6401
        %v6403 = vmul.f32 %v6256, 1.442695
        %v6404 = vpow.pop %v6403
        %v6405 = vmul.f32 %v6257, 1.442695
        %v6406 = vpow.pop %v6405
        %v6407 = vmul.f32 %v6258, 1.442695
        %v6408 = vpow.pop %v6407
        %v6409 = vmul.f32 %v6259, 1.442695
        %v6410 = vpow.pop %v6409
        %v6411 = vmul.f32 %v6260, 1.442695
        %v6412 = vpow.pop %v6411
        %v6413 = vmul.f32 %v6261, 1.442695
        %v6414 = vpow.pop %v6413
        %v6415 = vmul.f32 %v6262, 1.442695
        %v6416 = vpow.pop %v6415
        %v6417 = vmul.f32 %v6263, 1.442695
        %v6418 = vpow.pop %v6417
        %v6419 = vmul.f32 %v6264, 1.442695
        %v6420 = vpow.pop %v6419
        %v6421 = vmul.f32 %v6265, 1.442695
        %v6422 = vpow.pop %v6421
        %v6423 = vmul.f32 %v6266, 1.442695
        %v6424 = vpow.pop %v6423
        %v6425 = vmul.f32 %v6267, 1.442695
        %v6426 = vpow.pop %v6425
        %v6427 = vmul.f32 %v6268, 1.442695
        %v6428 = vpow.pop %v6427
        %v6429 = vmul.f32 %v6398, 2.0
        %v6430 = vmul.f32 %v6400, 2.0
        %v6431 = vmul.f32 %v6402, 2.0
        %v6432 = vmul.f32 %v6404, 2.0
        %v6433 = vmul.f32 %v6406, 2.0
        %v6434 = vmul.f32 %v6408, 2.0
        %v6435 = vmul.f32 %v6410, 2.0
        %v6436 = vmul.f32 %v6412, 2.0
        %v6437 = vmul.f32 %v6414, 2.0
        %v6438 = vmul.f32 %v6416, 2.0
        %v6439 = vmul.f32 %v6418, 2.0
        %v6440 = vmul.f32 %v6420, 2.0
        %v6441 = vmul.f32 %v6422, 2.0
        %v6442 = vmul.f32 %v6424, 2.0
        %v6443 = vmul.f32 %v6426, 2.0
        %v6444 = vmul.f32 %v6428, 2.0
        %v6445 = vmul.f32 %v6317, 1.442695
        %v6446 = vpow.pop %v6445
        %v6447 = vmul.f32 %v6318, 1.442695
        %v6448 = vpow.pop %v6447
        %v6449 = vmul.f32 %v6319, 1.442695
        %v6450 = vpow.pop %v6449
        %v6451 = vmul.f32 %v6320, 1.442695
        %v6452 = vpow.pop %v6451
        %v6453 = vmul.f32 %v6321, 1.442695
        %v6454 = vpow.pop %v6453
        %v6455 = vmul.f32 %v6322, 1.442695
        %v6456 = vpow.pop %v6455
        %v6457 = vmul.f32 %v6323, 1.442695
        %v6458 = vpow.pop %v6457
        %v6459 = vmul.f32 %v6324, 1.442695
        %v6460 = vpow.pop %v6459
        %v6461 = vmul.f32 %v6325, 1.442695
        %v6462 = vpow.pop %v6461
        %v6463 = vmul.f32 %v6326, 1.442695
        %v6464 = vpow.pop %v6463
        %v6465 = vmul.f32 %v6327, 1.442695
        %v6466 = vpow.pop %v6465
        %v6467 = vmul.f32 %v6328, 1.442695
        %v6468 = vpow.pop %v6467
        %v6469 = vmul.f32 %v6329, 1.442695
        %v6470 = vpow.pop %v6469
        %v6471 = vmul.f32 %v6330, 1.442695
        %v6472 = vpow.pop %v6471
        %v6473 = vmul.f32 %v6331, 1.442695
        %v6474 = vpow.pop %v6473
        %v6475 = vmul.f32 %v6332, 1.442695
        %v6476 = vpow.pop %v6475
        %v6477 = vadd.f32 %v6429, %v6446
        %v6478 = vadd.f32 %v6430, %v6448
        %v6479 = vadd.f32 %v6431, %v6450
        %v6480 = vadd.f32 %v6432, %v6452
        %v6481 = vadd.f32 %v6433, %v6454
        %v6482 = vadd.f32 %v6434, %v6456
        %v6483 = vadd.f32 %v6435, %v6458
        %v6484 = vadd.f32 %v6436, %v6460
        %v6485 = vadd.f32 %v6437, %v6462
        %v6486 = vadd.f32 %v6438, %v6464
        %v6487 = vadd.f32 %v6439, %v6466
        %v6488 = vadd.f32 %v6440, %v6468
        %v6489 = vadd.f32 %v6441, %v6470
        %v6490 = vadd.f32 %v6442, %v6472
        %v6491 = vadd.f32 %v6443, %v6474
        %v6492 = vadd.f32 %v6444, %v6476
        %v6493 = vmul.f32 %v6381, 1.442695
        %v6494 = vpow.pop %v6493
        %v6495 = vmul.f32 %v6382, 1.442695
        %v6496 = vpow.pop %v6495
        %v6497 = vmul.f32 %v6383, 1.442695
        %v6498 = vpow.pop %v6497
        %v6499 = vmul.f32 %v6384, 1.442695
        %v6500 = vpow.pop %v6499
        %v6501 = vmul.f32 %v6385, 1.442695
        %v6502 = vpow.pop %v6501
        %v6503 = vmul.f32 %v6386, 1.442695
        %v6504 = vpow.pop %v6503
        %v6505 = vmul.f32 %v6387, 1.442695
        %v6506 = vpow.pop %v6505
        %v6507 = vmul.f32 %v6388, 1.442695
        %v6508 = vpow.pop %v6507
        %v6509 = vmul.f32 %v6389, 1.442695
        %v6510 = vpow.pop %v6509
        %v6511 = vmul.f32 %v6390, 1.442695
        %v6512 = vpow.pop %v6511
        %v6513 = vmul.f32 %v6391, 1.442695
        %v6514 = vpow.pop %v6513
        %v6515 = vmul.f32 %v6392, 1.442695
        %v6516 = vpow.pop %v6515
        %v6517 = vmul.f32 %v6393, 1.442695
        %v6518 = vpow.pop %v6517
        %v6519 = vmul.f32 %v6394, 1.442695
        %v6520 = vpow.pop %v6519
        %v6521 = vmul.f32 %v6395, 1.442695
        %v6522 = vpow.pop %v6521
        %v6523 = vmul.f32 %v6396, 1.442695
        %v6524 = vpow.pop %v6523
        %v6525 = vadd.f32 %v6477, %v6494
        %v6526 = vadd.f32 %v6478, %v6496
        %v6527 = vadd.f32 %v6479, %v6498
        %v6528 = vadd.f32 %v6480, %v6500
        %v6529 = vadd.f32 %v6481, %v6502
        %v6530 = vadd.f32 %v6482, %v6504
        %v6531 = vadd.f32 %v6483, %v6506
        %v6532 = vadd.f32 %v6484, %v6508
        %v6533 = vadd.f32 %v6485, %v6510
        %v6534 = vadd.f32 %v6486, %v6512
        %v6535 = vadd.f32 %v6487, %v6514
        %v6536 = vadd.f32 %v6488, %v6516
        %v6537 = vadd.f32 %v6489, %v6518
        %v6538 = vadd.f32 %v6490, %v6520
        %v6539 = vadd.f32 %v6491, %v6522
        %v6540 = vadd.f32 %v6492, %v6524
        %v6541 = vlog2.pop %v6525
        %v6542 = vmul.f32 %v6541, 0.6931472
        %v6543 = vlog2.pop %v6526
        %v6544 = vmul.f32 %v6543, 0.6931472
        %v6545 = vlog2.pop %v6527
        %v6546 = vmul.f32 %v6545, 0.6931472
        %v6547 = vlog2.pop %v6528
        %v6548 = vmul.f32 %v6547, 0.6931472
        %v6549 = vlog2.pop %v6529
        %v6550 = vmul.f32 %v6549, 0.6931472
        %v6551 = vlog2.pop %v6530
        %v6552 = vmul.f32 %v6551, 0.6931472
        %v6553 = vlog2.pop %v6531
        %v6554 = vmul.f32 %v6553, 0.6931472
        %v6555 = vlog2.pop %v6532
        %v6556 = vmul.f32 %v6555, 0.6931472
        %v6557 = vlog2.pop %v6533
        %v6558 = vmul.f32 %v6557, 0.6931472
        %v6559 = vlog2.pop %v6534
        %v6560 = vmul.f32 %v6559, 0.6931472
        %v6561 = vlog2.pop %v6535
        %v6562 = vmul.f32 %v6561, 0.6931472
        %v6563 = vlog2.pop %v6536
        %v6564 = vmul.f32 %v6563, 0.6931472
        %v6565 = vlog2.pop %v6537
        %v6566 = vmul.f32 %v6565, 0.6931472
        %v6567 = vlog2.pop %v6538
        %v6568 = vmul.f32 %v6567, 0.6931472
        %v6569 = vlog2.pop %v6539
        %v6570 = vmul.f32 %v6569, 0.6931472
        %v6571 = vlog2.pop %v6540
        %v6572 = vmul.f32 %v6571, 0.6931472
        %v6573 = vsub.f32 %v6542, %v6253
        %v6574 = vsub.f32 %v6544, %v6254
        %v6575 = vsub.f32 %v6546, %v6255
        %v6576 = vsub.f32 %v6548, %v6256
        %v6577 = vsub.f32 %v6550, %v6257
        %v6578 = vsub.f32 %v6552, %v6258
        %v6579 = vsub.f32 %v6554, %v6259
        %v6580 = vsub.f32 %v6556, %v6260
        %v6581 = vsub.f32 %v6558, %v6261
        %v6582 = vsub.f32 %v6560, %v6262
        %v6583 = vsub.f32 %v6562, %v6263
        %v6584 = vsub.f32 %v6564, %v6264
        %v6585 = vsub.f32 %v6566, %v6265
        %v6586 = vsub.f32 %v6568, %v6266
        %v6587 = vsub.f32 %v6570, %v6267
        %v6588 = vsub.f32 %v6572, %v6268
        %vm6589 = vcmask 7168
        %6590 = vst.msk [vmem:[%s487] sm:$0xff] %vm6589, %v6573
        %6591 = vst.msk [vmem:[%s487 + $0x8] sm:$0xff] %vm6589, %v6574
        %6592 = vst.msk [vmem:[%s487 + $0x10] sm:$0xff] %vm6589, %v6575
        %6593 = vst.msk [vmem:[%s487 + $0x18] sm:$0xff] %vm6589, %v6576
        %6594 = vst.msk [vmem:[%s487 + $0x20] sm:$0xff] %vm6589, %v6577
        %6595 = vst.msk [vmem:[%s487 + $0x28] sm:$0xff] %vm6589, %v6578
        %6596 = vst.msk [vmem:[%s487 + $0x30] sm:$0xff] %vm6589, %v6579
        %6597 = vst.msk [vmem:[%s487 + $0x38] sm:$0xff] %vm6589, %v6580
        %6598 = vst.msk [vmem:[%s487 + $0x40] sm:$0xff] %vm6589, %v6581
        %6599 = vst.msk [vmem:[%s487 + $0x48] sm:$0xff] %vm6589, %v6582
        %6600 = vst.msk [vmem:[%s487 + $0x50] sm:$0xff] %vm6589, %v6583
        %6601 = vst.msk [vmem:[%s487 + $0x58] sm:$0xff] %vm6589, %v6584
        %6602 = vst.msk [vmem:[%s487 + $0x60] sm:$0xff] %vm6589, %v6585
        %6603 = vst.msk [vmem:[%s487 + $0x68] sm:$0xff] %vm6589, %v6586
        %6604 = vst.msk [vmem:[%s487 + $0x70] sm:$0xff] %vm6589, %v6587
        %6605 = vst.msk [vmem:[%s487 + $0x78] sm:$0xff] %vm6589, %v6588
        %s6606 = smul.u32 16, %s29
        %p6607 = scmp.lt.s32.totalorder %s6606, 63
        %s6608 = scalar_select %p6607, %s6606, 63
        %s6609 = smul.addr %s6608, 8
        %s6610 = scalar_lea.vmem %s8, %s6609
        // Predicated region
        $region77: #{tpu_custom_call.1} parent=51 // pred_check
          %p6611 = pneg %p235
        $region78: #{tpu_custom_call.1} parent=51 // pred_check_branch
          %6613 = sbr.rel (%p6611) target = $region80
        $region79: #{tpu_custom_call.1} parent=51 // pred_region
          %s6614 = smul.u32 16, %s29
        $region80: #{tpu_custom_call.1} parent=51 // pred_fallthru
          _
      $region52: #{tpu_custom_call.1} parent=5 // pred_fallthru
        _
      %p6615 = scmp.le.s32.totalorder 2, %s24
      // Predicated region
      $region81: #{tpu_custom_call.1} parent=5 // pred_check
        %p6616 = pneg %p6615
      $region82: #{tpu_custom_call.1} parent=5 // pred_check_branch
        %6618 = sbr.rel (%p6616) target = $region84
      $region83: #{tpu_custom_call.1} parent=5 // pred_region
        %s6619 = ssub.s32 %s24, 2
        // Predicated region
        $region85: #{tpu_custom_call.1} parent=83 // pred_check
          %p6620 = pneg %p241
        $region86: #{tpu_custom_call.1} parent=83 // pred_check_branch
          %6622 = sbr.rel (%p6620) target = $region88
        $region87: #{tpu_custom_call.1} parent=83 // pred_region
          %s6623 = smul.u32 16, %s30
          %p6624 = scmp.lt.s32.totalorder %s6623, 63
          %s6625 = scalar_select %p6624, %s6623, 63
          %s6626 = smul.addr %s6625, 8
          %s6627 = scalar_lea.vmem %s8, %s6626
        $region88: #{tpu_custom_call.1} parent=83 // pred_fallthru
          _
      $region84: #{tpu_custom_call.1} parent=5 // pred_fallthru
        _
    $region6: #{tpu_custom_call.1} parent=1 // loop_footer
      %s28 = sadd.s32 1, %s24
    $region7: #{tpu_custom_call.1} parent=1 // loop_footer_branch
      %23 = sbr.rel target = $region3
    $region8: #{tpu_custom_call.1} parent=1 // loop_exit
      _
    %6628 = vsyncpa [#allocation3], 1
    %s6629 = scalar_lea.sflag [#allocation3], 1
    %6630 = vsyncpa %s6629, 1
    %6631 = vsyncpa [#allocation5], 1
    %s6632 = scalar_lea.sflag [#allocation5], 1
    %6633 = vsyncpa %s6632, 1
    %6634 = vsyncpa [#allocation8], 1
    %s6635 = scalar_lea.sflag [#allocation8], 1
    %6636 = vsyncpa %s6635, 1
    %6637 = vsyncpa [#allocation11], 1

</llo_original>
